<compile_context>
chip_gen: v5e
topology: v5e:2x2
jax: 0.10.0
libtpu: 0.0.40
codegen_flags: <defaults>
</compile_context>

<pallas_src>
import functools

import jax
import jax.numpy as jnp
from jax.experimental import pallas as pl
from jax.experimental.pallas import tpu as pltpu

LANE = 128


def _round_up(x, m):
    return (x + m - 1) // m * m


def _vmem_limit_bytes():
    try:
        cap = int(pltpu.get_tpu_info().vmem_capacity_bytes)
    except Exception:
        cap = 128 * 1024 * 1024
    # 96 MiB on v5e/v6e (128 MiB physical), 48 MiB on v7x (64 MiB physical).
    return max(32 * 1024 * 1024, min(cap * 3 // 4, 96 * 1024 * 1024))


def _conv_tile_vmem_bytes(hb, W, Ci, Co):
    in_blk = hb * W * Ci * 2            # bf16 current rows
    halo = 2 * W * Ci * 2               # two 1-row halo blocks
    w_blk = 9 * Ci * Co * 2             # packed weights
    out_blk = hb * W * Co * 2           # bf16 conv tile
    pipelined = 2 * (in_blk + halo + w_blk + out_blk)   # double buffered
    window = (hb + 2) * (W + 2) * Ci * 2                # scratch window
    patch = hb * W * 3 * Ci * 2                         # one dy im2col chunk
    acc = hb * W * Co * 4                               # f32 accumulator
    return pipelined + window + 2 * patch + acc


def _pick_row_tile(H, W, Ci, Co, N, budget):
    cands = [hb for hb in range(1, H + 1) if H % hb == 0]
    feasible = [hb for hb in cands if _conv_tile_vmem_bytes(hb, W, Ci, Co) <= budget]
    if not feasible:
        feasible = [min(cands)]

    def score(hb):
        m = hb * W                      # MXU M dimension of the im2col matmul
        s = (512 - m) if m < 512 else (m - 2048 if m > 2048 else 0)
        if N * (H // hb) < 2:           # keep both v7x TensorCores busy
            s += 1_000_000
        return s

    return min(feasible, key=score)


def _pick_flat_tile(total, C, budget):
    cands = {total}
    for rb in range(8, total, 8):
        if total % rb == 0:
            cands.add(rb)
    feasible = [rb for rb in cands if 2 * rb * C * 6 <= budget] or [min(cands)]
    target = max(8, (2 * 1024 * 1024) // (C * 6))       # ~2 MB per block

    def score(rb):
        s = abs(rb - target)
        if total // rb < 2:
            s += 1 << 30
        return s

    return min(feasible, key=score)


# ---------------------------------------------------------------------------
# Kernel: [optional fused BN+ReLU on input] + 3x3 conv (3 accumulated im2col
# matmuls, f32 acc) + per-tile BN partial sums
# ---------------------------------------------------------------------------
def _conv_bn_stats_kernel(top_ref, cur_ref, bot_ref, w_ref, scale_ref, shift_ref,
                          conv_ref, stats_ref, win_ref, *, fuse_bn_relu):
    # top/bot_ref : (1, 1, W, Ci) bf16 -- 1-row halos (index_map clamped at edges)
    # cur_ref     : (1, hb, W, Ci) bf16
    # w_ref       : (9*Ci, Co) bf16 -- taps packed (dy, dx, ci)
    # scale/shift : (1, Ci) f32 -- previous layer's BN affine (used iff fused)
    # conv_ref    : (1, hb, W, Co) bf16 ; stats_ref: (1, 1, 2, Co) f32
    # win_ref     : (hb+2, W+2, Ci) bf16 scratch -- zero-padded conv window
    _, hb, W, Co = conv_ref.shape
    Ci = cur_ref.shape[-1]
    r = pl.program_id(1)
    T = pl.num_programs(1)

    def act(v):
        if fuse_bn_relu:
            v = jnp.maximum(v.astype(jnp.float32) * scale_ref[...].reshape(1, 1, Ci)
                            + shift_ref[...].reshape(1, 1, Ci), 0.0)
        return v.astype(jnp.bfloat16)

    # Image-border rows are zero in post-activation space (conv pads after BN+ReLU).
    top_keep = jnp.where(r > 0, 1.0, 0.0).astype(jnp.bfloat16)
    bot_keep = jnp.where(r < T - 1, 1.0, 0.0).astype(jnp.bfloat16)

    win_ref[...] = jnp.zeros_like(win_ref)                 # W halo + corners = 0
    win_ref[0:1, 1:W + 1, :] = act(top_ref[0]) * top_keep
    win_ref[1:hb + 1, 1:W + 1, :] = act(cur_ref[0])
    win_ref[hb + 1:hb + 2, 1:W + 1, :] = act(bot_ref[0]) * bot_keep

    # 3 accumulated matmuls (K = 3*Ci each) instead of one 9x im2col slab.
    acc = jnp.zeros((hb * W, Co), jnp.float32)
    for dy in range(3):
        patch = jnp.concatenate(
            [win_ref[dy:dy + hb, dx:dx + W, :] for dx in range(3)], axis=-1
        ).reshape(hb * W, 3 * Ci)
        acc = acc + jnp.dot(patch, w_ref[dy * 3 * Ci:(dy + 1) * 3 * Ci, :],
                            preferred_element_type=jnp.float32)

    conv_ref[...] = acc.reshape(1, hb, W, Co).astype(conv_ref.dtype)
    s = jnp.sum(acc, axis=0, keepdims=True)
    sq = jnp.sum(acc * acc, axis=0, keepdims=True)
    stats_ref[0, 0] = jnp.concatenate([s, sq], axis=0)


def _conv3x3_bn_stats(x_nhwc, w_packed, scale, shift, *, fuse, hb, vmem_limit):
    """x_nhwc: (N,H,W,Ci) bf16, Ci multiple of 128. Returns bf16 conv + f32 partials."""
    N, H, W, Ci = x_nhwc.shape
    Co = w_packed.shape[-1]
    T = H // hb
    kern = functools.partial(_conv_bn_stats_kernel, fuse_bn_relu=fuse)

    conv, stats = pl.pallas_call(
        kern,
        grid=(N, T),
        in_specs=[
            # 1-row halo above (row r*hb - 1, clamped; masked in-kernel at r==0)
            pl.BlockSpec((1, 1, W, Ci), lambda n, r: (n, jnp.maximum(r * hb - 1, 0), 0, 0)),
            # current rows
            pl.BlockSpec((1, hb, W, Ci), lambda n, r: (n, r, 0, 0)),
            # 1-row halo below (row (r+1)*hb, clamped; masked in-kernel at r==T-1)
            pl.BlockSpec((1, 1, W, Ci), lambda n, r: (n, jnp.minimum((r + 1) * hb, H - 1), 0, 0)),
            pl.BlockSpec((9 * Ci, Co), lambda n, r: (0, 0)),
            pl.BlockSpec((1, Ci), lambda n, r: (0, 0)),
            pl.BlockSpec((1, Ci), lambda n, r: (0, 0)),
        ],
        out_specs=(
            pl.BlockSpec((1, hb, W, Co), lambda n, r: (n, r, 0, 0)),
            pl.BlockSpec((1, 1, 2, Co), lambda n, r: (n, r, 0, 0)),
        ),
        out_shape=(
            jax.ShapeDtypeStruct((N, H, W, Co), jnp.bfloat16),
            jax.ShapeDtypeStruct((N, T, 2, Co), jnp.float32),
        ),
        scratch_shapes=[pltpu.VMEM((hb + 2, W + 2, Ci), jnp.bfloat16)],
        compiler_params=pltpu.CompilerParams(
            dimension_semantics=("parallel", "parallel"),
            vmem_limit_bytes=vmem_limit,
        ),
    )(x_nhwc, x_nhwc, x_nhwc, w_packed, scale, shift)
    return conv, stats


# ---------------------------------------------------------------------------
# Final BN (precomputed scale/shift) + ReLU over lane-dense (rows, C) blocks
# ---------------------------------------------------------------------------
def _bn_relu_kernel(y_ref, scale_ref, shift_ref, o_ref):
    o_ref[...] = jnp.maximum(
        y_ref[...].astype(jnp.float32) * scale_ref[...] + shift_ref[...], 0.0
    ).astype(o_ref.dtype)


def _bn_relu(y_flat_bf16, scale, shift, vmem_limit):
    total, C = y_flat_bf16.shape
    rb = _pick_flat_tile(total, C, vmem_limit // 2)
    return pl.pallas_call(
        _bn_relu_kernel,
        grid=(total // rb,),
        in_specs=[
            pl.BlockSpec((rb, C), lambda i: (i, 0)),
            pl.BlockSpec((1, C), lambda i: (0, 0)),
            pl.BlockSpec((1, C), lambda i: (0, 0)),
        ],
        out_specs=pl.BlockSpec((rb, C), lambda i: (i, 0)),
        out_shape=jax.ShapeDtypeStruct((total, C), jnp.float32),
        compiler_params=pltpu.CompilerParams(
            dimension_semantics=("parallel",),
            vmem_limit_bytes=vmem_limit,
        ),
    )(y_flat_bf16, scale, shift)


def _finalize_bn(stats, gamma, beta, count, eps):
    total = jnp.sum(stats, axis=(0, 1))                   # (2, C) f32
    mean = total[0] / count
    var = jnp.maximum(total[1] / count - mean * mean, 0.0)
    scale = gamma * jax.lax.rsqrt(var + eps)
    shift = beta - mean * scale
    return scale.reshape(1, -1), shift.reshape(1, -1)


# ---------------------------------------------------------------------------
# Parameter packing (PyTorch-shaped params -> lane-padded TPU layouts)
# ---------------------------------------------------------------------------
def _pack_weight(w_oihw, ci_pad, co_pad):
    co, ci, kh, kw = w_oihw.shape
    w = jnp.transpose(w_oihw, (2, 3, 1, 0))               # (3,3,Ci,Co)
    w = jnp.pad(w, ((0, 0), (0, 0), (0, ci_pad - ci), (0, co_pad - co)))
    return w.reshape(kh * kw * ci_pad, co_pad).astype(jnp.bfloat16)


def _pad_vec(v, c_pad):
    v = v.reshape(-1)
    return jnp.pad(v, (0, c_pad - v.shape[0])).astype(jnp.float32)


def init_double_conv(key, in_channels, out_channels, mid_channels=None):
    if not mid_channels:
        mid_channels = out_channels
    k1, k2 = jax.random.split(key)
    w1 = 0.1 * jax.random.normal(k1, (mid_channels, in_channels, 3, 3), jnp.float32)
    w2 = 0.1 * jax.random.normal(k2, (out_channels, mid_channels, 3, 3), jnp.float32)
    return dict(
        w1=w1, g1=jnp.ones((1, mid_channels), jnp.float32),
        b1=jnp.zeros((1, mid_channels), jnp.float32),
        w2=w2, g2=jnp.ones((1, out_channels), jnp.float32),
        b2=jnp.zeros((1, out_channels), jnp.float32),
    )


@jax.jit
def double_conv_forward(params, x_nchw, eps=1e-5):
    """DoubleConv forward. Input/output NCHW (PyTorch convention)."""
    N, Cin, H, W = x_nchw.shape
    Cmid = params["w1"].shape[0]
    Cout = params["w2"].shape[0]
    ci_p = _round_up(Cin, LANE)
    cm_p = _round_up(Cmid, LANE)
    co_p = _round_up(Cout, LANE)

    vmem_limit = _vmem_limit_bytes()
    budget = vmem_limit // 2
    count = float(N * H * W)

    # NCHW -> NHWC, lane-dense channels (zero pad), bf16 activations.
    x = jnp.transpose(x_nchw, (0, 2, 3, 1))
    x = jnp.pad(x, ((0, 0), (0, 0), (0, 0), (0, ci_p - Cin))).astype(jnp.bfloat16)

    w1 = _pack_weight(params["w1"], ci_p, cm_p)
    w2 = _pack_weight(params["w2"], cm_p, co_p)
    g1 = _pad_vec(params["g1"], cm_p)
    b1 = _pad_vec(params["b1"], cm_p)
    g2 = _pad_vec(params["g2"], co_p)
    b2 = _pad_vec(params["b2"], co_p)

    # Layer 1: conv3x3 + per-tile BN1 partial sums (raw input, no fusion).
    hb1 = _pick_row_tile(H, W, ci_p, cm_p, N, budget)
    dummy = jnp.zeros((1, ci_p), jnp.float32)
    conv1, stats1 = _conv3x3_bn_stats(x, w1, dummy, dummy,
                                      fuse=False, hb=hb1, vmem_limit=vmem_limit)
    scale1, shift1 = _finalize_bn(stats1, g1, b1, count, eps)

    # Layer 2: BN1+ReLU fused into the conv input load; conv3x3 + BN2 partials.
    hb2 = _pick_row_tile(H, W, cm_p, co_p, N, budget)
    conv2, stats2 = _conv3x3_bn_stats(conv1, w2, scale1, shift1,
                                      fuse=True, hb=hb2, vmem_limit=vmem_limit)
    scale2, shift2 = _finalize_bn(stats2, g2, b2, count, eps)

    # Final BN2 + ReLU (only surviving standalone elementwise pass).
    y = _bn_relu(conv2.reshape(N * H * W, co_p), scale2, shift2, vmem_limit)
    y = y.reshape(N, H, W, co_p)[..., :Cout]               # drop lane padding
    return jnp.transpose(y, (0, 3, 1, 2))                  # NHWC -> NCHW


# ---------------------------------------------------------------------------
# pure-JAX reference (mirrors the kernel's bf16-input / f32-accumulate /
# bf16-stored-intermediate casts)
# ---------------------------------------------------------------------------
def _ref_forward(params, x_nchw, eps=1e-5):
    x = jnp.transpose(x_nchw, (0, 2, 3, 1)).astype(jnp.bfloat16)

    def conv(inp_bf16, w_oihw):
        w = jnp.transpose(w_oihw, (2, 3, 1, 0)).astype(jnp.bfloat16)
        return jax.lax.conv_general_dilated(
            inp_bf16, w, window_strides=(1, 1), padding="SAME",
            dimension_numbers=("NHWC", "HWIO", "NHWC"),
            preferred_element_type=jnp.float32)

    def bn_scale_shift(y, gamma, beta):
        mean = jnp.mean(y, axis=(0, 1, 2))
        var = jnp.maximum(jnp.mean(y * y, axis=(0, 1, 2)) - mean * mean, 0.0)
        scale = gamma.reshape(-1) * jax.lax.rsqrt(var + eps)
        return scale, beta.reshape(-1) - mean * scale

    y1 = conv(x, params["w1"])
    s1, t1 = bn_scale_shift(y1, params["g1"], params["b1"])
    # kernel stores conv1 in bf16 and applies BN1+ReLU to the reloaded values
    a1 = jnp.maximum(y1.astype(jnp.bfloat16).astype(jnp.float32) * s1 + t1, 0.0)
    y2 = conv(a1.astype(jnp.bfloat16), params["w2"])
    s2, t2 = bn_scale_shift(y2, params["g2"], params["b2"])
    out = jnp.maximum(y2.astype(jnp.bfloat16).astype(jnp.float32) * s2 + t2, 0.0)
    return jnp.transpose(out, (0, 3, 1, 2))


if __name__ == "__main__":
    key = jax.random.PRNGKey(0)
    kx, kp = jax.random.split(key)

    N, Cin, H, W = 2, 4, 16, 16
    Cout = 8
    x = jax.random.normal(kx, (N, Cin, H, W), jnp.float32)
    params = init_double_conv(kp, in_channels=Cin, out_channels=Cout)

    out = jax.block_until_ready(double_conv_forward(params, x))
    assert out.shape == (N, Cout, H, W), out.shape

    ref = jax.block_until_ready(_ref_forward(params, x))
    max_err = float(jnp.max(jnp.abs(out - ref)))
    assert jnp.allclose(out, ref, atol=3e-2, rtol=3e-2), max_err

    print("KERNEL_OK")
</pallas_src>

<mosaic_0001>
module attributes {stable_mosaic.version = 11 : i64} {
  func.func @_conv_bn_stats_kernel(%arg0: i32, %arg1: i32, %arg2: memref<1x1x16x128xbf16, #tpu.memory_space<vmem>>, %arg3: memref<1x16x16x128xbf16, #tpu.memory_space<vmem>>, %arg4: memref<1x1x16x128xbf16, #tpu.memory_space<vmem>>, %arg5: memref<1152x128xbf16, #tpu.memory_space<vmem>>, %arg6: memref<1x128xf32, #tpu.memory_space<vmem>>, %arg7: memref<1x128xf32, #tpu.memory_space<vmem>>, %arg8: memref<1x16x16x128xbf16, #tpu.memory_space<vmem>>, %arg9: memref<1x1x2x128xf32, #tpu.memory_space<vmem>>, %arg10: memref<18x18x128xbf16, #tpu.memory_space<vmem>>) attributes {dimension_semantics = [#tpu.dimension_semantics<parallel>, #tpu.dimension_semantics<parallel>], iteration_bounds = array<i64: 2, 1>, scalar_prefetch = 0 : i64, scratch_operands = 1 : i64, tpu.core_type = #tpu.core_type<tc>, window_params = [{transform_indices = @transform_0, window_bounds = array<i64: 1, 1, 16, 128>}, {transform_indices = @transform_1, window_bounds = array<i64: 1, 16, 16, 128>}, {transform_indices = @transform_2, window_bounds = array<i64: 1, 1, 16, 128>}, {pipeline_mode = #tpu.pipeline_mode<synchronous>, transform_indices = @transform_3, window_bounds = array<i64: 1152, 128>}, {pipeline_mode = #tpu.pipeline_mode<synchronous>, transform_indices = @transform_4, window_bounds = array<i64: 1, 128>}, {pipeline_mode = #tpu.pipeline_mode<synchronous>, transform_indices = @transform_5, window_bounds = array<i64: 1, 128>}, {transform_indices = @transform_6, window_bounds = array<i64: 1, 16, 16, 128>}, {transform_indices = @transform_7, window_bounds = array<i64: 1, 1, 2, 128>}]} {
    %c0_i32 = arith.constant 0 : i32
    %0 = arith.cmpi sgt, %arg1, %c0_i32 : i32
    %cst = arith.constant 1.000000e+00 : f32
    %cst_0 = arith.constant 0.000000e+00 : f32
    %1 = arith.select %0, %cst, %cst_0 : f32
    %2 = arith.truncf %1 : f32 to bf16
    %c0_i32_1 = arith.constant 0 : i32
    %3 = arith.cmpi slt, %arg1, %c0_i32_1 : i32
    %cst_2 = arith.constant 1.000000e+00 : f32
    %cst_3 = arith.constant 0.000000e+00 : f32
    %4 = arith.select %3, %cst_2, %cst_3 : f32
    %5 = arith.truncf %4 : f32 to bf16
    %cst_4 = arith.constant 0.000000e+00 : bf16
    %6 = vector.broadcast %cst_4 : bf16 to vector<18x18x128xbf16>
    %c0 = arith.constant 0 : index
    %c0_5 = arith.constant 0 : index
    %c0_6 = arith.constant 0 : index
    %7 = vector.load %arg10[%c0, %c0_5, %c0_6] : memref<18x18x128xbf16, #tpu.memory_space<vmem>>, vector<18x18x128xbf16>
    tpu.vector_store %arg10[%c0, %c0_5, %c0_6], %6 {strides = array<i32>} : memref<18x18x128xbf16, #tpu.memory_space<vmem>>, vector<18x18x128xbf16>,
    %c0_7 = arith.constant 0 : index
    %c0_8 = arith.constant 0 : index
    %c0_9 = arith.constant 0 : index
    %c0_10 = arith.constant 0 : index
    %8 = vector.load %arg2[%c0_7, %c0_8, %c0_9, %c0_10] : memref<1x1x16x128xbf16, #tpu.memory_space<vmem>>, vector<1x1x16x128xbf16>
    %9 = vector.shape_cast %8 : vector<1x1x16x128xbf16> to vector<1x16x128xbf16>
    %10 = vector.broadcast %2 : bf16 to vector<1x16x128xbf16>
    %11 = arith.mulf %9, %10 : vector<1x16x128xbf16>
    %c0_11 = arith.constant 0 : index
    %c1 = arith.constant 1 : index
    %c0_12 = arith.constant 0 : index
    %12 = vector.load %arg10[%c0_11, %c1, %c0_12] : memref<18x18x128xbf16, #tpu.memory_space<vmem>>, vector<1x16x128xbf16>
    tpu.vector_store %arg10[%c0_11, %c1, %c0_12], %11 {strides = array<i32>} : memref<18x18x128xbf16, #tpu.memory_space<vmem>>, vector<1x16x128xbf16>,
    %c0_13 = arith.constant 0 : index
    %c0_14 = arith.constant 0 : index
    %c0_15 = arith.constant 0 : index
    %c0_16 = arith.constant 0 : index
    %13 = vector.load %arg3[%c0_13, %c0_14, %c0_15, %c0_16] : memref<1x16x16x128xbf16, #tpu.memory_space<vmem>>, vector<1x16x16x128xbf16>
    %14 = vector.shape_cast %13 : vector<1x16x16x128xbf16> to vector<16x16x128xbf16>
    %c1_17 = arith.constant 1 : index
    %c1_18 = arith.constant 1 : index
    %c0_19 = arith.constant 0 : index
    %15 = vector.load %arg10[%c1_17, %c1_18, %c0_19] : memref<18x18x128xbf16, #tpu.memory_space<vmem>>, vector<16x16x128xbf16>
    tpu.vector_store %arg10[%c1_17, %c1_18, %c0_19], %14 {strides = array<i32>} : memref<18x18x128xbf16, #tpu.memory_space<vmem>>, vector<16x16x128xbf16>,
    %c0_20 = arith.constant 0 : index
    %c0_21 = arith.constant 0 : index
    %c0_22 = arith.constant 0 : index
    %c0_23 = arith.constant 0 : index
    %16 = vector.load %arg4[%c0_20, %c0_21, %c0_22, %c0_23] : memref<1x1x16x128xbf16, #tpu.memory_space<vmem>>, vector<1x1x16x128xbf16>
    %17 = vector.shape_cast %16 : vector<1x1x16x128xbf16> to vector<1x16x128xbf16>
    %18 = vector.broadcast %5 : bf16 to vector<1x16x128xbf16>
    %19 = arith.mulf %17, %18 : vector<1x16x128xbf16>
    %c17 = arith.constant 17 : index
    %c1_24 = arith.constant 1 : index
    %c0_25 = arith.constant 0 : index
    %20 = vector.load %arg10[%c17, %c1_24, %c0_25] : memref<18x18x128xbf16, #tpu.memory_space<vmem>>, vector<1x16x128xbf16>
    tpu.vector_store %arg10[%c17, %c1_24, %c0_25], %19 {strides = array<i32>} : memref<18x18x128xbf16, #tpu.memory_space<vmem>>, vector<1x16x128xbf16>,
    %cst_26 = arith.constant 0.000000e+00 : f32
    %21 = vector.broadcast %cst_26 : f32 to vector<256x128xf32>
    %c0_27 = arith.constant 0 : index
    %c0_28 = arith.constant 0 : index
    %c0_29 = arith.constant 0 : index
    %22 = vector.load %arg10[%c0_27, %c0_28, %c0_29] : memref<18x18x128xbf16, #tpu.memory_space<vmem>>, vector<16x16x128xbf16>
    %c0_30 = arith.constant 0 : index
    %c1_31 = arith.constant 1 : index
    %c0_32 = arith.constant 0 : index
    %23 = vector.load %arg10[%c0_30, %c1_31, %c0_32] : memref<18x18x128xbf16, #tpu.memory_space<vmem>>, vector<16x16x128xbf16>
    %c0_33 = arith.constant 0 : index
    %c2 = arith.constant 2 : index
    %c0_34 = arith.constant 0 : index
    %24 = vector.load %arg10[%c0_33, %c2, %c0_34] : memref<18x18x128xbf16, #tpu.memory_space<vmem>>, vector<16x16x128xbf16>
    %25 = tpu.concatenate %22, %23, %24 in 2 : vector<16x16x128xbf16>, vector<16x16x128xbf16>, vector<16x16x128xbf16> -> vector<16x16x384xbf16>
    %26 = vector.shape_cast %25 : vector<16x16x384xbf16> to vector<256x384xbf16>
    %c0_35 = arith.constant 0 : index
    %c0_36 = arith.constant 0 : index
    %27 = vector.load %arg5[%c0_35, %c0_36] : memref<1152x128xbf16, #tpu.memory_space<vmem>>, vector<384x128xbf16>
    %cst_37 = arith.constant dense<0.000000e+00> : vector<256x128xf32>
    %28 = tpu.matmul %26, %27, %cst_37 {dimension_numbers = #tpu.dot_dimension_numbers<[1], [0], [0], [1], [0, 0, 1, 1], [], []>} : vector<256x384xbf16>, vector<384x128xbf16>, vector<256x128xf32> -> vector<256x128xf32>
    %29 = arith.addf %21, %28 : vector<256x128xf32>
    %c1_38 = arith.constant 1 : index
    %c0_39 = arith.constant 0 : index
    %c0_40 = arith.constant 0 : index
    %30 = vector.load %arg10[%c1_38, %c0_39, %c0_40] : memref<18x18x128xbf16, #tpu.memory_space<vmem>>, vector<16x16x128xbf16>
    %c1_41 = arith.constant 1 : index
    %c1_42 = arith.constant 1 : index
    %c0_43 = arith.constant 0 : index
    %31 = vector.load %arg10[%c1_41, %c1_42, %c0_43] : memref<18x18x128xbf16, #tpu.memory_space<vmem>>, vector<16x16x128xbf16>
    %c1_44 = arith.constant 1 : index
    %c2_45 = arith.constant 2 : index
    %c0_46 = arith.constant 0 : index
    %32 = vector.load %arg10[%c1_44, %c2_45, %c0_46] : memref<18x18x128xbf16, #tpu.memory_space<vmem>>, vector<16x16x128xbf16>
    %33 = tpu.concatenate %30, %31, %32 in 2 : vector<16x16x128xbf16>, vector<16x16x128xbf16>, vector<16x16x128xbf16> -> vector<16x16x384xbf16>
    %34 = vector.shape_cast %33 : vector<16x16x384xbf16> to vector<256x384xbf16>
    %c384 = arith.constant 384 : index
    %c0_47 = arith.constant 0 : index
    %35 = vector.load %arg5[%c384, %c0_47] : memref<1152x128xbf16, #tpu.memory_space<vmem>>, vector<384x128xbf16>
    %cst_48 = arith.constant dense<0.000000e+00> : vector<256x128xf32>
    %36 = tpu.matmul %34, %35, %cst_48 {dimension_numbers = #tpu.dot_dimension_numbers<[1], [0], [0], [1], [0, 0, 1, 1], [], []>} : vector<256x384xbf16>, vector<384x128xbf16>, vector<256x128xf32> -> vector<256x128xf32>
    %37 = arith.addf %29, %36 : vector<256x128xf32>
    %c2_49 = arith.constant 2 : index
    %c0_50 = arith.constant 0 : index
    %c0_51 = arith.constant 0 : index
    %38 = vector.load %arg10[%c2_49, %c0_50, %c0_51] : memref<18x18x128xbf16, #tpu.memory_space<vmem>>, vector<16x16x128xbf16>
    %c2_52 = arith.constant 2 : index
    %c1_53 = arith.constant 1 : index
    %c0_54 = arith.constant 0 : index
    %39 = vector.load %arg10[%c2_52, %c1_53, %c0_54] : memref<18x18x128xbf16, #tpu.memory_space<vmem>>, vector<16x16x128xbf16>
    %c2_55 = arith.constant 2 : index
    %c2_56 = arith.constant 2 : index
    %c0_57 = arith.constant 0 : index
    %40 = vector.load %arg10[%c2_55, %c2_56, %c0_57] : memref<18x18x128xbf16, #tpu.memory_space<vmem>>, vector<16x16x128xbf16>
    %41 = tpu.concatenate %38, %39, %40 in 2 : vector<16x16x128xbf16>, vector<16x16x128xbf16>, vector<16x16x128xbf16> -> vector<16x16x384xbf16>
    %42 = vector.shape_cast %41 : vector<16x16x384xbf16> to vector<256x384xbf16>
    %c768 = arith.constant 768 : index
    %c0_58 = arith.constant 0 : index
    %43 = vector.load %arg5[%c768, %c0_58] : memref<1152x128xbf16, #tpu.memory_space<vmem>>, vector<384x128xbf16>
    %cst_59 = arith.constant dense<0.000000e+00> : vector<256x128xf32>
    %44 = tpu.matmul %42, %43, %cst_59 {dimension_numbers = #tpu.dot_dimension_numbers<[1], [0], [0], [1], [0, 0, 1, 1], [], []>} : vector<256x384xbf16>, vector<384x128xbf16>, vector<256x128xf32> -> vector<256x128xf32>
    %45 = arith.addf %37, %44 : vector<256x128xf32>
    %46 = vector.shape_cast %45 : vector<256x128xf32> to vector<1x16x16x128xf32>
    %47 = arith.truncf %46 : vector<1x16x16x128xf32> to vector<1x16x16x128xbf16>
    %c0_60 = arith.constant 0 : index
    %c0_61 = arith.constant 0 : index
    %c0_62 = arith.constant 0 : index
    %c0_63 = arith.constant 0 : index
    %48 = vector.load %arg8[%c0_60, %c0_61, %c0_62, %c0_63] : memref<1x16x16x128xbf16, #tpu.memory_space<vmem>>, vector<1x16x16x128xbf16>
    tpu.vector_store %arg8[%c0_60, %c0_61, %c0_62, %c0_63], %47 {strides = array<i32>} : memref<1x16x16x128xbf16, #tpu.memory_space<vmem>>, vector<1x16x16x128xbf16>,
    %cst_64 = arith.constant dense<0.000000e+00> : vector<128xf32>
    %49 = vector.multi_reduction <add>, %45, %cst_64 [0] : vector<256x128xf32> to vector<128xf32>
    %50 = vector.shape_cast %49 : vector<128xf32> to vector<1x128xf32>
    %51 = arith.mulf %45, %45 : vector<256x128xf32>
    %cst_65 = arith.constant dense<0.000000e+00> : vector<128xf32>
    %52 = vector.multi_reduction <add>, %51, %cst_65 [0] : vector<256x128xf32> to vector<128xf32>
    %53 = vector.shape_cast %52 : vector<128xf32> to vector<1x128xf32>
    %54 = tpu.concatenate %50, %53 in 0 : vector<1x128xf32>, vector<1x128xf32> -> vector<2x128xf32>
    %c0_66 = arith.constant 0 : index
    %c0_67 = arith.constant 0 : index
    %c0_68 = arith.constant 0 : index
    %c0_69 = arith.constant 0 : index
    %55 = vector.load %arg9[%c0_66, %c0_67, %c0_68, %c0_69] : memref<1x1x2x128xf32, #tpu.memory_space<vmem>>, vector<1x1x2x128xf32>
    %56 = vector.shape_cast %55 : vector<1x1x2x128xf32> to vector<2x128xf32>
    %57 = vector.shape_cast %54 : vector<2x128xf32> to vector<1x1x2x128xf32>
    tpu.vector_store %arg9[%c0_66, %c0_67, %c0_68, %c0_69], %57 {strides = array<i32>} : memref<1x1x2x128xf32, #tpu.memory_space<vmem>>, vector<1x1x2x128xf32>,
    return
  }
  func.func @transform_0(%arg0: i32, %arg1: i32) -> (i32, i32, i32, i32) {
    %c16_i32 = arith.constant 16 : i32
    %0 = arith.muli %arg1, %c16_i32 : i32
    %c1_i32 = arith.constant 1 : i32
    %1 = arith.subi %0, %c1_i32 : i32
    %c0_i32 = arith.constant 0 : i32
    %2 = arith.maxsi %1, %c0_i32 : i32
    %c0_i32_0 = arith.constant 0 : i32
    %c0_i32_1 = arith.constant 0 : i32
    %c0_i32_2 = arith.constant 0 : i32
    return %arg0, %2, %c0_i32_0, %c0_i32_1 : i32, i32, i32, i32
  }
  func.func @transform_1(%arg0: i32, %arg1: i32) -> (i32, i32, i32, i32) {
    %c0_i32 = arith.constant 0 : i32
    %c0_i32_0 = arith.constant 0 : i32
    %c0_i32_1 = arith.constant 0 : i32
    return %arg0, %arg1, %c0_i32, %c0_i32_0 : i32, i32, i32, i32
  }
  func.func @transform_2(%arg0: i32, %arg1: i32) -> (i32, i32, i32, i32) {
    %c1_i32 = arith.constant 1 : i32
    %0 = arith.addi %arg1, %c1_i32 : i32
    %c16_i32 = arith.constant 16 : i32
    %1 = arith.muli %0, %c16_i32 : i32
    %c15_i32 = arith.constant 15 : i32
    %2 = arith.minsi %1, %c15_i32 : i32
    %c0_i32 = arith.constant 0 : i32
    %c0_i32_0 = arith.constant 0 : i32
    %c0_i32_1 = arith.constant 0 : i32
    return %arg0, %2, %c0_i32, %c0_i32_0 : i32, i32, i32, i32
  }
  func.func @transform_3(%arg0: i32, %arg1: i32) -> (i32, i32) {
    %c0_i32 = arith.constant 0 : i32
    %c0_i32_0 = arith.constant 0 : i32
    %c0_i32_1 = arith.constant 0 : i32
    return %c0_i32, %c0_i32_0 : i32, i32
  }
  func.func @transform_4(%arg0: i32, %arg1: i32) -> (i32, i32) {
    %c0_i32 = arith.constant 0 : i32
    %c0_i32_0 = arith.constant 0 : i32
    %c0_i32_1 = arith.constant 0 : i32
    return %c0_i32, %c0_i32_0 : i32, i32
  }
  func.func @transform_5(%arg0: i32, %arg1: i32) -> (i32, i32) {
    %c0_i32 = arith.constant 0 : i32
    %c0_i32_0 = arith.constant 0 : i32
    %c0_i32_1 = arith.constant 0 : i32
    return %c0_i32, %c0_i32_0 : i32, i32
  }
  func.func @transform_6(%arg0: i32, %arg1: i32) -> (i32, i32, i32, i32) {
    %c0_i32 = arith.constant 0 : i32
    %c0_i32_0 = arith.constant 0 : i32
    %c0_i32_1 = arith.constant 0 : i32
    return %arg0, %arg1, %c0_i32, %c0_i32_0 : i32, i32, i32, i32
  }
  func.func @transform_7(%arg0: i32, %arg1: i32) -> (i32, i32, i32, i32) {
    %c0_i32 = arith.constant 0 : i32
    %c0_i32_0 = arith.constant 0 : i32
    %c0_i32_1 = arith.constant 0 : i32
    return %arg0, %arg1, %c0_i32, %c0_i32_0 : i32, i32, i32, i32
  }
}

module attributes {stable_mosaic.version = 11 : i64} {
  func.func @_conv_bn_stats_kernel(%arg0: i32, %arg1: i32, %arg2: memref<1x1x16x128xbf16, #tpu.memory_space<vmem>>, %arg3: memref<1x16x16x128xbf16, #tpu.memory_space<vmem>>, %arg4: memref<1x1x16x128xbf16, #tpu.memory_space<vmem>>, %arg5: memref<1152x128xbf16, #tpu.memory_space<vmem>>, %arg6: memref<1x128xf32, #tpu.memory_space<vmem>>, %arg7: memref<1x128xf32, #tpu.memory_space<vmem>>, %arg8: memref<1x16x16x128xbf16, #tpu.memory_space<vmem>>, %arg9: memref<1x1x2x128xf32, #tpu.memory_space<vmem>>, %arg10: memref<18x18x128xbf16, #tpu.memory_space<vmem>>) attributes {dimension_semantics = [#tpu.dimension_semantics<parallel>, #tpu.dimension_semantics<parallel>], iteration_bounds = array<i64: 2, 1>, scalar_prefetch = 0 : i64, scratch_operands = 1 : i64, tpu.core_type = #tpu.core_type<tc>, window_params = [{transform_indices = @transform_0, window_bounds = array<i64: 1, 1, 16, 128>}, {transform_indices = @transform_1, window_bounds = array<i64: 1, 16, 16, 128>}, {transform_indices = @transform_2, window_bounds = array<i64: 1, 1, 16, 128>}, {pipeline_mode = #tpu.pipeline_mode<synchronous>, transform_indices = @transform_3, window_bounds = array<i64: 1152, 128>}, {pipeline_mode = #tpu.pipeline_mode<synchronous>, transform_indices = @transform_4, window_bounds = array<i64: 1, 128>}, {pipeline_mode = #tpu.pipeline_mode<synchronous>, transform_indices = @transform_5, window_bounds = array<i64: 1, 128>}, {transform_indices = @transform_6, window_bounds = array<i64: 1, 16, 16, 128>}, {transform_indices = @transform_7, window_bounds = array<i64: 1, 1, 2, 128>}]} {
    %c0_i32 = arith.constant 0 : i32
    %0 = arith.cmpi sgt, %arg1, %c0_i32 : i32
    %cst = arith.constant 1.000000e+00 : f32
    %cst_0 = arith.constant 0.000000e+00 : f32
    %1 = arith.select %0, %cst, %cst_0 : f32
    %2 = arith.truncf %1 : f32 to bf16
    %c0_i32_1 = arith.constant 0 : i32
    %3 = arith.cmpi slt, %arg1, %c0_i32_1 : i32
    %cst_2 = arith.constant 1.000000e+00 : f32
    %cst_3 = arith.constant 0.000000e+00 : f32
    %4 = arith.select %3, %cst_2, %cst_3 : f32
    %5 = arith.truncf %4 : f32 to bf16
    %cst_4 = arith.constant 0.000000e+00 : bf16
    %6 = vector.broadcast %cst_4 : bf16 to vector<18x18x128xbf16>
    %c0 = arith.constant 0 : index
    %c0_5 = arith.constant 0 : index
    %c0_6 = arith.constant 0 : index
    %7 = vector.load %arg10[%c0, %c0_5, %c0_6] : memref<18x18x128xbf16, #tpu.memory_space<vmem>>, vector<18x18x128xbf16>
    tpu.vector_store %arg10[%c0, %c0_5, %c0_6], %6 {strides = array<i32>} : memref<18x18x128xbf16, #tpu.memory_space<vmem>>, vector<18x18x128xbf16>,
    %c0_7 = arith.constant 0 : index
    %c0_8 = arith.constant 0 : index
    %c0_9 = arith.constant 0 : index
    %c0_10 = arith.constant 0 : index
    %8 = vector.load %arg2[%c0_7, %c0_8, %c0_9, %c0_10] : memref<1x1x16x128xbf16, #tpu.memory_space<vmem>>, vector<1x1x16x128xbf16>
    %9 = vector.shape_cast %8 : vector<1x1x16x128xbf16> to vector<1x16x128xbf16>
    %10 = arith.extf %9 : vector<1x16x128xbf16> to vector<1x16x128xf32>
    %c0_11 = arith.constant 0 : index
    %c0_12 = arith.constant 0 : index
    %11 = vector.load %arg6[%c0_11, %c0_12] : memref<1x128xf32, #tpu.memory_space<vmem>>, vector<1x128xf32>
    %12 = vector.shape_cast %11 : vector<1x128xf32> to vector<1x1x128xf32>
    %13 = vector.broadcast %12 : vector<1x1x128xf32> to vector<1x16x128xf32>
    %14 = arith.mulf %10, %13 : vector<1x16x128xf32>
    %c0_13 = arith.constant 0 : index
    %c0_14 = arith.constant 0 : index
    %15 = vector.load %arg7[%c0_13, %c0_14] : memref<1x128xf32, #tpu.memory_space<vmem>>, vector<1x128xf32>
    %16 = vector.shape_cast %15 : vector<1x128xf32> to vector<1x1x128xf32>
    %17 = vector.broadcast %16 : vector<1x1x128xf32> to vector<1x16x128xf32>
    %18 = arith.addf %14, %17 : vector<1x16x128xf32>
    %cst_15 = arith.constant 0.000000e+00 : f32
    %19 = vector.broadcast %cst_15 : f32 to vector<1x16x128xf32>
    %20 = arith.maximumf %18, %19 : vector<1x16x128xf32>
    %21 = arith.truncf %20 : vector<1x16x128xf32> to vector<1x16x128xbf16>
    %22 = vector.broadcast %2 : bf16 to vector<1x16x128xbf16>
    %23 = arith.mulf %21, %22 : vector<1x16x128xbf16>
    %c0_16 = arith.constant 0 : index
    %c1 = arith.constant 1 : index
    %c0_17 = arith.constant 0 : index
    %24 = vector.load %arg10[%c0_16, %c1, %c0_17] : memref<18x18x128xbf16, #tpu.memory_space<vmem>>, vector<1x16x128xbf16>
    tpu.vector_store %arg10[%c0_16, %c1, %c0_17], %23 {strides = array<i32>} : memref<18x18x128xbf16, #tpu.memory_space<vmem>>, vector<1x16x128xbf16>,
    %c0_18 = arith.constant 0 : index
    %c0_19 = arith.constant 0 : index
    %c0_20 = arith.constant 0 : index
    %c0_21 = arith.constant 0 : index
    %25 = vector.load %arg3[%c0_18, %c0_19, %c0_20, %c0_21] : memref<1x16x16x128xbf16, #tpu.memory_space<vmem>>, vector<1x16x16x128xbf16>
    %26 = vector.shape_cast %25 : vector<1x16x16x128xbf16> to vector<16x16x128xbf16>
    %27 = arith.extf %26 : vector<16x16x128xbf16> to vector<16x16x128xf32>
    %c0_22 = arith.constant 0 : index
    %c0_23 = arith.constant 0 : index
    %28 = vector.load %arg6[%c0_22, %c0_23] : memref<1x128xf32, #tpu.memory_space<vmem>>, vector<1x128xf32>
    %29 = vector.shape_cast %28 : vector<1x128xf32> to vector<1x1x128xf32>
    %30 = vector.broadcast %29 : vector<1x1x128xf32> to vector<16x16x128xf32>
    %31 = arith.mulf %27, %30 : vector<16x16x128xf32>
    %c0_24 = arith.constant 0 : index
    %c0_25 = arith.constant 0 : index
    %32 = vector.load %arg7[%c0_24, %c0_25] : memref<1x128xf32, #tpu.memory_space<vmem>>, vector<1x128xf32>
    %33 = vector.shape_cast %32 : vector<1x128xf32> to vector<1x1x128xf32>
    %34 = vector.broadcast %33 : vector<1x1x128xf32> to vector<16x16x128xf32>
    %35 = arith.addf %31, %34 : vector<16x16x128xf32>
    %cst_26 = arith.constant 0.000000e+00 : f32
    %36 = vector.broadcast %cst_26 : f32 to vector<16x16x128xf32>
    %37 = arith.maximumf %35, %36 : vector<16x16x128xf32>
    %38 = arith.truncf %37 : vector<16x16x128xf32> to vector<16x16x128xbf16>
    %c1_27 = arith.constant 1 : index
    %c1_28 = arith.constant 1 : index
    %c0_29 = arith.constant 0 : index
    %39 = vector.load %arg10[%c1_27, %c1_28, %c0_29] : memref<18x18x128xbf16, #tpu.memory_space<vmem>>, vector<16x16x128xbf16>
    tpu.vector_store %arg10[%c1_27, %c1_28, %c0_29], %38 {strides = array<i32>} : memref<18x18x128xbf16, #tpu.memory_space<vmem>>, vector<16x16x128xbf16>,
    %c0_30 = arith.constant 0 : index
    %c0_31 = arith.constant 0 : index
    %c0_32 = arith.constant 0 : index
    %c0_33 = arith.constant 0 : index
    %40 = vector.load %arg4[%c0_30, %c0_31, %c0_32, %c0_33] : memref<1x1x16x128xbf16, #tpu.memory_space<vmem>>, vector<1x1x16x128xbf16>
    %41 = vector.shape_cast %40 : vector<1x1x16x128xbf16> to vector<1x16x128xbf16>
    %42 = arith.extf %41 : vector<1x16x128xbf16> to vector<1x16x128xf32>
    %c0_34 = arith.constant 0 : index
    %c0_35 = arith.constant 0 : index
    %43 = vector.load %arg6[%c0_34, %c0_35] : memref<1x128xf32, #tpu.memory_space<vmem>>, vector<1x128xf32>
    %44 = vector.shape_cast %43 : vector<1x128xf32> to vector<1x1x128xf32>
    %45 = vector.broadcast %44 : vector<1x1x128xf32> to vector<1x16x128xf32>
    %46 = arith.mulf %42, %45 : vector<1x16x128xf32>
    %c0_36 = arith.constant 0 : index
    %c0_37 = arith.constant 0 : index
    %47 = vector.load %arg7[%c0_36, %c0_37] : memref<1x128xf32, #tpu.memory_space<vmem>>, vector<1x128xf32>
    %48 = vector.shape_cast %47 : vector<1x128xf32> to vector<1x1x128xf32>
    %49 = vector.broadcast %48 : vector<1x1x128xf32> to vector<1x16x128xf32>
    %50 = arith.addf %46, %49 : vector<1x16x128xf32>
    %cst_38 = arith.constant 0.000000e+00 : f32
    %51 = vector.broadcast %cst_38 : f32 to vector<1x16x128xf32>
    %52 = arith.maximumf %50, %51 : vector<1x16x128xf32>
    %53 = arith.truncf %52 : vector<1x16x128xf32> to vector<1x16x128xbf16>
    %54 = vector.broadcast %5 : bf16 to vector<1x16x128xbf16>
    %55 = arith.mulf %53, %54 : vector<1x16x128xbf16>
    %c17 = arith.constant 17 : index
    %c1_39 = arith.constant 1 : index
    %c0_40 = arith.constant 0 : index
    %56 = vector.load %arg10[%c17, %c1_39, %c0_40] : memref<18x18x128xbf16, #tpu.memory_space<vmem>>, vector<1x16x128xbf16>
    tpu.vector_store %arg10[%c17, %c1_39, %c0_40], %55 {strides = array<i32>} : memref<18x18x128xbf16, #tpu.memory_space<vmem>>, vector<1x16x128xbf16>,
    %cst_41 = arith.constant 0.000000e+00 : f32
    %57 = vector.broadcast %cst_41 : f32 to vector<256x128xf32>
    %c0_42 = arith.constant 0 : index
    %c0_43 = arith.constant 0 : index
    %c0_44 = arith.constant 0 : index
    %58 = vector.load %arg10[%c0_42, %c0_43, %c0_44] : memref<18x18x128xbf16, #tpu.memory_space<vmem>>, vector<16x16x128xbf16>
    %c0_45 = arith.constant 0 : index
    %c1_46 = arith.constant 1 : index
    %c0_47 = arith.constant 0 : index
    %59 = vector.load %arg10[%c0_45, %c1_46, %c0_47] : memref<18x18x128xbf16, #tpu.memory_space<vmem>>, vector<16x16x128xbf16>
    %c0_48 = arith.constant 0 : index
    %c2 = arith.constant 2 : index
    %c0_49 = arith.constant 0 : index
    %60 = vector.load %arg10[%c0_48, %c2, %c0_49] : memref<18x18x128xbf16, #tpu.memory_space<vmem>>, vector<16x16x128xbf16>
    %61 = tpu.concatenate %58, %59, %60 in 2 : vector<16x16x128xbf16>, vector<16x16x128xbf16>, vector<16x16x128xbf16> -> vector<16x16x384xbf16>
    %62 = vector.shape_cast %61 : vector<16x16x384xbf16> to vector<256x384xbf16>
    %c0_50 = arith.constant 0 : index
    %c0_51 = arith.constant 0 : index
    %63 = vector.load %arg5[%c0_50, %c0_51] : memref<1152x128xbf16, #tpu.memory_space<vmem>>, vector<384x128xbf16>
    %cst_52 = arith.constant dense<0.000000e+00> : vector<256x128xf32>
    %64 = tpu.matmul %62, %63, %cst_52 {dimension_numbers = #tpu.dot_dimension_numbers<[1], [0], [0], [1], [0, 0, 1, 1], [], []>} : vector<256x384xbf16>, vector<384x128xbf16>, vector<256x128xf32> -> vector<256x128xf32>
    %65 = arith.addf %57, %64 : vector<256x128xf32>
    %c1_53 = arith.constant 1 : index
    %c0_54 = arith.constant 0 : index
    %c0_55 = arith.constant 0 : index
    %66 = vector.load %arg10[%c1_53, %c0_54, %c0_55] : memref<18x18x128xbf16, #tpu.memory_space<vmem>>, vector<16x16x128xbf16>
    %c1_56 = arith.constant 1 : index
    %c1_57 = arith.constant 1 : index
    %c0_58 = arith.constant 0 : index
    %67 = vector.load %arg10[%c1_56, %c1_57, %c0_58] : memref<18x18x128xbf16, #tpu.memory_space<vmem>>, vector<16x16x128xbf16>
    %c1_59 = arith.constant 1 : index
    %c2_60 = arith.constant 2 : index
    %c0_61 = arith.constant 0 : index
    %68 = vector.load %arg10[%c1_59, %c2_60, %c0_61] : memref<18x18x128xbf16, #tpu.memory_space<vmem>>, vector<16x16x128xbf16>
    %69 = tpu.concatenate %66, %67, %68 in 2 : vector<16x16x128xbf16>, vector<16x16x128xbf16>, vector<16x16x128xbf16> -> vector<16x16x384xbf16>
    %70 = vector.shape_cast %69 : vector<16x16x384xbf16> to vector<256x384xbf16>
    %c384 = arith.constant 384 : index
    %c0_62 = arith.constant 0 : index
    %71 = vector.load %arg5[%c384, %c0_62] : memref<1152x128xbf16, #tpu.memory_space<vmem>>, vector<384x128xbf16>
    %cst_63 = arith.constant dense<0.000000e+00> : vector<256x128xf32>
    %72 = tpu.matmul %70, %71, %cst_63 {dimension_numbers = #tpu.dot_dimension_numbers<[1], [0], [0], [1], [0, 0, 1, 1], [], []>} : vector<256x384xbf16>, vector<384x128xbf16>, vector<256x128xf32> -> vector<256x128xf32>
    %73 = arith.addf %65, %72 : vector<256x128xf32>
    %c2_64 = arith.constant 2 : index
    %c0_65 = arith.constant 0 : index
    %c0_66 = arith.constant 0 : index
    %74 = vector.load %arg10[%c2_64, %c0_65, %c0_66] : memref<18x18x128xbf16, #tpu.memory_space<vmem>>, vector<16x16x128xbf16>
    %c2_67 = arith.constant 2 : index
    %c1_68 = arith.constant 1 : index
    %c0_69 = arith.constant 0 : index
    %75 = vector.load %arg10[%c2_67, %c1_68, %c0_69] : memref<18x18x128xbf16, #tpu.memory_space<vmem>>, vector<16x16x128xbf16>
    %c2_70 = arith.constant 2 : index
    %c2_71 = arith.constant 2 : index
    %c0_72 = arith.constant 0 : index
    %76 = vector.load %arg10[%c2_70, %c2_71, %c0_72] : memref<18x18x128xbf16, #tpu.memory_space<vmem>>, vector<16x16x128xbf16>
    %77 = tpu.concatenate %74, %75, %76 in 2 : vector<16x16x128xbf16>, vector<16x16x128xbf16>, vector<16x16x128xbf16> -> vector<16x16x384xbf16>
    %78 = vector.shape_cast %77 : vector<16x16x384xbf16> to vector<256x384xbf16>
    %c768 = arith.constant 768 : index
    %c0_73 = arith.constant 0 : index
    %79 = vector.load %arg5[%c768, %c0_73] : memref<1152x128xbf16, #tpu.memory_space<vmem>>, vector<384x128xbf16>
    %cst_74 = arith.constant dense<0.000000e+00> : vector<256x128xf32>
    %80 = tpu.matmul %78, %79, %cst_74 {dimension_numbers = #tpu.dot_dimension_numbers<[1], [0], [0], [1], [0, 0, 1, 1], [], []>} : vector<256x384xbf16>, vector<384x128xbf16>, vector<256x128xf32> -> vector<256x128xf32>
    %81 = arith.addf %73, %80 : vector<256x128xf32>
    %82 = vector.shape_cast %81 : vector<256x128xf32> to vector<1x16x16x128xf32>
    %83 = arith.truncf %82 : vector<1x16x16x128xf32> to vector<1x16x16x128xbf16>
    %c0_75 = arith.constant 0 : index
    %c0_76 = arith.constant 0 : index
    %c0_77 = arith.constant 0 : index
    %c0_78 = arith.constant 0 : index
    %84 = vector.load %arg8[%c0_75, %c0_76, %c0_77, %c0_78] : memref<1x16x16x128xbf16, #tpu.memory_space<vmem>>, vector<1x16x16x128xbf16>
    tpu.vector_store %arg8[%c0_75, %c0_76, %c0_77, %c0_78], %83 {strides = array<i32>} : memref<1x16x16x128xbf16, #tpu.memory_space<vmem>>, vector<1x16x16x128xbf16>,
    %cst_79 = arith.constant dense<0.000000e+00> : vector<128xf32>
    %85 = vector.multi_reduction <add>, %81, %cst_79 [0] : vector<256x128xf32> to vector<128xf32>
    %86 = vector.shape_cast %85 : vector<128xf32> to vector<1x128xf32>
    %87 = arith.mulf %81, %81 : vector<256x128xf32>
    %cst_80 = arith.constant dense<0.000000e+00> : vector<128xf32>
    %88 = vector.multi_reduction <add>, %87, %cst_80 [0] : vector<256x128xf32> to vector<128xf32>
    %89 = vector.shape_cast %88 : vector<128xf32> to vector<1x128xf32>
    %90 = tpu.concatenate %86, %89 in 0 : vector<1x128xf32>, vector<1x128xf32> -> vector<2x128xf32>
    %c0_81 = arith.constant 0 : index
    %c0_82 = arith.constant 0 : index
    %c0_83 = arith.constant 0 : index
    %c0_84 = arith.constant 0 : index
    %91 = vector.load %arg9[%c0_81, %c0_82, %c0_83, %c0_84] : memref<1x1x2x128xf32, #tpu.memory_space<vmem>>, vector<1x1x2x128xf32>
    %92 = vector.shape_cast %91 : vector<1x1x2x128xf32> to vector<2x128xf32>
    %93 = vector.shape_cast %90 : vector<2x128xf32> to vector<1x1x2x128xf32>
    tpu.vector_store %arg9[%c0_81, %c0_82, %c0_83, %c0_84], %93 {strides = array<i32>} : memref<1x1x2x128xf32, #tpu.memory_space<vmem>>, vector<1x1x2x128xf32>,
    return
  }
  func.func @transform_0(%arg0: i32, %arg1: i32) -> (i32, i32, i32, i32) {
    %c16_i32 = arith.constant 16 : i32
    %0 = arith.muli %arg1, %c16_i32 : i32
    %c1_i32 = arith.constant 1 : i32
    %1 = arith.subi %0, %c1_i32 : i32
    %c0_i32 = arith.constant 0 : i32
    %2 = arith.maxsi %1, %c0_i32 : i32
    %c0_i32_0 = arith.constant 0 : i32
    %c0_i32_1 = arith.constant 0 : i32
    %c0_i32_2 = arith.constant 0 : i32
    return %arg0, %2, %c0_i32_0, %c0_i32_1 : i32, i32, i32, i32
  }
  func.func @transform_1(%arg0: i32, %arg1: i32) -> (i32, i32, i32, i32) {
    %c0_i32 = arith.constant 0 : i32
    %c0_i32_0 = arith.constant 0 : i32
    %c0_i32_1 = arith.constant 0 : i32
    return %arg0, %arg1, %c0_i32, %c0_i32_0 : i32, i32, i32, i32
  }
  func.func @transform_2(%arg0: i32, %arg1: i32) -> (i32, i32, i32, i32) {
    %c1_i32 = arith.constant 1 : i32
    %0 = arith.addi %arg1, %c1_i32 : i32
    %c16_i32 = arith.constant 16 : i32
    %1 = arith.muli %0, %c16_i32 : i32
    %c15_i32 = arith.constant 15 : i32
    %2 = arith.minsi %1, %c15_i32 : i32
    %c0_i32 = arith.constant 0 : i32
    %c0_i32_0 = arith.constant 0 : i32
    %c0_i32_1 = arith.constant 0 : i32
    return %arg0, %2, %c0_i32, %c0_i32_0 : i32, i32, i32, i32
  }
  func.func @transform_3(%arg0: i32, %arg1: i32) -> (i32, i32) {
    %c0_i32 = arith.constant 0 : i32
    %c0_i32_0 = arith.constant 0 : i32
    %c0_i32_1 = arith.constant 0 : i32
    return %c0_i32, %c0_i32_0 : i32, i32
  }
  func.func @transform_4(%arg0: i32, %arg1: i32) -> (i32, i32) {
    %c0_i32 = arith.constant 0 : i32
    %c0_i32_0 = arith.constant 0 : i32
    %c0_i32_1 = arith.constant 0 : i32
    return %c0_i32, %c0_i32_0 : i32, i32
  }
  func.func @transform_5(%arg0: i32, %arg1: i32) -> (i32, i32) {
    %c0_i32 = arith.constant 0 : i32
    %c0_i32_0 = arith.constant 0 : i32
    %c0_i32_1 = arith.constant 0 : i32
    return %c0_i32, %c0_i32_0 : i32, i32
  }
  func.func @transform_6(%arg0: i32, %arg1: i32) -> (i32, i32, i32, i32) {
    %c0_i32 = arith.constant 0 : i32
    %c0_i32_0 = arith.constant 0 : i32
    %c0_i32_1 = arith.constant 0 : i32
    return %arg0, %arg1, %c0_i32, %c0_i32_0 : i32, i32, i32, i32
  }
  func.func @transform_7(%arg0: i32, %arg1: i32) -> (i32, i32, i32, i32) {
    %c0_i32 = arith.constant 0 : i32
    %c0_i32_0 = arith.constant 0 : i32
    %c0_i32_1 = arith.constant 0 : i32
    return %arg0, %arg1, %c0_i32, %c0_i32_0 : i32, i32, i32, i32
  }
}

module attributes {stable_mosaic.version = 11 : i64} {
  func.func @_bn_relu_kernel(%arg0: i32, %arg1: memref<256x128xbf16, #tpu.memory_space<vmem>>, %arg2: memref<1x128xf32, #tpu.memory_space<vmem>>, %arg3: memref<1x128xf32, #tpu.memory_space<vmem>>, %arg4: memref<256x128xf32, #tpu.memory_space<vmem>>) attributes {dimension_semantics = [#tpu.dimension_semantics<parallel>], iteration_bounds = array<i64: 2>, scalar_prefetch = 0 : i64, scratch_operands = 0 : i64, tpu.core_type = #tpu.core_type<tc>, window_params = [{transform_indices = @transform_0, window_bounds = array<i64: 256, 128>}, {pipeline_mode = #tpu.pipeline_mode<synchronous>, transform_indices = @transform_1, window_bounds = array<i64: 1, 128>}, {pipeline_mode = #tpu.pipeline_mode<synchronous>, transform_indices = @transform_2, window_bounds = array<i64: 1, 128>}, {transform_indices = @transform_3, window_bounds = array<i64: 256, 128>}]} {
    %c0 = arith.constant 0 : index
    %c0_0 = arith.constant 0 : index
    %0 = vector.load %arg1[%c0, %c0_0] : memref<256x128xbf16, #tpu.memory_space<vmem>>, vector<256x128xbf16>
    %1 = arith.extf %0 : vector<256x128xbf16> to vector<256x128xf32>
    %c0_1 = arith.constant 0 : index
    %c0_2 = arith.constant 0 : index
    %2 = vector.load %arg2[%c0_1, %c0_2] : memref<1x128xf32, #tpu.memory_space<vmem>>, vector<1x128xf32>
    %3 = vector.broadcast %2 : vector<1x128xf32> to vector<256x128xf32>
    %4 = arith.mulf %1, %3 : vector<256x128xf32>
    %c0_3 = arith.constant 0 : index
    %c0_4 = arith.constant 0 : index
    %5 = vector.load %arg3[%c0_3, %c0_4] : memref<1x128xf32, #tpu.memory_space<vmem>>, vector<1x128xf32>
    %6 = vector.broadcast %5 : vector<1x128xf32> to vector<256x128xf32>
    %7 = arith.addf %4, %6 : vector<256x128xf32>
    %cst = arith.constant 0.000000e+00 : f32
    %8 = vector.broadcast %cst : f32 to vector<256x128xf32>
    %9 = arith.maximumf %7, %8 : vector<256x128xf32>
    %c0_5 = arith.constant 0 : index
    %c0_6 = arith.constant 0 : index
    %10 = vector.load %arg4[%c0_5, %c0_6] : memref<256x128xf32, #tpu.memory_space<vmem>>, vector<256x128xf32>
    tpu.vector_store %arg4[%c0_5, %c0_6], %9 {strides = array<i32>} : memref<256x128xf32, #tpu.memory_space<vmem>>, vector<256x128xf32>,
    return
  }
  func.func @transform_0(%arg0: i32) -> (i32, i32) {
    %c0_i32 = arith.constant 0 : i32
    %c0_i32_0 = arith.constant 0 : i32
    return %arg0, %c0_i32 : i32, i32
  }
  func.func @transform_1(%arg0: i32) -> (i32, i32) {
    %c0_i32 = arith.constant 0 : i32
    %c0_i32_0 = arith.constant 0 : i32
    %c0_i32_1 = arith.constant 0 : i32
    return %c0_i32, %c0_i32_0 : i32, i32
  }
  func.func @transform_2(%arg0: i32) -> (i32, i32) {
    %c0_i32 = arith.constant 0 : i32
    %c0_i32_0 = arith.constant 0 : i32
    %c0_i32_1 = arith.constant 0 : i32
    return %c0_i32, %c0_i32_0 : i32, i32
  }
  func.func @transform_3(%arg0: i32) -> (i32, i32) {
    %c0_i32 = arith.constant 0 : i32
    %c0_i32_0 = arith.constant 0 : i32
    return %arg0, %c0_i32 : i32, i32
  }
}

</mosaic_0001>

<llo_original>
// kernel: double_conv_forward.5
$region0: #{double_conv_forward.5}
  #allocation0 [shape = 'u32[]', space=smem, size = 0x4, offset = 0x4, fixed_abs, tag = 'smem constant byte address 0x4 - core index']
  #allocation1 [shape = 'u32[72,128]{1,0:T(1,128)}', space=vmem, size = 0x9000, scoped, tag = 'internal scratch']
  %s0 = inlined_call_operand.vmem [shape: bf16[512,128], index: 0, kind: input, shape index: {}]
  %s1 = inlined_call_operand.vmem [shape: f32[1,128], index: 1, kind: input, shape index: {}]
  %s2 = inlined_call_operand.vmem [shape: f32[1,128], index: 2, kind: input, shape index: {}]
  %s3 = inlined_call_operand.vmem [shape: f32[512,128], index: 3, kind: output, shape index: {}]
  %s4 = sld [smem:[#allocation0]]
  $region45: #{double_conv_forward.5} parent=0
    _
  %s6 = ssub.s32 1, %s4
  %s7 = scalar_select 0, %s6, %s4
  loop: start=0, step=1, limit=4
  $region2: #{double_conv_forward.5} parent=0 // loop_pre_header
    _
  $region3: #{double_conv_forward.5} parent=0 // loop_header
    %s9 = sphi 0, %s13
    %p10 = scmp.ge.s32.totalorder %s9, 4
    %s19 = sphi 0, %s21
    %s22 = sphi 0, %s19
    %s23 = sphi 0, %s22
    %s39 = sphi 0, %s23
    %s43 = sphi 0, %s43
    %s45 = sphi 0, %s43
    %s46 = sphi 0, %s45
    %s60 = sphi 0, %s46
    %s64 = sphi 0, %s64
    %s66 = sphi 0, %s64
    %s67 = sphi 0, %s66
    %s81 = sphi 0, %s67
    %s87 = sphi 0, %s89
    %s90 = sphi 0, %s87
    %s91 = sphi 0, %s90
    %s107 = sphi 0, %s91
  $region4: #{double_conv_forward.5} parent=0 // loop_header_branch
    %12 = sbr.rel (%p10) target = $region8
  $region5: #{double_conv_forward.5} parent=0 // loop_body
    %s14 = ssub.s32 %s9, 1
    %s15 = ssub.s32 %s9, 2
    %s16 = sadd.s32 %s9, 1
    %s17 = ssub.s32 %s9, %s16
    %p18 = scmp.eq.s32.totalorder %s17, 0
    %s20 = sadd.s32 %s19, 1
    %s21 = scalar_select %p18, %s19, %s20
    %p24 = pneg %p18
    %p25 = scmp.eq.s32.totalorder %s9, 1
    %p26 = por %p24, %p25
    %p27 = scmp.ne.s32.totalorder %s19, %s22
    %p28 = scmp.eq.s32.totalorder %s9, 0
    %p29 = por %p27, %p28
    %p30 = scmp.ne.s32.totalorder %s19, %s22
    %p31 = scmp.eq.s32.totalorder %s14, 1
    %p32 = por %p30, %p31
    %p33 = scmp.ne.s32.totalorder %s22, %s23
    %p34 = scmp.eq.s32.totalorder %s14, 0
    %p35 = por %p33, %p34
    %p36 = scmp.ne.s32.totalorder %s22, %s23
    %p37 = scmp.eq.s32.totalorder %s15, 1
    %p38 = por %p36, %p37
    %p40 = scmp.ne.s32.totalorder %s23, %s39
    %p41 = scmp.eq.s32.totalorder %s15, 0
    %p42 = por %p40, %p41
    %s44 = sadd.s32 %s43, 1
    %p47 = scmp.eq.s32.totalorder %s9, 1
    %p48 = scmp.ne.s32.totalorder %s43, %s45
    %p49 = scmp.eq.s32.totalorder %s9, 0
    %p50 = por %p48, %p49
    %p51 = scmp.ne.s32.totalorder %s43, %s45
    %p52 = scmp.eq.s32.totalorder %s14, 1
    %p53 = por %p51, %p52
    %p54 = scmp.ne.s32.totalorder %s45, %s46
    %p55 = scmp.eq.s32.totalorder %s14, 0
    %p56 = por %p54, %p55
    %p57 = scmp.ne.s32.totalorder %s45, %s46
    %p58 = scmp.eq.s32.totalorder %s15, 1
    %p59 = por %p57, %p58
    %p61 = scmp.ne.s32.totalorder %s46, %s60
    %p62 = scmp.eq.s32.totalorder %s15, 0
    %p63 = por %p61, %p62
    %s65 = sadd.s32 %s64, 1
    %p68 = scmp.eq.s32.totalorder %s9, 1
    %p69 = scmp.ne.s32.totalorder %s64, %s66
    %p70 = scmp.eq.s32.totalorder %s9, 0
    %p71 = por %p69, %p70
    %p72 = scmp.ne.s32.totalorder %s64, %s66
    %p73 = scmp.eq.s32.totalorder %s14, 1
    %p74 = por %p72, %p73
    %p75 = scmp.ne.s32.totalorder %s66, %s67
    %p76 = scmp.eq.s32.totalorder %s14, 0
    %p77 = por %p75, %p76
    %p78 = scmp.ne.s32.totalorder %s66, %s67
    %p79 = scmp.eq.s32.totalorder %s15, 1
    %p80 = por %p78, %p79
    %p82 = scmp.ne.s32.totalorder %s67, %s81
    %p83 = scmp.eq.s32.totalorder %s15, 0
    %p84 = por %p82, %p83
    %s85 = ssub.s32 %s9, %s16
    %p86 = scmp.eq.s32.totalorder %s85, 0
    %s88 = sadd.s32 %s87, 1
    %s89 = scalar_select %p86, %s87, %s88
    %p92 = pneg %p86
    %p93 = scmp.eq.s32.totalorder %s9, 1
    %p94 = por %p92, %p93
    %p95 = scmp.ne.s32.totalorder %s87, %s90
    %p96 = scmp.eq.s32.totalorder %s9, 0
    %p97 = por %p95, %p96
    %p98 = scmp.ne.s32.totalorder %s87, %s90
    %p99 = scmp.eq.s32.totalorder %s14, 1
    %p100 = por %p98, %p99
    %p101 = scmp.ne.s32.totalorder %s90, %s91
    %p102 = scmp.eq.s32.totalorder %s14, 0
    %p103 = por %p101, %p102
    %p104 = scmp.ne.s32.totalorder %s90, %s91
    %p105 = scmp.eq.s32.totalorder %s15, 1
    %p106 = por %p104, %p105
    %p108 = scmp.ne.s32.totalorder %s91, %s107
    %p109 = scmp.eq.s32.totalorder %s15, 0
    %p110 = por %p108, %p109
    %p111 = scmp.le.s32.totalorder 1, %s9
    %p112 = scmp.lt.s32.totalorder %s9, 3
    %p113 = pnand %p111, %p112
    %p114 = pneg %p113
    // Predicated region
    $region9: #{double_conv_forward.5} parent=5 // pred_check
      _
    $region10: #{double_conv_forward.5} parent=5 // pred_check_branch
      %116 = sbr.rel (%p113) target = $region12
    $region11: #{double_conv_forward.5} parent=5 // pred_region
      %s117 = ssub.s32 %s9, 1
      // Predicated region
      $region13: #{double_conv_forward.5} parent=11 // pred_check
        %p118 = pneg %p56
      $region14: #{double_conv_forward.5} parent=11 // pred_check_branch
        %120 = sbr.rel (%p118) target = $region16
      $region15: #{double_conv_forward.5} parent=11 // pred_region
        _
      $region16: #{double_conv_forward.5} parent=11 // pred_fallthru
        _
      // Predicated region
      $region17: #{double_conv_forward.5} parent=11 // pred_check
        %p121 = pneg %p77
      $region18: #{double_conv_forward.5} parent=11 // pred_check_branch
        %123 = sbr.rel (%p121) target = $region20
      $region19: #{double_conv_forward.5} parent=11 // pred_region
        _
      $region20: #{double_conv_forward.5} parent=11 // pred_fallthru
        _
    $region12: #{double_conv_forward.5} parent=5 // pred_fallthru
      _
    %p124 = scmp.lt.s32.totalorder %s9, 2
    // Predicated region
    $region21: #{double_conv_forward.5} parent=5 // pred_check
      %p125 = pneg %p124
    $region22: #{double_conv_forward.5} parent=5 // pred_check_branch
      %127 = sbr.rel (%p125) target = $region24
    $region23: #{double_conv_forward.5} parent=5 // pred_region
      // Predicated region
      $region25: #{double_conv_forward.5} parent=23 // pred_check
        %p128 = pneg %p29
      $region26: #{double_conv_forward.5} parent=23 // pred_check_branch
        %130 = sbr.rel (%p128) target = $region28
      $region27: #{double_conv_forward.5} parent=23 // pred_region
        %s131 = smul.u32 32, %s9
        %p132 = scmp.lt.s32.totalorder %s131, 63
        %s133 = scalar_select %p132, %s131, 63
        %s134 = smul.addr %s133, 4
        %s135 = scalar_lea.vmem %s0, %s134
        %s136 = smul.u32 32, %s9
      $region28: #{double_conv_forward.5} parent=23 // pred_fallthru
        _
    $region24: #{double_conv_forward.5} parent=5 // pred_fallthru
      _
    %p137 = scmp.le.s32.totalorder 1, %s9
    %p138 = scmp.lt.s32.totalorder %s9, 3
    %p139 = pnand %p137, %p138
    %p140 = pneg %p139
    // Predicated region
    $region29: #{double_conv_forward.5} parent=5 // pred_check
      _
    $region30: #{double_conv_forward.5} parent=5 // pred_check_branch
      %142 = sbr.rel (%p139) target = $region32
    $region31: #{double_conv_forward.5} parent=5 // pred_region
      %s143 = ssub.s32 %s9, 1
      %s144 = smul.u32 32, %s14
      %p145 = scmp.lt.s32.totalorder %s144, 63
      %s146 = scalar_select %p145, %s144, 63
      %s147 = smul.addr %s146, 4
      %s148 = scalar_lea.vmem %s0, %s147
      %p149 = pneg %p35
      %p150 = pneg %p32
      %p151 = pneg %p56
      %p152 = pneg %p53
      %p153 = pneg %p77
      %p154 = pneg %p74
      %p155 = pneg %p103
      %p156 = pneg %p100
      %s157 = smul.u32 32, %s14
      %p158 = scmp.lt.s32.totalorder %s157, 63
      %s159 = scalar_select %p158, %s157, 63
      %s160 = smul.addr %s159, 8
      %s161 = scalar_lea.vmem %s3, %s160
      %s162 = smul.u32 32, %s14
      %p163 = scmp.lt.s32.totalorder %s162, 63
      %s164 = scalar_select %p163, %s162, 63
      %s165 = smul.addr %s164, 4
      %s166 = scalar_lea.vmem %s0, %s165
      %s167 = smul.u32 32, %s14
      %s168 = smul.u32 32, %s14
      %p169 = scmp.lt.s32.totalorder %s168, 63
      %s170 = scalar_select %p169, %s168, 63
      %s171 = smul.addr %s170, 8
      %s172 = scalar_lea.vmem %s3, %s171
      %s173 = smul.u32 32, %s14
      %v174 = vld [vmem:[%s166] sm:$0xf]
      %v175 = vld [vmem:[%s166 + $0x4] sm:$0xf]
      %v176 = vld [vmem:[%s166 + $0x8] sm:$0xf]
      %v177 = vld [vmem:[%s166 + $0xc] sm:$0xf]
      %v178 = vld [vmem:[%s166 + $0x10] sm:$0xf]
      %v179 = vld [vmem:[%s166 + $0x14] sm:$0xf]
      %v180 = vld [vmem:[%s166 + $0x18] sm:$0xf]
      %v181 = vld [vmem:[%s166 + $0x1c] sm:$0xf]
      %v182 = vld [vmem:[%s166 + $0x20] sm:$0xf]
      %v183 = vld [vmem:[%s166 + $0x24] sm:$0xf]
      %v184 = vld [vmem:[%s166 + $0x28] sm:$0xf]
      %v185 = vld [vmem:[%s166 + $0x2c] sm:$0xf]
      %v186 = vld [vmem:[%s166 + $0x30] sm:$0xf]
      %v187 = vld [vmem:[%s166 + $0x34] sm:$0xf]
      %v188 = vld [vmem:[%s166 + $0x38] sm:$0xf]
      %v189 = vld [vmem:[%s166 + $0x3c] sm:$0xf]
      %v190 = vld [vmem:[%s166 + $0x40] sm:$0xf]
      %v191 = vld [vmem:[%s166 + $0x44] sm:$0xf]
      %v192 = vld [vmem:[%s166 + $0x48] sm:$0xf]
      %v193 = vld [vmem:[%s166 + $0x4c] sm:$0xf]
      %v194 = vld [vmem:[%s166 + $0x50] sm:$0xf]
      %v195 = vld [vmem:[%s166 + $0x54] sm:$0xf]
      %v196 = vld [vmem:[%s166 + $0x58] sm:$0xf]
      %v197 = vld [vmem:[%s166 + $0x5c] sm:$0xf]
      %v198 = vld [vmem:[%s166 + $0x60] sm:$0xf]
      %v199 = vld [vmem:[%s166 + $0x64] sm:$0xf]
      %v200 = vld [vmem:[%s166 + $0x68] sm:$0xf]
      %v201 = vld [vmem:[%s166 + $0x6c] sm:$0xf]
      %v202 = vld [vmem:[%s166 + $0x70] sm:$0xf]
      %v203 = vld [vmem:[%s166 + $0x74] sm:$0xf]
      %v204 = vld [vmem:[%s166 + $0x78] sm:$0xf]
      %v205 = vld [vmem:[%s166 + $0x7c] sm:$0xf]
      %v206 = vunpack.c.l.bf16 %v174
      %v207 = vunpack.c.l.bf16 %v175
      %v208 = vunpack.c.l.bf16 %v176
      %v209 = vunpack.c.l.bf16 %v177
      %v210 = vunpack.c.l.bf16 %v178
      %v211 = vunpack.c.l.bf16 %v179
      %v212 = vunpack.c.l.bf16 %v180
      %v213 = vunpack.c.l.bf16 %v181
      %v214 = vunpack.c.l.bf16 %v182
      %v215 = vunpack.c.l.bf16 %v183
      %v216 = vunpack.c.l.bf16 %v184
      %v217 = vunpack.c.l.bf16 %v185
      %v218 = vunpack.c.l.bf16 %v186
      %v219 = vunpack.c.l.bf16 %v187
      %v220 = vunpack.c.l.bf16 %v188
      %v221 = vunpack.c.l.bf16 %v189
      %v222 = vunpack.c.l.bf16 %v190
      %v223 = vunpack.c.l.bf16 %v191
      %v224 = vunpack.c.l.bf16 %v192
      %v225 = vunpack.c.l.bf16 %v193
      %v226 = vunpack.c.l.bf16 %v194
      %v227 = vunpack.c.l.bf16 %v195
      %v228 = vunpack.c.l.bf16 %v196
      %v229 = vunpack.c.l.bf16 %v197
      %v230 = vunpack.c.l.bf16 %v198
      %v231 = vunpack.c.l.bf16 %v199
      %v232 = vunpack.c.l.bf16 %v200
      %v233 = vunpack.c.l.bf16 %v201
      %v234 = vunpack.c.l.bf16 %v202
      %v235 = vunpack.c.l.bf16 %v203
      %v236 = vunpack.c.l.bf16 %v204
      %v237 = vunpack.c.l.bf16 %v205
      %v238 = vld [vmem:[%s1] sm:$0x1]
      %v240 = vperm.slane %v238, 0
      %v242 = vmul.f32 %v206, %v240
      %v243 = vmul.f32 %v207, %v240
      %v244 = vmul.f32 %v208, %v240
      %v245 = vmul.f32 %v209, %v240
      %v246 = vmul.f32 %v210, %v240
      %v247 = vmul.f32 %v211, %v240
      %v248 = vmul.f32 %v212, %v240
      %v249 = vmul.f32 %v213, %v240
      %v250 = vmul.f32 %v214, %v240
      %v251 = vmul.f32 %v215, %v240
      %v252 = vmul.f32 %v216, %v240
      %v253 = vmul.f32 %v217, %v240
      %v254 = vmul.f32 %v218, %v240
      %v255 = vmul.f32 %v219, %v240
      %v256 = vmul.f32 %v220, %v240
      %v257 = vmul.f32 %v221, %v240
      %v258 = vmul.f32 %v222, %v240
      %v259 = vmul.f32 %v223, %v240
      %v260 = vmul.f32 %v224, %v240
      %v261 = vmul.f32 %v225, %v240
      %v262 = vmul.f32 %v226, %v240
      %v263 = vmul.f32 %v227, %v240
      %v264 = vmul.f32 %v228, %v240
      %v265 = vmul.f32 %v229, %v240
      %v266 = vmul.f32 %v230, %v240
      %v267 = vmul.f32 %v231, %v240
      %v268 = vmul.f32 %v232, %v240
      %v269 = vmul.f32 %v233, %v240
      %v270 = vmul.f32 %v234, %v240
      %v271 = vmul.f32 %v235, %v240
      %v272 = vmul.f32 %v236, %v240
      %v273 = vmul.f32 %v237, %v240
      %v274 = vld [vmem:[%s2] sm:$0x1]
      %v276 = vperm.slane %v274, 0
      %v278 = vadd.f32 %v242, %v276
      %v279 = vadd.f32 %v243, %v276
      %v280 = vadd.f32 %v244, %v276
      %v281 = vadd.f32 %v245, %v276
      %v282 = vadd.f32 %v246, %v276
      %v283 = vadd.f32 %v247, %v276
      %v284 = vadd.f32 %v248, %v276
      %v285 = vadd.f32 %v249, %v276
      %v286 = vadd.f32 %v250, %v276
      %v287 = vadd.f32 %v251, %v276
      %v288 = vadd.f32 %v252, %v276
      %v289 = vadd.f32 %v253, %v276
      %v290 = vadd.f32 %v254, %v276
      %v291 = vadd.f32 %v255, %v276
      %v292 = vadd.f32 %v256, %v276
      %v293 = vadd.f32 %v257, %v276
      %v294 = vadd.f32 %v258, %v276
      %v295 = vadd.f32 %v259, %v276
      %v296 = vadd.f32 %v260, %v276
      %v297 = vadd.f32 %v261, %v276
      %v298 = vadd.f32 %v262, %v276
      %v299 = vadd.f32 %v263, %v276
      %v300 = vadd.f32 %v264, %v276
      %v301 = vadd.f32 %v265, %v276
      %v302 = vadd.f32 %v266, %v276
      %v303 = vadd.f32 %v267, %v276
      %v304 = vadd.f32 %v268, %v276
      %v305 = vadd.f32 %v269, %v276
      %v306 = vadd.f32 %v270, %v276
      %v307 = vadd.f32 %v271, %v276
      %v308 = vadd.f32 %v272, %v276
      %v309 = vadd.f32 %v273, %v276
      %v310 = vmax.f32 %v278, 0.0
      %v311 = vmax.f32 %v279, 0.0
      %v312 = vmax.f32 %v280, 0.0
      %v313 = vmax.f32 %v281, 0.0
      %v314 = vmax.f32 %v282, 0.0
      %v315 = vmax.f32 %v283, 0.0
      %v316 = vmax.f32 %v284, 0.0
      %v317 = vmax.f32 %v285, 0.0
      %v318 = vmax.f32 %v286, 0.0
      %v319 = vmax.f32 %v287, 0.0
      %v320 = vmax.f32 %v288, 0.0
      %v321 = vmax.f32 %v289, 0.0
      %v322 = vmax.f32 %v290, 0.0
      %v323 = vmax.f32 %v291, 0.0
      %v324 = vmax.f32 %v292, 0.0
      %v325 = vmax.f32 %v293, 0.0
      %v326 = vmax.f32 %v294, 0.0
      %v327 = vmax.f32 %v295, 0.0
      %v328 = vmax.f32 %v296, 0.0
      %v329 = vmax.f32 %v297, 0.0
      %v330 = vmax.f32 %v298, 0.0
      %v331 = vmax.f32 %v299, 0.0
      %v332 = vmax.f32 %v300, 0.0
      %v333 = vmax.f32 %v301, 0.0
      %v334 = vmax.f32 %v302, 0.0
      %v335 = vmax.f32 %v303, 0.0
      %v336 = vmax.f32 %v304, 0.0
      %v337 = vmax.f32 %v305, 0.0
      %v338 = vmax.f32 %v306, 0.0
      %v339 = vmax.f32 %v307, 0.0
      %v340 = vmax.f32 %v308, 0.0
      %v341 = vmax.f32 %v309, 0.0
      %342 = vst [vmem:[%s172] sm:$0xff] %v310
      %343 = vst [vmem:[%s172 + $0x8] sm:$0xff] %v311
      %344 = vst [vmem:[%s172 + $0x10] sm:$0xff] %v312
      %345 = vst [vmem:[%s172 + $0x18] sm:$0xff] %v313
      %346 = vst [vmem:[%s172 + $0x20] sm:$0xff] %v314
      %347 = vst [vmem:[%s172 + $0x28] sm:$0xff] %v315
      %348 = vst [vmem:[%s172 + $0x30] sm:$0xff] %v316
      %349 = vst [vmem:[%s172 + $0x38] sm:$0xff] %v317
      %350 = vst [vmem:[%s172 + $0x40] sm:$0xff] %v318
      %351 = vst [vmem:[%s172 + $0x48] sm:$0xff] %v319
      %352 = vst [vmem:[%s172 + $0x50] sm:$0xff] %v320
      %353 = vst [vmem:[%s172 + $0x58] sm:$0xff] %v321
      %354 = vst [vmem:[%s172 + $0x60] sm:$0xff] %v322
      %355 = vst [vmem:[%s172 + $0x68] sm:$0xff] %v323
      %356 = vst [vmem:[%s172 + $0x70] sm:$0xff] %v324
      %357 = vst [vmem:[%s172 + $0x78] sm:$0xff] %v325
      %358 = vst [vmem:[%s172 + $0x80] sm:$0xff] %v326
      %359 = vst [vmem:[%s172 + $0x88] sm:$0xff] %v327
      %360 = vst [vmem:[%s172 + $0x90] sm:$0xff] %v328
      %361 = vst [vmem:[%s172 + $0x98] sm:$0xff] %v329
      %362 = vst [vmem:[%s172 + $0xa0] sm:$0xff] %v330
      %363 = vst [vmem:[%s172 + $0xa8] sm:$0xff] %v331
      %364 = vst [vmem:[%s172 + $0xb0] sm:$0xff] %v332
      %365 = vst [vmem:[%s172 + $0xb8] sm:$0xff] %v333
      %366 = vst [vmem:[%s172 + $0xc0] sm:$0xff] %v334
      %367 = vst [vmem:[%s172 + $0xc8] sm:$0xff] %v335
      %368 = vst [vmem:[%s172 + $0xd0] sm:$0xff] %v336
      %369 = vst [vmem:[%s172 + $0xd8] sm:$0xff] %v337
      %370 = vst [vmem:[%s172 + $0xe0] sm:$0xff] %v338
      %371 = vst [vmem:[%s172 + $0xe8] sm:$0xff] %v339
      %372 = vst [vmem:[%s172 + $0xf0] sm:$0xff] %v340
      %373 = vst [vmem:[%s172 + $0xf8] sm:$0xff] %v341
      %s374 = smul.u32 32, %s14
      %p375 = scmp.lt.s32.totalorder %s374, 63
      %s376 = scalar_select %p375, %s374, 63
      %s377 = smul.addr %s376, 8
      %s378 = scalar_lea.vmem %s3, %s377
      // Predicated region
      $region33: #{double_conv_forward.5} parent=31 // pred_check
        %p379 = pneg %p100
      $region34: #{double_conv_forward.5} parent=31 // pred_check_branch
        %381 = sbr.rel (%p379) target = $region36
      $region35: #{double_conv_forward.5} parent=31 // pred_region
        %s382 = smul.u32 32, %s14
      $region36: #{double_conv_forward.5} parent=31 // pred_fallthru
        _
    $region32: #{double_conv_forward.5} parent=5 // pred_fallthru
      _
    %p383 = scmp.le.s32.totalorder 2, %s9
    // Predicated region
    $region37: #{double_conv_forward.5} parent=5 // pred_check
      %p384 = pneg %p383
    $region38: #{double_conv_forward.5} parent=5 // pred_check_branch
      %386 = sbr.rel (%p384) target = $region40
    $region39: #{double_conv_forward.5} parent=5 // pred_region
      %s387 = ssub.s32 %s9, 2
      // Predicated region
      $region41: #{double_conv_forward.5} parent=39 // pred_check
        %p388 = pneg %p106
      $region42: #{double_conv_forward.5} parent=39 // pred_check_branch
        %390 = sbr.rel (%p388) target = $region44
      $region43: #{double_conv_forward.5} parent=39 // pred_region
        %s391 = smul.u32 32, %s15
        %p392 = scmp.lt.s32.totalorder %s391, 63
        %s393 = scalar_select %p392, %s391, 63
        %s394 = smul.addr %s393, 8
        %s395 = scalar_lea.vmem %s3, %s394
      $region44: #{double_conv_forward.5} parent=39 // pred_fallthru
        _
    $region40: #{double_conv_forward.5} parent=5 // pred_fallthru
      _
  $region6: #{double_conv_forward.5} parent=0 // loop_footer
    %s13 = sadd.s32 1, %s9
  $region7: #{double_conv_forward.5} parent=0 // loop_footer_branch
    %8 = sbr.rel target = $region3
  $region8: #{double_conv_forward.5} parent=0 // loop_exit
    _

// kernel: double_conv_forward.3
$region0: #{double_conv_forward.3}
  #allocation0 [shape = 'u32[]', space=smem, size = 0x4, offset = 0x4, fixed_abs, tag = 'smem constant byte address 0x4 - core index']
  #allocation1 [shape = 'u32[72,128]{1,0:T(1,128)}', space=vmem, size = 0x9000, scoped, tag = 'internal scratch']
  #allocation2 [shape = 'bf16[18,18,128]{2,1,0:T(8,128)(2,1)}', space=vmem, size = 0x1b000, scoped, tag = 'scratch operand']
  %s0 = inlined_call_operand.vmem [shape: bf16[2,16,16,128], index: 0, kind: input, shape index: {}, may-alias: {0,1,2}]
  %s1 = inlined_call_operand.vmem [shape: bf16[2,16,16,128], index: 1, kind: input, shape index: {}, may-alias: {0,1,2}]
  %s2 = inlined_call_operand.vmem [shape: bf16[2,16,16,128], index: 2, kind: input, shape index: {}, may-alias: {0,1,2}]
  %s3 = inlined_call_operand.vmem [shape: bf16[1152,128], index: 3, kind: input, shape index: {}]
  %s4 = inlined_call_operand.vmem [shape: f32[1,128], index: 4, kind: input, shape index: {}, may-alias: {4,5}]
  %s5 = inlined_call_operand.vmem [shape: f32[1,128], index: 5, kind: input, shape index: {}, may-alias: {4,5}]
  %s6 = inlined_call_operand.vmem [shape: bf16[2,16,16,128], index: 6, kind: output, shape index: {0}]
  %s7 = inlined_call_operand.vmem [shape: f32[2,1,2,128], index: 7, kind: output, shape index: {1}]
  %8 = xla_tuple %s6, %s7
  %s9 = sld [smem:[#allocation0]]
  $region65: #{double_conv_forward.3} parent=0
    _
  %s11 = ssub.s32 1, %s9
  %s12 = scalar_select 0, %s11, %s9
  loop: start=0, step=1, limit=4
  $region2: #{double_conv_forward.3} parent=0 // loop_pre_header
    _
  $region3: #{double_conv_forward.3} parent=0 // loop_header
    %s14 = sphi 0, %s18
    %p15 = scmp.ge.s32.totalorder %s14, 4
    %s21 = sphi 0, %s33
    %s22 = sphi 0, %s29
    %s23 = sphi 0, %s21
    %s24 = sphi 0, %s22
    %s25 = sphi 0, %s23
    %s26 = sphi 0, %s24
    %s46 = sphi 0, %s48
    %s49 = sphi 0, %s46
    %s50 = sphi 0, %s49
    %s66 = sphi 0, %s50
    %s74 = sphi 0, %s76
    %s77 = sphi 0, %s74
    %s78 = sphi 0, %s77
    %s94 = sphi 0, %s78
    %s110 = sphi 0, %s112
    %s113 = sphi 0, %s110
    %s114 = sphi 0, %s113
    %s130 = sphi 0, %s114
    %s134 = sphi 0, %s134
    %s136 = sphi 0, %s134
    %s137 = sphi 0, %s136
    %s151 = sphi 0, %s137
    %s155 = sphi 0, %s155
    %s157 = sphi 0, %s155
    %s158 = sphi 0, %s157
    %s172 = sphi 0, %s158
    %s176 = sphi 0, %s176
    %s178 = sphi 0, %s176
    %s179 = sphi 0, %s178
    %s193 = sphi 0, %s179
    %s201 = sphi 0, %s203
    %s204 = sphi 0, %s201
    %s205 = sphi 0, %s204
    %s221 = sphi 0, %s205
    %s229 = sphi 0, %s231
    %s232 = sphi 0, %s229
    %s233 = sphi 0, %s232
    %s249 = sphi 0, %s233
  $region4: #{double_conv_forward.3} parent=0 // loop_header_branch
    %17 = sbr.rel (%p15) target = $region8
  $region5: #{double_conv_forward.3} parent=0 // loop_body
    %s19 = ssub.s32 %s14, 1
    %s20 = ssub.s32 %s14, 2
    %s27 = sadd.s32 1, %s22
    %p28 = scmp.ge.s32.totalorder %s27, 1
    %s29 = scalar_select %p28, 0, %s27
    %s30 = sadd.s32 1, %s21
    %s31 = scalar_select %p28, %s30, %s21
    %p32 = scmp.ge.s32.totalorder %s31, 2
    %s33 = scalar_select %p32, 0, %s31
    %s34 = smul.u32 %s22, 16
    %s35 = ssub.s32 %s34, 1
    %p36 = scmp.gt.s32.totalorder %s35, 0
    %s37 = scalar_select %p36, %s35, 0
    %s38 = smul.u32 %s29, 16
    %s39 = ssub.s32 %s38, 1
    %p40 = scmp.gt.s32.totalorder %s39, 0
    %s41 = scalar_select %p40, %s39, 0
    %s42 = ssub.s32 %s21, %s33
    %s43 = ssub.s32 %s37, %s41
    %s44 = sor.u32 %s42, %s43
    %p45 = scmp.eq.s32.totalorder %s44, 0
    %s47 = sadd.s32 %s46, 1
    %s48 = scalar_select %p45, %s46, %s47
    %p51 = pneg %p45
    %p52 = scmp.eq.s32.totalorder %s14, 1
    %p53 = por %p51, %p52
    %p54 = scmp.ne.s32.totalorder %s46, %s49
    %p55 = scmp.eq.s32.totalorder %s14, 0
    %p56 = por %p54, %p55
    %p57 = scmp.ne.s32.totalorder %s46, %s49
    %p58 = scmp.eq.s32.totalorder %s19, 1
    %p59 = por %p57, %p58
    %p60 = scmp.ne.s32.totalorder %s49, %s50
    %p61 = scmp.eq.s32.totalorder %s19, 0
    %p62 = por %p60, %p61
    %p63 = scmp.ne.s32.totalorder %s49, %s50
    %p64 = scmp.eq.s32.totalorder %s20, 1
    %p65 = por %p63, %p64
    %p67 = scmp.ne.s32.totalorder %s50, %s66
    %p68 = scmp.eq.s32.totalorder %s20, 0
    %p69 = por %p67, %p68
    %s70 = ssub.s32 %s21, %s33
    %s71 = ssub.s32 %s22, %s29
    %s72 = sor.u32 %s70, %s71
    %p73 = scmp.eq.s32.totalorder %s72, 0
    %s75 = sadd.s32 %s74, 1
    %s76 = scalar_select %p73, %s74, %s75
    %p79 = pneg %p73
    %p80 = scmp.eq.s32.totalorder %s14, 1
    %p81 = por %p79, %p80
    %p82 = scmp.ne.s32.totalorder %s74, %s77
    %p83 = scmp.eq.s32.totalorder %s14, 0
    %p84 = por %p82, %p83
    %p85 = scmp.ne.s32.totalorder %s74, %s77
    %p86 = scmp.eq.s32.totalorder %s19, 1
    %p87 = por %p85, %p86
    %p88 = scmp.ne.s32.totalorder %s77, %s78
    %p89 = scmp.eq.s32.totalorder %s19, 0
    %p90 = por %p88, %p89
    %p91 = scmp.ne.s32.totalorder %s77, %s78
    %p92 = scmp.eq.s32.totalorder %s20, 1
    %p93 = por %p91, %p92
    %p95 = scmp.ne.s32.totalorder %s78, %s94
    %p96 = scmp.eq.s32.totalorder %s20, 0
    %p97 = por %p95, %p96
    %s98 = sadd.s32 %s22, 1
    %s99 = smul.u32 %s98, 16
    %p100 = scmp.lt.s32.totalorder %s99, 15
    %s101 = scalar_select %p100, %s99, 15
    %s102 = sadd.s32 %s29, 1
    %s103 = smul.u32 %s102, 16
    %p104 = scmp.lt.s32.totalorder %s103, 15
    %s105 = scalar_select %p104, %s103, 15
    %s106 = ssub.s32 %s21, %s33
    %s107 = ssub.s32 %s101, %s105
    %s108 = sor.u32 %s106, %s107
    %p109 = scmp.eq.s32.totalorder %s108, 0
    %s111 = sadd.s32 %s110, 1
    %s112 = scalar_select %p109, %s110, %s111
    %p115 = pneg %p109
    %p116 = scmp.eq.s32.totalorder %s14, 1
    %p117 = por %p115, %p116
    %p118 = scmp.ne.s32.totalorder %s110, %s113
    %p119 = scmp.eq.s32.totalorder %s14, 0
    %p120 = por %p118, %p119
    %p121 = scmp.ne.s32.totalorder %s110, %s113
    %p122 = scmp.eq.s32.totalorder %s19, 1
    %p123 = por %p121, %p122
    %p124 = scmp.ne.s32.totalorder %s113, %s114
    %p125 = scmp.eq.s32.totalorder %s19, 0
    %p126 = por %p124, %p125
    %p127 = scmp.ne.s32.totalorder %s113, %s114
    %p128 = scmp.eq.s32.totalorder %s20, 1
    %p129 = por %p127, %p128
    %p131 = scmp.ne.s32.totalorder %s114, %s130
    %p132 = scmp.eq.s32.totalorder %s20, 0
    %p133 = por %p131, %p132
    %s135 = sadd.s32 %s134, 1
    %p138 = scmp.eq.s32.totalorder %s14, 1
    %p139 = scmp.ne.s32.totalorder %s134, %s136
    %p140 = scmp.eq.s32.totalorder %s14, 0
    %p141 = por %p139, %p140
    %p142 = scmp.ne.s32.totalorder %s134, %s136
    %p143 = scmp.eq.s32.totalorder %s19, 1
    %p144 = por %p142, %p143
    %p145 = scmp.ne.s32.totalorder %s136, %s137
    %p146 = scmp.eq.s32.totalorder %s19, 0
    %p147 = por %p145, %p146
    %p148 = scmp.ne.s32.totalorder %s136, %s137
    %p149 = scmp.eq.s32.totalorder %s20, 1
    %p150 = por %p148, %p149
    %p152 = scmp.ne.s32.totalorder %s137, %s151
    %p153 = scmp.eq.s32.totalorder %s20, 0
    %p154 = por %p152, %p153
    %s156 = sadd.s32 %s155, 1
    %p159 = scmp.eq.s32.totalorder %s14, 1
    %p160 = scmp.ne.s32.totalorder %s155, %s157
    %p161 = scmp.eq.s32.totalorder %s14, 0
    %p162 = por %p160, %p161
    %p163 = scmp.ne.s32.totalorder %s155, %s157
    %p164 = scmp.eq.s32.totalorder %s19, 1
    %p165 = por %p163, %p164
    %p166 = scmp.ne.s32.totalorder %s157, %s158
    %p167 = scmp.eq.s32.totalorder %s19, 0
    %p168 = por %p166, %p167
    %p169 = scmp.ne.s32.totalorder %s157, %s158
    %p170 = scmp.eq.s32.totalorder %s20, 1
    %p171 = por %p169, %p170
    %p173 = scmp.ne.s32.totalorder %s158, %s172
    %p174 = scmp.eq.s32.totalorder %s20, 0
    %p175 = por %p173, %p174
    %s177 = sadd.s32 %s176, 1
    %p180 = scmp.eq.s32.totalorder %s14, 1
    %p181 = scmp.ne.s32.totalorder %s176, %s178
    %p182 = scmp.eq.s32.totalorder %s14, 0
    %p183 = por %p181, %p182
    %p184 = scmp.ne.s32.totalorder %s176, %s178
    %p185 = scmp.eq.s32.totalorder %s19, 1
    %p186 = por %p184, %p185
    %p187 = scmp.ne.s32.totalorder %s178, %s179
    %p188 = scmp.eq.s32.totalorder %s19, 0
    %p189 = por %p187, %p188
    %p190 = scmp.ne.s32.totalorder %s178, %s179
    %p191 = scmp.eq.s32.totalorder %s20, 1
    %p192 = por %p190, %p191
    %p194 = scmp.ne.s32.totalorder %s179, %s193
    %p195 = scmp.eq.s32.totalorder %s20, 0
    %p196 = por %p194, %p195
    %s197 = ssub.s32 %s21, %s33
    %s198 = ssub.s32 %s22, %s29
    %s199 = sor.u32 %s197, %s198
    %p200 = scmp.eq.s32.totalorder %s199, 0
    %s202 = sadd.s32 %s201, 1
    %s203 = scalar_select %p200, %s201, %s202
    %p206 = pneg %p200
    %p207 = scmp.eq.s32.totalorder %s14, 1
    %p208 = por %p206, %p207
    %p209 = scmp.ne.s32.totalorder %s201, %s204
    %p210 = scmp.eq.s32.totalorder %s14, 0
    %p211 = por %p209, %p210
    %p212 = scmp.ne.s32.totalorder %s201, %s204
    %p213 = scmp.eq.s32.totalorder %s19, 1
    %p214 = por %p212, %p213
    %p215 = scmp.ne.s32.totalorder %s204, %s205
    %p216 = scmp.eq.s32.totalorder %s19, 0
    %p217 = por %p215, %p216
    %p218 = scmp.ne.s32.totalorder %s204, %s205
    %p219 = scmp.eq.s32.totalorder %s20, 1
    %p220 = por %p218, %p219
    %p222 = scmp.ne.s32.totalorder %s205, %s221
    %p223 = scmp.eq.s32.totalorder %s20, 0
    %p224 = por %p222, %p223
    %s225 = ssub.s32 %s21, %s33
    %s226 = ssub.s32 %s22, %s29
    %s227 = sor.u32 %s225, %s226
    %p228 = scmp.eq.s32.totalorder %s227, 0
    %s230 = sadd.s32 %s229, 1
    %s231 = scalar_select %p228, %s229, %s230
    %p234 = pneg %p228
    %p235 = scmp.eq.s32.totalorder %s14, 1
    %p236 = por %p234, %p235
    %p237 = scmp.ne.s32.totalorder %s229, %s232
    %p238 = scmp.eq.s32.totalorder %s14, 0
    %p239 = por %p237, %p238
    %p240 = scmp.ne.s32.totalorder %s229, %s232
    %p241 = scmp.eq.s32.totalorder %s19, 1
    %p242 = por %p240, %p241
    %p243 = scmp.ne.s32.totalorder %s232, %s233
    %p244 = scmp.eq.s32.totalorder %s19, 0
    %p245 = por %p243, %p244
    %p246 = scmp.ne.s32.totalorder %s232, %s233
    %p247 = scmp.eq.s32.totalorder %s20, 1
    %p248 = por %p246, %p247
    %p250 = scmp.ne.s32.totalorder %s233, %s249
    %p251 = scmp.eq.s32.totalorder %s20, 0
    %p252 = por %p250, %p251
    %p253 = scmp.le.s32.totalorder 1, %s14
    %p254 = scmp.lt.s32.totalorder %s14, 3
    %p255 = pnand %p253, %p254
    %p256 = pneg %p255
    // Predicated region
    $region9: #{double_conv_forward.3} parent=5 // pred_check
      _
    $region10: #{double_conv_forward.3} parent=5 // pred_check_branch
      %258 = sbr.rel (%p255) target = $region12
    $region11: #{double_conv_forward.3} parent=5 // pred_region
      %s259 = ssub.s32 %s14, 1
      // Predicated region
      $region13: #{double_conv_forward.3} parent=11 // pred_check
        %p260 = pneg %p147
      $region14: #{double_conv_forward.3} parent=11 // pred_check_branch
        %262 = sbr.rel (%p260) target = $region16
      $region15: #{double_conv_forward.3} parent=11 // pred_region
        _
      $region16: #{double_conv_forward.3} parent=11 // pred_fallthru
        _
      // Predicated region
      $region17: #{double_conv_forward.3} parent=11 // pred_check
        %p263 = pneg %p168
      $region18: #{double_conv_forward.3} parent=11 // pred_check_branch
        %265 = sbr.rel (%p263) target = $region20
      $region19: #{double_conv_forward.3} parent=11 // pred_region
        _
      $region20: #{double_conv_forward.3} parent=11 // pred_fallthru
        _
      // Predicated region
      $region21: #{double_conv_forward.3} parent=11 // pred_check
        %p266 = pneg %p189
      $region22: #{double_conv_forward.3} parent=11 // pred_check_branch
        %268 = sbr.rel (%p266) target = $region24
      $region23: #{double_conv_forward.3} parent=11 // pred_region
        _
      $region24: #{double_conv_forward.3} parent=11 // pred_fallthru
        _
    $region12: #{double_conv_forward.3} parent=5 // pred_fallthru
      _
    %p269 = scmp.lt.s32.totalorder %s14, 2
    // Predicated region
    $region25: #{double_conv_forward.3} parent=5 // pred_check
      %p270 = pneg %p269
    $region26: #{double_conv_forward.3} parent=5 // pred_check_branch
      %272 = sbr.rel (%p270) target = $region28
    $region27: #{double_conv_forward.3} parent=5 // pred_region
      // Predicated region
      $region29: #{double_conv_forward.3} parent=27 // pred_check
        %p273 = pneg %p56
      $region30: #{double_conv_forward.3} parent=27 // pred_check_branch
        %275 = sbr.rel (%p273) target = $region32
      $region31: #{double_conv_forward.3} parent=27 // pred_region
        %s276 = smul.u32 %s22, 16
        %s277 = ssub.s32 %s276, 1
        %p278 = scmp.gt.s32.totalorder %s277, 0
        %s279 = scalar_select %p278, %s277, 0
        %p280 = scmp.lt.s32.totalorder %s21, 1
        %s281 = scalar_select %p280, %s21, 1
        %p282 = scmp.lt.s32.totalorder %s279, 15
        %s283 = scalar_select %p282, %s279, 15
        %s284 = smul.addr %s283, 2
        %s285 = smul.addr %s281, 32
        %s286 = sadd.s32 %s284, %s285
        %s287 = smul.addr %s286, 4
        %s288 = scalar_lea.vmem %s0, %s287
        %s289 = smul.u32 %s22, 16
        %s290 = ssub.s32 %s289, 1
        %p291 = scmp.gt.s32.totalorder %s290, 0
        %s292 = scalar_select %p291, %s290, 0
      $region32: #{double_conv_forward.3} parent=27 // pred_fallthru
        _
      // Predicated region
      $region33: #{double_conv_forward.3} parent=27 // pred_check
        %p293 = pneg %p84
      $region34: #{double_conv_forward.3} parent=27 // pred_check_branch
        %295 = sbr.rel (%p293) target = $region36
      $region35: #{double_conv_forward.3} parent=27 // pred_region
        %s296 = smul.u32 16, %s22
        %p297 = scmp.lt.s32.totalorder %s21, 1
        %s298 = scalar_select %p297, %s21, 1
        %p299 = scmp.lt.s32.totalorder %s296, 15
        %s300 = scalar_select %p299, %s296, 15
        %s301 = smul.addr %s300, 2
        %s302 = smul.addr %s298, 32
        %s303 = sadd.s32 %s301, %s302
        %s304 = smul.addr %s303, 4
        %s305 = scalar_lea.vmem %s1, %s304
        %s306 = smul.u32 16, %s22
      $region36: #{double_conv_forward.3} parent=27 // pred_fallthru
        _
      // Predicated region
      $region37: #{double_conv_forward.3} parent=27 // pred_check
        %p307 = pneg %p120
      $region38: #{double_conv_forward.3} parent=27 // pred_check_branch
        %309 = sbr.rel (%p307) target = $region40
      $region39: #{double_conv_forward.3} parent=27 // pred_region
        %s310 = sadd.s32 %s22, 1
        %s311 = smul.u32 %s310, 16
        %p312 = scmp.lt.s32.totalorder %s311, 15
        %s313 = scalar_select %p312, %s311, 15
        %p314 = scmp.lt.s32.totalorder %s21, 1
        %s315 = scalar_select %p314, %s21, 1
        %p316 = scmp.lt.s32.totalorder %s313, 15
        %s317 = scalar_select %p316, %s313, 15
        %s318 = smul.addr %s317, 2
        %s319 = smul.addr %s315, 32
        %s320 = sadd.s32 %s318, %s319
        %s321 = smul.addr %s320, 4
        %s322 = scalar_lea.vmem %s2, %s321
        %s323 = sadd.s32 %s22, 1
        %s324 = smul.u32 %s323, 16
        %p325 = scmp.lt.s32.totalorder %s324, 15
        %s326 = scalar_select %p325, %s324, 15
      $region40: #{double_conv_forward.3} parent=27 // pred_fallthru
        _
    $region28: #{double_conv_forward.3} parent=5 // pred_fallthru
      _
    %p327 = scmp.le.s32.totalorder 1, %s14
    %p328 = scmp.lt.s32.totalorder %s14, 3
    %p329 = pnand %p327, %p328
    %p330 = pneg %p329
    // Predicated region
    $region41: #{double_conv_forward.3} parent=5 // pred_check
      _
    $region42: #{double_conv_forward.3} parent=5 // pred_check_branch
      %332 = sbr.rel (%p329) target = $region44
    $region43: #{double_conv_forward.3} parent=5 // pred_region
      %s333 = ssub.s32 %s14, 1
      %s334 = smul.u32 %s24, 16
      %s335 = ssub.s32 %s334, 1
      %p336 = scmp.gt.s32.totalorder %s335, 0
      %s337 = scalar_select %p336, %s335, 0
      %p338 = scmp.lt.s32.totalorder %s23, 1
      %s339 = scalar_select %p338, %s23, 1
      %p340 = scmp.lt.s32.totalorder %s337, 15
      %s341 = scalar_select %p340, %s337, 15
      %s342 = smul.addr %s341, 2
      %s343 = smul.addr %s339, 32
      %s344 = sadd.s32 %s342, %s343
      %s345 = smul.addr %s344, 4
      %s346 = scalar_lea.vmem %s0, %s345
      %p347 = pneg %p62
      %p348 = pneg %p59
      %s349 = smul.u32 16, %s24
      %p350 = scmp.lt.s32.totalorder %s23, 1
      %s351 = scalar_select %p350, %s23, 1
      %p352 = scmp.lt.s32.totalorder %s349, 15
      %s353 = scalar_select %p352, %s349, 15
      %s354 = smul.addr %s353, 2
      %s355 = smul.addr %s351, 32
      %s356 = sadd.s32 %s354, %s355
      %s357 = smul.addr %s356, 4
      %s358 = scalar_lea.vmem %s1, %s357
      %p359 = pneg %p90
      %p360 = pneg %p87
      %s361 = sadd.s32 %s24, 1
      %s362 = smul.u32 %s361, 16
      %p363 = scmp.lt.s32.totalorder %s362, 15
      %s364 = scalar_select %p363, %s362, 15
      %p365 = scmp.lt.s32.totalorder %s23, 1
      %s366 = scalar_select %p365, %s23, 1
      %p367 = scmp.lt.s32.totalorder %s364, 15
      %s368 = scalar_select %p367, %s364, 15
      %s369 = smul.addr %s368, 2
      %s370 = smul.addr %s366, 32
      %s371 = sadd.s32 %s369, %s370
      %s372 = smul.addr %s371, 4
      %s373 = scalar_lea.vmem %s2, %s372
      %p374 = pneg %p126
      %p375 = pneg %p123
      %p376 = pneg %p147
      %p377 = pneg %p144
      %p378 = pneg %p168
      %p379 = pneg %p165
      %p380 = pneg %p189
      %p381 = pneg %p186
      %p382 = pneg %p217
      %p383 = pneg %p214
      %s384 = smul.u32 16, %s24
      %p385 = scmp.lt.s32.totalorder %s23, 1
      %s386 = scalar_select %p385, %s23, 1
      %p387 = scmp.lt.s32.totalorder %s384, 15
      %s388 = scalar_select %p387, %s384, 15
      %s389 = smul.addr %s388, 2
      %s390 = smul.addr %s386, 32
      %s391 = sadd.s32 %s389, %s390
      %s392 = smul.addr %s391, 4
      %s393 = scalar_lea.vmem %s6, %s392
      %p394 = pneg %p245
      %p395 = pneg %p242
      %p396 = scmp.lt.s32.totalorder %s23, 1
      %s397 = scalar_select %p396, %s23, 1
      %p398 = scmp.lt.s32.totalorder %s24, 0
      %s399 = scalar_select %p398, %s24, 0
      %s400 = sadd.s32 %s399, %s397
      %s401 = smul.addr %s400, 2
      %s402 = scalar_lea.vmem %s7, %s401
      %s403 = smul.u32 %s24, 16
      %s404 = ssub.s32 %s403, 1
      %p405 = scmp.gt.s32.totalorder %s404, 0
      %s406 = scalar_select %p405, %s404, 0
      %p407 = scmp.lt.s32.totalorder %s23, 1
      %s408 = scalar_select %p407, %s23, 1
      %p409 = scmp.lt.s32.totalorder %s406, 15
      %s410 = scalar_select %p409, %s406, 15
      %s411 = smul.addr %s410, 2
      %s412 = smul.addr %s408, 32
      %s413 = sadd.s32 %s411, %s412
      %s414 = smul.addr %s413, 4
      %s415 = scalar_lea.vmem %s0, %s414
      %s416 = smul.u32 %s24, 16
      %s417 = ssub.s32 %s416, 1
      %p418 = scmp.gt.s32.totalorder %s417, 0
      %s419 = scalar_select %p418, %s417, 0
      %s420 = smul.u32 16, %s24
      %p421 = scmp.lt.s32.totalorder %s23, 1
      %s422 = scalar_select %p421, %s23, 1
      %p423 = scmp.lt.s32.totalorder %s420, 15
      %s424 = scalar_select %p423, %s420, 15
      %s425 = smul.addr %s424, 2
      %s426 = smul.addr %s422, 32
      %s427 = sadd.s32 %s425, %s426
      %s428 = smul.addr %s427, 4
      %s429 = scalar_lea.vmem %s1, %s428
      %s430 = smul.u32 16, %s24
      %s431 = sadd.s32 %s24, 1
      %s432 = smul.u32 %s431, 16
      %p433 = scmp.lt.s32.totalorder %s432, 15
      %s434 = scalar_select %p433, %s432, 15
      %p435 = scmp.lt.s32.totalorder %s23, 1
      %s436 = scalar_select %p435, %s23, 1
      %p437 = scmp.lt.s32.totalorder %s434, 15
      %s438 = scalar_select %p437, %s434, 15
      %s439 = smul.addr %s438, 2
      %s440 = smul.addr %s436, 32
      %s441 = sadd.s32 %s439, %s440
      %s442 = smul.addr %s441, 4
      %s443 = scalar_lea.vmem %s2, %s442
      %s444 = sadd.s32 %s24, 1
      %s445 = smul.u32 %s444, 16
      %p446 = scmp.lt.s32.totalorder %s445, 15
      %s447 = scalar_select %p446, %s445, 15
      %s448 = smul.u32 16, %s24
      %p449 = scmp.lt.s32.totalorder %s23, 1
      %s450 = scalar_select %p449, %s23, 1
      %p451 = scmp.lt.s32.totalorder %s448, 15
      %s452 = scalar_select %p451, %s448, 15
      %s453 = smul.addr %s452, 2
      %s454 = smul.addr %s450, 32
      %s455 = sadd.s32 %s453, %s454
      %s456 = smul.addr %s455, 4
      %s457 = scalar_lea.vmem %s6, %s456
      %s458 = smul.u32 16, %s24
      %p459 = scmp.lt.s32.totalorder %s23, 1
      %s460 = scalar_select %p459, %s23, 1
      %p461 = scmp.lt.s32.totalorder %s24, 0
      %s462 = scalar_select %p461, %s24, 0
      %s463 = sadd.s32 %s462, %s460
      %s464 = smul.addr %s463, 2
      %s465 = scalar_lea.vmem %s7, %s464
      %p467 = scmp.gt.s32.totalorder %s24, 0
      %s468 = scalar_select %p467, 1.0, 0.0
      %p470 = scmp.ne.f32.partialorder %s468, %s468
      %s471 = sshrl.u32 %s468, 16
      %s472 = sand.u32 %s471, 1
      %s473 = sadd.s32 32767, %s472
      %s474 = sadd.s32 %s468, %s473
      %s475 = sand.u32 %s474, 4294901760
      %s476 = scalar_select %p470, 2143289344, %s475
      %s478 = sshrl.u32 %s476, 16
      %p479 = scmp.lt.s32.totalorder %s24, 0
      %s480 = scalar_select %p479, 1.0, 0.0
      %p482 = scmp.ne.f32.partialorder %s480, %s480
      %s483 = sshrl.u32 %s480, 16
      %s484 = sand.u32 %s483, 1
      %s485 = sadd.s32 32767, %s484
      %s486 = sadd.s32 %s480, %s485
      %s487 = sand.u32 %s486, 4294901760
      %s488 = scalar_select %p482, 2143289344, %s487
      %s490 = sshrl.u32 %s488, 16
      %491 = vst [vmem:[#allocation2] sm:$0xf] 0
      %492 = vst [vmem:[#allocation2 + $0x4] sm:$0xf] 0
      %493 = vst [vmem:[#allocation2 + $0x8] sm:$0x1] 0
      %494 = vst [vmem:[#allocation2 + $0xc] sm:$0xf] 0
      %495 = vst [vmem:[#allocation2 + $0x10] sm:$0xf] 0
      %496 = vst [vmem:[#allocation2 + $0x14] sm:$0x1] 0
      %497 = vst [vmem:[#allocation2 + $0x18] sm:$0xf] 0
      %498 = vst [vmem:[#allocation2 + $0x1c] sm:$0xf] 0
      %499 = vst [vmem:[#allocation2 + $0x20] sm:$0x1] 0
      %500 = vst [vmem:[#allocation2 + $0x24] sm:$0xf] 0
      %501 = vst [vmem:[#allocation2 + $0x28] sm:$0xf] 0
      %502 = vst [vmem:[#allocation2 + $0x2c] sm:$0x1] 0
      %503 = vst [vmem:[#allocation2 + $0x30] sm:$0xf] 0
      %504 = vst [vmem:[#allocation2 + $0x34] sm:$0xf] 0
      %505 = vst [vmem:[#allocation2 + $0x38] sm:$0x1] 0
      %506 = vst [vmem:[#allocation2 + $0x3c] sm:$0xf] 0
      %507 = vst [vmem:[#allocation2 + $0x40] sm:$0xf] 0
      %508 = vst [vmem:[#allocation2 + $0x44] sm:$0x1] 0
      %509 = vst [vmem:[#allocation2 + $0x48] sm:$0xf] 0
      %510 = vst [vmem:[#allocation2 + $0x4c] sm:$0xf] 0
      %511 = vst [vmem:[#allocation2 + $0x50] sm:$0x1] 0
      %512 = vst [vmem:[#allocation2 + $0x54] sm:$0xf] 0
      %513 = vst [vmem:[#allocation2 + $0x58] sm:$0xf] 0
      %514 = vst [vmem:[#allocation2 + $0x5c] sm:$0x1] 0
      %515 = vst [vmem:[#allocation2 + $0x60] sm:$0xf] 0
      %516 = vst [vmem:[#allocation2 + $0x64] sm:$0xf] 0
      %517 = vst [vmem:[#allocation2 + $0x68] sm:$0x1] 0
      %518 = vst [vmem:[#allocation2 + $0x6c] sm:$0xf] 0
      %519 = vst [vmem:[#allocation2 + $0x70] sm:$0xf] 0
      %520 = vst [vmem:[#allocation2 + $0x74] sm:$0x1] 0
      %521 = vst [vmem:[#allocation2 + $0x78] sm:$0xf] 0
      %522 = vst [vmem:[#allocation2 + $0x7c] sm:$0xf] 0
      %523 = vst [vmem:[#allocation2 + $0x80] sm:$0x1] 0
      %524 = vst [vmem:[#allocation2 + $0x84] sm:$0xf] 0
      %525 = vst [vmem:[#allocation2 + $0x88] sm:$0xf] 0
      %526 = vst [vmem:[#allocation2 + $0x8c] sm:$0x1] 0
      %527 = vst [vmem:[#allocation2 + $0x90] sm:$0xf] 0
      %528 = vst [vmem:[#allocation2 + $0x94] sm:$0xf] 0
      %529 = vst [vmem:[#allocation2 + $0x98] sm:$0x1] 0
      %530 = vst [vmem:[#allocation2 + $0x9c] sm:$0xf] 0
      %531 = vst [vmem:[#allocation2 + $0xa0] sm:$0xf] 0
      %532 = vst [vmem:[#allocation2 + $0xa4] sm:$0x1] 0
      %533 = vst [vmem:[#allocation2 + $0xa8] sm:$0xf] 0
      %534 = vst [vmem:[#allocation2 + $0xac] sm:$0xf] 0
      %535 = vst [vmem:[#allocation2 + $0xb0] sm:$0x1] 0
      %536 = vst [vmem:[#allocation2 + $0xb4] sm:$0xf] 0
      %537 = vst [vmem:[#allocation2 + $0xb8] sm:$0xf] 0
      %538 = vst [vmem:[#allocation2 + $0xbc] sm:$0x1] 0
      %539 = vst [vmem:[#allocation2 + $0xc0] sm:$0xf] 0
      %540 = vst [vmem:[#allocation2 + $0xc4] sm:$0xf] 0
      %541 = vst [vmem:[#allocation2 + $0xc8] sm:$0x1] 0
      %542 = vst [vmem:[#allocation2 + $0xcc] sm:$0xf] 0
      %543 = vst [vmem:[#allocation2 + $0xd0] sm:$0xf] 0
      %544 = vst [vmem:[#allocation2 + $0xd4] sm:$0x1] 0
      %v545 = vld [vmem:[%s415] sm:$0xf]
      %v546 = vld [vmem:[%s415 + $0x4] sm:$0xf]
      %s547 = sshll.u32 %s478, 16
      %s548 = sor.u32 %s478, %s547
      %v549 = vstv %s548
      %v551 = vunpack.c.l.bf16 %v545
      %v552 = vunpack.c.l.bf16 %v546
      %v553 = vunpack.c.l.bf16 %v549
      %v554 = vmul.f32 %v551, %v553
      %v555 = vmul.f32 %v552, %v553
      %v556 = vpack.c.bf16 %v554, %v554
      %v557 = vpack.c.bf16 %v555, %v555
      %vm558 = vsmask.f32 256
      %vm559 = vsmask.f32 4368
      %vm560 = vmor %vm558, %vm559
      %v562 = vshrl.u32 %v556, 16
      %v564 = vrot.slane %v562, 7
      %v565 = vshll.u32 %v556, 16
      %v567 = vor.u32 %v564, %v565
      %v568 = vrot.slane %v564, 4
      %v570 = vshrl.u32 %v557, 16
      %v572 = vrot.slane %v570, 7
      %v573 = vshll.u32 %v557, 16
      %v575 = vor.u32 %v572, %v573
      %v576 = vsel %vm560, %v568, %v575
      %v577 = vrot.slane %v572, 4
      %vm581 = vcmask 1043456
      %vm582 = vsmask.f32 7938
      %vm583 = vmand %vm581, %vm582
      %v584 = vld [vmem:[#allocation2] sm:$0xf]
      %v585 = vsel %vm583, %v567, %v584
      %586 = vst [vmem:[#allocation2] sm:$0xf] %v585
      %587 = vst [vmem:[#allocation2 + $0x4] sm:$0xf] %v576
      %vm588 = vcmask 1040384
      %vm589 = vmand %vm588, %vm558
      %v590 = vld [vmem:[#allocation2 + $0x8] sm:$0x1]
      %v591 = vsel %vm589, %v577, %v590
      %592 = vst [vmem:[#allocation2 + $0x8] sm:$0x1] %v591
      %v593 = vld [vmem:[%s429] sm:$0xf]
      %v594 = vld [vmem:[%s429 + $0x4] sm:$0xf]
      %v595 = vld [vmem:[%s429 + $0x8] sm:$0xf]
      %v596 = vld [vmem:[%s429 + $0xc] sm:$0xf]
      %v597 = vld [vmem:[%s429 + $0x10] sm:$0xf]
      %v598 = vld [vmem:[%s429 + $0x14] sm:$0xf]
      %v599 = vld [vmem:[%s429 + $0x18] sm:$0xf]
      %v600 = vld [vmem:[%s429 + $0x1c] sm:$0xf]
      %v601 = vld [vmem:[%s429 + $0x20] sm:$0xf]
      %v602 = vld [vmem:[%s429 + $0x24] sm:$0xf]
      %v603 = vld [vmem:[%s429 + $0x28] sm:$0xf]
      %v604 = vld [vmem:[%s429 + $0x2c] sm:$0xf]
      %v605 = vld [vmem:[%s429 + $0x30] sm:$0xf]
      %v606 = vld [vmem:[%s429 + $0x34] sm:$0xf]
      %v607 = vld [vmem:[%s429 + $0x38] sm:$0xf]
      %v608 = vld [vmem:[%s429 + $0x3c] sm:$0xf]
      %v609 = vld [vmem:[%s429 + $0x40] sm:$0xf]
      %v610 = vld [vmem:[%s429 + $0x44] sm:$0xf]
      %v611 = vld [vmem:[%s429 + $0x48] sm:$0xf]
      %v612 = vld [vmem:[%s429 + $0x4c] sm:$0xf]
      %v613 = vld [vmem:[%s429 + $0x50] sm:$0xf]
      %v614 = vld [vmem:[%s429 + $0x54] sm:$0xf]
      %v615 = vld [vmem:[%s429 + $0x58] sm:$0xf]
      %v616 = vld [vmem:[%s429 + $0x5c] sm:$0xf]
      %v617 = vld [vmem:[%s429 + $0x60] sm:$0xf]
      %v618 = vld [vmem:[%s429 + $0x64] sm:$0xf]
      %v619 = vld [vmem:[%s429 + $0x68] sm:$0xf]
      %v620 = vld [vmem:[%s429 + $0x6c] sm:$0xf]
      %v621 = vld [vmem:[%s429 + $0x70] sm:$0xf]
      %v622 = vld [vmem:[%s429 + $0x74] sm:$0xf]
      %v623 = vld [vmem:[%s429 + $0x78] sm:$0xf]
      %v624 = vld [vmem:[%s429 + $0x7c] sm:$0xf]
      %v626 = vshrl.u32 %v593, 16
      %v628 = vrot.slane %v626, 7
      %v629 = vshll.u32 %v593, 16
      %v631 = vor.u32 %v628, %v629
      %v632 = vrot.slane %v628, 4
      %v634 = vshrl.u32 %v594, 16
      %v636 = vrot.slane %v634, 7
      %v637 = vshll.u32 %v594, 16
      %v639 = vor.u32 %v636, %v637
      %v640 = vsel %vm560, %v632, %v639
      %v641 = vrot.slane %v636, 4
      %v643 = vshrl.u32 %v595, 16
      %v645 = vrot.slane %v643, 7
      %v646 = vshll.u32 %v595, 16
      %v648 = vor.u32 %v645, %v646
      %v649 = vrot.slane %v645, 4
      %v651 = vshrl.u32 %v596, 16
      %v653 = vrot.slane %v651, 7
      %v654 = vshll.u32 %v596, 16
      %v656 = vor.u32 %v653, %v654
      %v657 = vsel %vm560, %v649, %v656
      %v658 = vrot.slane %v653, 4
      %v660 = vshrl.u32 %v597, 16
      %v662 = vrot.slane %v660, 7
      %v663 = vshll.u32 %v597, 16
      %v665 = vor.u32 %v662, %v663
      %v666 = vrot.slane %v662, 4
      %v668 = vshrl.u32 %v598, 16
      %v670 = vrot.slane %v668, 7
      %v671 = vshll.u32 %v598, 16
      %v673 = vor.u32 %v670, %v671
      %v674 = vsel %vm560, %v666, %v673
      %v675 = vrot.slane %v670, 4
      %v677 = vshrl.u32 %v599, 16
      %v679 = vrot.slane %v677, 7
      %v680 = vshll.u32 %v599, 16
      %v682 = vor.u32 %v679, %v680
      %v683 = vrot.slane %v679, 4
      %v685 = vshrl.u32 %v600, 16
      %v687 = vrot.slane %v685, 7
      %v688 = vshll.u32 %v600, 16
      %v690 = vor.u32 %v687, %v688
      %v691 = vsel %vm560, %v683, %v690
      %v692 = vrot.slane %v687, 4
      %v694 = vshrl.u32 %v601, 16
      %v696 = vrot.slane %v694, 7
      %v697 = vshll.u32 %v601, 16
      %v699 = vor.u32 %v696, %v697
      %v700 = vrot.slane %v696, 4
      %v702 = vshrl.u32 %v602, 16
      %v704 = vrot.slane %v702, 7
      %v705 = vshll.u32 %v602, 16
      %v707 = vor.u32 %v704, %v705
      %v708 = vsel %vm560, %v700, %v707
      %v709 = vrot.slane %v704, 4
      %v711 = vshrl.u32 %v603, 16
      %v713 = vrot.slane %v711, 7
      %v714 = vshll.u32 %v603, 16
      %v716 = vor.u32 %v713, %v714
      %v717 = vrot.slane %v713, 4
      %v719 = vshrl.u32 %v604, 16
      %v721 = vrot.slane %v719, 7
      %v722 = vshll.u32 %v604, 16
      %v724 = vor.u32 %v721, %v722
      %v725 = vsel %vm560, %v717, %v724
      %v726 = vrot.slane %v721, 4
      %v728 = vshrl.u32 %v605, 16
      %v730 = vrot.slane %v728, 7
      %v731 = vshll.u32 %v605, 16
      %v733 = vor.u32 %v730, %v731
      %v734 = vrot.slane %v730, 4
      %v736 = vshrl.u32 %v606, 16
      %v738 = vrot.slane %v736, 7
      %v739 = vshll.u32 %v606, 16
      %v741 = vor.u32 %v738, %v739
      %v742 = vsel %vm560, %v734, %v741
      %v743 = vrot.slane %v738, 4
      %v745 = vshrl.u32 %v607, 16
      %v747 = vrot.slane %v745, 7
      %v748 = vshll.u32 %v607, 16
      %v750 = vor.u32 %v747, %v748
      %v751 = vrot.slane %v747, 4
      %v753 = vshrl.u32 %v608, 16
      %v755 = vrot.slane %v753, 7
      %v756 = vshll.u32 %v608, 16
      %v758 = vor.u32 %v755, %v756
      %v759 = vsel %vm560, %v751, %v758
      %v760 = vrot.slane %v755, 4
      %v762 = vshrl.u32 %v609, 16
      %v764 = vrot.slane %v762, 7
      %v765 = vshll.u32 %v609, 16
      %v767 = vor.u32 %v764, %v765
      %v768 = vrot.slane %v764, 4
      %v770 = vshrl.u32 %v610, 16
      %v772 = vrot.slane %v770, 7
      %v773 = vshll.u32 %v610, 16
      %v775 = vor.u32 %v772, %v773
      %v776 = vsel %vm560, %v768, %v775
      %v777 = vrot.slane %v772, 4
      %v779 = vshrl.u32 %v611, 16
      %v781 = vrot.slane %v779, 7
      %v782 = vshll.u32 %v611, 16
      %v784 = vor.u32 %v781, %v782
      %v785 = vrot.slane %v781, 4
      %v787 = vshrl.u32 %v612, 16
      %v789 = vrot.slane %v787, 7
      %v790 = vshll.u32 %v612, 16
      %v792 = vor.u32 %v789, %v790
      %v793 = vsel %vm560, %v785, %v792
      %v794 = vrot.slane %v789, 4
      %v796 = vshrl.u32 %v613, 16
      %v798 = vrot.slane %v796, 7
      %v799 = vshll.u32 %v613, 16
      %v801 = vor.u32 %v798, %v799
      %v802 = vrot.slane %v798, 4
      %v804 = vshrl.u32 %v614, 16
      %v806 = vrot.slane %v804, 7
      %v807 = vshll.u32 %v614, 16
      %v809 = vor.u32 %v806, %v807
      %v810 = vsel %vm560, %v802, %v809
      %v811 = vrot.slane %v806, 4
      %v813 = vshrl.u32 %v615, 16
      %v815 = vrot.slane %v813, 7
      %v816 = vshll.u32 %v615, 16
      %v818 = vor.u32 %v815, %v816
      %v819 = vrot.slane %v815, 4
      %v821 = vshrl.u32 %v616, 16
      %v823 = vrot.slane %v821, 7
      %v824 = vshll.u32 %v616, 16
      %v826 = vor.u32 %v823, %v824
      %v827 = vsel %vm560, %v819, %v826
      %v828 = vrot.slane %v823, 4
      %v830 = vshrl.u32 %v617, 16
      %v832 = vrot.slane %v830, 7
      %v833 = vshll.u32 %v617, 16
      %v835 = vor.u32 %v832, %v833
      %v836 = vrot.slane %v832, 4
      %v838 = vshrl.u32 %v618, 16
      %v840 = vrot.slane %v838, 7
      %v841 = vshll.u32 %v618, 16
      %v843 = vor.u32 %v840, %v841
      %v844 = vsel %vm560, %v836, %v843
      %v845 = vrot.slane %v840, 4
      %v847 = vshrl.u32 %v619, 16
      %v849 = vrot.slane %v847, 7
      %v850 = vshll.u32 %v619, 16
      %v852 = vor.u32 %v849, %v850
      %v853 = vrot.slane %v849, 4
      %v855 = vshrl.u32 %v620, 16
      %v857 = vrot.slane %v855, 7
      %v858 = vshll.u32 %v620, 16
      %v860 = vor.u32 %v857, %v858
      %v861 = vsel %vm560, %v853, %v860
      %v862 = vrot.slane %v857, 4
      %v864 = vshrl.u32 %v621, 16
      %v866 = vrot.slane %v864, 7
      %v867 = vshll.u32 %v621, 16
      %v869 = vor.u32 %v866, %v867
      %v870 = vrot.slane %v866, 4
      %v872 = vshrl.u32 %v622, 16
      %v874 = vrot.slane %v872, 7
      %v875 = vshll.u32 %v622, 16
      %v877 = vor.u32 %v874, %v875
      %v878 = vsel %vm560, %v870, %v877
      %v879 = vrot.slane %v874, 4
      %v881 = vshrl.u32 %v623, 16
      %v883 = vrot.slane %v881, 7
      %v884 = vshll.u32 %v623, 16
      %v886 = vor.u32 %v883, %v884
      %v887 = vrot.slane %v883, 4
      %v889 = vshrl.u32 %v624, 16
      %v891 = vrot.slane %v889, 7
      %v892 = vshll.u32 %v624, 16
      %v894 = vor.u32 %v891, %v892
      %v895 = vsel %vm560, %v887, %v894
      %v896 = vrot.slane %v891, 4
      %s945 = scalar_lea.vmem [#allocation2], 12
      %v946 = vld [vmem:[%s945] sm:$0xf]
      %v947 = vsel %vm583, %v631, %v946
      %948 = vst [vmem:[%s945] sm:$0xf] %v947
      %949 = vst [vmem:[%s945 + $0x4] sm:$0xf] %v640
      %v950 = vld [vmem:[%s945 + $0x8] sm:$0x1]
      %v951 = vsel %vm589, %v641, %v950
      %952 = vst [vmem:[%s945 + $0x8] sm:$0x1] %v951
      %v953 = vld [vmem:[%s945 + $0xc] sm:$0xf]
      %v954 = vsel %vm583, %v648, %v953
      %955 = vst [vmem:[%s945 + $0xc] sm:$0xf] %v954
      %956 = vst [vmem:[%s945 + $0x10] sm:$0xf] %v657
      %v957 = vld [vmem:[%s945 + $0x14] sm:$0x1]
      %v958 = vsel %vm589, %v658, %v957
      %959 = vst [vmem:[%s945 + $0x14] sm:$0x1] %v958
      %v960 = vld [vmem:[%s945 + $0x18] sm:$0xf]
      %v961 = vsel %vm583, %v665, %v960
      %962 = vst [vmem:[%s945 + $0x18] sm:$0xf] %v961
      %963 = vst [vmem:[%s945 + $0x1c] sm:$0xf] %v674
      %v964 = vld [vmem:[%s945 + $0x20] sm:$0x1]
      %v965 = vsel %vm589, %v675, %v964
      %966 = vst [vmem:[%s945 + $0x20] sm:$0x1] %v965
      %v967 = vld [vmem:[%s945 + $0x24] sm:$0xf]
      %v968 = vsel %vm583, %v682, %v967
      %969 = vst [vmem:[%s945 + $0x24] sm:$0xf] %v968
      %970 = vst [vmem:[%s945 + $0x28] sm:$0xf] %v691
      %v971 = vld [vmem:[%s945 + $0x2c] sm:$0x1]
      %v972 = vsel %vm589, %v692, %v971
      %973 = vst [vmem:[%s945 + $0x2c] sm:$0x1] %v972
      %v974 = vld [vmem:[%s945 + $0x30] sm:$0xf]
      %v975 = vsel %vm583, %v699, %v974
      %976 = vst [vmem:[%s945 + $0x30] sm:$0xf] %v975
      %977 = vst [vmem:[%s945 + $0x34] sm:$0xf] %v708
      %v978 = vld [vmem:[%s945 + $0x38] sm:$0x1]
      %v979 = vsel %vm589, %v709, %v978
      %980 = vst [vmem:[%s945 + $0x38] sm:$0x1] %v979
      %v981 = vld [vmem:[%s945 + $0x3c] sm:$0xf]
      %v982 = vsel %vm583, %v716, %v981
      %983 = vst [vmem:[%s945 + $0x3c] sm:$0xf] %v982
      %984 = vst [vmem:[%s945 + $0x40] sm:$0xf] %v725
      %v985 = vld [vmem:[%s945 + $0x44] sm:$0x1]
      %v986 = vsel %vm589, %v726, %v985
      %987 = vst [vmem:[%s945 + $0x44] sm:$0x1] %v986
      %v988 = vld [vmem:[%s945 + $0x48] sm:$0xf]
      %v989 = vsel %vm583, %v733, %v988
      %990 = vst [vmem:[%s945 + $0x48] sm:$0xf] %v989
      %991 = vst [vmem:[%s945 + $0x4c] sm:$0xf] %v742
      %v992 = vld [vmem:[%s945 + $0x50] sm:$0x1]
      %v993 = vsel %vm589, %v743, %v992
      %994 = vst [vmem:[%s945 + $0x50] sm:$0x1] %v993
      %v995 = vld [vmem:[%s945 + $0x54] sm:$0xf]
      %v996 = vsel %vm583, %v750, %v995
      %997 = vst [vmem:[%s945 + $0x54] sm:$0xf] %v996
      %998 = vst [vmem:[%s945 + $0x58] sm:$0xf] %v759
      %v999 = vld [vmem:[%s945 + $0x5c] sm:$0x1]
      %v1000 = vsel %vm589, %v760, %v999
      %1001 = vst [vmem:[%s945 + $0x5c] sm:$0x1] %v1000
      %v1002 = vld [vmem:[%s945 + $0x60] sm:$0xf]
      %v1003 = vsel %vm583, %v767, %v1002
      %1004 = vst [vmem:[%s945 + $0x60] sm:$0xf] %v1003
      %1005 = vst [vmem:[%s945 + $0x64] sm:$0xf] %v776
      %v1006 = vld [vmem:[%s945 + $0x68] sm:$0x1]
      %v1007 = vsel %vm589, %v777, %v1006
      %1008 = vst [vmem:[%s945 + $0x68] sm:$0x1] %v1007
      %v1009 = vld [vmem:[%s945 + $0x6c] sm:$0xf]
      %v1010 = vsel %vm583, %v784, %v1009
      %1011 = vst [vmem:[%s945 + $0x6c] sm:$0xf] %v1010
      %1012 = vst [vmem:[%s945 + $0x70] sm:$0xf] %v793
      %v1013 = vld [vmem:[%s945 + $0x74] sm:$0x1]
      %v1014 = vsel %vm589, %v794, %v1013
      %1015 = vst [vmem:[%s945 + $0x74] sm:$0x1] %v1014
      %v1016 = vld [vmem:[%s945 + $0x78] sm:$0xf]
      %v1017 = vsel %vm583, %v801, %v1016
      %1018 = vst [vmem:[%s945 + $0x78] sm:$0xf] %v1017
      %1019 = vst [vmem:[%s945 + $0x7c] sm:$0xf] %v810
      %v1020 = vld [vmem:[%s945 + $0x80] sm:$0x1]
      %v1021 = vsel %vm589, %v811, %v1020
      %1022 = vst [vmem:[%s945 + $0x80] sm:$0x1] %v1021
      %v1023 = vld [vmem:[%s945 + $0x84] sm:$0xf]
      %v1024 = vsel %vm583, %v818, %v1023
      %1025 = vst [vmem:[%s945 + $0x84] sm:$0xf] %v1024
      %1026 = vst [vmem:[%s945 + $0x88] sm:$0xf] %v827
      %v1027 = vld [vmem:[%s945 + $0x8c] sm:$0x1]
      %v1028 = vsel %vm589, %v828, %v1027
      %1029 = vst [vmem:[%s945 + $0x8c] sm:$0x1] %v1028
      %v1030 = vld [vmem:[%s945 + $0x90] sm:$0xf]
      %v1031 = vsel %vm583, %v835, %v1030
      %1032 = vst [vmem:[%s945 + $0x90] sm:$0xf] %v1031
      %1033 = vst [vmem:[%s945 + $0x94] sm:$0xf] %v844
      %v1034 = vld [vmem:[%s945 + $0x98] sm:$0x1]
      %v1035 = vsel %vm589, %v845, %v1034
      %1036 = vst [vmem:[%s945 + $0x98] sm:$0x1] %v1035
      %v1037 = vld [vmem:[%s945 + $0x9c] sm:$0xf]
      %v1038 = vsel %vm583, %v852, %v1037
      %1039 = vst [vmem:[%s945 + $0x9c] sm:$0xf] %v1038
      %1040 = vst [vmem:[%s945 + $0xa0] sm:$0xf] %v861
      %v1041 = vld [vmem:[%s945 + $0xa4] sm:$0x1]
      %v1042 = vsel %vm589, %v862, %v1041
      %1043 = vst [vmem:[%s945 + $0xa4] sm:$0x1] %v1042
      %v1044 = vld [vmem:[%s945 + $0xa8] sm:$0xf]
      %v1045 = vsel %vm583, %v869, %v1044
      %1046 = vst [vmem:[%s945 + $0xa8] sm:$0xf] %v1045
      %1047 = vst [vmem:[%s945 + $0xac] sm:$0xf] %v878
      %v1048 = vld [vmem:[%s945 + $0xb0] sm:$0x1]
      %v1049 = vsel %vm589, %v879, %v1048
      %1050 = vst [vmem:[%s945 + $0xb0] sm:$0x1] %v1049
      %v1051 = vld [vmem:[%s945 + $0xb4] sm:$0xf]
      %v1052 = vsel %vm583, %v886, %v1051
      %1053 = vst [vmem:[%s945 + $0xb4] sm:$0xf] %v1052
      %1054 = vst [vmem:[%s945 + $0xb8] sm:$0xf] %v895
      %v1055 = vld [vmem:[%s945 + $0xbc] sm:$0x1]
      %v1056 = vsel %vm589, %v896, %v1055
      %1057 = vst [vmem:[%s945 + $0xbc] sm:$0x1] %v1056
      %v1058 = vld [vmem:[%s443] sm:$0xf]
      %v1059 = vld [vmem:[%s443 + $0x4] sm:$0xf]
      %s1060 = sshll.u32 %s490, 16
      %s1061 = sor.u32 %s490, %s1060
      %v1062 = vstv %s1061
      %v1064 = vunpack.c.l.bf16 %v1058
      %v1065 = vunpack.c.l.bf16 %v1059
      %v1066 = vunpack.c.l.bf16 %v1062
      %v1067 = vmul.f32 %v1064, %v1066
      %v1068 = vmul.f32 %v1065, %v1066
      %v1069 = vpack.c.bf16 %v1067, %v1067
      %v1070 = vpack.c.bf16 %v1068, %v1068
      %v1072 = vshrl.u32 %v1069, 16
      %v1074 = vrot.slane %v1072, 7
      %v1075 = vshll.u32 %v1069, 16
      %v1077 = vor.u32 %v1074, %v1075
      %v1078 = vrot.slane %v1074, 4
      %v1080 = vshrl.u32 %v1070, 16
      %v1082 = vrot.slane %v1080, 7
      %v1083 = vshll.u32 %v1070, 16
      %v1085 = vor.u32 %v1082, %v1083
      %v1086 = vsel %vm560, %v1078, %v1085
      %v1087 = vrot.slane %v1082, 4
      %s1091 = scalar_lea.vmem [#allocation2], 204
      %v1092 = vld [vmem:[%s1091] sm:$0xf]
      %v1093 = vsel %vm583, %v1077, %v1092
      %1094 = vst [vmem:[%s1091] sm:$0xf] %v1093
      %1095 = vst [vmem:[%s1091 + $0x4] sm:$0xf] %v1086
      %v1096 = vld [vmem:[%s1091 + $0x8] sm:$0x1]
      %v1097 = vsel %vm589, %v1087, %v1096
      %1098 = vst [vmem:[%s1091 + $0x8] sm:$0x1] %v1097
      %v1099 = vld [vmem:[#allocation2] sm:$0xf]
      %v1100 = vld [vmem:[#allocation2 + $0x4] sm:$0xf]
      %v1101 = vld [vmem:[#allocation2 + $0xc] sm:$0xf]
      %v1102 = vld [vmem:[#allocation2 + $0x10] sm:$0xf]
      %v1103 = vld [vmem:[#allocation2 + $0x18] sm:$0xf]
      %v1104 = vld [vmem:[#allocation2 + $0x1c] sm:$0xf]
      %v1105 = vld [vmem:[#allocation2 + $0x24] sm:$0xf]
      %v1106 = vld [vmem:[#allocation2 + $0x28] sm:$0xf]
      %v1107 = vld [vmem:[#allocation2 + $0x30] sm:$0xf]
      %v1108 = vld [vmem:[#allocation2 + $0x34] sm:$0xf]
      %v1109 = vld [vmem:[#allocation2 + $0x3c] sm:$0xf]
      %v1110 = vld [vmem:[#allocation2 + $0x40] sm:$0xf]
      %v1111 = vld [vmem:[#allocation2 + $0x48] sm:$0xf]
      %v1112 = vld [vmem:[#allocation2 + $0x4c] sm:$0xf]
      %v1113 = vld [vmem:[#allocation2 + $0x54] sm:$0xf]
      %v1114 = vld [vmem:[#allocation2 + $0x58] sm:$0xf]
      %v1115 = vld [vmem:[#allocation2 + $0x60] sm:$0xf]
      %v1116 = vld [vmem:[#allocation2 + $0x64] sm:$0xf]
      %v1117 = vld [vmem:[#allocation2 + $0x6c] sm:$0xf]
      %v1118 = vld [vmem:[#allocation2 + $0x70] sm:$0xf]
      %v1119 = vld [vmem:[#allocation2 + $0x78] sm:$0xf]
      %v1120 = vld [vmem:[#allocation2 + $0x7c] sm:$0xf]
      %v1121 = vld [vmem:[#allocation2 + $0x84] sm:$0xf]
      %v1122 = vld [vmem:[#allocation2 + $0x88] sm:$0xf]
      %v1123 = vld [vmem:[#allocation2 + $0x90] sm:$0xf]
      %v1124 = vld [vmem:[#allocation2 + $0x94] sm:$0xf]
      %v1125 = vld [vmem:[#allocation2 + $0x9c] sm:$0xf]
      %v1126 = vld [vmem:[#allocation2 + $0xa0] sm:$0xf]
      %v1127 = vld [vmem:[#allocation2 + $0xa8] sm:$0xf]
      %v1128 = vld [vmem:[#allocation2 + $0xac] sm:$0xf]
      %v1129 = vld [vmem:[#allocation2 + $0xb4] sm:$0xf]
      %v1130 = vld [vmem:[#allocation2 + $0xb8] sm:$0xf]
      %v1131 = vld [vmem:[#allocation2 + $0x8] sm:$0x1]
      %v1132 = vld [vmem:[#allocation2 + $0x14] sm:$0x1]
      %v1133 = vld [vmem:[#allocation2 + $0x20] sm:$0x1]
      %v1134 = vld [vmem:[#allocation2 + $0x2c] sm:$0x1]
      %v1135 = vld [vmem:[#allocation2 + $0x38] sm:$0x1]
      %v1136 = vld [vmem:[#allocation2 + $0x44] sm:$0x1]
      %v1137 = vld [vmem:[#allocation2 + $0x50] sm:$0x1]
      %v1138 = vld [vmem:[#allocation2 + $0x5c] sm:$0x1]
      %v1139 = vld [vmem:[#allocation2 + $0x68] sm:$0x1]
      %v1140 = vld [vmem:[#allocation2 + $0x74] sm:$0x1]
      %v1141 = vld [vmem:[#allocation2 + $0x80] sm:$0x1]
      %v1142 = vld [vmem:[#allocation2 + $0x8c] sm:$0x1]
      %v1143 = vld [vmem:[#allocation2 + $0x98] sm:$0x1]
      %v1144 = vld [vmem:[#allocation2 + $0xa4] sm:$0x1]
      %v1145 = vld [vmem:[#allocation2 + $0xb0] sm:$0x1]
      %v1146 = vld [vmem:[#allocation2 + $0xbc] sm:$0x1]
      %v1147 = vld [vmem:[#allocation2] sm:$0xe]
      %v1148 = vld [vmem:[#allocation2 + $0xc] sm:$0xe]
      %v1149 = vld [vmem:[#allocation2 + $0x18] sm:$0xe]
      %v1150 = vld [vmem:[#allocation2 + $0x24] sm:$0xe]
      %v1151 = vld [vmem:[#allocation2 + $0x30] sm:$0xe]
      %v1152 = vld [vmem:[#allocation2 + $0x3c] sm:$0xe]
      %v1153 = vld [vmem:[#allocation2 + $0x48] sm:$0xe]
      %v1154 = vld [vmem:[#allocation2 + $0x54] sm:$0xe]
      %v1155 = vld [vmem:[#allocation2 + $0x60] sm:$0xe]
      %v1156 = vld [vmem:[#allocation2 + $0x6c] sm:$0xe]
      %v1157 = vld [vmem:[#allocation2 + $0x78] sm:$0xe]
      %v1158 = vld [vmem:[#allocation2 + $0x84] sm:$0xe]
      %v1159 = vld [vmem:[#allocation2 + $0x90] sm:$0xe]
      %v1160 = vld [vmem:[#allocation2 + $0x9c] sm:$0xe]
      %v1161 = vld [vmem:[#allocation2 + $0xa8] sm:$0xe]
      %v1162 = vld [vmem:[#allocation2 + $0xb4] sm:$0xe]
      %v1195 = vunpack.c.l.b16 %v1099
      %v1196 = vunpack.c.l.b16 %v1100
      %v1197 = vunpack.c.l.b16 %v1101
      %v1198 = vunpack.c.l.b16 %v1102
      %v1199 = vunpack.c.l.b16 %v1103
      %v1200 = vunpack.c.l.b16 %v1104
      %v1201 = vunpack.c.l.b16 %v1105
      %v1202 = vunpack.c.l.b16 %v1106
      %v1203 = vunpack.c.l.b16 %v1107
      %v1204 = vunpack.c.l.b16 %v1108
      %v1205 = vunpack.c.l.b16 %v1109
      %v1206 = vunpack.c.l.b16 %v1110
      %v1207 = vunpack.c.l.b16 %v1111
      %v1208 = vunpack.c.l.b16 %v1112
      %v1209 = vunpack.c.l.b16 %v1113
      %v1210 = vunpack.c.l.b16 %v1114
      %v1211 = vunpack.c.l.b16 %v1115
      %v1212 = vunpack.c.l.b16 %v1116
      %v1213 = vunpack.c.l.b16 %v1117
      %v1214 = vunpack.c.l.b16 %v1118
      %v1215 = vunpack.c.l.b16 %v1119
      %v1216 = vunpack.c.l.b16 %v1120
      %v1217 = vunpack.c.l.b16 %v1121
      %v1218 = vunpack.c.l.b16 %v1122
      %v1219 = vunpack.c.l.b16 %v1123
      %v1220 = vunpack.c.l.b16 %v1124
      %v1221 = vunpack.c.l.b16 %v1125
      %v1222 = vunpack.c.l.b16 %v1126
      %v1223 = vunpack.c.l.b16 %v1127
      %v1224 = vunpack.c.l.b16 %v1128
      %v1225 = vunpack.c.l.b16 %v1129
      %v1226 = vunpack.c.l.b16 %v1130
      %v1227 = vpack.c.b16 %v1196, %v1195
      %v1228 = vpack.c.b16 %v1198, %v1197
      %v1229 = vpack.c.b16 %v1200, %v1199
      %v1230 = vpack.c.b16 %v1202, %v1201
      %v1231 = vpack.c.b16 %v1204, %v1203
      %v1232 = vpack.c.b16 %v1206, %v1205
      %v1233 = vpack.c.b16 %v1208, %v1207
      %v1234 = vpack.c.b16 %v1210, %v1209
      %v1235 = vpack.c.b16 %v1212, %v1211
      %v1236 = vpack.c.b16 %v1214, %v1213
      %v1237 = vpack.c.b16 %v1216, %v1215
      %v1238 = vpack.c.b16 %v1218, %v1217
      %v1239 = vpack.c.b16 %v1220, %v1219
      %v1240 = vpack.c.b16 %v1222, %v1221
      %v1241 = vpack.c.b16 %v1224, %v1223
      %v1242 = vpack.c.b16 %v1226, %v1225
      %v1275 = vunpack.c.l.b16 %v1131
      %v1276 = vunpack.c.l.b16 %v1132
      %v1277 = vunpack.c.l.b16 %v1133
      %v1278 = vunpack.c.l.b16 %v1134
      %v1279 = vunpack.c.l.b16 %v1135
      %v1280 = vunpack.c.l.b16 %v1136
      %v1281 = vunpack.c.l.b16 %v1137
      %v1282 = vunpack.c.l.b16 %v1138
      %v1283 = vunpack.c.l.b16 %v1139
      %v1284 = vunpack.c.l.b16 %v1140
      %v1285 = vunpack.c.l.b16 %v1141
      %v1286 = vunpack.c.l.b16 %v1142
      %v1287 = vunpack.c.l.b16 %v1143
      %v1288 = vunpack.c.l.b16 %v1144
      %v1289 = vunpack.c.l.b16 %v1145
      %v1290 = vunpack.c.l.b16 %v1146
      %v1291 = vpack.c.b16 %v1275, %v1275
      %v1292 = vpack.c.b16 %v1276, %v1276
      %v1293 = vpack.c.b16 %v1277, %v1277
      %v1294 = vpack.c.b16 %v1278, %v1278
      %v1295 = vpack.c.b16 %v1279, %v1279
      %v1296 = vpack.c.b16 %v1280, %v1280
      %v1297 = vpack.c.b16 %v1281, %v1281
      %v1298 = vpack.c.b16 %v1282, %v1282
      %v1299 = vpack.c.b16 %v1283, %v1283
      %v1300 = vpack.c.b16 %v1284, %v1284
      %v1301 = vpack.c.b16 %v1285, %v1285
      %v1302 = vpack.c.b16 %v1286, %v1286
      %v1303 = vpack.c.b16 %v1287, %v1287
      %v1304 = vpack.c.b16 %v1288, %v1288
      %v1305 = vpack.c.b16 %v1289, %v1289
      %v1306 = vpack.c.b16 %v1290, %v1290
      %vm1307 = vsmask.f32 7424
      %v1309 = vshrl.u32 %v1227, 16
      %v1311 = vshll.u32 %v1227, 16
      %v1313 = vrot.slane %v1311, 1
      %v1314 = vor.u32 %v1309, %v1313
      %v1316 = vshll.u32 %v1291, 16
      %v1318 = vrot.slane %v1316, 1
      %v1319 = vsel %vm1307, %v1314, %v1318
      %v1321 = vshrl.u32 %v1228, 16
      %v1323 = vshll.u32 %v1228, 16
      %v1325 = vrot.slane %v1323, 1
      %v1326 = vor.u32 %v1321, %v1325
      %v1328 = vshll.u32 %v1292, 16
      %v1330 = vrot.slane %v1328, 1
      %v1331 = vsel %vm1307, %v1326, %v1330
      %v1333 = vshrl.u32 %v1229, 16
      %v1335 = vshll.u32 %v1229, 16
      %v1337 = vrot.slane %v1335, 1
      %v1338 = vor.u32 %v1333, %v1337
      %v1340 = vshll.u32 %v1293, 16
      %v1342 = vrot.slane %v1340, 1
      %v1343 = vsel %vm1307, %v1338, %v1342
      %v1345 = vshrl.u32 %v1230, 16
      %v1347 = vshll.u32 %v1230, 16
      %v1349 = vrot.slane %v1347, 1
      %v1350 = vor.u32 %v1345, %v1349
      %v1352 = vshll.u32 %v1294, 16
      %v1354 = vrot.slane %v1352, 1
      %v1355 = vsel %vm1307, %v1350, %v1354
      %v1357 = vshrl.u32 %v1231, 16
      %v1359 = vshll.u32 %v1231, 16
      %v1361 = vrot.slane %v1359, 1
      %v1362 = vor.u32 %v1357, %v1361
      %v1364 = vshll.u32 %v1295, 16
      %v1366 = vrot.slane %v1364, 1
      %v1367 = vsel %vm1307, %v1362, %v1366
      %v1369 = vshrl.u32 %v1232, 16
      %v1371 = vshll.u32 %v1232, 16
      %v1373 = vrot.slane %v1371, 1
      %v1374 = vor.u32 %v1369, %v1373
      %v1376 = vshll.u32 %v1296, 16
      %v1378 = vrot.slane %v1376, 1
      %v1379 = vsel %vm1307, %v1374, %v1378
      %v1381 = vshrl.u32 %v1233, 16
      %v1383 = vshll.u32 %v1233, 16
      %v1385 = vrot.slane %v1383, 1
      %v1386 = vor.u32 %v1381, %v1385
      %v1388 = vshll.u32 %v1297, 16
      %v1390 = vrot.slane %v1388, 1
      %v1391 = vsel %vm1307, %v1386, %v1390
      %v1393 = vshrl.u32 %v1234, 16
      %v1395 = vshll.u32 %v1234, 16
      %v1397 = vrot.slane %v1395, 1
      %v1398 = vor.u32 %v1393, %v1397
      %v1400 = vshll.u32 %v1298, 16
      %v1402 = vrot.slane %v1400, 1
      %v1403 = vsel %vm1307, %v1398, %v1402
      %v1405 = vshrl.u32 %v1235, 16
      %v1407 = vshll.u32 %v1235, 16
      %v1409 = vrot.slane %v1407, 1
      %v1410 = vor.u32 %v1405, %v1409
      %v1412 = vshll.u32 %v1299, 16
      %v1414 = vrot.slane %v1412, 1
      %v1415 = vsel %vm1307, %v1410, %v1414
      %v1417 = vshrl.u32 %v1236, 16
      %v1419 = vshll.u32 %v1236, 16
      %v1421 = vrot.slane %v1419, 1
      %v1422 = vor.u32 %v1417, %v1421
      %v1424 = vshll.u32 %v1300, 16
      %v1426 = vrot.slane %v1424, 1
      %v1427 = vsel %vm1307, %v1422, %v1426
      %v1429 = vshrl.u32 %v1237, 16
      %v1431 = vshll.u32 %v1237, 16
      %v1433 = vrot.slane %v1431, 1
      %v1434 = vor.u32 %v1429, %v1433
      %v1436 = vshll.u32 %v1301, 16
      %v1438 = vrot.slane %v1436, 1
      %v1439 = vsel %vm1307, %v1434, %v1438
      %v1441 = vshrl.u32 %v1238, 16
      %v1443 = vshll.u32 %v1238, 16
      %v1445 = vrot.slane %v1443, 1
      %v1446 = vor.u32 %v1441, %v1445
      %v1448 = vshll.u32 %v1302, 16
      %v1450 = vrot.slane %v1448, 1
      %v1451 = vsel %vm1307, %v1446, %v1450
      %v1453 = vshrl.u32 %v1239, 16
      %v1455 = vshll.u32 %v1239, 16
      %v1457 = vrot.slane %v1455, 1
      %v1458 = vor.u32 %v1453, %v1457
      %v1460 = vshll.u32 %v1303, 16
      %v1462 = vrot.slane %v1460, 1
      %v1463 = vsel %vm1307, %v1458, %v1462
      %v1465 = vshrl.u32 %v1240, 16
      %v1467 = vshll.u32 %v1240, 16
      %v1469 = vrot.slane %v1467, 1
      %v1470 = vor.u32 %v1465, %v1469
      %v1472 = vshll.u32 %v1304, 16
      %v1474 = vrot.slane %v1472, 1
      %v1475 = vsel %vm1307, %v1470, %v1474
      %v1477 = vshrl.u32 %v1241, 16
      %v1479 = vshll.u32 %v1241, 16
      %v1481 = vrot.slane %v1479, 1
      %v1482 = vor.u32 %v1477, %v1481
      %v1484 = vshll.u32 %v1305, 16
      %v1486 = vrot.slane %v1484, 1
      %v1487 = vsel %vm1307, %v1482, %v1486
      %v1489 = vshrl.u32 %v1242, 16
      %v1491 = vshll.u32 %v1242, 16
      %v1493 = vrot.slane %v1491, 1
      %v1494 = vor.u32 %v1489, %v1493
      %v1496 = vshll.u32 %v1306, 16
      %v1498 = vrot.slane %v1496, 1
      %v1499 = vsel %vm1307, %v1494, %v1498
      %v1532 = vunpack.c.l.b16 %v1147
      %v1533 = vunpack.c.l.b16 %v1148
      %v1534 = vunpack.c.l.b16 %v1149
      %v1535 = vunpack.c.l.b16 %v1150
      %v1536 = vunpack.c.l.b16 %v1151
      %v1537 = vunpack.c.l.b16 %v1152
      %v1538 = vunpack.c.l.b16 %v1153
      %v1539 = vunpack.c.l.b16 %v1154
      %v1540 = vunpack.c.l.b16 %v1155
      %v1541 = vunpack.c.l.b16 %v1156
      %v1542 = vunpack.c.l.b16 %v1157
      %v1543 = vunpack.c.l.b16 %v1158
      %v1544 = vunpack.c.l.b16 %v1159
      %v1545 = vunpack.c.l.b16 %v1160
      %v1546 = vunpack.c.l.b16 %v1161
      %v1547 = vunpack.c.l.b16 %v1162
      %v1548 = vpack.c.b16 %v1196, %v1532
      %v1549 = vpack.c.b16 %v1198, %v1533
      %v1550 = vpack.c.b16 %v1200, %v1534
      %v1551 = vpack.c.b16 %v1202, %v1535
      %v1552 = vpack.c.b16 %v1204, %v1536
      %v1553 = vpack.c.b16 %v1206, %v1537
      %v1554 = vpack.c.b16 %v1208, %v1538
      %v1555 = vpack.c.b16 %v1210, %v1539
      %v1556 = vpack.c.b16 %v1212, %v1540
      %v1557 = vpack.c.b16 %v1214, %v1541
      %v1558 = vpack.c.b16 %v1216, %v1542
      %v1559 = vpack.c.b16 %v1218, %v1543
      %v1560 = vpack.c.b16 %v1220, %v1544
      %v1561 = vpack.c.b16 %v1222, %v1545
      %v1562 = vpack.c.b16 %v1224, %v1546
      %v1563 = vpack.c.b16 %v1226, %v1547
      %vm1564 = vcmask 1046528
      %v1565 = vrot.slane %v1548, 1
      %v1566 = vrot.slane %v1291, 1
      %v1567 = vsel %vm1564, %v1565, %v1566
      %v1568 = vrot.slane %v1549, 1
      %v1569 = vrot.slane %v1292, 1
      %v1570 = vsel %vm1564, %v1568, %v1569
      %v1571 = vrot.slane %v1550, 1
      %v1572 = vrot.slane %v1293, 1
      %v1573 = vsel %vm1564, %v1571, %v1572
      %v1574 = vrot.slane %v1551, 1
      %v1575 = vrot.slane %v1294, 1
      %v1576 = vsel %vm1564, %v1574, %v1575
      %v1577 = vrot.slane %v1552, 1
      %v1578 = vrot.slane %v1295, 1
      %v1579 = vsel %vm1564, %v1577, %v1578
      %v1580 = vrot.slane %v1553, 1
      %v1581 = vrot.slane %v1296, 1
      %v1582 = vsel %vm1564, %v1580, %v1581
      %v1583 = vrot.slane %v1554, 1
      %v1584 = vrot.slane %v1297, 1
      %v1585 = vsel %vm1564, %v1583, %v1584
      %v1586 = vrot.slane %v1555, 1
      %v1587 = vrot.slane %v1298, 1
      %v1588 = vsel %vm1564, %v1586, %v1587
      %v1589 = vrot.slane %v1556, 1
      %v1590 = vrot.slane %v1299, 1
      %v1591 = vsel %vm1564, %v1589, %v1590
      %v1592 = vrot.slane %v1557, 1
      %v1593 = vrot.slane %v1300, 1
      %v1594 = vsel %vm1564, %v1592, %v1593
      %v1595 = vrot.slane %v1558, 1
      %v1596 = vrot.slane %v1301, 1
      %v1597 = vsel %vm1564, %v1595, %v1596
      %v1598 = vrot.slane %v1559, 1
      %v1599 = vrot.slane %v1302, 1
      %v1600 = vsel %vm1564, %v1598, %v1599
      %v1601 = vrot.slane %v1560, 1
      %v1602 = vrot.slane %v1303, 1
      %v1603 = vsel %vm1564, %v1601, %v1602
      %v1604 = vrot.slane %v1561, 1
      %v1605 = vrot.slane %v1304, 1
      %v1606 = vsel %vm1564, %v1604, %v1605
      %v1607 = vrot.slane %v1562, 1
      %v1608 = vrot.slane %v1305, 1
      %v1609 = vsel %vm1564, %v1607, %v1608
      %v1610 = vrot.slane %v1563, 1
      %v1611 = vrot.slane %v1306, 1
      %v1612 = vsel %vm1564, %v1610, %v1611
      %v1629 = vld [vmem:[%s3] sm:$0xf]
      %v1630 = vld [vmem:[%s3 + $0x4] sm:$0xf]
      %v1631 = vld [vmem:[%s3 + $0x8] sm:$0xf]
      %v1632 = vld [vmem:[%s3 + $0xc] sm:$0xf]
      %v1633 = vld [vmem:[%s3 + $0x10] sm:$0xf]
      %v1634 = vld [vmem:[%s3 + $0x14] sm:$0xf]
      %v1635 = vld [vmem:[%s3 + $0x18] sm:$0xf]
      %v1636 = vld [vmem:[%s3 + $0x1c] sm:$0xf]
      %v1637 = vld [vmem:[%s3 + $0x20] sm:$0xf]
      %v1638 = vld [vmem:[%s3 + $0x24] sm:$0xf]
      %v1639 = vld [vmem:[%s3 + $0x28] sm:$0xf]
      %v1640 = vld [vmem:[%s3 + $0x2c] sm:$0xf]
      %v1641 = vld [vmem:[%s3 + $0x30] sm:$0xf]
      %v1642 = vld [vmem:[%s3 + $0x34] sm:$0xf]
      %v1643 = vld [vmem:[%s3 + $0x38] sm:$0xf]
      %v1644 = vld [vmem:[%s3 + $0x3c] sm:$0xf]
      %v1645 = vld [vmem:[%s3 + $0x40] sm:$0xf]
      %v1646 = vld [vmem:[%s3 + $0x44] sm:$0xf]
      %v1647 = vld [vmem:[%s3 + $0x48] sm:$0xf]
      %v1648 = vld [vmem:[%s3 + $0x4c] sm:$0xf]
      %v1649 = vld [vmem:[%s3 + $0x50] sm:$0xf]
      %v1650 = vld [vmem:[%s3 + $0x54] sm:$0xf]
      %v1651 = vld [vmem:[%s3 + $0x58] sm:$0xf]
      %v1652 = vld [vmem:[%s3 + $0x5c] sm:$0xf]
      %v1653 = vld [vmem:[%s3 + $0x60] sm:$0xf]
      %v1654 = vld [vmem:[%s3 + $0x64] sm:$0xf]
      %v1655 = vld [vmem:[%s3 + $0x68] sm:$0xf]
      %v1656 = vld [vmem:[%s3 + $0x6c] sm:$0xf]
      %v1657 = vld [vmem:[%s3 + $0x70] sm:$0xf]
      %v1658 = vld [vmem:[%s3 + $0x74] sm:$0xf]
      %v1659 = vld [vmem:[%s3 + $0x78] sm:$0xf]
      %v1660 = vld [vmem:[%s3 + $0x7c] sm:$0xf]
      %v1661 = vld [vmem:[%s3 + $0x80] sm:$0xf]
      %v1662 = vld [vmem:[%s3 + $0x84] sm:$0xf]
      %v1663 = vld [vmem:[%s3 + $0x88] sm:$0xf]
      %v1664 = vld [vmem:[%s3 + $0x8c] sm:$0xf]
      %v1665 = vld [vmem:[%s3 + $0x90] sm:$0xf]
      %v1666 = vld [vmem:[%s3 + $0x94] sm:$0xf]
      %v1667 = vld [vmem:[%s3 + $0x98] sm:$0xf]
      %v1668 = vld [vmem:[%s3 + $0x9c] sm:$0xf]
      %v1669 = vld [vmem:[%s3 + $0xa0] sm:$0xf]
      %v1670 = vld [vmem:[%s3 + $0xa4] sm:$0xf]
      %v1671 = vld [vmem:[%s3 + $0xa8] sm:$0xf]
      %v1672 = vld [vmem:[%s3 + $0xac] sm:$0xf]
      %v1673 = vld [vmem:[%s3 + $0xb0] sm:$0xf]
      %v1674 = vld [vmem:[%s3 + $0xb4] sm:$0xf]
      %v1675 = vld [vmem:[%s3 + $0xb8] sm:$0xf]
      %v1676 = vld [vmem:[%s3 + $0xbc] sm:$0xf]
      %v1677 = vld [vmem:[%s945] sm:$0xf]
      %v1678 = vld [vmem:[%s945 + $0x4] sm:$0xf]
      %v1679 = vld [vmem:[%s945 + $0xc] sm:$0xf]
      %v1680 = vld [vmem:[%s945 + $0x10] sm:$0xf]
      %v1681 = vld [vmem:[%s945 + $0x18] sm:$0xf]
      %v1682 = vld [vmem:[%s945 + $0x1c] sm:$0xf]
      %v1683 = vld [vmem:[%s945 + $0x24] sm:$0xf]
      %v1684 = vld [vmem:[%s945 + $0x28] sm:$0xf]
      %v1685 = vld [vmem:[%s945 + $0x30] sm:$0xf]
      %v1686 = vld [vmem:[%s945 + $0x34] sm:$0xf]
      %v1687 = vld [vmem:[%s945 + $0x3c] sm:$0xf]
      %v1688 = vld [vmem:[%s945 + $0x40] sm:$0xf]
      %v1689 = vld [vmem:[%s945 + $0x48] sm:$0xf]
      %v1690 = vld [vmem:[%s945 + $0x4c] sm:$0xf]
      %v1691 = vld [vmem:[%s945 + $0x54] sm:$0xf]
      %v1692 = vld [vmem:[%s945 + $0x58] sm:$0xf]
      %v1693 = vld [vmem:[%s945 + $0x60] sm:$0xf]
      %v1694 = vld [vmem:[%s945 + $0x64] sm:$0xf]
      %v1695 = vld [vmem:[%s945 + $0x6c] sm:$0xf]
      %v1696 = vld [vmem:[%s945 + $0x70] sm:$0xf]
      %v1697 = vld [vmem:[%s945 + $0x78] sm:$0xf]
      %v1698 = vld [vmem:[%s945 + $0x7c] sm:$0xf]
      %v1699 = vld [vmem:[%s945 + $0x84] sm:$0xf]
      %v1700 = vld [vmem:[%s945 + $0x88] sm:$0xf]
      %v1701 = vld [vmem:[%s945 + $0x90] sm:$0xf]
      %v1702 = vld [vmem:[%s945 + $0x94] sm:$0xf]
      %v1703 = vld [vmem:[%s945 + $0x9c] sm:$0xf]
      %v1704 = vld [vmem:[%s945 + $0xa0] sm:$0xf]
      %v1705 = vld [vmem:[%s945 + $0xa8] sm:$0xf]
      %v1706 = vld [vmem:[%s945 + $0xac] sm:$0xf]
      %v1707 = vld [vmem:[%s945 + $0xb4] sm:$0xf]
      %v1708 = vld [vmem:[%s945 + $0xb8] sm:$0xf]
      %v1709 = vld [vmem:[%s945 + $0x8] sm:$0x1]
      %v1710 = vld [vmem:[%s945 + $0x14] sm:$0x1]
      %v1711 = vld [vmem:[%s945 + $0x20] sm:$0x1]
      %v1712 = vld [vmem:[%s945 + $0x2c] sm:$0x1]
      %v1713 = vld [vmem:[%s945 + $0x38] sm:$0x1]
      %v1714 = vld [vmem:[%s945 + $0x44] sm:$0x1]
      %v1715 = vld [vmem:[%s945 + $0x50] sm:$0x1]
      %v1716 = vld [vmem:[%s945 + $0x5c] sm:$0x1]
      %v1717 = vld [vmem:[%s945 + $0x68] sm:$0x1]
      %v1718 = vld [vmem:[%s945 + $0x74] sm:$0x1]
      %v1719 = vld [vmem:[%s945 + $0x80] sm:$0x1]
      %v1720 = vld [vmem:[%s945 + $0x8c] sm:$0x1]
      %v1721 = vld [vmem:[%s945 + $0x98] sm:$0x1]
      %v1722 = vld [vmem:[%s945 + $0xa4] sm:$0x1]
      %v1723 = vld [vmem:[%s945 + $0xb0] sm:$0x1]
      %v1724 = vld [vmem:[%s945 + $0xbc] sm:$0x1]
      %v1725 = vld [vmem:[%s945] sm:$0xe]
      %v1726 = vld [vmem:[%s945 + $0xc] sm:$0xe]
      %v1727 = vld [vmem:[%s945 + $0x18] sm:$0xe]
      %v1728 = vld [vmem:[%s945 + $0x24] sm:$0xe]
      %v1729 = vld [vmem:[%s945 + $0x30] sm:$0xe]
      %v1730 = vld [vmem:[%s945 + $0x3c] sm:$0xe]
      %v1731 = vld [vmem:[%s945 + $0x48] sm:$0xe]
      %v1732 = vld [vmem:[%s945 + $0x54] sm:$0xe]
      %v1733 = vld [vmem:[%s945 + $0x60] sm:$0xe]
      %v1734 = vld [vmem:[%s945 + $0x6c] sm:$0xe]
      %v1735 = vld [vmem:[%s945 + $0x78] sm:$0xe]
      %v1736 = vld [vmem:[%s945 + $0x84] sm:$0xe]
      %v1737 = vld [vmem:[%s945 + $0x90] sm:$0xe]
      %v1738 = vld [vmem:[%s945 + $0x9c] sm:$0xe]
      %v1739 = vld [vmem:[%s945 + $0xa8] sm:$0xe]
      %v1740 = vld [vmem:[%s945 + $0xb4] sm:$0xe]
      %v1773 = vunpack.c.l.b16 %v1677
      %v1774 = vunpack.c.l.b16 %v1678
      %v1775 = vunpack.c.l.b16 %v1679
      %v1776 = vunpack.c.l.b16 %v1680
      %v1777 = vunpack.c.l.b16 %v1681
      %v1778 = vunpack.c.l.b16 %v1682
      %v1779 = vunpack.c.l.b16 %v1683
      %v1780 = vunpack.c.l.b16 %v1684
      %v1781 = vunpack.c.l.b16 %v1685
      %v1782 = vunpack.c.l.b16 %v1686
      %v1783 = vunpack.c.l.b16 %v1687
      %v1784 = vunpack.c.l.b16 %v1688
      %v1785 = vunpack.c.l.b16 %v1689
      %v1786 = vunpack.c.l.b16 %v1690
      %v1787 = vunpack.c.l.b16 %v1691
      %v1788 = vunpack.c.l.b16 %v1692
      %v1789 = vunpack.c.l.b16 %v1693
      %v1790 = vunpack.c.l.b16 %v1694
      %v1791 = vunpack.c.l.b16 %v1695
      %v1792 = vunpack.c.l.b16 %v1696
      %v1793 = vunpack.c.l.b16 %v1697
      %v1794 = vunpack.c.l.b16 %v1698
      %v1795 = vunpack.c.l.b16 %v1699
      %v1796 = vunpack.c.l.b16 %v1700
      %v1797 = vunpack.c.l.b16 %v1701
      %v1798 = vunpack.c.l.b16 %v1702
      %v1799 = vunpack.c.l.b16 %v1703
      %v1800 = vunpack.c.l.b16 %v1704
      %v1801 = vunpack.c.l.b16 %v1705
      %v1802 = vunpack.c.l.b16 %v1706
      %v1803 = vunpack.c.l.b16 %v1707
      %v1804 = vunpack.c.l.b16 %v1708
      %v1805 = vpack.c.b16 %v1774, %v1773
      %v1806 = vpack.c.b16 %v1776, %v1775
      %v1807 = vpack.c.b16 %v1778, %v1777
      %v1808 = vpack.c.b16 %v1780, %v1779
      %v1809 = vpack.c.b16 %v1782, %v1781
      %v1810 = vpack.c.b16 %v1784, %v1783
      %v1811 = vpack.c.b16 %v1786, %v1785
      %v1812 = vpack.c.b16 %v1788, %v1787
      %v1813 = vpack.c.b16 %v1790, %v1789
      %v1814 = vpack.c.b16 %v1792, %v1791
      %v1815 = vpack.c.b16 %v1794, %v1793
      %v1816 = vpack.c.b16 %v1796, %v1795
      %v1817 = vpack.c.b16 %v1798, %v1797
      %v1818 = vpack.c.b16 %v1800, %v1799
      %v1819 = vpack.c.b16 %v1802, %v1801
      %v1820 = vpack.c.b16 %v1804, %v1803
      %v1853 = vunpack.c.l.b16 %v1709
      %v1854 = vunpack.c.l.b16 %v1710
      %v1855 = vunpack.c.l.b16 %v1711
      %v1856 = vunpack.c.l.b16 %v1712
      %v1857 = vunpack.c.l.b16 %v1713
      %v1858 = vunpack.c.l.b16 %v1714
      %v1859 = vunpack.c.l.b16 %v1715
      %v1860 = vunpack.c.l.b16 %v1716
      %v1861 = vunpack.c.l.b16 %v1717
      %v1862 = vunpack.c.l.b16 %v1718
      %v1863 = vunpack.c.l.b16 %v1719
      %v1864 = vunpack.c.l.b16 %v1720
      %v1865 = vunpack.c.l.b16 %v1721
      %v1866 = vunpack.c.l.b16 %v1722
      %v1867 = vunpack.c.l.b16 %v1723
      %v1868 = vunpack.c.l.b16 %v1724
      %v1869 = vpack.c.b16 %v1853, %v1853
      %v1870 = vpack.c.b16 %v1854, %v1854
      %v1871 = vpack.c.b16 %v1855, %v1855
      %v1872 = vpack.c.b16 %v1856, %v1856
      %v1873 = vpack.c.b16 %v1857, %v1857
      %v1874 = vpack.c.b16 %v1858, %v1858
      %v1875 = vpack.c.b16 %v1859, %v1859
      %v1876 = vpack.c.b16 %v1860, %v1860
      %v1877 = vpack.c.b16 %v1861, %v1861
      %v1878 = vpack.c.b16 %v1862, %v1862
      %v1879 = vpack.c.b16 %v1863, %v1863
      %v1880 = vpack.c.b16 %v1864, %v1864
      %v1881 = vpack.c.b16 %v1865, %v1865
      %v1882 = vpack.c.b16 %v1866, %v1866
      %v1883 = vpack.c.b16 %v1867, %v1867
      %v1884 = vpack.c.b16 %v1868, %v1868
      %v1886 = vshrl.u32 %v1805, 16
      %v1888 = vshll.u32 %v1805, 16
      %v1890 = vrot.slane %v1888, 1
      %v1891 = vor.u32 %v1886, %v1890
      %v1893 = vshll.u32 %v1869, 16
      %v1895 = vrot.slane %v1893, 1
      %v1896 = vsel %vm1307, %v1891, %v1895
      %v1898 = vshrl.u32 %v1806, 16
      %v1900 = vshll.u32 %v1806, 16
      %v1902 = vrot.slane %v1900, 1
      %v1903 = vor.u32 %v1898, %v1902
      %v1905 = vshll.u32 %v1870, 16
      %v1907 = vrot.slane %v1905, 1
      %v1908 = vsel %vm1307, %v1903, %v1907
      %v1910 = vshrl.u32 %v1807, 16
      %v1912 = vshll.u32 %v1807, 16
      %v1914 = vrot.slane %v1912, 1
      %v1915 = vor.u32 %v1910, %v1914
      %v1917 = vshll.u32 %v1871, 16
      %v1919 = vrot.slane %v1917, 1
      %v1920 = vsel %vm1307, %v1915, %v1919
      %v1922 = vshrl.u32 %v1808, 16
      %v1924 = vshll.u32 %v1808, 16
      %v1926 = vrot.slane %v1924, 1
      %v1927 = vor.u32 %v1922, %v1926
      %v1929 = vshll.u32 %v1872, 16
      %v1931 = vrot.slane %v1929, 1
      %v1932 = vsel %vm1307, %v1927, %v1931
      %v1934 = vshrl.u32 %v1809, 16
      %v1936 = vshll.u32 %v1809, 16
      %v1938 = vrot.slane %v1936, 1
      %v1939 = vor.u32 %v1934, %v1938
      %v1941 = vshll.u32 %v1873, 16
      %v1943 = vrot.slane %v1941, 1
      %v1944 = vsel %vm1307, %v1939, %v1943
      %v1946 = vshrl.u32 %v1810, 16
      %v1948 = vshll.u32 %v1810, 16
      %v1950 = vrot.slane %v1948, 1
      %v1951 = vor.u32 %v1946, %v1950
      %v1953 = vshll.u32 %v1874, 16
      %v1955 = vrot.slane %v1953, 1
      %v1956 = vsel %vm1307, %v1951, %v1955
      %v1958 = vshrl.u32 %v1811, 16
      %v1960 = vshll.u32 %v1811, 16
      %v1962 = vrot.slane %v1960, 1
      %v1963 = vor.u32 %v1958, %v1962
      %v1965 = vshll.u32 %v1875, 16
      %v1967 = vrot.slane %v1965, 1
      %v1968 = vsel %vm1307, %v1963, %v1967
      %v1970 = vshrl.u32 %v1812, 16
      %v1972 = vshll.u32 %v1812, 16
      %v1974 = vrot.slane %v1972, 1
      %v1975 = vor.u32 %v1970, %v1974
      %v1977 = vshll.u32 %v1876, 16
      %v1979 = vrot.slane %v1977, 1
      %v1980 = vsel %vm1307, %v1975, %v1979
      %v1982 = vshrl.u32 %v1813, 16
      %v1984 = vshll.u32 %v1813, 16
      %v1986 = vrot.slane %v1984, 1
      %v1987 = vor.u32 %v1982, %v1986
      %v1989 = vshll.u32 %v1877, 16
      %v1991 = vrot.slane %v1989, 1
      %v1992 = vsel %vm1307, %v1987, %v1991
      %v1994 = vshrl.u32 %v1814, 16
      %v1996 = vshll.u32 %v1814, 16
      %v1998 = vrot.slane %v1996, 1
      %v1999 = vor.u32 %v1994, %v1998
      %v2001 = vshll.u32 %v1878, 16
      %v2003 = vrot.slane %v2001, 1
      %v2004 = vsel %vm1307, %v1999, %v2003
      %v2006 = vshrl.u32 %v1815, 16
      %v2008 = vshll.u32 %v1815, 16
      %v2010 = vrot.slane %v2008, 1
      %v2011 = vor.u32 %v2006, %v2010
      %v2013 = vshll.u32 %v1879, 16
      %v2015 = vrot.slane %v2013, 1
      %v2016 = vsel %vm1307, %v2011, %v2015
      %v2018 = vshrl.u32 %v1816, 16
      %v2020 = vshll.u32 %v1816, 16
      %v2022 = vrot.slane %v2020, 1
      %v2023 = vor.u32 %v2018, %v2022
      %v2025 = vshll.u32 %v1880, 16
      %v2027 = vrot.slane %v2025, 1
      %v2028 = vsel %vm1307, %v2023, %v2027
      %v2030 = vshrl.u32 %v1817, 16
      %v2032 = vshll.u32 %v1817, 16
      %v2034 = vrot.slane %v2032, 1
      %v2035 = vor.u32 %v2030, %v2034
      %v2037 = vshll.u32 %v1881, 16
      %v2039 = vrot.slane %v2037, 1
      %v2040 = vsel %vm1307, %v2035, %v2039
      %v2042 = vshrl.u32 %v1818, 16
      %v2044 = vshll.u32 %v1818, 16
      %v2046 = vrot.slane %v2044, 1
      %v2047 = vor.u32 %v2042, %v2046
      %v2049 = vshll.u32 %v1882, 16
      %v2051 = vrot.slane %v2049, 1
      %v2052 = vsel %vm1307, %v2047, %v2051
      %v2054 = vshrl.u32 %v1819, 16
      %v2056 = vshll.u32 %v1819, 16
      %v2058 = vrot.slane %v2056, 1
      %v2059 = vor.u32 %v2054, %v2058
      %v2061 = vshll.u32 %v1883, 16
      %v2063 = vrot.slane %v2061, 1
      %v2064 = vsel %vm1307, %v2059, %v2063
      %v2066 = vshrl.u32 %v1820, 16
      %v2068 = vshll.u32 %v1820, 16
      %v2070 = vrot.slane %v2068, 1
      %v2071 = vor.u32 %v2066, %v2070
      %v2073 = vshll.u32 %v1884, 16
      %v2075 = vrot.slane %v2073, 1
      %v2076 = vsel %vm1307, %v2071, %v2075
      %v2109 = vunpack.c.l.b16 %v1725
      %v2110 = vunpack.c.l.b16 %v1726
      %v2111 = vunpack.c.l.b16 %v1727
      %v2112 = vunpack.c.l.b16 %v1728
      %v2113 = vunpack.c.l.b16 %v1729
      %v2114 = vunpack.c.l.b16 %v1730
      %v2115 = vunpack.c.l.b16 %v1731
      %v2116 = vunpack.c.l.b16 %v1732
      %v2117 = vunpack.c.l.b16 %v1733
      %v2118 = vunpack.c.l.b16 %v1734
      %v2119 = vunpack.c.l.b16 %v1735
      %v2120 = vunpack.c.l.b16 %v1736
      %v2121 = vunpack.c.l.b16 %v1737
      %v2122 = vunpack.c.l.b16 %v1738
      %v2123 = vunpack.c.l.b16 %v1739
      %v2124 = vunpack.c.l.b16 %v1740
      %v2125 = vpack.c.b16 %v1774, %v2109
      %v2126 = vpack.c.b16 %v1776, %v2110
      %v2127 = vpack.c.b16 %v1778, %v2111
      %v2128 = vpack.c.b16 %v1780, %v2112
      %v2129 = vpack.c.b16 %v1782, %v2113
      %v2130 = vpack.c.b16 %v1784, %v2114
      %v2131 = vpack.c.b16 %v1786, %v2115
      %v2132 = vpack.c.b16 %v1788, %v2116
      %v2133 = vpack.c.b16 %v1790, %v2117
      %v2134 = vpack.c.b16 %v1792, %v2118
      %v2135 = vpack.c.b16 %v1794, %v2119
      %v2136 = vpack.c.b16 %v1796, %v2120
      %v2137 = vpack.c.b16 %v1798, %v2121
      %v2138 = vpack.c.b16 %v1800, %v2122
      %v2139 = vpack.c.b16 %v1802, %v2123
      %v2140 = vpack.c.b16 %v1804, %v2124
      %v2141 = vrot.slane %v2125, 1
      %v2142 = vrot.slane %v1869, 1
      %v2143 = vsel %vm1564, %v2141, %v2142
      %v2144 = vrot.slane %v2126, 1
      %v2145 = vrot.slane %v1870, 1
      %v2146 = vsel %vm1564, %v2144, %v2145
      %v2147 = vrot.slane %v2127, 1
      %v2148 = vrot.slane %v1871, 1
      %v2149 = vsel %vm1564, %v2147, %v2148
      %v2150 = vrot.slane %v2128, 1
      %v2151 = vrot.slane %v1872, 1
      %v2152 = vsel %vm1564, %v2150, %v2151
      %v2153 = vrot.slane %v2129, 1
      %v2154 = vrot.slane %v1873, 1
      %v2155 = vsel %vm1564, %v2153, %v2154
      %v2156 = vrot.slane %v2130, 1
      %v2157 = vrot.slane %v1874, 1
      %v2158 = vsel %vm1564, %v2156, %v2157
      %v2159 = vrot.slane %v2131, 1
      %v2160 = vrot.slane %v1875, 1
      %v2161 = vsel %vm1564, %v2159, %v2160
      %v2162 = vrot.slane %v2132, 1
      %v2163 = vrot.slane %v1876, 1
      %v2164 = vsel %vm1564, %v2162, %v2163
      %v2165 = vrot.slane %v2133, 1
      %v2166 = vrot.slane %v1877, 1
      %v2167 = vsel %vm1564, %v2165, %v2166
      %v2168 = vrot.slane %v2134, 1
      %v2169 = vrot.slane %v1878, 1
      %v2170 = vsel %vm1564, %v2168, %v2169
      %v2171 = vrot.slane %v2135, 1
      %v2172 = vrot.slane %v1879, 1
      %v2173 = vsel %vm1564, %v2171, %v2172
      %v2174 = vrot.slane %v2136, 1
      %v2175 = vrot.slane %v1880, 1
      %v2176 = vsel %vm1564, %v2174, %v2175
      %v2177 = vrot.slane %v2137, 1
      %v2178 = vrot.slane %v1881, 1
      %v2179 = vsel %vm1564, %v2177, %v2178
      %v2180 = vrot.slane %v2138, 1
      %v2181 = vrot.slane %v1882, 1
      %v2182 = vsel %vm1564, %v2180, %v2181
      %v2183 = vrot.slane %v2139, 1
      %v2184 = vrot.slane %v1883, 1
      %v2185 = vsel %vm1564, %v2183, %v2184
      %v2186 = vrot.slane %v2140, 1
      %v2187 = vrot.slane %v1884, 1
      %v2188 = vsel %vm1564, %v2186, %v2187
      %v2205 = vld [vmem:[%s3 + $0xc0] sm:$0xf]
      %v2206 = vld [vmem:[%s3 + $0xc4] sm:$0xf]
      %v2207 = vld [vmem:[%s3 + $0xc8] sm:$0xf]
      %v2208 = vld [vmem:[%s3 + $0xcc] sm:$0xf]
      %v2209 = vld [vmem:[%s3 + $0xd0] sm:$0xf]
      %v2210 = vld [vmem:[%s3 + $0xd4] sm:$0xf]
      %v2211 = vld [vmem:[%s3 + $0xd8] sm:$0xf]
      %v2212 = vld [vmem:[%s3 + $0xdc] sm:$0xf]
      %v2213 = vld [vmem:[%s3 + $0xe0] sm:$0xf]
      %v2214 = vld [vmem:[%s3 + $0xe4] sm:$0xf]
      %v2215 = vld [vmem:[%s3 + $0xe8] sm:$0xf]
      %v2216 = vld [vmem:[%s3 + $0xec] sm:$0xf]
      %v2217 = vld [vmem:[%s3 + $0xf0] sm:$0xf]
      %v2218 = vld [vmem:[%s3 + $0xf4] sm:$0xf]
      %v2219 = vld [vmem:[%s3 + $0xf8] sm:$0xf]
      %v2220 = vld [vmem:[%s3 + $0xfc] sm:$0xf]
      %v2221 = vld [vmem:[%s3 + $0x100] sm:$0xf]
      %v2222 = vld [vmem:[%s3 + $0x104] sm:$0xf]
      %v2223 = vld [vmem:[%s3 + $0x108] sm:$0xf]
      %v2224 = vld [vmem:[%s3 + $0x10c] sm:$0xf]
      %v2225 = vld [vmem:[%s3 + $0x110] sm:$0xf]
      %v2226 = vld [vmem:[%s3 + $0x114] sm:$0xf]
      %v2227 = vld [vmem:[%s3 + $0x118] sm:$0xf]
      %v2228 = vld [vmem:[%s3 + $0x11c] sm:$0xf]
      %v2229 = vld [vmem:[%s3 + $0x120] sm:$0xf]
      %v2230 = vld [vmem:[%s3 + $0x124] sm:$0xf]
      %v2231 = vld [vmem:[%s3 + $0x128] sm:$0xf]
      %v2232 = vld [vmem:[%s3 + $0x12c] sm:$0xf]
      %v2233 = vld [vmem:[%s3 + $0x130] sm:$0xf]
      %v2234 = vld [vmem:[%s3 + $0x134] sm:$0xf]
      %v2235 = vld [vmem:[%s3 + $0x138] sm:$0xf]
      %v2236 = vld [vmem:[%s3 + $0x13c] sm:$0xf]
      %v2237 = vld [vmem:[%s3 + $0x140] sm:$0xf]
      %v2238 = vld [vmem:[%s3 + $0x144] sm:$0xf]
      %v2239 = vld [vmem:[%s3 + $0x148] sm:$0xf]
      %v2240 = vld [vmem:[%s3 + $0x14c] sm:$0xf]
      %v2241 = vld [vmem:[%s3 + $0x150] sm:$0xf]
      %v2242 = vld [vmem:[%s3 + $0x154] sm:$0xf]
      %v2243 = vld [vmem:[%s3 + $0x158] sm:$0xf]
      %v2244 = vld [vmem:[%s3 + $0x15c] sm:$0xf]
      %v2245 = vld [vmem:[%s3 + $0x160] sm:$0xf]
      %v2246 = vld [vmem:[%s3 + $0x164] sm:$0xf]
      %v2247 = vld [vmem:[%s3 + $0x168] sm:$0xf]
      %v2248 = vld [vmem:[%s3 + $0x16c] sm:$0xf]
      %v2249 = vld [vmem:[%s3 + $0x170] sm:$0xf]
      %v2250 = vld [vmem:[%s3 + $0x174] sm:$0xf]
      %v2251 = vld [vmem:[%s3 + $0x178] sm:$0xf]
      %v2252 = vld [vmem:[%s3 + $0x17c] sm:$0xf]
      %v2301 = vunpack.c.l.b16 %v2205
      %v2302 = vunpack.c.l.b16 %v2206
      %v2303 = vunpack.c.l.b16 %v2207
      %v2304 = vunpack.c.l.b16 %v2208
      %v2305 = vunpack.c.l.b16 %v2209
      %v2306 = vunpack.c.l.b16 %v2210
      %v2307 = vunpack.c.l.b16 %v2211
      %v2308 = vunpack.c.l.b16 %v2212
      %v2309 = vunpack.c.l.b16 %v2213
      %v2310 = vunpack.c.l.b16 %v2214
      %v2311 = vunpack.c.l.b16 %v2215
      %v2312 = vunpack.c.l.b16 %v2216
      %v2313 = vunpack.c.l.b16 %v2217
      %v2314 = vunpack.c.l.b16 %v2218
      %v2315 = vunpack.c.l.b16 %v2219
      %v2316 = vunpack.c.l.b16 %v2220
      %v2317 = vunpack.c.l.b16 %v2221
      %v2318 = vunpack.c.l.b16 %v2222
      %v2319 = vunpack.c.l.b16 %v2223
      %v2320 = vunpack.c.l.b16 %v2224
      %v2321 = vunpack.c.l.b16 %v2225
      %v2322 = vunpack.c.l.b16 %v2226
      %v2323 = vunpack.c.l.b16 %v2227
      %v2324 = vunpack.c.l.b16 %v2228
      %v2325 = vunpack.c.l.b16 %v2229
      %v2326 = vunpack.c.l.b16 %v2230
      %v2327 = vunpack.c.l.b16 %v2231
      %v2328 = vunpack.c.l.b16 %v2232
      %v2329 = vunpack.c.l.b16 %v2233
      %v2330 = vunpack.c.l.b16 %v2234
      %v2331 = vunpack.c.l.b16 %v2235
      %v2332 = vunpack.c.l.b16 %v2236
      %v2333 = vunpack.c.l.b16 %v2237
      %v2334 = vunpack.c.l.b16 %v2238
      %v2335 = vunpack.c.l.b16 %v2239
      %v2336 = vunpack.c.l.b16 %v2240
      %v2337 = vunpack.c.l.b16 %v2241
      %v2338 = vunpack.c.l.b16 %v2242
      %v2339 = vunpack.c.l.b16 %v2243
      %v2340 = vunpack.c.l.b16 %v2244
      %v2341 = vunpack.c.l.b16 %v2245
      %v2342 = vunpack.c.l.b16 %v2246
      %v2343 = vunpack.c.l.b16 %v2247
      %v2344 = vunpack.c.l.b16 %v2248
      %v2345 = vunpack.c.l.b16 %v2249
      %v2346 = vunpack.c.l.b16 %v2250
      %v2347 = vunpack.c.l.b16 %v2251
      %v2348 = vunpack.c.l.b16 %v2252
      %v2349 = vpack.c.b16 %v2302, %v2301
      %v2350 = vpack.c.b16 %v2304, %v2303
      %v2351 = vpack.c.b16 %v2306, %v2305
      %v2352 = vpack.c.b16 %v2308, %v2307
      %v2353 = vpack.c.b16 %v2310, %v2309
      %v2354 = vpack.c.b16 %v2312, %v2311
      %v2355 = vpack.c.b16 %v2314, %v2313
      %v2356 = vpack.c.b16 %v2316, %v2315
      %v2357 = vpack.c.b16 %v2318, %v2317
      %v2358 = vpack.c.b16 %v2320, %v2319
      %v2359 = vpack.c.b16 %v2322, %v2321
      %v2360 = vpack.c.b16 %v2324, %v2323
      %v2361 = vpack.c.b16 %v2326, %v2325
      %v2362 = vpack.c.b16 %v2328, %v2327
      %v2363 = vpack.c.b16 %v2330, %v2329
      %v2364 = vpack.c.b16 %v2332, %v2331
      %v2365 = vpack.c.b16 %v2334, %v2333
      %v2366 = vpack.c.b16 %v2336, %v2335
      %v2367 = vpack.c.b16 %v2338, %v2337
      %v2368 = vpack.c.b16 %v2340, %v2339
      %v2369 = vpack.c.b16 %v2342, %v2341
      %v2370 = vpack.c.b16 %v2344, %v2343
      %v2371 = vpack.c.b16 %v2346, %v2345
      %v2372 = vpack.c.b16 %v2348, %v2347
      %2397 = vmatpush.bf16.msra.mxu0 %v2356
      %2398 = vmatpush.bf16.msra.mxu0 %v2355
      %2399 = vmatpush.bf16.msra.mxu0 %v2354
      %2400 = vmatpush.bf16.msra.mxu0 %v2353
      %2401 = vmatpush.bf16.msra.mxu0 %v2352
      %2402 = vmatpush.bf16.msra.mxu0 %v2351
      %2403 = vmatpush.bf16.msra.mxu0 %v2350
      %2404 = vmatpush.bf16.msra.mxu0 %v2349
      %2405 = vmatmul.bf16.gmra.mxu0 %v1805
      %v2406 = vpop.f32.mrf.mxu0
      %v2407 = vadd.f32 0.0, %v2406
      %v2408 = vpop.f32.mrf.mxu0
      %v2409 = vadd.f32 0.0, %v2408
      %2410 = vmatmul.bf16.gmra.mxu0 %v1806
      %v2411 = vpop.f32.mrf.mxu0
      %v2412 = vadd.f32 0.0, %v2411
      %v2413 = vpop.f32.mrf.mxu0
      %v2414 = vadd.f32 0.0, %v2413
      %2415 = vmatmul.bf16.gmra.mxu0 %v1807
      %v2416 = vpop.f32.mrf.mxu0
      %v2417 = vadd.f32 0.0, %v2416
      %v2418 = vpop.f32.mrf.mxu0
      %v2419 = vadd.f32 0.0, %v2418
      %2420 = vmatmul.bf16.gmra.mxu0 %v1808
      %v2421 = vpop.f32.mrf.mxu0
      %v2422 = vadd.f32 0.0, %v2421
      %v2423 = vpop.f32.mrf.mxu0
      %v2424 = vadd.f32 0.0, %v2423
      %2425 = vmatmul.bf16.gmra.mxu0 %v1809
      %v2426 = vpop.f32.mrf.mxu0
      %v2427 = vadd.f32 0.0, %v2426
      %v2428 = vpop.f32.mrf.mxu0
      %v2429 = vadd.f32 0.0, %v2428
      %2430 = vmatmul.bf16.gmra.mxu0 %v1810
      %v2431 = vpop.f32.mrf.mxu0
      %v2432 = vadd.f32 0.0, %v2431
      %v2433 = vpop.f32.mrf.mxu0
      %v2434 = vadd.f32 0.0, %v2433
      %2435 = vmatmul.bf16.gmra.mxu0 %v1811
      %v2436 = vpop.f32.mrf.mxu0
      %v2437 = vadd.f32 0.0, %v2436
      %v2438 = vpop.f32.mrf.mxu0
      %v2439 = vadd.f32 0.0, %v2438
      %2440 = vmatmul.bf16.gmra.mxu0 %v1812
      %v2441 = vpop.f32.mrf.mxu0
      %v2442 = vadd.f32 0.0, %v2441
      %v2443 = vpop.f32.mrf.mxu0
      %v2444 = vadd.f32 0.0, %v2443
      %2445 = vmatmul.bf16.gmra.mxu0 %v1813
      %v2446 = vpop.f32.mrf.mxu0
      %v2447 = vadd.f32 0.0, %v2446
      %v2448 = vpop.f32.mrf.mxu0
      %v2449 = vadd.f32 0.0, %v2448
      %2450 = vmatmul.bf16.gmra.mxu0 %v1814
      %v2451 = vpop.f32.mrf.mxu0
      %v2452 = vadd.f32 0.0, %v2451
      %v2453 = vpop.f32.mrf.mxu0
      %v2454 = vadd.f32 0.0, %v2453
      %2455 = vmatmul.bf16.gmra.mxu0 %v1815
      %v2456 = vpop.f32.mrf.mxu0
      %v2457 = vadd.f32 0.0, %v2456
      %v2458 = vpop.f32.mrf.mxu0
      %v2459 = vadd.f32 0.0, %v2458
      %2460 = vmatmul.bf16.gmra.mxu0 %v1816
      %v2461 = vpop.f32.mrf.mxu0
      %v2462 = vadd.f32 0.0, %v2461
      %v2463 = vpop.f32.mrf.mxu0
      %v2464 = vadd.f32 0.0, %v2463
      %2465 = vmatmul.bf16.gmra.mxu0 %v1817
      %v2466 = vpop.f32.mrf.mxu0
      %v2467 = vadd.f32 0.0, %v2466
      %v2468 = vpop.f32.mrf.mxu0
      %v2469 = vadd.f32 0.0, %v2468
      %2470 = vmatmul.bf16.gmra.mxu0 %v1818
      %v2471 = vpop.f32.mrf.mxu0
      %v2472 = vadd.f32 0.0, %v2471
      %v2473 = vpop.f32.mrf.mxu0
      %v2474 = vadd.f32 0.0, %v2473
      %2475 = vmatmul.bf16.gmra.mxu0 %v1819
      %v2476 = vpop.f32.mrf.mxu0
      %v2477 = vadd.f32 0.0, %v2476
      %v2478 = vpop.f32.mrf.mxu0
      %v2479 = vadd.f32 0.0, %v2478
      %2480 = vmatmul.bf16.gmra.mxu0 %v1820
      %v2481 = vpop.f32.mrf.mxu0
      %v2482 = vadd.f32 0.0, %v2481
      %v2483 = vpop.f32.mrf.mxu0
      %v2484 = vadd.f32 0.0, %v2483
      %2485 = vdwg.mxu0
      %2486 = vmatpush.bf16.msra.mxu0 %v2364
      %2487 = vmatpush.bf16.msra.mxu0 %v2363
      %2488 = vmatpush.bf16.msra.mxu0 %v2362
      %2489 = vmatpush.bf16.msra.mxu0 %v2361
      %2490 = vmatpush.bf16.msra.mxu0 %v2360
      %2491 = vmatpush.bf16.msra.mxu0 %v2359
      %2492 = vmatpush.bf16.msra.mxu0 %v2358
      %2493 = vmatpush.bf16.msra.mxu0 %v2357
      %2494 = vmatmul.bf16.gmra.mxu0 %v1896
      %v2495 = vpop.f32.mrf.mxu0
      %v2496 = vadd.f32 %v2407, %v2495
      %v2497 = vpop.f32.mrf.mxu0
      %v2498 = vadd.f32 %v2409, %v2497
      %2499 = vmatmul.bf16.gmra.mxu0 %v1908
      %v2500 = vpop.f32.mrf.mxu0
      %v2501 = vadd.f32 %v2412, %v2500
      %v2502 = vpop.f32.mrf.mxu0
      %v2503 = vadd.f32 %v2414, %v2502
      %2504 = vmatmul.bf16.gmra.mxu0 %v1920
      %v2505 = vpop.f32.mrf.mxu0
      %v2506 = vadd.f32 %v2417, %v2505
      %v2507 = vpop.f32.mrf.mxu0
      %v2508 = vadd.f32 %v2419, %v2507
      %2509 = vmatmul.bf16.gmra.mxu0 %v1932
      %v2510 = vpop.f32.mrf.mxu0
      %v2511 = vadd.f32 %v2422, %v2510
      %v2512 = vpop.f32.mrf.mxu0
      %v2513 = vadd.f32 %v2424, %v2512
      %2514 = vmatmul.bf16.gmra.mxu0 %v1944
      %v2515 = vpop.f32.mrf.mxu0
      %v2516 = vadd.f32 %v2427, %v2515
      %v2517 = vpop.f32.mrf.mxu0
      %v2518 = vadd.f32 %v2429, %v2517
      %2519 = vmatmul.bf16.gmra.mxu0 %v1956
      %v2520 = vpop.f32.mrf.mxu0
      %v2521 = vadd.f32 %v2432, %v2520
      %v2522 = vpop.f32.mrf.mxu0
      %v2523 = vadd.f32 %v2434, %v2522
      %2524 = vmatmul.bf16.gmra.mxu0 %v1968
      %v2525 = vpop.f32.mrf.mxu0
      %v2526 = vadd.f32 %v2437, %v2525
      %v2527 = vpop.f32.mrf.mxu0
      %v2528 = vadd.f32 %v2439, %v2527
      %2529 = vmatmul.bf16.gmra.mxu0 %v1980
      %v2530 = vpop.f32.mrf.mxu0
      %v2531 = vadd.f32 %v2442, %v2530
      %v2532 = vpop.f32.mrf.mxu0
      %v2533 = vadd.f32 %v2444, %v2532
      %2534 = vmatmul.bf16.gmra.mxu0 %v1992
      %v2535 = vpop.f32.mrf.mxu0
      %v2536 = vadd.f32 %v2447, %v2535
      %v2537 = vpop.f32.mrf.mxu0
      %v2538 = vadd.f32 %v2449, %v2537
      %2539 = vmatmul.bf16.gmra.mxu0 %v2004
      %v2540 = vpop.f32.mrf.mxu0
      %v2541 = vadd.f32 %v2452, %v2540
      %v2542 = vpop.f32.mrf.mxu0
      %v2543 = vadd.f32 %v2454, %v2542
      %2544 = vmatmul.bf16.gmra.mxu0 %v2016
      %v2545 = vpop.f32.mrf.mxu0
      %v2546 = vadd.f32 %v2457, %v2545
      %v2547 = vpop.f32.mrf.mxu0
      %v2548 = vadd.f32 %v2459, %v2547
      %2549 = vmatmul.bf16.gmra.mxu0 %v2028
      %v2550 = vpop.f32.mrf.mxu0
      %v2551 = vadd.f32 %v2462, %v2550
      %v2552 = vpop.f32.mrf.mxu0
      %v2553 = vadd.f32 %v2464, %v2552
      %2554 = vmatmul.bf16.gmra.mxu0 %v2040
      %v2555 = vpop.f32.mrf.mxu0
      %v2556 = vadd.f32 %v2467, %v2555
      %v2557 = vpop.f32.mrf.mxu0
      %v2558 = vadd.f32 %v2469, %v2557
      %2559 = vmatmul.bf16.gmra.mxu0 %v2052
      %v2560 = vpop.f32.mrf.mxu0
      %v2561 = vadd.f32 %v2472, %v2560
      %v2562 = vpop.f32.mrf.mxu0
      %v2563 = vadd.f32 %v2474, %v2562
      %2564 = vmatmul.bf16.gmra.mxu0 %v2064
      %v2565 = vpop.f32.mrf.mxu0
      %v2566 = vadd.f32 %v2477, %v2565
      %v2567 = vpop.f32.mrf.mxu0
      %v2568 = vadd.f32 %v2479, %v2567
      %2569 = vmatmul.bf16.gmra.mxu0 %v2076
      %v2570 = vpop.f32.mrf.mxu0
      %v2571 = vadd.f32 %v2482, %v2570
      %v2572 = vpop.f32.mrf.mxu0
      %v2573 = vadd.f32 %v2484, %v2572
      %2574 = vdwg.mxu0
      %2575 = vmatpush.bf16.msra.mxu0 %v2372
      %2576 = vmatpush.bf16.msra.mxu0 %v2371
      %2577 = vmatpush.bf16.msra.mxu0 %v2370
      %2578 = vmatpush.bf16.msra.mxu0 %v2369
      %2579 = vmatpush.bf16.msra.mxu0 %v2368
      %2580 = vmatpush.bf16.msra.mxu0 %v2367
      %2581 = vmatpush.bf16.msra.mxu0 %v2366
      %2582 = vmatpush.bf16.msra.mxu0 %v2365
      %2583 = vmatmul.bf16.gmra.mxu0 %v2143
      %v2584 = vpop.f32.mrf.mxu0
      %v2585 = vadd.f32 %v2496, %v2584
      %v2586 = vpop.f32.mrf.mxu0
      %v2587 = vadd.f32 %v2498, %v2586
      %2588 = vmatmul.bf16.gmra.mxu0 %v2146
      %v2589 = vpop.f32.mrf.mxu0
      %v2590 = vadd.f32 %v2501, %v2589
      %v2591 = vpop.f32.mrf.mxu0
      %v2592 = vadd.f32 %v2503, %v2591
      %2593 = vmatmul.bf16.gmra.mxu0 %v2149
      %v2594 = vpop.f32.mrf.mxu0
      %v2595 = vadd.f32 %v2506, %v2594
      %v2596 = vpop.f32.mrf.mxu0
      %v2597 = vadd.f32 %v2508, %v2596
      %2598 = vmatmul.bf16.gmra.mxu0 %v2152
      %v2599 = vpop.f32.mrf.mxu0
      %v2600 = vadd.f32 %v2511, %v2599
      %v2601 = vpop.f32.mrf.mxu0
      %v2602 = vadd.f32 %v2513, %v2601
      %2603 = vmatmul.bf16.gmra.mxu0 %v2155
      %v2604 = vpop.f32.mrf.mxu0
      %v2605 = vadd.f32 %v2516, %v2604
      %v2606 = vpop.f32.mrf.mxu0
      %v2607 = vadd.f32 %v2518, %v2606
      %2608 = vmatmul.bf16.gmra.mxu0 %v2158
      %v2609 = vpop.f32.mrf.mxu0
      %v2610 = vadd.f32 %v2521, %v2609
      %v2611 = vpop.f32.mrf.mxu0
      %v2612 = vadd.f32 %v2523, %v2611
      %2613 = vmatmul.bf16.gmra.mxu0 %v2161
      %v2614 = vpop.f32.mrf.mxu0
      %v2615 = vadd.f32 %v2526, %v2614
      %v2616 = vpop.f32.mrf.mxu0
      %v2617 = vadd.f32 %v2528, %v2616
      %2618 = vmatmul.bf16.gmra.mxu0 %v2164
      %v2619 = vpop.f32.mrf.mxu0
      %v2620 = vadd.f32 %v2531, %v2619
      %v2621 = vpop.f32.mrf.mxu0
      %v2622 = vadd.f32 %v2533, %v2621
      %2623 = vmatmul.bf16.gmra.mxu0 %v2167
      %v2624 = vpop.f32.mrf.mxu0
      %v2625 = vadd.f32 %v2536, %v2624
      %v2626 = vpop.f32.mrf.mxu0
      %v2627 = vadd.f32 %v2538, %v2626
      %2628 = vmatmul.bf16.gmra.mxu0 %v2170
      %v2629 = vpop.f32.mrf.mxu0
      %v2630 = vadd.f32 %v2541, %v2629
      %v2631 = vpop.f32.mrf.mxu0
      %v2632 = vadd.f32 %v2543, %v2631
      %2633 = vmatmul.bf16.gmra.mxu0 %v2173
      %v2634 = vpop.f32.mrf.mxu0
      %v2635 = vadd.f32 %v2546, %v2634
      %v2636 = vpop.f32.mrf.mxu0
      %v2637 = vadd.f32 %v2548, %v2636
      %2638 = vmatmul.bf16.gmra.mxu0 %v2176
      %v2639 = vpop.f32.mrf.mxu0
      %v2640 = vadd.f32 %v2551, %v2639
      %v2641 = vpop.f32.mrf.mxu0
      %v2642 = vadd.f32 %v2553, %v2641
      %2643 = vmatmul.bf16.gmra.mxu0 %v2179
      %v2644 = vpop.f32.mrf.mxu0
      %v2645 = vadd.f32 %v2556, %v2644
      %v2646 = vpop.f32.mrf.mxu0
      %v2647 = vadd.f32 %v2558, %v2646
      %2648 = vmatmul.bf16.gmra.mxu0 %v2182
      %v2649 = vpop.f32.mrf.mxu0
      %v2650 = vadd.f32 %v2561, %v2649
      %v2651 = vpop.f32.mrf.mxu0
      %v2652 = vadd.f32 %v2563, %v2651
      %2653 = vmatmul.bf16.gmra.mxu0 %v2185
      %v2654 = vpop.f32.mrf.mxu0
      %v2655 = vadd.f32 %v2566, %v2654
      %v2656 = vpop.f32.mrf.mxu0
      %v2657 = vadd.f32 %v2568, %v2656
      %2658 = vmatmul.bf16.gmra.mxu0 %v2188
      %v2659 = vpop.f32.mrf.mxu0
      %v2660 = vadd.f32 %v2571, %v2659
      %v2661 = vpop.f32.mrf.mxu0
      %v2662 = vadd.f32 %v2573, %v2661
      %2663 = vdwg.mxu0
      %v2712 = vunpack.c.l.b16 %v1629
      %v2713 = vunpack.c.l.b16 %v1630
      %v2714 = vunpack.c.l.b16 %v1631
      %v2715 = vunpack.c.l.b16 %v1632
      %v2716 = vunpack.c.l.b16 %v1633
      %v2717 = vunpack.c.l.b16 %v1634
      %v2718 = vunpack.c.l.b16 %v1635
      %v2719 = vunpack.c.l.b16 %v1636
      %v2720 = vunpack.c.l.b16 %v1637
      %v2721 = vunpack.c.l.b16 %v1638
      %v2722 = vunpack.c.l.b16 %v1639
      %v2723 = vunpack.c.l.b16 %v1640
      %v2724 = vunpack.c.l.b16 %v1641
      %v2725 = vunpack.c.l.b16 %v1642
      %v2726 = vunpack.c.l.b16 %v1643
      %v2727 = vunpack.c.l.b16 %v1644
      %v2728 = vunpack.c.l.b16 %v1645
      %v2729 = vunpack.c.l.b16 %v1646
      %v2730 = vunpack.c.l.b16 %v1647
      %v2731 = vunpack.c.l.b16 %v1648
      %v2732 = vunpack.c.l.b16 %v1649
      %v2733 = vunpack.c.l.b16 %v1650
      %v2734 = vunpack.c.l.b16 %v1651
      %v2735 = vunpack.c.l.b16 %v1652
      %v2736 = vunpack.c.l.b16 %v1653
      %v2737 = vunpack.c.l.b16 %v1654
      %v2738 = vunpack.c.l.b16 %v1655
      %v2739 = vunpack.c.l.b16 %v1656
      %v2740 = vunpack.c.l.b16 %v1657
      %v2741 = vunpack.c.l.b16 %v1658
      %v2742 = vunpack.c.l.b16 %v1659
      %v2743 = vunpack.c.l.b16 %v1660
      %v2744 = vunpack.c.l.b16 %v1661
      %v2745 = vunpack.c.l.b16 %v1662
      %v2746 = vunpack.c.l.b16 %v1663
      %v2747 = vunpack.c.l.b16 %v1664
      %v2748 = vunpack.c.l.b16 %v1665
      %v2749 = vunpack.c.l.b16 %v1666
      %v2750 = vunpack.c.l.b16 %v1667
      %v2751 = vunpack.c.l.b16 %v1668
      %v2752 = vunpack.c.l.b16 %v1669
      %v2753 = vunpack.c.l.b16 %v1670
      %v2754 = vunpack.c.l.b16 %v1671
      %v2755 = vunpack.c.l.b16 %v1672
      %v2756 = vunpack.c.l.b16 %v1673
      %v2757 = vunpack.c.l.b16 %v1674
      %v2758 = vunpack.c.l.b16 %v1675
      %v2759 = vunpack.c.l.b16 %v1676
      %v2760 = vpack.c.b16 %v2713, %v2712
      %v2761 = vpack.c.b16 %v2715, %v2714
      %v2762 = vpack.c.b16 %v2717, %v2716
      %v2763 = vpack.c.b16 %v2719, %v2718
      %v2764 = vpack.c.b16 %v2721, %v2720
      %v2765 = vpack.c.b16 %v2723, %v2722
      %v2766 = vpack.c.b16 %v2725, %v2724
      %v2767 = vpack.c.b16 %v2727, %v2726
      %v2768 = vpack.c.b16 %v2729, %v2728
      %v2769 = vpack.c.b16 %v2731, %v2730
      %v2770 = vpack.c.b16 %v2733, %v2732
      %v2771 = vpack.c.b16 %v2735, %v2734
      %v2772 = vpack.c.b16 %v2737, %v2736
      %v2773 = vpack.c.b16 %v2739, %v2738
      %v2774 = vpack.c.b16 %v2741, %v2740
      %v2775 = vpack.c.b16 %v2743, %v2742
      %v2776 = vpack.c.b16 %v2745, %v2744
      %v2777 = vpack.c.b16 %v2747, %v2746
      %v2778 = vpack.c.b16 %v2749, %v2748
      %v2779 = vpack.c.b16 %v2751, %v2750
      %v2780 = vpack.c.b16 %v2753, %v2752
      %v2781 = vpack.c.b16 %v2755, %v2754
      %v2782 = vpack.c.b16 %v2757, %v2756
      %v2783 = vpack.c.b16 %v2759, %v2758
      %2808 = vmatpush.bf16.msra.mxu0 %v2767
      %2809 = vmatpush.bf16.msra.mxu0 %v2766
      %2810 = vmatpush.bf16.msra.mxu0 %v2765
      %2811 = vmatpush.bf16.msra.mxu0 %v2764
      %2812 = vmatpush.bf16.msra.mxu0 %v2763
      %2813 = vmatpush.bf16.msra.mxu0 %v2762
      %2814 = vmatpush.bf16.msra.mxu0 %v2761
      %2815 = vmatpush.bf16.msra.mxu0 %v2760
      %2816 = vmatmul.bf16.gmra.mxu0 %v1227
      %v2817 = vpop.f32.mrf.mxu0
      %v2818 = vadd.f32 %v2585, %v2817
      %v2819 = vpop.f32.mrf.mxu0
      %v2820 = vadd.f32 %v2587, %v2819
      %2821 = vmatmul.bf16.gmra.mxu0 %v1228
      %v2822 = vpop.f32.mrf.mxu0
      %v2823 = vadd.f32 %v2590, %v2822
      %v2824 = vpop.f32.mrf.mxu0
      %v2825 = vadd.f32 %v2592, %v2824
      %2826 = vmatmul.bf16.gmra.mxu0 %v1229
      %v2827 = vpop.f32.mrf.mxu0
      %v2828 = vadd.f32 %v2595, %v2827
      %v2829 = vpop.f32.mrf.mxu0
      %v2830 = vadd.f32 %v2597, %v2829
      %2831 = vmatmul.bf16.gmra.mxu0 %v1230
      %v2832 = vpop.f32.mrf.mxu0
      %v2833 = vadd.f32 %v2600, %v2832
      %v2834 = vpop.f32.mrf.mxu0
      %v2835 = vadd.f32 %v2602, %v2834
      %2836 = vmatmul.bf16.gmra.mxu0 %v1231
      %v2837 = vpop.f32.mrf.mxu0
      %v2838 = vadd.f32 %v2605, %v2837
      %v2839 = vpop.f32.mrf.mxu0
      %v2840 = vadd.f32 %v2607, %v2839
      %2841 = vmatmul.bf16.gmra.mxu0 %v1232
      %v2842 = vpop.f32.mrf.mxu0
      %v2843 = vadd.f32 %v2610, %v2842
      %v2844 = vpop.f32.mrf.mxu0
      %v2845 = vadd.f32 %v2612, %v2844
      %2846 = vmatmul.bf16.gmra.mxu0 %v1233
      %v2847 = vpop.f32.mrf.mxu0
      %v2848 = vadd.f32 %v2615, %v2847
      %v2849 = vpop.f32.mrf.mxu0
      %v2850 = vadd.f32 %v2617, %v2849
      %2851 = vmatmul.bf16.gmra.mxu0 %v1234
      %v2852 = vpop.f32.mrf.mxu0
      %v2853 = vadd.f32 %v2620, %v2852
      %v2854 = vpop.f32.mrf.mxu0
      %v2855 = vadd.f32 %v2622, %v2854
      %2856 = vmatmul.bf16.gmra.mxu0 %v1235
      %v2857 = vpop.f32.mrf.mxu0
      %v2858 = vadd.f32 %v2625, %v2857
      %v2859 = vpop.f32.mrf.mxu0
      %v2860 = vadd.f32 %v2627, %v2859
      %2861 = vmatmul.bf16.gmra.mxu0 %v1236
      %v2862 = vpop.f32.mrf.mxu0
      %v2863 = vadd.f32 %v2630, %v2862
      %v2864 = vpop.f32.mrf.mxu0
      %v2865 = vadd.f32 %v2632, %v2864
      %2866 = vmatmul.bf16.gmra.mxu0 %v1237
      %v2867 = vpop.f32.mrf.mxu0
      %v2868 = vadd.f32 %v2635, %v2867
      %v2869 = vpop.f32.mrf.mxu0
      %v2870 = vadd.f32 %v2637, %v2869
      %2871 = vmatmul.bf16.gmra.mxu0 %v1238
      %v2872 = vpop.f32.mrf.mxu0
      %v2873 = vadd.f32 %v2640, %v2872
      %v2874 = vpop.f32.mrf.mxu0
      %v2875 = vadd.f32 %v2642, %v2874
      %2876 = vmatmul.bf16.gmra.mxu0 %v1239
      %v2877 = vpop.f32.mrf.mxu0
      %v2878 = vadd.f32 %v2645, %v2877
      %v2879 = vpop.f32.mrf.mxu0
      %v2880 = vadd.f32 %v2647, %v2879
      %2881 = vmatmul.bf16.gmra.mxu0 %v1240
      %v2882 = vpop.f32.mrf.mxu0
      %v2883 = vadd.f32 %v2650, %v2882
      %v2884 = vpop.f32.mrf.mxu0
      %v2885 = vadd.f32 %v2652, %v2884
      %2886 = vmatmul.bf16.gmra.mxu0 %v1241
      %v2887 = vpop.f32.mrf.mxu0
      %v2888 = vadd.f32 %v2655, %v2887
      %v2889 = vpop.f32.mrf.mxu0
      %v2890 = vadd.f32 %v2657, %v2889
      %2891 = vmatmul.bf16.gmra.mxu0 %v1242
      %v2892 = vpop.f32.mrf.mxu0
      %v2893 = vadd.f32 %v2660, %v2892
      %v2894 = vpop.f32.mrf.mxu0
      %v2895 = vadd.f32 %v2662, %v2894
      %2896 = vdwg.mxu0
      %2897 = vmatpush.bf16.msra.mxu0 %v2775
      %2898 = vmatpush.bf16.msra.mxu0 %v2774
      %2899 = vmatpush.bf16.msra.mxu0 %v2773
      %2900 = vmatpush.bf16.msra.mxu0 %v2772
      %2901 = vmatpush.bf16.msra.mxu0 %v2771
      %2902 = vmatpush.bf16.msra.mxu0 %v2770
      %2903 = vmatpush.bf16.msra.mxu0 %v2769
      %2904 = vmatpush.bf16.msra.mxu0 %v2768
      %2905 = vmatmul.bf16.gmra.mxu0 %v1319
      %v2906 = vpop.f32.mrf.mxu0
      %v2907 = vadd.f32 %v2818, %v2906
      %v2908 = vpop.f32.mrf.mxu0
      %v2909 = vadd.f32 %v2820, %v2908
      %2910 = vmatmul.bf16.gmra.mxu0 %v1331
      %v2911 = vpop.f32.mrf.mxu0
      %v2912 = vadd.f32 %v2823, %v2911
      %v2913 = vpop.f32.mrf.mxu0
      %v2914 = vadd.f32 %v2825, %v2913
      %2915 = vmatmul.bf16.gmra.mxu0 %v1343
      %v2916 = vpop.f32.mrf.mxu0
      %v2917 = vadd.f32 %v2828, %v2916
      %v2918 = vpop.f32.mrf.mxu0
      %v2919 = vadd.f32 %v2830, %v2918
      %2920 = vmatmul.bf16.gmra.mxu0 %v1355
      %v2921 = vpop.f32.mrf.mxu0
      %v2922 = vadd.f32 %v2833, %v2921
      %v2923 = vpop.f32.mrf.mxu0
      %v2924 = vadd.f32 %v2835, %v2923
      %2925 = vmatmul.bf16.gmra.mxu0 %v1367
      %v2926 = vpop.f32.mrf.mxu0
      %v2927 = vadd.f32 %v2838, %v2926
      %v2928 = vpop.f32.mrf.mxu0
      %v2929 = vadd.f32 %v2840, %v2928
      %2930 = vmatmul.bf16.gmra.mxu0 %v1379
      %v2931 = vpop.f32.mrf.mxu0
      %v2932 = vadd.f32 %v2843, %v2931
      %v2933 = vpop.f32.mrf.mxu0
      %v2934 = vadd.f32 %v2845, %v2933
      %2935 = vmatmul.bf16.gmra.mxu0 %v1391
      %v2936 = vpop.f32.mrf.mxu0
      %v2937 = vadd.f32 %v2848, %v2936
      %v2938 = vpop.f32.mrf.mxu0
      %v2939 = vadd.f32 %v2850, %v2938
      %2940 = vmatmul.bf16.gmra.mxu0 %v1403
      %v2941 = vpop.f32.mrf.mxu0
      %v2942 = vadd.f32 %v2853, %v2941
      %v2943 = vpop.f32.mrf.mxu0
      %v2944 = vadd.f32 %v2855, %v2943
      %2945 = vmatmul.bf16.gmra.mxu0 %v1415
      %v2946 = vpop.f32.mrf.mxu0
      %v2947 = vadd.f32 %v2858, %v2946
      %v2948 = vpop.f32.mrf.mxu0
      %v2949 = vadd.f32 %v2860, %v2948
      %2950 = vmatmul.bf16.gmra.mxu0 %v1427
      %v2951 = vpop.f32.mrf.mxu0
      %v2952 = vadd.f32 %v2863, %v2951
      %v2953 = vpop.f32.mrf.mxu0
      %v2954 = vadd.f32 %v2865, %v2953
      %2955 = vmatmul.bf16.gmra.mxu0 %v1439
      %v2956 = vpop.f32.mrf.mxu0
      %v2957 = vadd.f32 %v2868, %v2956
      %v2958 = vpop.f32.mrf.mxu0
      %v2959 = vadd.f32 %v2870, %v2958
      %2960 = vmatmul.bf16.gmra.mxu0 %v1451
      %v2961 = vpop.f32.mrf.mxu0
      %v2962 = vadd.f32 %v2873, %v2961
      %v2963 = vpop.f32.mrf.mxu0
      %v2964 = vadd.f32 %v2875, %v2963
      %2965 = vmatmul.bf16.gmra.mxu0 %v1463
      %v2966 = vpop.f32.mrf.mxu0
      %v2967 = vadd.f32 %v2878, %v2966
      %v2968 = vpop.f32.mrf.mxu0
      %v2969 = vadd.f32 %v2880, %v2968
      %2970 = vmatmul.bf16.gmra.mxu0 %v1475
      %v2971 = vpop.f32.mrf.mxu0
      %v2972 = vadd.f32 %v2883, %v2971
      %v2973 = vpop.f32.mrf.mxu0
      %v2974 = vadd.f32 %v2885, %v2973
      %2975 = vmatmul.bf16.gmra.mxu0 %v1487
      %v2976 = vpop.f32.mrf.mxu0
      %v2977 = vadd.f32 %v2888, %v2976
      %v2978 = vpop.f32.mrf.mxu0
      %v2979 = vadd.f32 %v2890, %v2978
      %2980 = vmatmul.bf16.gmra.mxu0 %v1499
      %v2981 = vpop.f32.mrf.mxu0
      %v2982 = vadd.f32 %v2893, %v2981
      %v2983 = vpop.f32.mrf.mxu0
      %v2984 = vadd.f32 %v2895, %v2983
      %2985 = vdwg.mxu0
      %2986 = vmatpush.bf16.msra.mxu0 %v2783
      %2987 = vmatpush.bf16.msra.mxu0 %v2782
      %2988 = vmatpush.bf16.msra.mxu0 %v2781
      %2989 = vmatpush.bf16.msra.mxu0 %v2780
      %2990 = vmatpush.bf16.msra.mxu0 %v2779
      %2991 = vmatpush.bf16.msra.mxu0 %v2778
      %2992 = vmatpush.bf16.msra.mxu0 %v2777
      %2993 = vmatpush.bf16.msra.mxu0 %v2776
      %2994 = vmatmul.bf16.gmra.mxu0 %v1567
      %v2995 = vpop.f32.mrf.mxu0
      %v2996 = vadd.f32 %v2907, %v2995
      %v2997 = vpop.f32.mrf.mxu0
      %v2998 = vadd.f32 %v2909, %v2997
      %2999 = vmatmul.bf16.gmra.mxu0 %v1570
      %v3000 = vpop.f32.mrf.mxu0
      %v3001 = vadd.f32 %v2912, %v3000
      %v3002 = vpop.f32.mrf.mxu0
      %v3003 = vadd.f32 %v2914, %v3002
      %3004 = vmatmul.bf16.gmra.mxu0 %v1573
      %v3005 = vpop.f32.mrf.mxu0
      %v3006 = vadd.f32 %v2917, %v3005
      %v3007 = vpop.f32.mrf.mxu0
      %v3008 = vadd.f32 %v2919, %v3007
      %3009 = vmatmul.bf16.gmra.mxu0 %v1576
      %v3010 = vpop.f32.mrf.mxu0
      %v3011 = vadd.f32 %v2922, %v3010
      %v3012 = vpop.f32.mrf.mxu0
      %v3013 = vadd.f32 %v2924, %v3012
      %3014 = vmatmul.bf16.gmra.mxu0 %v1579
      %v3015 = vpop.f32.mrf.mxu0
      %v3016 = vadd.f32 %v2927, %v3015
      %v3017 = vpop.f32.mrf.mxu0
      %v3018 = vadd.f32 %v2929, %v3017
      %3019 = vmatmul.bf16.gmra.mxu0 %v1582
      %v3020 = vpop.f32.mrf.mxu0
      %v3021 = vadd.f32 %v2932, %v3020
      %v3022 = vpop.f32.mrf.mxu0
      %v3023 = vadd.f32 %v2934, %v3022
      %3024 = vmatmul.bf16.gmra.mxu0 %v1585
      %v3025 = vpop.f32.mrf.mxu0
      %v3026 = vadd.f32 %v2937, %v3025
      %v3027 = vpop.f32.mrf.mxu0
      %v3028 = vadd.f32 %v2939, %v3027
      %3029 = vmatmul.bf16.gmra.mxu0 %v1588
      %v3030 = vpop.f32.mrf.mxu0
      %v3031 = vadd.f32 %v2942, %v3030
      %v3032 = vpop.f32.mrf.mxu0
      %v3033 = vadd.f32 %v2944, %v3032
      %3034 = vmatmul.bf16.gmra.mxu0 %v1591
      %v3035 = vpop.f32.mrf.mxu0
      %v3036 = vadd.f32 %v2947, %v3035
      %v3037 = vpop.f32.mrf.mxu0
      %v3038 = vadd.f32 %v2949, %v3037
      %3039 = vmatmul.bf16.gmra.mxu0 %v1594
      %v3040 = vpop.f32.mrf.mxu0
      %v3041 = vadd.f32 %v2952, %v3040
      %v3042 = vpop.f32.mrf.mxu0
      %v3043 = vadd.f32 %v2954, %v3042
      %3044 = vmatmul.bf16.gmra.mxu0 %v1597
      %v3045 = vpop.f32.mrf.mxu0
      %v3046 = vadd.f32 %v2957, %v3045
      %v3047 = vpop.f32.mrf.mxu0
      %v3048 = vadd.f32 %v2959, %v3047
      %3049 = vmatmul.bf16.gmra.mxu0 %v1600
      %v3050 = vpop.f32.mrf.mxu0
      %v3051 = vadd.f32 %v2962, %v3050
      %v3052 = vpop.f32.mrf.mxu0
      %v3053 = vadd.f32 %v2964, %v3052
      %3054 = vmatmul.bf16.gmra.mxu0 %v1603
      %v3055 = vpop.f32.mrf.mxu0
      %v3056 = vadd.f32 %v2967, %v3055
      %v3057 = vpop.f32.mrf.mxu0
      %v3058 = vadd.f32 %v2969, %v3057
      %3059 = vmatmul.bf16.gmra.mxu0 %v1606
      %v3060 = vpop.f32.mrf.mxu0
      %v3061 = vadd.f32 %v2972, %v3060
      %v3062 = vpop.f32.mrf.mxu0
      %v3063 = vadd.f32 %v2974, %v3062
      %3064 = vmatmul.bf16.gmra.mxu0 %v1609
      %v3065 = vpop.f32.mrf.mxu0
      %v3066 = vadd.f32 %v2977, %v3065
      %v3067 = vpop.f32.mrf.mxu0
      %v3068 = vadd.f32 %v2979, %v3067
      %3069 = vmatmul.bf16.gmra.mxu0 %v1612
      %v3070 = vpop.f32.mrf.mxu0
      %v3071 = vadd.f32 %v2982, %v3070
      %v3072 = vpop.f32.mrf.mxu0
      %v3073 = vadd.f32 %v2984, %v3072
      %3074 = vdwg.mxu0
      %s3075 = scalar_lea.vmem [#allocation2], 24
      %v3076 = vld [vmem:[%s3075] sm:$0xf]
      %v3077 = vld [vmem:[%s3075 + $0x4] sm:$0xf]
      %v3078 = vld [vmem:[%s3075 + $0xc] sm:$0xf]
      %v3079 = vld [vmem:[%s3075 + $0x10] sm:$0xf]
      %v3080 = vld [vmem:[%s3075 + $0x18] sm:$0xf]
      %v3081 = vld [vmem:[%s3075 + $0x1c] sm:$0xf]
      %v3082 = vld [vmem:[%s3075 + $0x24] sm:$0xf]
      %v3083 = vld [vmem:[%s3075 + $0x28] sm:$0xf]
      %v3084 = vld [vmem:[%s3075 + $0x30] sm:$0xf]
      %v3085 = vld [vmem:[%s3075 + $0x34] sm:$0xf]
      %v3086 = vld [vmem:[%s3075 + $0x3c] sm:$0xf]
      %v3087 = vld [vmem:[%s3075 + $0x40] sm:$0xf]
      %v3088 = vld [vmem:[%s3075 + $0x48] sm:$0xf]
      %v3089 = vld [vmem:[%s3075 + $0x4c] sm:$0xf]
      %v3090 = vld [vmem:[%s3075 + $0x54] sm:$0xf]
      %v3091 = vld [vmem:[%s3075 + $0x58] sm:$0xf]
      %v3092 = vld [vmem:[%s3075 + $0x60] sm:$0xf]
      %v3093 = vld [vmem:[%s3075 + $0x64] sm:$0xf]
      %v3094 = vld [vmem:[%s3075 + $0x6c] sm:$0xf]
      %v3095 = vld [vmem:[%s3075 + $0x70] sm:$0xf]
      %v3096 = vld [vmem:[%s3075 + $0x78] sm:$0xf]
      %v3097 = vld [vmem:[%s3075 + $0x7c] sm:$0xf]
      %v3098 = vld [vmem:[%s3075 + $0x84] sm:$0xf]
      %v3099 = vld [vmem:[%s3075 + $0x88] sm:$0xf]
      %v3100 = vld [vmem:[%s3075 + $0x90] sm:$0xf]
      %v3101 = vld [vmem:[%s3075 + $0x94] sm:$0xf]
      %v3102 = vld [vmem:[%s3075 + $0x9c] sm:$0xf]
      %v3103 = vld [vmem:[%s3075 + $0xa0] sm:$0xf]
      %v3104 = vld [vmem:[%s3075 + $0xa8] sm:$0xf]
      %v3105 = vld [vmem:[%s3075 + $0xac] sm:$0xf]
      %v3106 = vld [vmem:[%s3075 + $0xb4] sm:$0xf]
      %v3107 = vld [vmem:[%s3075 + $0xb8] sm:$0xf]
      %v3108 = vld [vmem:[%s3075 + $0x8] sm:$0x1]
      %v3109 = vld [vmem:[%s3075 + $0x14] sm:$0x1]
      %v3110 = vld [vmem:[%s3075 + $0x20] sm:$0x1]
      %v3111 = vld [vmem:[%s3075 + $0x2c] sm:$0x1]
      %v3112 = vld [vmem:[%s3075 + $0x38] sm:$0x1]
      %v3113 = vld [vmem:[%s3075 + $0x44] sm:$0x1]
      %v3114 = vld [vmem:[%s3075 + $0x50] sm:$0x1]
      %v3115 = vld [vmem:[%s3075 + $0x5c] sm:$0x1]
      %v3116 = vld [vmem:[%s3075 + $0x68] sm:$0x1]
      %v3117 = vld [vmem:[%s3075 + $0x74] sm:$0x1]
      %v3118 = vld [vmem:[%s3075 + $0x80] sm:$0x1]
      %v3119 = vld [vmem:[%s3075 + $0x8c] sm:$0x1]
      %v3120 = vld [vmem:[%s3075 + $0x98] sm:$0x1]
      %v3121 = vld [vmem:[%s3075 + $0xa4] sm:$0x1]
      %v3122 = vld [vmem:[%s3075 + $0xb0] sm:$0x1]
      %v3123 = vld [vmem:[%s3075 + $0xbc] sm:$0x1]
      %v3124 = vld [vmem:[%s3075] sm:$0xe]
      %v3125 = vld [vmem:[%s3075 + $0xc] sm:$0xe]
      %v3126 = vld [vmem:[%s3075 + $0x18] sm:$0xe]
      %v3127 = vld [vmem:[%s3075 + $0x24] sm:$0xe]
      %v3128 = vld [vmem:[%s3075 + $0x30] sm:$0xe]
      %v3129 = vld [vmem:[%s3075 + $0x3c] sm:$0xe]
      %v3130 = vld [vmem:[%s3075 + $0x48] sm:$0xe]
      %v3131 = vld [vmem:[%s3075 + $0x54] sm:$0xe]
      %v3132 = vld [vmem:[%s3075 + $0x60] sm:$0xe]
      %v3133 = vld [vmem:[%s3075 + $0x6c] sm:$0xe]
      %v3134 = vld [vmem:[%s3075 + $0x78] sm:$0xe]
      %v3135 = vld [vmem:[%s3075 + $0x84] sm:$0xe]
      %v3136 = vld [vmem:[%s3075 + $0x90] sm:$0xe]
      %v3137 = vld [vmem:[%s3075 + $0x9c] sm:$0xe]
      %v3138 = vld [vmem:[%s3075 + $0xa8] sm:$0xe]
      %v3139 = vld [vmem:[%s3075 + $0xb4] sm:$0xe]
      %v3172 = vunpack.c.l.b16 %v3076
      %v3173 = vunpack.c.l.b16 %v3077
      %v3174 = vunpack.c.l.b16 %v3078
      %v3175 = vunpack.c.l.b16 %v3079
      %v3176 = vunpack.c.l.b16 %v3080
      %v3177 = vunpack.c.l.b16 %v3081
      %v3178 = vunpack.c.l.b16 %v3082
      %v3179 = vunpack.c.l.b16 %v3083
      %v3180 = vunpack.c.l.b16 %v3084
      %v3181 = vunpack.c.l.b16 %v3085
      %v3182 = vunpack.c.l.b16 %v3086
      %v3183 = vunpack.c.l.b16 %v3087
      %v3184 = vunpack.c.l.b16 %v3088
      %v3185 = vunpack.c.l.b16 %v3089
      %v3186 = vunpack.c.l.b16 %v3090
      %v3187 = vunpack.c.l.b16 %v3091
      %v3188 = vunpack.c.l.b16 %v3092
      %v3189 = vunpack.c.l.b16 %v3093
      %v3190 = vunpack.c.l.b16 %v3094
      %v3191 = vunpack.c.l.b16 %v3095
      %v3192 = vunpack.c.l.b16 %v3096
      %v3193 = vunpack.c.l.b16 %v3097
      %v3194 = vunpack.c.l.b16 %v3098
      %v3195 = vunpack.c.l.b16 %v3099
      %v3196 = vunpack.c.l.b16 %v3100
      %v3197 = vunpack.c.l.b16 %v3101
      %v3198 = vunpack.c.l.b16 %v3102
      %v3199 = vunpack.c.l.b16 %v3103
      %v3200 = vunpack.c.l.b16 %v3104
      %v3201 = vunpack.c.l.b16 %v3105
      %v3202 = vunpack.c.l.b16 %v3106
      %v3203 = vunpack.c.l.b16 %v3107
      %v3204 = vpack.c.b16 %v3173, %v3172
      %v3205 = vpack.c.b16 %v3175, %v3174
      %v3206 = vpack.c.b16 %v3177, %v3176
      %v3207 = vpack.c.b16 %v3179, %v3178
      %v3208 = vpack.c.b16 %v3181, %v3180
      %v3209 = vpack.c.b16 %v3183, %v3182
      %v3210 = vpack.c.b16 %v3185, %v3184
      %v3211 = vpack.c.b16 %v3187, %v3186
      %v3212 = vpack.c.b16 %v3189, %v3188
      %v3213 = vpack.c.b16 %v3191, %v3190
      %v3214 = vpack.c.b16 %v3193, %v3192
      %v3215 = vpack.c.b16 %v3195, %v3194
      %v3216 = vpack.c.b16 %v3197, %v3196
      %v3217 = vpack.c.b16 %v3199, %v3198
      %v3218 = vpack.c.b16 %v3201, %v3200
      %v3219 = vpack.c.b16 %v3203, %v3202
      %v3252 = vunpack.c.l.b16 %v3108
      %v3253 = vunpack.c.l.b16 %v3109
      %v3254 = vunpack.c.l.b16 %v3110
      %v3255 = vunpack.c.l.b16 %v3111
      %v3256 = vunpack.c.l.b16 %v3112
      %v3257 = vunpack.c.l.b16 %v3113
      %v3258 = vunpack.c.l.b16 %v3114
      %v3259 = vunpack.c.l.b16 %v3115
      %v3260 = vunpack.c.l.b16 %v3116
      %v3261 = vunpack.c.l.b16 %v3117
      %v3262 = vunpack.c.l.b16 %v3118
      %v3263 = vunpack.c.l.b16 %v3119
      %v3264 = vunpack.c.l.b16 %v3120
      %v3265 = vunpack.c.l.b16 %v3121
      %v3266 = vunpack.c.l.b16 %v3122
      %v3267 = vunpack.c.l.b16 %v3123
      %v3268 = vpack.c.b16 %v3252, %v3252
      %v3269 = vpack.c.b16 %v3253, %v3253
      %v3270 = vpack.c.b16 %v3254, %v3254
      %v3271 = vpack.c.b16 %v3255, %v3255
      %v3272 = vpack.c.b16 %v3256, %v3256
      %v3273 = vpack.c.b16 %v3257, %v3257
      %v3274 = vpack.c.b16 %v3258, %v3258
      %v3275 = vpack.c.b16 %v3259, %v3259
      %v3276 = vpack.c.b16 %v3260, %v3260
      %v3277 = vpack.c.b16 %v3261, %v3261
      %v3278 = vpack.c.b16 %v3262, %v3262
      %v3279 = vpack.c.b16 %v3263, %v3263
      %v3280 = vpack.c.b16 %v3264, %v3264
      %v3281 = vpack.c.b16 %v3265, %v3265
      %v3282 = vpack.c.b16 %v3266, %v3266
      %v3283 = vpack.c.b16 %v3267, %v3267
      %v3285 = vshrl.u32 %v3204, 16
      %v3287 = vshll.u32 %v3204, 16
      %v3289 = vrot.slane %v3287, 1
      %v3290 = vor.u32 %v3285, %v3289
      %v3292 = vshll.u32 %v3268, 16
      %v3294 = vrot.slane %v3292, 1
      %v3295 = vsel %vm1307, %v3290, %v3294
      %v3297 = vshrl.u32 %v3205, 16
      %v3299 = vshll.u32 %v3205, 16
      %v3301 = vrot.slane %v3299, 1
      %v3302 = vor.u32 %v3297, %v3301
      %v3304 = vshll.u32 %v3269, 16
      %v3306 = vrot.slane %v3304, 1
      %v3307 = vsel %vm1307, %v3302, %v3306
      %v3309 = vshrl.u32 %v3206, 16
      %v3311 = vshll.u32 %v3206, 16
      %v3313 = vrot.slane %v3311, 1
      %v3314 = vor.u32 %v3309, %v3313
      %v3316 = vshll.u32 %v3270, 16
      %v3318 = vrot.slane %v3316, 1
      %v3319 = vsel %vm1307, %v3314, %v3318
      %v3321 = vshrl.u32 %v3207, 16
      %v3323 = vshll.u32 %v3207, 16
      %v3325 = vrot.slane %v3323, 1
      %v3326 = vor.u32 %v3321, %v3325
      %v3328 = vshll.u32 %v3271, 16
      %v3330 = vrot.slane %v3328, 1
      %v3331 = vsel %vm1307, %v3326, %v3330
      %v3333 = vshrl.u32 %v3208, 16
      %v3335 = vshll.u32 %v3208, 16
      %v3337 = vrot.slane %v3335, 1
      %v3338 = vor.u32 %v3333, %v3337
      %v3340 = vshll.u32 %v3272, 16
      %v3342 = vrot.slane %v3340, 1
      %v3343 = vsel %vm1307, %v3338, %v3342
      %v3345 = vshrl.u32 %v3209, 16
      %v3347 = vshll.u32 %v3209, 16
      %v3349 = vrot.slane %v3347, 1
      %v3350 = vor.u32 %v3345, %v3349
      %v3352 = vshll.u32 %v3273, 16
      %v3354 = vrot.slane %v3352, 1
      %v3355 = vsel %vm1307, %v3350, %v3354
      %v3357 = vshrl.u32 %v3210, 16
      %v3359 = vshll.u32 %v3210, 16
      %v3361 = vrot.slane %v3359, 1
      %v3362 = vor.u32 %v3357, %v3361
      %v3364 = vshll.u32 %v3274, 16
      %v3366 = vrot.slane %v3364, 1
      %v3367 = vsel %vm1307, %v3362, %v3366
      %v3369 = vshrl.u32 %v3211, 16
      %v3371 = vshll.u32 %v3211, 16
      %v3373 = vrot.slane %v3371, 1
      %v3374 = vor.u32 %v3369, %v3373
      %v3376 = vshll.u32 %v3275, 16
      %v3378 = vrot.slane %v3376, 1
      %v3379 = vsel %vm1307, %v3374, %v3378
      %v3381 = vshrl.u32 %v3212, 16
      %v3383 = vshll.u32 %v3212, 16
      %v3385 = vrot.slane %v3383, 1
      %v3386 = vor.u32 %v3381, %v3385
      %v3388 = vshll.u32 %v3276, 16
      %v3390 = vrot.slane %v3388, 1
      %v3391 = vsel %vm1307, %v3386, %v3390
      %v3393 = vshrl.u32 %v3213, 16
      %v3395 = vshll.u32 %v3213, 16
      %v3397 = vrot.slane %v3395, 1
      %v3398 = vor.u32 %v3393, %v3397
      %v3400 = vshll.u32 %v3277, 16
      %v3402 = vrot.slane %v3400, 1
      %v3403 = vsel %vm1307, %v3398, %v3402
      %v3405 = vshrl.u32 %v3214, 16
      %v3407 = vshll.u32 %v3214, 16
      %v3409 = vrot.slane %v3407, 1
      %v3410 = vor.u32 %v3405, %v3409
      %v3412 = vshll.u32 %v3278, 16
      %v3414 = vrot.slane %v3412, 1
      %v3415 = vsel %vm1307, %v3410, %v3414
      %v3417 = vshrl.u32 %v3215, 16
      %v3419 = vshll.u32 %v3215, 16
      %v3421 = vrot.slane %v3419, 1
      %v3422 = vor.u32 %v3417, %v3421
      %v3424 = vshll.u32 %v3279, 16
      %v3426 = vrot.slane %v3424, 1
      %v3427 = vsel %vm1307, %v3422, %v3426
      %v3429 = vshrl.u32 %v3216, 16
      %v3431 = vshll.u32 %v3216, 16
      %v3433 = vrot.slane %v3431, 1
      %v3434 = vor.u32 %v3429, %v3433
      %v3436 = vshll.u32 %v3280, 16
      %v3438 = vrot.slane %v3436, 1
      %v3439 = vsel %vm1307, %v3434, %v3438
      %v3441 = vshrl.u32 %v3217, 16
      %v3443 = vshll.u32 %v3217, 16
      %v3445 = vrot.slane %v3443, 1
      %v3446 = vor.u32 %v3441, %v3445
      %v3448 = vshll.u32 %v3281, 16
      %v3450 = vrot.slane %v3448, 1
      %v3451 = vsel %vm1307, %v3446, %v3450
      %v3453 = vshrl.u32 %v3218, 16
      %v3455 = vshll.u32 %v3218, 16
      %v3457 = vrot.slane %v3455, 1
      %v3458 = vor.u32 %v3453, %v3457
      %v3460 = vshll.u32 %v3282, 16
      %v3462 = vrot.slane %v3460, 1
      %v3463 = vsel %vm1307, %v3458, %v3462
      %v3465 = vshrl.u32 %v3219, 16
      %v3467 = vshll.u32 %v3219, 16
      %v3469 = vrot.slane %v3467, 1
      %v3470 = vor.u32 %v3465, %v3469
      %v3472 = vshll.u32 %v3283, 16
      %v3474 = vrot.slane %v3472, 1
      %v3475 = vsel %vm1307, %v3470, %v3474
      %v3508 = vunpack.c.l.b16 %v3124
      %v3509 = vunpack.c.l.b16 %v3125
      %v3510 = vunpack.c.l.b16 %v3126
      %v3511 = vunpack.c.l.b16 %v3127
      %v3512 = vunpack.c.l.b16 %v3128
      %v3513 = vunpack.c.l.b16 %v3129
      %v3514 = vunpack.c.l.b16 %v3130
      %v3515 = vunpack.c.l.b16 %v3131
      %v3516 = vunpack.c.l.b16 %v3132
      %v3517 = vunpack.c.l.b16 %v3133
      %v3518 = vunpack.c.l.b16 %v3134
      %v3519 = vunpack.c.l.b16 %v3135
      %v3520 = vunpack.c.l.b16 %v3136
      %v3521 = vunpack.c.l.b16 %v3137
      %v3522 = vunpack.c.l.b16 %v3138
      %v3523 = vunpack.c.l.b16 %v3139
      %v3524 = vpack.c.b16 %v3173, %v3508
      %v3525 = vpack.c.b16 %v3175, %v3509
      %v3526 = vpack.c.b16 %v3177, %v3510
      %v3527 = vpack.c.b16 %v3179, %v3511
      %v3528 = vpack.c.b16 %v3181, %v3512
      %v3529 = vpack.c.b16 %v3183, %v3513
      %v3530 = vpack.c.b16 %v3185, %v3514
      %v3531 = vpack.c.b16 %v3187, %v3515
      %v3532 = vpack.c.b16 %v3189, %v3516
      %v3533 = vpack.c.b16 %v3191, %v3517
      %v3534 = vpack.c.b16 %v3193, %v3518
      %v3535 = vpack.c.b16 %v3195, %v3519
      %v3536 = vpack.c.b16 %v3197, %v3520
      %v3537 = vpack.c.b16 %v3199, %v3521
      %v3538 = vpack.c.b16 %v3201, %v3522
      %v3539 = vpack.c.b16 %v3203, %v3523
      %v3540 = vrot.slane %v3524, 1
      %v3541 = vrot.slane %v3268, 1
      %v3542 = vsel %vm1564, %v3540, %v3541
      %v3543 = vrot.slane %v3525, 1
      %v3544 = vrot.slane %v3269, 1
      %v3545 = vsel %vm1564, %v3543, %v3544
      %v3546 = vrot.slane %v3526, 1
      %v3547 = vrot.slane %v3270, 1
      %v3548 = vsel %vm1564, %v3546, %v3547
      %v3549 = vrot.slane %v3527, 1
      %v3550 = vrot.slane %v3271, 1
      %v3551 = vsel %vm1564, %v3549, %v3550
      %v3552 = vrot.slane %v3528, 1
      %v3553 = vrot.slane %v3272, 1
      %v3554 = vsel %vm1564, %v3552, %v3553
      %v3555 = vrot.slane %v3529, 1
      %v3556 = vrot.slane %v3273, 1
      %v3557 = vsel %vm1564, %v3555, %v3556
      %v3558 = vrot.slane %v3530, 1
      %v3559 = vrot.slane %v3274, 1
      %v3560 = vsel %vm1564, %v3558, %v3559
      %v3561 = vrot.slane %v3531, 1
      %v3562 = vrot.slane %v3275, 1
      %v3563 = vsel %vm1564, %v3561, %v3562
      %v3564 = vrot.slane %v3532, 1
      %v3565 = vrot.slane %v3276, 1
      %v3566 = vsel %vm1564, %v3564, %v3565
      %v3567 = vrot.slane %v3533, 1
      %v3568 = vrot.slane %v3277, 1
      %v3569 = vsel %vm1564, %v3567, %v3568
      %v3570 = vrot.slane %v3534, 1
      %v3571 = vrot.slane %v3278, 1
      %v3572 = vsel %vm1564, %v3570, %v3571
      %v3573 = vrot.slane %v3535, 1
      %v3574 = vrot.slane %v3279, 1
      %v3575 = vsel %vm1564, %v3573, %v3574
      %v3576 = vrot.slane %v3536, 1
      %v3577 = vrot.slane %v3280, 1
      %v3578 = vsel %vm1564, %v3576, %v3577
      %v3579 = vrot.slane %v3537, 1
      %v3580 = vrot.slane %v3281, 1
      %v3581 = vsel %vm1564, %v3579, %v3580
      %v3582 = vrot.slane %v3538, 1
      %v3583 = vrot.slane %v3282, 1
      %v3584 = vsel %vm1564, %v3582, %v3583
      %v3585 = vrot.slane %v3539, 1
      %v3586 = vrot.slane %v3283, 1
      %v3587 = vsel %vm1564, %v3585, %v3586
      %v3604 = vld [vmem:[%s3 + $0x180] sm:$0xf]
      %v3605 = vld [vmem:[%s3 + $0x184] sm:$0xf]
      %v3606 = vld [vmem:[%s3 + $0x188] sm:$0xf]
      %v3607 = vld [vmem:[%s3 + $0x18c] sm:$0xf]
      %v3608 = vld [vmem:[%s3 + $0x190] sm:$0xf]
      %v3609 = vld [vmem:[%s3 + $0x194] sm:$0xf]
      %v3610 = vld [vmem:[%s3 + $0x198] sm:$0xf]
      %v3611 = vld [vmem:[%s3 + $0x19c] sm:$0xf]
      %v3612 = vld [vmem:[%s3 + $0x1a0] sm:$0xf]
      %v3613 = vld [vmem:[%s3 + $0x1a4] sm:$0xf]
      %v3614 = vld [vmem:[%s3 + $0x1a8] sm:$0xf]
      %v3615 = vld [vmem:[%s3 + $0x1ac] sm:$0xf]
      %v3616 = vld [vmem:[%s3 + $0x1b0] sm:$0xf]
      %v3617 = vld [vmem:[%s3 + $0x1b4] sm:$0xf]
      %v3618 = vld [vmem:[%s3 + $0x1b8] sm:$0xf]
      %v3619 = vld [vmem:[%s3 + $0x1bc] sm:$0xf]
      %v3620 = vld [vmem:[%s3 + $0x1c0] sm:$0xf]
      %v3621 = vld [vmem:[%s3 + $0x1c4] sm:$0xf]
      %v3622 = vld [vmem:[%s3 + $0x1c8] sm:$0xf]
      %v3623 = vld [vmem:[%s3 + $0x1cc] sm:$0xf]
      %v3624 = vld [vmem:[%s3 + $0x1d0] sm:$0xf]
      %v3625 = vld [vmem:[%s3 + $0x1d4] sm:$0xf]
      %v3626 = vld [vmem:[%s3 + $0x1d8] sm:$0xf]
      %v3627 = vld [vmem:[%s3 + $0x1dc] sm:$0xf]
      %v3628 = vld [vmem:[%s3 + $0x1e0] sm:$0xf]
      %v3629 = vld [vmem:[%s3 + $0x1e4] sm:$0xf]
      %v3630 = vld [vmem:[%s3 + $0x1e8] sm:$0xf]
      %v3631 = vld [vmem:[%s3 + $0x1ec] sm:$0xf]
      %v3632 = vld [vmem:[%s3 + $0x1f0] sm:$0xf]
      %v3633 = vld [vmem:[%s3 + $0x1f4] sm:$0xf]
      %v3634 = vld [vmem:[%s3 + $0x1f8] sm:$0xf]
      %v3635 = vld [vmem:[%s3 + $0x1fc] sm:$0xf]
      %v3636 = vld [vmem:[%s3 + $0x200] sm:$0xf]
      %v3637 = vld [vmem:[%s3 + $0x204] sm:$0xf]
      %v3638 = vld [vmem:[%s3 + $0x208] sm:$0xf]
      %v3639 = vld [vmem:[%s3 + $0x20c] sm:$0xf]
      %v3640 = vld [vmem:[%s3 + $0x210] sm:$0xf]
      %v3641 = vld [vmem:[%s3 + $0x214] sm:$0xf]
      %v3642 = vld [vmem:[%s3 + $0x218] sm:$0xf]
      %v3643 = vld [vmem:[%s3 + $0x21c] sm:$0xf]
      %v3644 = vld [vmem:[%s3 + $0x220] sm:$0xf]
      %v3645 = vld [vmem:[%s3 + $0x224] sm:$0xf]
      %v3646 = vld [vmem:[%s3 + $0x228] sm:$0xf]
      %v3647 = vld [vmem:[%s3 + $0x22c] sm:$0xf]
      %v3648 = vld [vmem:[%s3 + $0x230] sm:$0xf]
      %v3649 = vld [vmem:[%s3 + $0x234] sm:$0xf]
      %v3650 = vld [vmem:[%s3 + $0x238] sm:$0xf]
      %v3651 = vld [vmem:[%s3 + $0x23c] sm:$0xf]
      %v3700 = vunpack.c.l.b16 %v3604
      %v3701 = vunpack.c.l.b16 %v3605
      %v3702 = vunpack.c.l.b16 %v3606
      %v3703 = vunpack.c.l.b16 %v3607
      %v3704 = vunpack.c.l.b16 %v3608
      %v3705 = vunpack.c.l.b16 %v3609
      %v3706 = vunpack.c.l.b16 %v3610
      %v3707 = vunpack.c.l.b16 %v3611
      %v3708 = vunpack.c.l.b16 %v3612
      %v3709 = vunpack.c.l.b16 %v3613
      %v3710 = vunpack.c.l.b16 %v3614
      %v3711 = vunpack.c.l.b16 %v3615
      %v3712 = vunpack.c.l.b16 %v3616
      %v3713 = vunpack.c.l.b16 %v3617
      %v3714 = vunpack.c.l.b16 %v3618
      %v3715 = vunpack.c.l.b16 %v3619
      %v3716 = vunpack.c.l.b16 %v3620
      %v3717 = vunpack.c.l.b16 %v3621
      %v3718 = vunpack.c.l.b16 %v3622
      %v3719 = vunpack.c.l.b16 %v3623
      %v3720 = vunpack.c.l.b16 %v3624
      %v3721 = vunpack.c.l.b16 %v3625
      %v3722 = vunpack.c.l.b16 %v3626
      %v3723 = vunpack.c.l.b16 %v3627
      %v3724 = vunpack.c.l.b16 %v3628
      %v3725 = vunpack.c.l.b16 %v3629
      %v3726 = vunpack.c.l.b16 %v3630
      %v3727 = vunpack.c.l.b16 %v3631
      %v3728 = vunpack.c.l.b16 %v3632
      %v3729 = vunpack.c.l.b16 %v3633
      %v3730 = vunpack.c.l.b16 %v3634
      %v3731 = vunpack.c.l.b16 %v3635
      %v3732 = vunpack.c.l.b16 %v3636
      %v3733 = vunpack.c.l.b16 %v3637
      %v3734 = vunpack.c.l.b16 %v3638
      %v3735 = vunpack.c.l.b16 %v3639
      %v3736 = vunpack.c.l.b16 %v3640
      %v3737 = vunpack.c.l.b16 %v3641
      %v3738 = vunpack.c.l.b16 %v3642
      %v3739 = vunpack.c.l.b16 %v3643
      %v3740 = vunpack.c.l.b16 %v3644
      %v3741 = vunpack.c.l.b16 %v3645
      %v3742 = vunpack.c.l.b16 %v3646
      %v3743 = vunpack.c.l.b16 %v3647
      %v3744 = vunpack.c.l.b16 %v3648
      %v3745 = vunpack.c.l.b16 %v3649
      %v3746 = vunpack.c.l.b16 %v3650
      %v3747 = vunpack.c.l.b16 %v3651
      %v3748 = vpack.c.b16 %v3701, %v3700
      %v3749 = vpack.c.b16 %v3703, %v3702
      %v3750 = vpack.c.b16 %v3705, %v3704
      %v3751 = vpack.c.b16 %v3707, %v3706
      %v3752 = vpack.c.b16 %v3709, %v3708
      %v3753 = vpack.c.b16 %v3711, %v3710
      %v3754 = vpack.c.b16 %v3713, %v3712
      %v3755 = vpack.c.b16 %v3715, %v3714
      %v3756 = vpack.c.b16 %v3717, %v3716
      %v3757 = vpack.c.b16 %v3719, %v3718
      %v3758 = vpack.c.b16 %v3721, %v3720
      %v3759 = vpack.c.b16 %v3723, %v3722
      %v3760 = vpack.c.b16 %v3725, %v3724
      %v3761 = vpack.c.b16 %v3727, %v3726
      %v3762 = vpack.c.b16 %v3729, %v3728
      %v3763 = vpack.c.b16 %v3731, %v3730
      %v3764 = vpack.c.b16 %v3733, %v3732
      %v3765 = vpack.c.b16 %v3735, %v3734
      %v3766 = vpack.c.b16 %v3737, %v3736
      %v3767 = vpack.c.b16 %v3739, %v3738
      %v3768 = vpack.c.b16 %v3741, %v3740
      %v3769 = vpack.c.b16 %v3743, %v3742
      %v3770 = vpack.c.b16 %v3745, %v3744
      %v3771 = vpack.c.b16 %v3747, %v3746
      %3796 = vmatpush.bf16.msra.mxu0 %v3755
      %3797 = vmatpush.bf16.msra.mxu0 %v3754
      %3798 = vmatpush.bf16.msra.mxu0 %v3753
      %3799 = vmatpush.bf16.msra.mxu0 %v3752
      %3800 = vmatpush.bf16.msra.mxu0 %v3751
      %3801 = vmatpush.bf16.msra.mxu0 %v3750
      %3802 = vmatpush.bf16.msra.mxu0 %v3749
      %3803 = vmatpush.bf16.msra.mxu0 %v3748
      %3804 = vmatmul.bf16.gmra.mxu0 %v3204
      %v3805 = vpop.f32.mrf.mxu0
      %v3806 = vadd.f32 0.0, %v3805
      %v3807 = vpop.f32.mrf.mxu0
      %v3808 = vadd.f32 0.0, %v3807
      %3809 = vmatmul.bf16.gmra.mxu0 %v3205
      %v3810 = vpop.f32.mrf.mxu0
      %v3811 = vadd.f32 0.0, %v3810
      %v3812 = vpop.f32.mrf.mxu0
      %v3813 = vadd.f32 0.0, %v3812
      %3814 = vmatmul.bf16.gmra.mxu0 %v3206
      %v3815 = vpop.f32.mrf.mxu0
      %v3816 = vadd.f32 0.0, %v3815
      %v3817 = vpop.f32.mrf.mxu0
      %v3818 = vadd.f32 0.0, %v3817
      %3819 = vmatmul.bf16.gmra.mxu0 %v3207
      %v3820 = vpop.f32.mrf.mxu0
      %v3821 = vadd.f32 0.0, %v3820
      %v3822 = vpop.f32.mrf.mxu0
      %v3823 = vadd.f32 0.0, %v3822
      %3824 = vmatmul.bf16.gmra.mxu0 %v3208
      %v3825 = vpop.f32.mrf.mxu0
      %v3826 = vadd.f32 0.0, %v3825
      %v3827 = vpop.f32.mrf.mxu0
      %v3828 = vadd.f32 0.0, %v3827
      %3829 = vmatmul.bf16.gmra.mxu0 %v3209
      %v3830 = vpop.f32.mrf.mxu0
      %v3831 = vadd.f32 0.0, %v3830
      %v3832 = vpop.f32.mrf.mxu0
      %v3833 = vadd.f32 0.0, %v3832
      %3834 = vmatmul.bf16.gmra.mxu0 %v3210
      %v3835 = vpop.f32.mrf.mxu0
      %v3836 = vadd.f32 0.0, %v3835
      %v3837 = vpop.f32.mrf.mxu0
      %v3838 = vadd.f32 0.0, %v3837
      %3839 = vmatmul.bf16.gmra.mxu0 %v3211
      %v3840 = vpop.f32.mrf.mxu0
      %v3841 = vadd.f32 0.0, %v3840
      %v3842 = vpop.f32.mrf.mxu0
      %v3843 = vadd.f32 0.0, %v3842
      %3844 = vmatmul.bf16.gmra.mxu0 %v3212
      %v3845 = vpop.f32.mrf.mxu0
      %v3846 = vadd.f32 0.0, %v3845
      %v3847 = vpop.f32.mrf.mxu0
      %v3848 = vadd.f32 0.0, %v3847
      %3849 = vmatmul.bf16.gmra.mxu0 %v3213
      %v3850 = vpop.f32.mrf.mxu0
      %v3851 = vadd.f32 0.0, %v3850
      %v3852 = vpop.f32.mrf.mxu0
      %v3853 = vadd.f32 0.0, %v3852
      %3854 = vmatmul.bf16.gmra.mxu0 %v3214
      %v3855 = vpop.f32.mrf.mxu0
      %v3856 = vadd.f32 0.0, %v3855
      %v3857 = vpop.f32.mrf.mxu0
      %v3858 = vadd.f32 0.0, %v3857
      %3859 = vmatmul.bf16.gmra.mxu0 %v3215
      %v3860 = vpop.f32.mrf.mxu0
      %v3861 = vadd.f32 0.0, %v3860
      %v3862 = vpop.f32.mrf.mxu0
      %v3863 = vadd.f32 0.0, %v3862
      %3864 = vmatmul.bf16.gmra.mxu0 %v3216
      %v3865 = vpop.f32.mrf.mxu0
      %v3866 = vadd.f32 0.0, %v3865
      %v3867 = vpop.f32.mrf.mxu0
      %v3868 = vadd.f32 0.0, %v3867
      %3869 = vmatmul.bf16.gmra.mxu0 %v3217
      %v3870 = vpop.f32.mrf.mxu0
      %v3871 = vadd.f32 0.0, %v3870
      %v3872 = vpop.f32.mrf.mxu0
      %v3873 = vadd.f32 0.0, %v3872
      %3874 = vmatmul.bf16.gmra.mxu0 %v3218
      %v3875 = vpop.f32.mrf.mxu0
      %v3876 = vadd.f32 0.0, %v3875
      %v3877 = vpop.f32.mrf.mxu0
      %v3878 = vadd.f32 0.0, %v3877
      %3879 = vmatmul.bf16.gmra.mxu0 %v3219
      %v3880 = vpop.f32.mrf.mxu0
      %v3881 = vadd.f32 0.0, %v3880
      %v3882 = vpop.f32.mrf.mxu0
      %v3883 = vadd.f32 0.0, %v3882
      %3884 = vdwg.mxu0
      %3885 = vmatpush.bf16.msra.mxu0 %v3763
      %3886 = vmatpush.bf16.msra.mxu0 %v3762
      %3887 = vmatpush.bf16.msra.mxu0 %v3761
      %3888 = vmatpush.bf16.msra.mxu0 %v3760
      %3889 = vmatpush.bf16.msra.mxu0 %v3759
      %3890 = vmatpush.bf16.msra.mxu0 %v3758
      %3891 = vmatpush.bf16.msra.mxu0 %v3757
      %3892 = vmatpush.bf16.msra.mxu0 %v3756
      %3893 = vmatmul.bf16.gmra.mxu0 %v3295
      %v3894 = vpop.f32.mrf.mxu0
      %v3895 = vadd.f32 %v3806, %v3894
      %v3896 = vpop.f32.mrf.mxu0
      %v3897 = vadd.f32 %v3808, %v3896
      %3898 = vmatmul.bf16.gmra.mxu0 %v3307
      %v3899 = vpop.f32.mrf.mxu0
      %v3900 = vadd.f32 %v3811, %v3899
      %v3901 = vpop.f32.mrf.mxu0
      %v3902 = vadd.f32 %v3813, %v3901
      %3903 = vmatmul.bf16.gmra.mxu0 %v3319
      %v3904 = vpop.f32.mrf.mxu0
      %v3905 = vadd.f32 %v3816, %v3904
      %v3906 = vpop.f32.mrf.mxu0
      %v3907 = vadd.f32 %v3818, %v3906
      %3908 = vmatmul.bf16.gmra.mxu0 %v3331
      %v3909 = vpop.f32.mrf.mxu0
      %v3910 = vadd.f32 %v3821, %v3909
      %v3911 = vpop.f32.mrf.mxu0
      %v3912 = vadd.f32 %v3823, %v3911
      %3913 = vmatmul.bf16.gmra.mxu0 %v3343
      %v3914 = vpop.f32.mrf.mxu0
      %v3915 = vadd.f32 %v3826, %v3914
      %v3916 = vpop.f32.mrf.mxu0
      %v3917 = vadd.f32 %v3828, %v3916
      %3918 = vmatmul.bf16.gmra.mxu0 %v3355
      %v3919 = vpop.f32.mrf.mxu0
      %v3920 = vadd.f32 %v3831, %v3919
      %v3921 = vpop.f32.mrf.mxu0
      %v3922 = vadd.f32 %v3833, %v3921
      %3923 = vmatmul.bf16.gmra.mxu0 %v3367
      %v3924 = vpop.f32.mrf.mxu0
      %v3925 = vadd.f32 %v3836, %v3924
      %v3926 = vpop.f32.mrf.mxu0
      %v3927 = vadd.f32 %v3838, %v3926
      %3928 = vmatmul.bf16.gmra.mxu0 %v3379
      %v3929 = vpop.f32.mrf.mxu0
      %v3930 = vadd.f32 %v3841, %v3929
      %v3931 = vpop.f32.mrf.mxu0
      %v3932 = vadd.f32 %v3843, %v3931
      %3933 = vmatmul.bf16.gmra.mxu0 %v3391
      %v3934 = vpop.f32.mrf.mxu0
      %v3935 = vadd.f32 %v3846, %v3934
      %v3936 = vpop.f32.mrf.mxu0
      %v3937 = vadd.f32 %v3848, %v3936
      %3938 = vmatmul.bf16.gmra.mxu0 %v3403
      %v3939 = vpop.f32.mrf.mxu0
      %v3940 = vadd.f32 %v3851, %v3939
      %v3941 = vpop.f32.mrf.mxu0
      %v3942 = vadd.f32 %v3853, %v3941
      %3943 = vmatmul.bf16.gmra.mxu0 %v3415
      %v3944 = vpop.f32.mrf.mxu0
      %v3945 = vadd.f32 %v3856, %v3944
      %v3946 = vpop.f32.mrf.mxu0
      %v3947 = vadd.f32 %v3858, %v3946
      %3948 = vmatmul.bf16.gmra.mxu0 %v3427
      %v3949 = vpop.f32.mrf.mxu0
      %v3950 = vadd.f32 %v3861, %v3949
      %v3951 = vpop.f32.mrf.mxu0
      %v3952 = vadd.f32 %v3863, %v3951
      %3953 = vmatmul.bf16.gmra.mxu0 %v3439
      %v3954 = vpop.f32.mrf.mxu0
      %v3955 = vadd.f32 %v3866, %v3954
      %v3956 = vpop.f32.mrf.mxu0
      %v3957 = vadd.f32 %v3868, %v3956
      %3958 = vmatmul.bf16.gmra.mxu0 %v3451
      %v3959 = vpop.f32.mrf.mxu0
      %v3960 = vadd.f32 %v3871, %v3959
      %v3961 = vpop.f32.mrf.mxu0
      %v3962 = vadd.f32 %v3873, %v3961
      %3963 = vmatmul.bf16.gmra.mxu0 %v3463
      %v3964 = vpop.f32.mrf.mxu0
      %v3965 = vadd.f32 %v3876, %v3964
      %v3966 = vpop.f32.mrf.mxu0
      %v3967 = vadd.f32 %v3878, %v3966
      %3968 = vmatmul.bf16.gmra.mxu0 %v3475
      %v3969 = vpop.f32.mrf.mxu0
      %v3970 = vadd.f32 %v3881, %v3969
      %v3971 = vpop.f32.mrf.mxu0
      %v3972 = vadd.f32 %v3883, %v3971
      %3973 = vdwg.mxu0
      %3974 = vmatpush.bf16.msra.mxu0 %v3771
      %3975 = vmatpush.bf16.msra.mxu0 %v3770
      %3976 = vmatpush.bf16.msra.mxu0 %v3769
      %3977 = vmatpush.bf16.msra.mxu0 %v3768
      %3978 = vmatpush.bf16.msra.mxu0 %v3767
      %3979 = vmatpush.bf16.msra.mxu0 %v3766
      %3980 = vmatpush.bf16.msra.mxu0 %v3765
      %3981 = vmatpush.bf16.msra.mxu0 %v3764
      %3982 = vmatmul.bf16.gmra.mxu0 %v3542
      %v3983 = vpop.f32.mrf.mxu0
      %v3984 = vadd.f32 %v3895, %v3983
      %v3985 = vpop.f32.mrf.mxu0
      %v3986 = vadd.f32 %v3897, %v3985
      %3987 = vmatmul.bf16.gmra.mxu0 %v3545
      %v3988 = vpop.f32.mrf.mxu0
      %v3989 = vadd.f32 %v3900, %v3988
      %v3990 = vpop.f32.mrf.mxu0
      %v3991 = vadd.f32 %v3902, %v3990
      %3992 = vmatmul.bf16.gmra.mxu0 %v3548
      %v3993 = vpop.f32.mrf.mxu0
      %v3994 = vadd.f32 %v3905, %v3993
      %v3995 = vpop.f32.mrf.mxu0
      %v3996 = vadd.f32 %v3907, %v3995
      %3997 = vmatmul.bf16.gmra.mxu0 %v3551
      %v3998 = vpop.f32.mrf.mxu0
      %v3999 = vadd.f32 %v3910, %v3998
      %v4000 = vpop.f32.mrf.mxu0
      %v4001 = vadd.f32 %v3912, %v4000
      %4002 = vmatmul.bf16.gmra.mxu0 %v3554
      %v4003 = vpop.f32.mrf.mxu0
      %v4004 = vadd.f32 %v3915, %v4003
      %v4005 = vpop.f32.mrf.mxu0
      %v4006 = vadd.f32 %v3917, %v4005
      %4007 = vmatmul.bf16.gmra.mxu0 %v3557
      %v4008 = vpop.f32.mrf.mxu0
      %v4009 = vadd.f32 %v3920, %v4008
      %v4010 = vpop.f32.mrf.mxu0
      %v4011 = vadd.f32 %v3922, %v4010
      %4012 = vmatmul.bf16.gmra.mxu0 %v3560
      %v4013 = vpop.f32.mrf.mxu0
      %v4014 = vadd.f32 %v3925, %v4013
      %v4015 = vpop.f32.mrf.mxu0
      %v4016 = vadd.f32 %v3927, %v4015
      %4017 = vmatmul.bf16.gmra.mxu0 %v3563
      %v4018 = vpop.f32.mrf.mxu0
      %v4019 = vadd.f32 %v3930, %v4018
      %v4020 = vpop.f32.mrf.mxu0
      %v4021 = vadd.f32 %v3932, %v4020
      %4022 = vmatmul.bf16.gmra.mxu0 %v3566
      %v4023 = vpop.f32.mrf.mxu0
      %v4024 = vadd.f32 %v3935, %v4023
      %v4025 = vpop.f32.mrf.mxu0
      %v4026 = vadd.f32 %v3937, %v4025
      %4027 = vmatmul.bf16.gmra.mxu0 %v3569
      %v4028 = vpop.f32.mrf.mxu0
      %v4029 = vadd.f32 %v3940, %v4028
      %v4030 = vpop.f32.mrf.mxu0
      %v4031 = vadd.f32 %v3942, %v4030
      %4032 = vmatmul.bf16.gmra.mxu0 %v3572
      %v4033 = vpop.f32.mrf.mxu0
      %v4034 = vadd.f32 %v3945, %v4033
      %v4035 = vpop.f32.mrf.mxu0
      %v4036 = vadd.f32 %v3947, %v4035
      %4037 = vmatmul.bf16.gmra.mxu0 %v3575
      %v4038 = vpop.f32.mrf.mxu0
      %v4039 = vadd.f32 %v3950, %v4038
      %v4040 = vpop.f32.mrf.mxu0
      %v4041 = vadd.f32 %v3952, %v4040
      %4042 = vmatmul.bf16.gmra.mxu0 %v3578
      %v4043 = vpop.f32.mrf.mxu0
      %v4044 = vadd.f32 %v3955, %v4043
      %v4045 = vpop.f32.mrf.mxu0
      %v4046 = vadd.f32 %v3957, %v4045
      %4047 = vmatmul.bf16.gmra.mxu0 %v3581
      %v4048 = vpop.f32.mrf.mxu0
      %v4049 = vadd.f32 %v3960, %v4048
      %v4050 = vpop.f32.mrf.mxu0
      %v4051 = vadd.f32 %v3962, %v4050
      %4052 = vmatmul.bf16.gmra.mxu0 %v3584
      %v4053 = vpop.f32.mrf.mxu0
      %v4054 = vadd.f32 %v3965, %v4053
      %v4055 = vpop.f32.mrf.mxu0
      %v4056 = vadd.f32 %v3967, %v4055
      %4057 = vmatmul.bf16.gmra.mxu0 %v3587
      %v4058 = vpop.f32.mrf.mxu0
      %v4059 = vadd.f32 %v3970, %v4058
      %v4060 = vpop.f32.mrf.mxu0
      %v4061 = vadd.f32 %v3972, %v4060
      %4062 = vdwg.mxu0
      %v4063 = vadd.f32 %v2996, %v3984
      %v4064 = vadd.f32 %v2998, %v3986
      %v4065 = vadd.f32 %v3001, %v3989
      %v4066 = vadd.f32 %v3003, %v3991
      %v4067 = vadd.f32 %v3006, %v3994
      %v4068 = vadd.f32 %v3008, %v3996
      %v4069 = vadd.f32 %v3011, %v3999
      %v4070 = vadd.f32 %v3013, %v4001
      %v4071 = vadd.f32 %v3016, %v4004
      %v4072 = vadd.f32 %v3018, %v4006
      %v4073 = vadd.f32 %v3021, %v4009
      %v4074 = vadd.f32 %v3023, %v4011
      %v4075 = vadd.f32 %v3026, %v4014
      %v4076 = vadd.f32 %v3028, %v4016
      %v4077 = vadd.f32 %v3031, %v4019
      %v4078 = vadd.f32 %v3033, %v4021
      %v4079 = vadd.f32 %v3036, %v4024
      %v4080 = vadd.f32 %v3038, %v4026
      %v4081 = vadd.f32 %v3041, %v4029
      %v4082 = vadd.f32 %v3043, %v4031
      %v4083 = vadd.f32 %v3046, %v4034
      %v4084 = vadd.f32 %v3048, %v4036
      %v4085 = vadd.f32 %v3051, %v4039
      %v4086 = vadd.f32 %v3053, %v4041
      %v4087 = vadd.f32 %v3056, %v4044
      %v4088 = vadd.f32 %v3058, %v4046
      %v4089 = vadd.f32 %v3061, %v4049
      %v4090 = vadd.f32 %v3063, %v4051
      %v4091 = vadd.f32 %v3066, %v4054
      %v4092 = vadd.f32 %v3068, %v4056
      %v4093 = vadd.f32 %v3071, %v4059
      %v4094 = vadd.f32 %v3073, %v4061
      %v4095 = vpack.c.bf16 %v4063, %v4063
      %v4096 = vpack.c.bf16 %v4064, %v4064
      %v4097 = vpack.c.bf16 %v4065, %v4065
      %v4098 = vpack.c.bf16 %v4066, %v4066
      %v4099 = vpack.c.bf16 %v4067, %v4067
      %v4100 = vpack.c.bf16 %v4068, %v4068
      %v4101 = vpack.c.bf16 %v4069, %v4069
      %v4102 = vpack.c.bf16 %v4070, %v4070
      %v4103 = vpack.c.bf16 %v4071, %v4071
      %v4104 = vpack.c.bf16 %v4072, %v4072
      %v4105 = vpack.c.bf16 %v4073, %v4073
      %v4106 = vpack.c.bf16 %v4074, %v4074
      %v4107 = vpack.c.bf16 %v4075, %v4075
      %v4108 = vpack.c.bf16 %v4076, %v4076
      %v4109 = vpack.c.bf16 %v4077, %v4077
      %v4110 = vpack.c.bf16 %v4078, %v4078
      %v4111 = vpack.c.bf16 %v4079, %v4079
      %v4112 = vpack.c.bf16 %v4080, %v4080
      %v4113 = vpack.c.bf16 %v4081, %v4081
      %v4114 = vpack.c.bf16 %v4082, %v4082
      %v4115 = vpack.c.bf16 %v4083, %v4083
      %v4116 = vpack.c.bf16 %v4084, %v4084
      %v4117 = vpack.c.bf16 %v4085, %v4085
      %v4118 = vpack.c.bf16 %v4086, %v4086
      %v4119 = vpack.c.bf16 %v4087, %v4087
      %v4120 = vpack.c.bf16 %v4088, %v4088
      %v4121 = vpack.c.bf16 %v4089, %v4089
      %v4122 = vpack.c.bf16 %v4090, %v4090
      %v4123 = vpack.c.bf16 %v4091, %v4091
      %v4124 = vpack.c.bf16 %v4092, %v4092
      %v4125 = vpack.c.bf16 %v4093, %v4093
      %v4126 = vpack.c.bf16 %v4094, %v4094
      %4127 = vst [vmem:[%s457] sm:$0xf] %v4095
      %4128 = vst [vmem:[%s457 + $0x4] sm:$0xf] %v4096
      %4129 = vst [vmem:[%s457 + $0x8] sm:$0xf] %v4097
      %4130 = vst [vmem:[%s457 + $0xc] sm:$0xf] %v4098
      %4131 = vst [vmem:[%s457 + $0x10] sm:$0xf] %v4099
      %4132 = vst [vmem:[%s457 + $0x14] sm:$0xf] %v4100
      %4133 = vst [vmem:[%s457 + $0x18] sm:$0xf] %v4101
      %4134 = vst [vmem:[%s457 + $0x1c] sm:$0xf] %v4102
      %4135 = vst [vmem:[%s457 + $0x20] sm:$0xf] %v4103
      %4136 = vst [vmem:[%s457 + $0x24] sm:$0xf] %v4104
      %4137 = vst [vmem:[%s457 + $0x28] sm:$0xf] %v4105
      %4138 = vst [vmem:[%s457 + $0x2c] sm:$0xf] %v4106
      %4139 = vst [vmem:[%s457 + $0x30] sm:$0xf] %v4107
      %4140 = vst [vmem:[%s457 + $0x34] sm:$0xf] %v4108
      %4141 = vst [vmem:[%s457 + $0x38] sm:$0xf] %v4109
      %4142 = vst [vmem:[%s457 + $0x3c] sm:$0xf] %v4110
      %4143 = vst [vmem:[%s457 + $0x40] sm:$0xf] %v4111
      %4144 = vst [vmem:[%s457 + $0x44] sm:$0xf] %v4112
      %4145 = vst [vmem:[%s457 + $0x48] sm:$0xf] %v4113
      %4146 = vst [vmem:[%s457 + $0x4c] sm:$0xf] %v4114
      %4147 = vst [vmem:[%s457 + $0x50] sm:$0xf] %v4115
      %4148 = vst [vmem:[%s457 + $0x54] sm:$0xf] %v4116
      %4149 = vst [vmem:[%s457 + $0x58] sm:$0xf] %v4117
      %4150 = vst [vmem:[%s457 + $0x5c] sm:$0xf] %v4118
      %4151 = vst [vmem:[%s457 + $0x60] sm:$0xf] %v4119
      %4152 = vst [vmem:[%s457 + $0x64] sm:$0xf] %v4120
      %4153 = vst [vmem:[%s457 + $0x68] sm:$0xf] %v4121
      %4154 = vst [vmem:[%s457 + $0x6c] sm:$0xf] %v4122
      %4155 = vst [vmem:[%s457 + $0x70] sm:$0xf] %v4123
      %4156 = vst [vmem:[%s457 + $0x74] sm:$0xf] %v4124
      %4157 = vst [vmem:[%s457 + $0x78] sm:$0xf] %v4125
      %4158 = vst [vmem:[%s457 + $0x7c] sm:$0xf] %v4126
      %v4159 = vadd.f32 %v4063, %v4064
      %v4160 = vadd.f32 %v4159, %v4065
      %v4161 = vadd.f32 %v4160, %v4066
      %v4162 = vadd.f32 %v4161, %v4067
      %v4163 = vadd.f32 %v4162, %v4068
      %v4164 = vadd.f32 %v4163, %v4069
      %v4165 = vadd.f32 %v4164, %v4070
      %v4166 = vadd.f32 %v4165, %v4071
      %v4167 = vadd.f32 %v4166, %v4072
      %v4168 = vadd.f32 %v4167, %v4073
      %v4169 = vadd.f32 %v4168, %v4074
      %v4170 = vadd.f32 %v4169, %v4075
      %v4171 = vadd.f32 %v4170, %v4076
      %v4172 = vadd.f32 %v4171, %v4077
      %v4173 = vadd.f32 %v4172, %v4078
      %v4174 = vadd.f32 %v4173, %v4079
      %v4175 = vadd.f32 %v4174, %v4080
      %v4176 = vadd.f32 %v4175, %v4081
      %v4177 = vadd.f32 %v4176, %v4082
      %v4178 = vadd.f32 %v4177, %v4083
      %v4179 = vadd.f32 %v4178, %v4084
      %v4180 = vadd.f32 %v4179, %v4085
      %v4181 = vadd.f32 %v4180, %v4086
      %v4182 = vadd.f32 %v4181, %v4087
      %v4183 = vadd.f32 %v4182, %v4088
      %v4184 = vadd.f32 %v4183, %v4089
      %v4185 = vadd.f32 %v4184, %v4090
      %v4186 = vadd.f32 %v4185, %v4091
      %v4187 = vadd.f32 %v4186, %v4092
      %v4188 = vadd.f32 %v4187, %v4093
      %v4189 = vadd.f32 %v4188, %v4094
      %v4190 = vrot.slane %v4189, 4
      %v4191 = vadd.f32 %v4189, %v4190
      %v4192 = vrot.slane %v4191, 2
      %v4193 = vadd.f32 %v4191, %v4192
      %v4194 = vrot.slane %v4193, 1
      %v4195 = vadd.f32 %v4193, %v4194
      %v4196 = vmul.f32 %v4063, %v4063
      %v4197 = vmul.f32 %v4064, %v4064
      %v4198 = vmul.f32 %v4065, %v4065
      %v4199 = vmul.f32 %v4066, %v4066
      %v4200 = vmul.f32 %v4067, %v4067
      %v4201 = vmul.f32 %v4068, %v4068
      %v4202 = vmul.f32 %v4069, %v4069
      %v4203 = vmul.f32 %v4070, %v4070
      %v4204 = vmul.f32 %v4071, %v4071
      %v4205 = vmul.f32 %v4072, %v4072
      %v4206 = vmul.f32 %v4073, %v4073
      %v4207 = vmul.f32 %v4074, %v4074
      %v4208 = vmul.f32 %v4075, %v4075
      %v4209 = vmul.f32 %v4076, %v4076
      %v4210 = vmul.f32 %v4077, %v4077
      %v4211 = vmul.f32 %v4078, %v4078
      %v4212 = vmul.f32 %v4079, %v4079
      %v4213 = vmul.f32 %v4080, %v4080
      %v4214 = vmul.f32 %v4081, %v4081
      %v4215 = vmul.f32 %v4082, %v4082
      %v4216 = vmul.f32 %v4083, %v4083
      %v4217 = vmul.f32 %v4084, %v4084
      %v4218 = vmul.f32 %v4085, %v4085
      %v4219 = vmul.f32 %v4086, %v4086
      %v4220 = vmul.f32 %v4087, %v4087
      %v4221 = vmul.f32 %v4088, %v4088
      %v4222 = vmul.f32 %v4089, %v4089
      %v4223 = vmul.f32 %v4090, %v4090
      %v4224 = vmul.f32 %v4091, %v4091
      %v4225 = vmul.f32 %v4092, %v4092
      %v4226 = vmul.f32 %v4093, %v4093
      %v4227 = vmul.f32 %v4094, %v4094
      %v4228 = vadd.f32 %v4196, %v4197
      %v4229 = vadd.f32 %v4228, %v4198
      %v4230 = vadd.f32 %v4229, %v4199
      %v4231 = vadd.f32 %v4230, %v4200
      %v4232 = vadd.f32 %v4231, %v4201
      %v4233 = vadd.f32 %v4232, %v4202
      %v4234 = vadd.f32 %v4233, %v4203
      %v4235 = vadd.f32 %v4234, %v4204
      %v4236 = vadd.f32 %v4235, %v4205
      %v4237 = vadd.f32 %v4236, %v4206
      %v4238 = vadd.f32 %v4237, %v4207
      %v4239 = vadd.f32 %v4238, %v4208
      %v4240 = vadd.f32 %v4239, %v4209
      %v4241 = vadd.f32 %v4240, %v4210
      %v4242 = vadd.f32 %v4241, %v4211
      %v4243 = vadd.f32 %v4242, %v4212
      %v4244 = vadd.f32 %v4243, %v4213
      %v4245 = vadd.f32 %v4244, %v4214
      %v4246 = vadd.f32 %v4245, %v4215
      %v4247 = vadd.f32 %v4246, %v4216
      %v4248 = vadd.f32 %v4247, %v4217
      %v4249 = vadd.f32 %v4248, %v4218
      %v4250 = vadd.f32 %v4249, %v4219
      %v4251 = vadd.f32 %v4250, %v4220
      %v4252 = vadd.f32 %v4251, %v4221
      %v4253 = vadd.f32 %v4252, %v4222
      %v4254 = vadd.f32 %v4253, %v4223
      %v4255 = vadd.f32 %v4254, %v4224
      %v4256 = vadd.f32 %v4255, %v4225
      %v4257 = vadd.f32 %v4256, %v4226
      %v4258 = vadd.f32 %v4257, %v4227
      %v4259 = vrot.slane %v4258, 4
      %v4260 = vadd.f32 %v4258, %v4259
      %v4261 = vrot.slane %v4260, 2
      %v4262 = vadd.f32 %v4260, %v4261
      %v4263 = vrot.slane %v4262, 1
      %v4264 = vadd.f32 %v4262, %v4263
      %vm4265 = vcmask 1040384
      %v4266 = vsel %vm4265, %v4195, %v4264
      %4267 = vst [vmem:[%s465] sm:$0x3] %v4266
      %s4268 = smul.u32 16, %s24
      %p4269 = scmp.lt.s32.totalorder %s23, 1
      %s4270 = scalar_select %p4269, %s23, 1
      %p4271 = scmp.lt.s32.totalorder %s4268, 15
      %s4272 = scalar_select %p4271, %s4268, 15
      %s4273 = smul.addr %s4272, 2
      %s4274 = smul.addr %s4270, 32
      %s4275 = sadd.s32 %s4273, %s4274
      %s4276 = smul.addr %s4275, 4
      %s4277 = scalar_lea.vmem %s6, %s4276
      %p4278 = scmp.lt.s32.totalorder %s23, 1
      %s4279 = scalar_select %p4278, %s23, 1
      %p4280 = scmp.lt.s32.totalorder %s24, 0
      %s4281 = scalar_select %p4280, %s24, 0
      %s4282 = sadd.s32 %s4281, %s4279
      %s4283 = smul.addr %s4282, 2
      %s4284 = scalar_lea.vmem %s7, %s4283
      // Predicated region
      $region45: #{double_conv_forward.3} parent=43 // pred_check
        %p4285 = pneg %p214
      $region46: #{double_conv_forward.3} parent=43 // pred_check_branch
        %4287 = sbr.rel (%p4285) target = $region48
      $region47: #{double_conv_forward.3} parent=43 // pred_region
        %s4288 = smul.u32 16, %s24
      $region48: #{double_conv_forward.3} parent=43 // pred_fallthru
        _
      // Predicated region
      $region49: #{double_conv_forward.3} parent=43 // pred_check
        %p4289 = pneg %p242
      $region50: #{double_conv_forward.3} parent=43 // pred_check_branch
        %4291 = sbr.rel (%p4289) target = $region52
      $region51: #{double_conv_forward.3} parent=43 // pred_region
        _
      $region52: #{double_conv_forward.3} parent=43 // pred_fallthru
        _
    $region44: #{double_conv_forward.3} parent=5 // pred_fallthru
      _
    %p4292 = scmp.le.s32.totalorder 2, %s14
    // Predicated region
    $region53: #{double_conv_forward.3} parent=5 // pred_check
      %p4293 = pneg %p4292
    $region54: #{double_conv_forward.3} parent=5 // pred_check_branch
      %4295 = sbr.rel (%p4293) target = $region56
    $region55: #{double_conv_forward.3} parent=5 // pred_region
      %s4296 = ssub.s32 %s14, 2
      // Predicated region
      $region57: #{double_conv_forward.3} parent=55 // pred_check
        %p4297 = pneg %p220
      $region58: #{double_conv_forward.3} parent=55 // pred_check_branch
        %4299 = sbr.rel (%p4297) target = $region60
      $region59: #{double_conv_forward.3} parent=55 // pred_region
        %s4300 = smul.u32 16, %s26
        %p4301 = scmp.lt.s32.totalorder %s25, 1
        %s4302 = scalar_select %p4301, %s25, 1
        %p4303 = scmp.lt.s32.totalorder %s4300, 15
        %s4304 = scalar_select %p4303, %s4300, 15
        %s4305 = smul.addr %s4304, 2
        %s4306 = smul.addr %s4302, 32
        %s4307 = sadd.s32 %s4305, %s4306
        %s4308 = smul.addr %s4307, 4
        %s4309 = scalar_lea.vmem %s6, %s4308
      $region60: #{double_conv_forward.3} parent=55 // pred_fallthru
        _
      // Predicated region
      $region61: #{double_conv_forward.3} parent=55 // pred_check
        %p4310 = pneg %p248
      $region62: #{double_conv_forward.3} parent=55 // pred_check_branch
        %4312 = sbr.rel (%p4310) target = $region64
      $region63: #{double_conv_forward.3} parent=55 // pred_region
        %p4313 = scmp.lt.s32.totalorder %s25, 1
        %s4314 = scalar_select %p4313, %s25, 1
        %p4315 = scmp.lt.s32.totalorder %s26, 0
        %s4316 = scalar_select %p4315, %s26, 0
        %s4317 = sadd.s32 %s4316, %s4314
        %s4318 = smul.addr %s4317, 2
        %s4319 = scalar_lea.vmem %s7, %s4318
      $region64: #{double_conv_forward.3} parent=55 // pred_fallthru
        _
    $region56: #{double_conv_forward.3} parent=5 // pred_fallthru
      _
  $region6: #{double_conv_forward.3} parent=0 // loop_footer
    %s18 = sadd.s32 1, %s14
  $region7: #{double_conv_forward.3} parent=0 // loop_footer_branch
    %13 = sbr.rel target = $region3
  $region8: #{double_conv_forward.3} parent=0 // loop_exit
    _

// kernel: double_conv_forward.4
$region0: #{double_conv_forward.4}
  #allocation0 [shape = 'u32[]', space=smem, size = 0x4, offset = 0x4, fixed_abs, tag = 'smem constant byte address 0x4 - core index']
  #allocation1 [shape = 'u32[72,128]{1,0:T(1,128)}', space=vmem, size = 0x9000, scoped, tag = 'internal scratch']
  #allocation2 [shape = 'bf16[18,18,128]{2,1,0:T(8,128)(2,1)}', space=vmem, size = 0x1b000, scoped, tag = 'scratch operand']
  %s0 = inlined_call_operand.vmem [shape: bf16[2,16,16,128], index: 0, kind: input, shape index: {}, may-alias: {0,1,2}]
  %s1 = inlined_call_operand.vmem [shape: bf16[2,16,16,128], index: 1, kind: input, shape index: {}, may-alias: {0,1,2}]
  %s2 = inlined_call_operand.vmem [shape: bf16[2,16,16,128], index: 2, kind: input, shape index: {}, may-alias: {0,1,2}]
  %s3 = inlined_call_operand.vmem [shape: bf16[1152,128], index: 3, kind: input, shape index: {}]
  %s4 = inlined_call_operand.vmem [shape: f32[1,128], index: 4, kind: input, shape index: {}]
  %s5 = inlined_call_operand.vmem [shape: f32[1,128], index: 5, kind: input, shape index: {}]
  %s6 = inlined_call_operand.vmem [shape: bf16[2,16,16,128], index: 6, kind: output, shape index: {0}]
  %s7 = inlined_call_operand.vmem [shape: f32[2,1,2,128], index: 7, kind: output, shape index: {1}]
  %8 = xla_tuple %s6, %s7
  %s9 = sld [smem:[#allocation0]]
  $region65: #{double_conv_forward.4} parent=0
    _
  %s11 = ssub.s32 1, %s9
  %s12 = scalar_select 0, %s11, %s9
  loop: start=0, step=1, limit=4
  $region2: #{double_conv_forward.4} parent=0 // loop_pre_header
    _
  $region3: #{double_conv_forward.4} parent=0 // loop_header
    %s14 = sphi 0, %s18
    %p15 = scmp.ge.s32.totalorder %s14, 4
    %s21 = sphi 0, %s33
    %s22 = sphi 0, %s29
    %s23 = sphi 0, %s21
    %s24 = sphi 0, %s22
    %s25 = sphi 0, %s23
    %s26 = sphi 0, %s24
    %s46 = sphi 0, %s48
    %s49 = sphi 0, %s46
    %s50 = sphi 0, %s49
    %s66 = sphi 0, %s50
    %s74 = sphi 0, %s76
    %s77 = sphi 0, %s74
    %s78 = sphi 0, %s77
    %s94 = sphi 0, %s78
    %s110 = sphi 0, %s112
    %s113 = sphi 0, %s110
    %s114 = sphi 0, %s113
    %s130 = sphi 0, %s114
    %s134 = sphi 0, %s134
    %s136 = sphi 0, %s134
    %s137 = sphi 0, %s136
    %s151 = sphi 0, %s137
    %s155 = sphi 0, %s155
    %s157 = sphi 0, %s155
    %s158 = sphi 0, %s157
    %s172 = sphi 0, %s158
    %s176 = sphi 0, %s176
    %s178 = sphi 0, %s176
    %s179 = sphi 0, %s178
    %s193 = sphi 0, %s179
    %s201 = sphi 0, %s203
    %s204 = sphi 0, %s201
    %s205 = sphi 0, %s204
    %s221 = sphi 0, %s205
    %s229 = sphi 0, %s231
    %s232 = sphi 0, %s229
    %s233 = sphi 0, %s232
    %s249 = sphi 0, %s233
  $region4: #{double_conv_forward.4} parent=0 // loop_header_branch
    %17 = sbr.rel (%p15) target = $region8
  $region5: #{double_conv_forward.4} parent=0 // loop_body
    %s19 = ssub.s32 %s14, 1
    %s20 = ssub.s32 %s14, 2
    %s27 = sadd.s32 1, %s22
    %p28 = scmp.ge.s32.totalorder %s27, 1
    %s29 = scalar_select %p28, 0, %s27
    %s30 = sadd.s32 1, %s21
    %s31 = scalar_select %p28, %s30, %s21
    %p32 = scmp.ge.s32.totalorder %s31, 2
    %s33 = scalar_select %p32, 0, %s31
    %s34 = smul.u32 %s22, 16
    %s35 = ssub.s32 %s34, 1
    %p36 = scmp.gt.s32.totalorder %s35, 0
    %s37 = scalar_select %p36, %s35, 0
    %s38 = smul.u32 %s29, 16
    %s39 = ssub.s32 %s38, 1
    %p40 = scmp.gt.s32.totalorder %s39, 0
    %s41 = scalar_select %p40, %s39, 0
    %s42 = ssub.s32 %s21, %s33
    %s43 = ssub.s32 %s37, %s41
    %s44 = sor.u32 %s42, %s43
    %p45 = scmp.eq.s32.totalorder %s44, 0
    %s47 = sadd.s32 %s46, 1
    %s48 = scalar_select %p45, %s46, %s47
    %p51 = pneg %p45
    %p52 = scmp.eq.s32.totalorder %s14, 1
    %p53 = por %p51, %p52
    %p54 = scmp.ne.s32.totalorder %s46, %s49
    %p55 = scmp.eq.s32.totalorder %s14, 0
    %p56 = por %p54, %p55
    %p57 = scmp.ne.s32.totalorder %s46, %s49
    %p58 = scmp.eq.s32.totalorder %s19, 1
    %p59 = por %p57, %p58
    %p60 = scmp.ne.s32.totalorder %s49, %s50
    %p61 = scmp.eq.s32.totalorder %s19, 0
    %p62 = por %p60, %p61
    %p63 = scmp.ne.s32.totalorder %s49, %s50
    %p64 = scmp.eq.s32.totalorder %s20, 1
    %p65 = por %p63, %p64
    %p67 = scmp.ne.s32.totalorder %s50, %s66
    %p68 = scmp.eq.s32.totalorder %s20, 0
    %p69 = por %p67, %p68
    %s70 = ssub.s32 %s21, %s33
    %s71 = ssub.s32 %s22, %s29
    %s72 = sor.u32 %s70, %s71
    %p73 = scmp.eq.s32.totalorder %s72, 0
    %s75 = sadd.s32 %s74, 1
    %s76 = scalar_select %p73, %s74, %s75
    %p79 = pneg %p73
    %p80 = scmp.eq.s32.totalorder %s14, 1
    %p81 = por %p79, %p80
    %p82 = scmp.ne.s32.totalorder %s74, %s77
    %p83 = scmp.eq.s32.totalorder %s14, 0
    %p84 = por %p82, %p83
    %p85 = scmp.ne.s32.totalorder %s74, %s77
    %p86 = scmp.eq.s32.totalorder %s19, 1
    %p87 = por %p85, %p86
    %p88 = scmp.ne.s32.totalorder %s77, %s78
    %p89 = scmp.eq.s32.totalorder %s19, 0
    %p90 = por %p88, %p89
    %p91 = scmp.ne.s32.totalorder %s77, %s78
    %p92 = scmp.eq.s32.totalorder %s20, 1
    %p93 = por %p91, %p92
    %p95 = scmp.ne.s32.totalorder %s78, %s94
    %p96 = scmp.eq.s32.totalorder %s20, 0
    %p97 = por %p95, %p96
    %s98 = sadd.s32 %s22, 1
    %s99 = smul.u32 %s98, 16
    %p100 = scmp.lt.s32.totalorder %s99, 15
    %s101 = scalar_select %p100, %s99, 15
    %s102 = sadd.s32 %s29, 1
    %s103 = smul.u32 %s102, 16
    %p104 = scmp.lt.s32.totalorder %s103, 15
    %s105 = scalar_select %p104, %s103, 15
    %s106 = ssub.s32 %s21, %s33
    %s107 = ssub.s32 %s101, %s105
    %s108 = sor.u32 %s106, %s107
    %p109 = scmp.eq.s32.totalorder %s108, 0
    %s111 = sadd.s32 %s110, 1
    %s112 = scalar_select %p109, %s110, %s111
    %p115 = pneg %p109
    %p116 = scmp.eq.s32.totalorder %s14, 1
    %p117 = por %p115, %p116
    %p118 = scmp.ne.s32.totalorder %s110, %s113
    %p119 = scmp.eq.s32.totalorder %s14, 0
    %p120 = por %p118, %p119
    %p121 = scmp.ne.s32.totalorder %s110, %s113
    %p122 = scmp.eq.s32.totalorder %s19, 1
    %p123 = por %p121, %p122
    %p124 = scmp.ne.s32.totalorder %s113, %s114
    %p125 = scmp.eq.s32.totalorder %s19, 0
    %p126 = por %p124, %p125
    %p127 = scmp.ne.s32.totalorder %s113, %s114
    %p128 = scmp.eq.s32.totalorder %s20, 1
    %p129 = por %p127, %p128
    %p131 = scmp.ne.s32.totalorder %s114, %s130
    %p132 = scmp.eq.s32.totalorder %s20, 0
    %p133 = por %p131, %p132
    %s135 = sadd.s32 %s134, 1
    %p138 = scmp.eq.s32.totalorder %s14, 1
    %p139 = scmp.ne.s32.totalorder %s134, %s136
    %p140 = scmp.eq.s32.totalorder %s14, 0
    %p141 = por %p139, %p140
    %p142 = scmp.ne.s32.totalorder %s134, %s136
    %p143 = scmp.eq.s32.totalorder %s19, 1
    %p144 = por %p142, %p143
    %p145 = scmp.ne.s32.totalorder %s136, %s137
    %p146 = scmp.eq.s32.totalorder %s19, 0
    %p147 = por %p145, %p146
    %p148 = scmp.ne.s32.totalorder %s136, %s137
    %p149 = scmp.eq.s32.totalorder %s20, 1
    %p150 = por %p148, %p149
    %p152 = scmp.ne.s32.totalorder %s137, %s151
    %p153 = scmp.eq.s32.totalorder %s20, 0
    %p154 = por %p152, %p153
    %s156 = sadd.s32 %s155, 1
    %p159 = scmp.eq.s32.totalorder %s14, 1
    %p160 = scmp.ne.s32.totalorder %s155, %s157
    %p161 = scmp.eq.s32.totalorder %s14, 0
    %p162 = por %p160, %p161
    %p163 = scmp.ne.s32.totalorder %s155, %s157
    %p164 = scmp.eq.s32.totalorder %s19, 1
    %p165 = por %p163, %p164
    %p166 = scmp.ne.s32.totalorder %s157, %s158
    %p167 = scmp.eq.s32.totalorder %s19, 0
    %p168 = por %p166, %p167
    %p169 = scmp.ne.s32.totalorder %s157, %s158
    %p170 = scmp.eq.s32.totalorder %s20, 1
    %p171 = por %p169, %p170
    %p173 = scmp.ne.s32.totalorder %s158, %s172
    %p174 = scmp.eq.s32.totalorder %s20, 0
    %p175 = por %p173, %p174
    %s177 = sadd.s32 %s176, 1
    %p180 = scmp.eq.s32.totalorder %s14, 1
    %p181 = scmp.ne.s32.totalorder %s176, %s178
    %p182 = scmp.eq.s32.totalorder %s14, 0
    %p183 = por %p181, %p182
    %p184 = scmp.ne.s32.totalorder %s176, %s178
    %p185 = scmp.eq.s32.totalorder %s19, 1
    %p186 = por %p184, %p185
    %p187 = scmp.ne.s32.totalorder %s178, %s179
    %p188 = scmp.eq.s32.totalorder %s19, 0
    %p189 = por %p187, %p188
    %p190 = scmp.ne.s32.totalorder %s178, %s179
    %p191 = scmp.eq.s32.totalorder %s20, 1
    %p192 = por %p190, %p191
    %p194 = scmp.ne.s32.totalorder %s179, %s193
    %p195 = scmp.eq.s32.totalorder %s20, 0
    %p196 = por %p194, %p195
    %s197 = ssub.s32 %s21, %s33
    %s198 = ssub.s32 %s22, %s29
    %s199 = sor.u32 %s197, %s198
    %p200 = scmp.eq.s32.totalorder %s199, 0
    %s202 = sadd.s32 %s201, 1
    %s203 = scalar_select %p200, %s201, %s202
    %p206 = pneg %p200
    %p207 = scmp.eq.s32.totalorder %s14, 1
    %p208 = por %p206, %p207
    %p209 = scmp.ne.s32.totalorder %s201, %s204
    %p210 = scmp.eq.s32.totalorder %s14, 0
    %p211 = por %p209, %p210
    %p212 = scmp.ne.s32.totalorder %s201, %s204
    %p213 = scmp.eq.s32.totalorder %s19, 1
    %p214 = por %p212, %p213
    %p215 = scmp.ne.s32.totalorder %s204, %s205
    %p216 = scmp.eq.s32.totalorder %s19, 0
    %p217 = por %p215, %p216
    %p218 = scmp.ne.s32.totalorder %s204, %s205
    %p219 = scmp.eq.s32.totalorder %s20, 1
    %p220 = por %p218, %p219
    %p222 = scmp.ne.s32.totalorder %s205, %s221
    %p223 = scmp.eq.s32.totalorder %s20, 0
    %p224 = por %p222, %p223
    %s225 = ssub.s32 %s21, %s33
    %s226 = ssub.s32 %s22, %s29
    %s227 = sor.u32 %s225, %s226
    %p228 = scmp.eq.s32.totalorder %s227, 0
    %s230 = sadd.s32 %s229, 1
    %s231 = scalar_select %p228, %s229, %s230
    %p234 = pneg %p228
    %p235 = scmp.eq.s32.totalorder %s14, 1
    %p236 = por %p234, %p235
    %p237 = scmp.ne.s32.totalorder %s229, %s232
    %p238 = scmp.eq.s32.totalorder %s14, 0
    %p239 = por %p237, %p238
    %p240 = scmp.ne.s32.totalorder %s229, %s232
    %p241 = scmp.eq.s32.totalorder %s19, 1
    %p242 = por %p240, %p241
    %p243 = scmp.ne.s32.totalorder %s232, %s233
    %p244 = scmp.eq.s32.totalorder %s19, 0
    %p245 = por %p243, %p244
    %p246 = scmp.ne.s32.totalorder %s232, %s233
    %p247 = scmp.eq.s32.totalorder %s20, 1
    %p248 = por %p246, %p247
    %p250 = scmp.ne.s32.totalorder %s233, %s249
    %p251 = scmp.eq.s32.totalorder %s20, 0
    %p252 = por %p250, %p251
    %p253 = scmp.le.s32.totalorder 1, %s14
    %p254 = scmp.lt.s32.totalorder %s14, 3
    %p255 = pnand %p253, %p254
    %p256 = pneg %p255
    // Predicated region
    $region9: #{double_conv_forward.4} parent=5 // pred_check
      _
    $region10: #{double_conv_forward.4} parent=5 // pred_check_branch
      %258 = sbr.rel (%p255) target = $region12
    $region11: #{double_conv_forward.4} parent=5 // pred_region
      %s259 = ssub.s32 %s14, 1
      // Predicated region
      $region13: #{double_conv_forward.4} parent=11 // pred_check
        %p260 = pneg %p147
      $region14: #{double_conv_forward.4} parent=11 // pred_check_branch
        %262 = sbr.rel (%p260) target = $region16
      $region15: #{double_conv_forward.4} parent=11 // pred_region
        _
      $region16: #{double_conv_forward.4} parent=11 // pred_fallthru
        _
      // Predicated region
      $region17: #{double_conv_forward.4} parent=11 // pred_check
        %p263 = pneg %p168
      $region18: #{double_conv_forward.4} parent=11 // pred_check_branch
        %265 = sbr.rel (%p263) target = $region20
      $region19: #{double_conv_forward.4} parent=11 // pred_region
        _
      $region20: #{double_conv_forward.4} parent=11 // pred_fallthru
        _
      // Predicated region
      $region21: #{double_conv_forward.4} parent=11 // pred_check
        %p266 = pneg %p189
      $region22: #{double_conv_forward.4} parent=11 // pred_check_branch
        %268 = sbr.rel (%p266) target = $region24
      $region23: #{double_conv_forward.4} parent=11 // pred_region
        _
      $region24: #{double_conv_forward.4} parent=11 // pred_fallthru
        _
    $region12: #{double_conv_forward.4} parent=5 // pred_fallthru
      _
    %p269 = scmp.lt.s32.totalorder %s14, 2
    // Predicated region
    $region25: #{double_conv_forward.4} parent=5 // pred_check
      %p270 = pneg %p269
    $region26: #{double_conv_forward.4} parent=5 // pred_check_branch
      %272 = sbr.rel (%p270) target = $region28
    $region27: #{double_conv_forward.4} parent=5 // pred_region
      // Predicated region
      $region29: #{double_conv_forward.4} parent=27 // pred_check
        %p273 = pneg %p56
      $region30: #{double_conv_forward.4} parent=27 // pred_check_branch
        %275 = sbr.rel (%p273) target = $region32
      $region31: #{double_conv_forward.4} parent=27 // pred_region
        %s276 = smul.u32 %s22, 16
        %s277 = ssub.s32 %s276, 1
        %p278 = scmp.gt.s32.totalorder %s277, 0
        %s279 = scalar_select %p278, %s277, 0
        %p280 = scmp.lt.s32.totalorder %s21, 1
        %s281 = scalar_select %p280, %s21, 1
        %p282 = scmp.lt.s32.totalorder %s279, 15
        %s283 = scalar_select %p282, %s279, 15
        %s284 = smul.addr %s283, 2
        %s285 = smul.addr %s281, 32
        %s286 = sadd.s32 %s284, %s285
        %s287 = smul.addr %s286, 4
        %s288 = scalar_lea.vmem %s0, %s287
        %s289 = smul.u32 %s22, 16
        %s290 = ssub.s32 %s289, 1
        %p291 = scmp.gt.s32.totalorder %s290, 0
        %s292 = scalar_select %p291, %s290, 0
      $region32: #{double_conv_forward.4} parent=27 // pred_fallthru
        _
      // Predicated region
      $region33: #{double_conv_forward.4} parent=27 // pred_check
        %p293 = pneg %p84
      $region34: #{double_conv_forward.4} parent=27 // pred_check_branch
        %295 = sbr.rel (%p293) target = $region36
      $region35: #{double_conv_forward.4} parent=27 // pred_region
        %s296 = smul.u32 16, %s22
        %p297 = scmp.lt.s32.totalorder %s21, 1
        %s298 = scalar_select %p297, %s21, 1
        %p299 = scmp.lt.s32.totalorder %s296, 15
        %s300 = scalar_select %p299, %s296, 15
        %s301 = smul.addr %s300, 2
        %s302 = smul.addr %s298, 32
        %s303 = sadd.s32 %s301, %s302
        %s304 = smul.addr %s303, 4
        %s305 = scalar_lea.vmem %s1, %s304
        %s306 = smul.u32 16, %s22
      $region36: #{double_conv_forward.4} parent=27 // pred_fallthru
        _
      // Predicated region
      $region37: #{double_conv_forward.4} parent=27 // pred_check
        %p307 = pneg %p120
      $region38: #{double_conv_forward.4} parent=27 // pred_check_branch
        %309 = sbr.rel (%p307) target = $region40
      $region39: #{double_conv_forward.4} parent=27 // pred_region
        %s310 = sadd.s32 %s22, 1
        %s311 = smul.u32 %s310, 16
        %p312 = scmp.lt.s32.totalorder %s311, 15
        %s313 = scalar_select %p312, %s311, 15
        %p314 = scmp.lt.s32.totalorder %s21, 1
        %s315 = scalar_select %p314, %s21, 1
        %p316 = scmp.lt.s32.totalorder %s313, 15
        %s317 = scalar_select %p316, %s313, 15
        %s318 = smul.addr %s317, 2
        %s319 = smul.addr %s315, 32
        %s320 = sadd.s32 %s318, %s319
        %s321 = smul.addr %s320, 4
        %s322 = scalar_lea.vmem %s2, %s321
        %s323 = sadd.s32 %s22, 1
        %s324 = smul.u32 %s323, 16
        %p325 = scmp.lt.s32.totalorder %s324, 15
        %s326 = scalar_select %p325, %s324, 15
      $region40: #{double_conv_forward.4} parent=27 // pred_fallthru
        _
    $region28: #{double_conv_forward.4} parent=5 // pred_fallthru
      _
    %p327 = scmp.le.s32.totalorder 1, %s14
    %p328 = scmp.lt.s32.totalorder %s14, 3
    %p329 = pnand %p327, %p328
    %p330 = pneg %p329
    // Predicated region
    $region41: #{double_conv_forward.4} parent=5 // pred_check
      _
    $region42: #{double_conv_forward.4} parent=5 // pred_check_branch
      %332 = sbr.rel (%p329) target = $region44
    $region43: #{double_conv_forward.4} parent=5 // pred_region
      %s333 = ssub.s32 %s14, 1
      %s334 = smul.u32 %s24, 16
      %s335 = ssub.s32 %s334, 1
      %p336 = scmp.gt.s32.totalorder %s335, 0
      %s337 = scalar_select %p336, %s335, 0
      %p338 = scmp.lt.s32.totalorder %s23, 1
      %s339 = scalar_select %p338, %s23, 1
      %p340 = scmp.lt.s32.totalorder %s337, 15
      %s341 = scalar_select %p340, %s337, 15
      %s342 = smul.addr %s341, 2
      %s343 = smul.addr %s339, 32
      %s344 = sadd.s32 %s342, %s343
      %s345 = smul.addr %s344, 4
      %s346 = scalar_lea.vmem %s0, %s345
      %p347 = pneg %p62
      %p348 = pneg %p59
      %s349 = smul.u32 16, %s24
      %p350 = scmp.lt.s32.totalorder %s23, 1
      %s351 = scalar_select %p350, %s23, 1
      %p352 = scmp.lt.s32.totalorder %s349, 15
      %s353 = scalar_select %p352, %s349, 15
      %s354 = smul.addr %s353, 2
      %s355 = smul.addr %s351, 32
      %s356 = sadd.s32 %s354, %s355
      %s357 = smul.addr %s356, 4
      %s358 = scalar_lea.vmem %s1, %s357
      %p359 = pneg %p90
      %p360 = pneg %p87
      %s361 = sadd.s32 %s24, 1
      %s362 = smul.u32 %s361, 16
      %p363 = scmp.lt.s32.totalorder %s362, 15
      %s364 = scalar_select %p363, %s362, 15
      %p365 = scmp.lt.s32.totalorder %s23, 1
      %s366 = scalar_select %p365, %s23, 1
      %p367 = scmp.lt.s32.totalorder %s364, 15
      %s368 = scalar_select %p367, %s364, 15
      %s369 = smul.addr %s368, 2
      %s370 = smul.addr %s366, 32
      %s371 = sadd.s32 %s369, %s370
      %s372 = smul.addr %s371, 4
      %s373 = scalar_lea.vmem %s2, %s372
      %p374 = pneg %p126
      %p375 = pneg %p123
      %p376 = pneg %p147
      %p377 = pneg %p144
      %p378 = pneg %p168
      %p379 = pneg %p165
      %p380 = pneg %p189
      %p381 = pneg %p186
      %p382 = pneg %p217
      %p383 = pneg %p214
      %s384 = smul.u32 16, %s24
      %p385 = scmp.lt.s32.totalorder %s23, 1
      %s386 = scalar_select %p385, %s23, 1
      %p387 = scmp.lt.s32.totalorder %s384, 15
      %s388 = scalar_select %p387, %s384, 15
      %s389 = smul.addr %s388, 2
      %s390 = smul.addr %s386, 32
      %s391 = sadd.s32 %s389, %s390
      %s392 = smul.addr %s391, 4
      %s393 = scalar_lea.vmem %s6, %s392
      %p394 = pneg %p245
      %p395 = pneg %p242
      %p396 = scmp.lt.s32.totalorder %s23, 1
      %s397 = scalar_select %p396, %s23, 1
      %p398 = scmp.lt.s32.totalorder %s24, 0
      %s399 = scalar_select %p398, %s24, 0
      %s400 = sadd.s32 %s399, %s397
      %s401 = smul.addr %s400, 2
      %s402 = scalar_lea.vmem %s7, %s401
      %s403 = smul.u32 %s24, 16
      %s404 = ssub.s32 %s403, 1
      %p405 = scmp.gt.s32.totalorder %s404, 0
      %s406 = scalar_select %p405, %s404, 0
      %p407 = scmp.lt.s32.totalorder %s23, 1
      %s408 = scalar_select %p407, %s23, 1
      %p409 = scmp.lt.s32.totalorder %s406, 15
      %s410 = scalar_select %p409, %s406, 15
      %s411 = smul.addr %s410, 2
      %s412 = smul.addr %s408, 32
      %s413 = sadd.s32 %s411, %s412
      %s414 = smul.addr %s413, 4
      %s415 = scalar_lea.vmem %s0, %s414
      %s416 = smul.u32 %s24, 16
      %s417 = ssub.s32 %s416, 1
      %p418 = scmp.gt.s32.totalorder %s417, 0
      %s419 = scalar_select %p418, %s417, 0
      %s420 = smul.u32 16, %s24
      %p421 = scmp.lt.s32.totalorder %s23, 1
      %s422 = scalar_select %p421, %s23, 1
      %p423 = scmp.lt.s32.totalorder %s420, 15
      %s424 = scalar_select %p423, %s420, 15
      %s425 = smul.addr %s424, 2
      %s426 = smul.addr %s422, 32
      %s427 = sadd.s32 %s425, %s426
      %s428 = smul.addr %s427, 4
      %s429 = scalar_lea.vmem %s1, %s428
      %s430 = smul.u32 16, %s24
      %s431 = sadd.s32 %s24, 1
      %s432 = smul.u32 %s431, 16
      %p433 = scmp.lt.s32.totalorder %s432, 15
      %s434 = scalar_select %p433, %s432, 15
      %p435 = scmp.lt.s32.totalorder %s23, 1
      %s436 = scalar_select %p435, %s23, 1
      %p437 = scmp.lt.s32.totalorder %s434, 15
      %s438 = scalar_select %p437, %s434, 15
      %s439 = smul.addr %s438, 2
      %s440 = smul.addr %s436, 32
      %s441 = sadd.s32 %s439, %s440
      %s442 = smul.addr %s441, 4
      %s443 = scalar_lea.vmem %s2, %s442
      %s444 = sadd.s32 %s24, 1
      %s445 = smul.u32 %s444, 16
      %p446 = scmp.lt.s32.totalorder %s445, 15
      %s447 = scalar_select %p446, %s445, 15
      %s448 = smul.u32 16, %s24
      %p449 = scmp.lt.s32.totalorder %s23, 1
      %s450 = scalar_select %p449, %s23, 1
      %p451 = scmp.lt.s32.totalorder %s448, 15
      %s452 = scalar_select %p451, %s448, 15
      %s453 = smul.addr %s452, 2
      %s454 = smul.addr %s450, 32
      %s455 = sadd.s32 %s453, %s454
      %s456 = smul.addr %s455, 4
      %s457 = scalar_lea.vmem %s6, %s456
      %s458 = smul.u32 16, %s24
      %p459 = scmp.lt.s32.totalorder %s23, 1
      %s460 = scalar_select %p459, %s23, 1
      %p461 = scmp.lt.s32.totalorder %s24, 0
      %s462 = scalar_select %p461, %s24, 0
      %s463 = sadd.s32 %s462, %s460
      %s464 = smul.addr %s463, 2
      %s465 = scalar_lea.vmem %s7, %s464
      %p467 = scmp.gt.s32.totalorder %s24, 0
      %s468 = scalar_select %p467, 1.0, 0.0
      %p470 = scmp.ne.f32.partialorder %s468, %s468
      %s471 = sshrl.u32 %s468, 16
      %s472 = sand.u32 %s471, 1
      %s473 = sadd.s32 32767, %s472
      %s474 = sadd.s32 %s468, %s473
      %s475 = sand.u32 %s474, 4294901760
      %s476 = scalar_select %p470, 2143289344, %s475
      %s478 = sshrl.u32 %s476, 16
      %p479 = scmp.lt.s32.totalorder %s24, 0
      %s480 = scalar_select %p479, 1.0, 0.0
      %p482 = scmp.ne.f32.partialorder %s480, %s480
      %s483 = sshrl.u32 %s480, 16
      %s484 = sand.u32 %s483, 1
      %s485 = sadd.s32 32767, %s484
      %s486 = sadd.s32 %s480, %s485
      %s487 = sand.u32 %s486, 4294901760
      %s488 = scalar_select %p482, 2143289344, %s487
      %s490 = sshrl.u32 %s488, 16
      %491 = vst [vmem:[#allocation2] sm:$0xf] 0
      %492 = vst [vmem:[#allocation2 + $0x4] sm:$0xf] 0
      %493 = vst [vmem:[#allocation2 + $0x8] sm:$0x1] 0
      %494 = vst [vmem:[#allocation2 + $0xc] sm:$0xf] 0
      %495 = vst [vmem:[#allocation2 + $0x10] sm:$0xf] 0
      %496 = vst [vmem:[#allocation2 + $0x14] sm:$0x1] 0
      %497 = vst [vmem:[#allocation2 + $0x18] sm:$0xf] 0
      %498 = vst [vmem:[#allocation2 + $0x1c] sm:$0xf] 0
      %499 = vst [vmem:[#allocation2 + $0x20] sm:$0x1] 0
      %500 = vst [vmem:[#allocation2 + $0x24] sm:$0xf] 0
      %501 = vst [vmem:[#allocation2 + $0x28] sm:$0xf] 0
      %502 = vst [vmem:[#allocation2 + $0x2c] sm:$0x1] 0
      %503 = vst [vmem:[#allocation2 + $0x30] sm:$0xf] 0
      %504 = vst [vmem:[#allocation2 + $0x34] sm:$0xf] 0
      %505 = vst [vmem:[#allocation2 + $0x38] sm:$0x1] 0
      %506 = vst [vmem:[#allocation2 + $0x3c] sm:$0xf] 0
      %507 = vst [vmem:[#allocation2 + $0x40] sm:$0xf] 0
      %508 = vst [vmem:[#allocation2 + $0x44] sm:$0x1] 0
      %509 = vst [vmem:[#allocation2 + $0x48] sm:$0xf] 0
      %510 = vst [vmem:[#allocation2 + $0x4c] sm:$0xf] 0
      %511 = vst [vmem:[#allocation2 + $0x50] sm:$0x1] 0
      %512 = vst [vmem:[#allocation2 + $0x54] sm:$0xf] 0
      %513 = vst [vmem:[#allocation2 + $0x58] sm:$0xf] 0
      %514 = vst [vmem:[#allocation2 + $0x5c] sm:$0x1] 0
      %515 = vst [vmem:[#allocation2 + $0x60] sm:$0xf] 0
      %516 = vst [vmem:[#allocation2 + $0x64] sm:$0xf] 0
      %517 = vst [vmem:[#allocation2 + $0x68] sm:$0x1] 0
      %518 = vst [vmem:[#allocation2 + $0x6c] sm:$0xf] 0
      %519 = vst [vmem:[#allocation2 + $0x70] sm:$0xf] 0
      %520 = vst [vmem:[#allocation2 + $0x74] sm:$0x1] 0
      %521 = vst [vmem:[#allocation2 + $0x78] sm:$0xf] 0
      %522 = vst [vmem:[#allocation2 + $0x7c] sm:$0xf] 0
      %523 = vst [vmem:[#allocation2 + $0x80] sm:$0x1] 0
      %524 = vst [vmem:[#allocation2 + $0x84] sm:$0xf] 0
      %525 = vst [vmem:[#allocation2 + $0x88] sm:$0xf] 0
      %526 = vst [vmem:[#allocation2 + $0x8c] sm:$0x1] 0
      %527 = vst [vmem:[#allocation2 + $0x90] sm:$0xf] 0
      %528 = vst [vmem:[#allocation2 + $0x94] sm:$0xf] 0
      %529 = vst [vmem:[#allocation2 + $0x98] sm:$0x1] 0
      %530 = vst [vmem:[#allocation2 + $0x9c] sm:$0xf] 0
      %531 = vst [vmem:[#allocation2 + $0xa0] sm:$0xf] 0
      %532 = vst [vmem:[#allocation2 + $0xa4] sm:$0x1] 0
      %533 = vst [vmem:[#allocation2 + $0xa8] sm:$0xf] 0
      %534 = vst [vmem:[#allocation2 + $0xac] sm:$0xf] 0
      %535 = vst [vmem:[#allocation2 + $0xb0] sm:$0x1] 0
      %536 = vst [vmem:[#allocation2 + $0xb4] sm:$0xf] 0
      %537 = vst [vmem:[#allocation2 + $0xb8] sm:$0xf] 0
      %538 = vst [vmem:[#allocation2 + $0xbc] sm:$0x1] 0
      %539 = vst [vmem:[#allocation2 + $0xc0] sm:$0xf] 0
      %540 = vst [vmem:[#allocation2 + $0xc4] sm:$0xf] 0
      %541 = vst [vmem:[#allocation2 + $0xc8] sm:$0x1] 0
      %542 = vst [vmem:[#allocation2 + $0xcc] sm:$0xf] 0
      %543 = vst [vmem:[#allocation2 + $0xd0] sm:$0xf] 0
      %544 = vst [vmem:[#allocation2 + $0xd4] sm:$0x1] 0
      %v545 = vld [vmem:[%s415] sm:$0xf]
      %v546 = vld [vmem:[%s415 + $0x4] sm:$0xf]
      %v547 = vunpack.c.l.bf16 %v545
      %v548 = vunpack.c.l.bf16 %v546
      %v549 = vld [vmem:[%s4] sm:$0x1]
      %v551 = vperm.slane %v549, 0
      %v553 = vmul.f32 %v547, %v551
      %v554 = vmul.f32 %v548, %v551
      %v555 = vld [vmem:[%s5] sm:$0x1]
      %v557 = vperm.slane %v555, 0
      %v559 = vadd.f32 %v553, %v557
      %v560 = vadd.f32 %v554, %v557
      %v561 = vmax.f32 %v559, 0.0
      %v562 = vmax.f32 %v560, 0.0
      %v563 = vpack.c.bf16 %v561, %v561
      %v564 = vpack.c.bf16 %v562, %v562
      %s565 = sshll.u32 %s478, 16
      %s566 = sor.u32 %s478, %s565
      %v567 = vstv %s566
      %v569 = vunpack.c.l.bf16 %v563
      %v570 = vunpack.c.l.bf16 %v564
      %v571 = vunpack.c.l.bf16 %v567
      %v572 = vmul.f32 %v569, %v571
      %v573 = vmul.f32 %v570, %v571
      %v574 = vpack.c.bf16 %v572, %v572
      %v575 = vpack.c.bf16 %v573, %v573
      %vm576 = vsmask.f32 256
      %vm577 = vsmask.f32 4368
      %vm578 = vmor %vm576, %vm577
      %v580 = vshrl.u32 %v574, 16
      %v582 = vrot.slane %v580, 7
      %v583 = vshll.u32 %v574, 16
      %v585 = vor.u32 %v582, %v583
      %v586 = vrot.slane %v582, 4
      %v588 = vshrl.u32 %v575, 16
      %v590 = vrot.slane %v588, 7
      %v591 = vshll.u32 %v575, 16
      %v593 = vor.u32 %v590, %v591
      %v594 = vsel %vm578, %v586, %v593
      %v595 = vrot.slane %v590, 4
      %vm599 = vcmask 1043456
      %vm600 = vsmask.f32 7938
      %vm601 = vmand %vm599, %vm600
      %v602 = vld [vmem:[#allocation2] sm:$0xf]
      %v603 = vsel %vm601, %v585, %v602
      %604 = vst [vmem:[#allocation2] sm:$0xf] %v603
      %605 = vst [vmem:[#allocation2 + $0x4] sm:$0xf] %v594
      %vm606 = vcmask 1040384
      %vm607 = vmand %vm606, %vm576
      %v608 = vld [vmem:[#allocation2 + $0x8] sm:$0x1]
      %v609 = vsel %vm607, %v595, %v608
      %610 = vst [vmem:[#allocation2 + $0x8] sm:$0x1] %v609
      %v611 = vld [vmem:[%s429] sm:$0xf]
      %v612 = vld [vmem:[%s429 + $0x4] sm:$0xf]
      %v613 = vld [vmem:[%s429 + $0x8] sm:$0xf]
      %v614 = vld [vmem:[%s429 + $0xc] sm:$0xf]
      %v615 = vld [vmem:[%s429 + $0x10] sm:$0xf]
      %v616 = vld [vmem:[%s429 + $0x14] sm:$0xf]
      %v617 = vld [vmem:[%s429 + $0x18] sm:$0xf]
      %v618 = vld [vmem:[%s429 + $0x1c] sm:$0xf]
      %v619 = vld [vmem:[%s429 + $0x20] sm:$0xf]
      %v620 = vld [vmem:[%s429 + $0x24] sm:$0xf]
      %v621 = vld [vmem:[%s429 + $0x28] sm:$0xf]
      %v622 = vld [vmem:[%s429 + $0x2c] sm:$0xf]
      %v623 = vld [vmem:[%s429 + $0x30] sm:$0xf]
      %v624 = vld [vmem:[%s429 + $0x34] sm:$0xf]
      %v625 = vld [vmem:[%s429 + $0x38] sm:$0xf]
      %v626 = vld [vmem:[%s429 + $0x3c] sm:$0xf]
      %v627 = vld [vmem:[%s429 + $0x40] sm:$0xf]
      %v628 = vld [vmem:[%s429 + $0x44] sm:$0xf]
      %v629 = vld [vmem:[%s429 + $0x48] sm:$0xf]
      %v630 = vld [vmem:[%s429 + $0x4c] sm:$0xf]
      %v631 = vld [vmem:[%s429 + $0x50] sm:$0xf]
      %v632 = vld [vmem:[%s429 + $0x54] sm:$0xf]
      %v633 = vld [vmem:[%s429 + $0x58] sm:$0xf]
      %v634 = vld [vmem:[%s429 + $0x5c] sm:$0xf]
      %v635 = vld [vmem:[%s429 + $0x60] sm:$0xf]
      %v636 = vld [vmem:[%s429 + $0x64] sm:$0xf]
      %v637 = vld [vmem:[%s429 + $0x68] sm:$0xf]
      %v638 = vld [vmem:[%s429 + $0x6c] sm:$0xf]
      %v639 = vld [vmem:[%s429 + $0x70] sm:$0xf]
      %v640 = vld [vmem:[%s429 + $0x74] sm:$0xf]
      %v641 = vld [vmem:[%s429 + $0x78] sm:$0xf]
      %v642 = vld [vmem:[%s429 + $0x7c] sm:$0xf]
      %v643 = vunpack.c.l.bf16 %v611
      %v644 = vunpack.c.l.bf16 %v612
      %v645 = vunpack.c.l.bf16 %v613
      %v646 = vunpack.c.l.bf16 %v614
      %v647 = vunpack.c.l.bf16 %v615
      %v648 = vunpack.c.l.bf16 %v616
      %v649 = vunpack.c.l.bf16 %v617
      %v650 = vunpack.c.l.bf16 %v618
      %v651 = vunpack.c.l.bf16 %v619
      %v652 = vunpack.c.l.bf16 %v620
      %v653 = vunpack.c.l.bf16 %v621
      %v654 = vunpack.c.l.bf16 %v622
      %v655 = vunpack.c.l.bf16 %v623
      %v656 = vunpack.c.l.bf16 %v624
      %v657 = vunpack.c.l.bf16 %v625
      %v658 = vunpack.c.l.bf16 %v626
      %v659 = vunpack.c.l.bf16 %v627
      %v660 = vunpack.c.l.bf16 %v628
      %v661 = vunpack.c.l.bf16 %v629
      %v662 = vunpack.c.l.bf16 %v630
      %v663 = vunpack.c.l.bf16 %v631
      %v664 = vunpack.c.l.bf16 %v632
      %v665 = vunpack.c.l.bf16 %v633
      %v666 = vunpack.c.l.bf16 %v634
      %v667 = vunpack.c.l.bf16 %v635
      %v668 = vunpack.c.l.bf16 %v636
      %v669 = vunpack.c.l.bf16 %v637
      %v670 = vunpack.c.l.bf16 %v638
      %v671 = vunpack.c.l.bf16 %v639
      %v672 = vunpack.c.l.bf16 %v640
      %v673 = vunpack.c.l.bf16 %v641
      %v674 = vunpack.c.l.bf16 %v642
      %v675 = vld [vmem:[%s4] sm:$0x1]
      %v677 = vperm.slane %v675, 0
      %v679 = vmul.f32 %v643, %v677
      %v680 = vmul.f32 %v644, %v677
      %v681 = vmul.f32 %v645, %v677
      %v682 = vmul.f32 %v646, %v677
      %v683 = vmul.f32 %v647, %v677
      %v684 = vmul.f32 %v648, %v677
      %v685 = vmul.f32 %v649, %v677
      %v686 = vmul.f32 %v650, %v677
      %v687 = vmul.f32 %v651, %v677
      %v688 = vmul.f32 %v652, %v677
      %v689 = vmul.f32 %v653, %v677
      %v690 = vmul.f32 %v654, %v677
      %v691 = vmul.f32 %v655, %v677
      %v692 = vmul.f32 %v656, %v677
      %v693 = vmul.f32 %v657, %v677
      %v694 = vmul.f32 %v658, %v677
      %v695 = vmul.f32 %v659, %v677
      %v696 = vmul.f32 %v660, %v677
      %v697 = vmul.f32 %v661, %v677
      %v698 = vmul.f32 %v662, %v677
      %v699 = vmul.f32 %v663, %v677
      %v700 = vmul.f32 %v664, %v677
      %v701 = vmul.f32 %v665, %v677
      %v702 = vmul.f32 %v666, %v677
      %v703 = vmul.f32 %v667, %v677
      %v704 = vmul.f32 %v668, %v677
      %v705 = vmul.f32 %v669, %v677
      %v706 = vmul.f32 %v670, %v677
      %v707 = vmul.f32 %v671, %v677
      %v708 = vmul.f32 %v672, %v677
      %v709 = vmul.f32 %v673, %v677
      %v710 = vmul.f32 %v674, %v677
      %v711 = vld [vmem:[%s5] sm:$0x1]
      %v713 = vperm.slane %v711, 0
      %v715 = vadd.f32 %v679, %v713
      %v716 = vadd.f32 %v680, %v713
      %v717 = vadd.f32 %v681, %v713
      %v718 = vadd.f32 %v682, %v713
      %v719 = vadd.f32 %v683, %v713
      %v720 = vadd.f32 %v684, %v713
      %v721 = vadd.f32 %v685, %v713
      %v722 = vadd.f32 %v686, %v713
      %v723 = vadd.f32 %v687, %v713
      %v724 = vadd.f32 %v688, %v713
      %v725 = vadd.f32 %v689, %v713
      %v726 = vadd.f32 %v690, %v713
      %v727 = vadd.f32 %v691, %v713
      %v728 = vadd.f32 %v692, %v713
      %v729 = vadd.f32 %v693, %v713
      %v730 = vadd.f32 %v694, %v713
      %v731 = vadd.f32 %v695, %v713
      %v732 = vadd.f32 %v696, %v713
      %v733 = vadd.f32 %v697, %v713
      %v734 = vadd.f32 %v698, %v713
      %v735 = vadd.f32 %v699, %v713
      %v736 = vadd.f32 %v700, %v713
      %v737 = vadd.f32 %v701, %v713
      %v738 = vadd.f32 %v702, %v713
      %v739 = vadd.f32 %v703, %v713
      %v740 = vadd.f32 %v704, %v713
      %v741 = vadd.f32 %v705, %v713
      %v742 = vadd.f32 %v706, %v713
      %v743 = vadd.f32 %v707, %v713
      %v744 = vadd.f32 %v708, %v713
      %v745 = vadd.f32 %v709, %v713
      %v746 = vadd.f32 %v710, %v713
      %v747 = vmax.f32 %v715, 0.0
      %v748 = vmax.f32 %v716, 0.0
      %v749 = vmax.f32 %v717, 0.0
      %v750 = vmax.f32 %v718, 0.0
      %v751 = vmax.f32 %v719, 0.0
      %v752 = vmax.f32 %v720, 0.0
      %v753 = vmax.f32 %v721, 0.0
      %v754 = vmax.f32 %v722, 0.0
      %v755 = vmax.f32 %v723, 0.0
      %v756 = vmax.f32 %v724, 0.0
      %v757 = vmax.f32 %v725, 0.0
      %v758 = vmax.f32 %v726, 0.0
      %v759 = vmax.f32 %v727, 0.0
      %v760 = vmax.f32 %v728, 0.0
      %v761 = vmax.f32 %v729, 0.0
      %v762 = vmax.f32 %v730, 0.0
      %v763 = vmax.f32 %v731, 0.0
      %v764 = vmax.f32 %v732, 0.0
      %v765 = vmax.f32 %v733, 0.0
      %v766 = vmax.f32 %v734, 0.0
      %v767 = vmax.f32 %v735, 0.0
      %v768 = vmax.f32 %v736, 0.0
      %v769 = vmax.f32 %v737, 0.0
      %v770 = vmax.f32 %v738, 0.0
      %v771 = vmax.f32 %v739, 0.0
      %v772 = vmax.f32 %v740, 0.0
      %v773 = vmax.f32 %v741, 0.0
      %v774 = vmax.f32 %v742, 0.0
      %v775 = vmax.f32 %v743, 0.0
      %v776 = vmax.f32 %v744, 0.0
      %v777 = vmax.f32 %v745, 0.0
      %v778 = vmax.f32 %v746, 0.0
      %v779 = vpack.c.bf16 %v747, %v747
      %v780 = vpack.c.bf16 %v748, %v748
      %v781 = vpack.c.bf16 %v749, %v749
      %v782 = vpack.c.bf16 %v750, %v750
      %v783 = vpack.c.bf16 %v751, %v751
      %v784 = vpack.c.bf16 %v752, %v752
      %v785 = vpack.c.bf16 %v753, %v753
      %v786 = vpack.c.bf16 %v754, %v754
      %v787 = vpack.c.bf16 %v755, %v755
      %v788 = vpack.c.bf16 %v756, %v756
      %v789 = vpack.c.bf16 %v757, %v757
      %v790 = vpack.c.bf16 %v758, %v758
      %v791 = vpack.c.bf16 %v759, %v759
      %v792 = vpack.c.bf16 %v760, %v760
      %v793 = vpack.c.bf16 %v761, %v761
      %v794 = vpack.c.bf16 %v762, %v762
      %v795 = vpack.c.bf16 %v763, %v763
      %v796 = vpack.c.bf16 %v764, %v764
      %v797 = vpack.c.bf16 %v765, %v765
      %v798 = vpack.c.bf16 %v766, %v766
      %v799 = vpack.c.bf16 %v767, %v767
      %v800 = vpack.c.bf16 %v768, %v768
      %v801 = vpack.c.bf16 %v769, %v769
      %v802 = vpack.c.bf16 %v770, %v770
      %v803 = vpack.c.bf16 %v771, %v771
      %v804 = vpack.c.bf16 %v772, %v772
      %v805 = vpack.c.bf16 %v773, %v773
      %v806 = vpack.c.bf16 %v774, %v774
      %v807 = vpack.c.bf16 %v775, %v775
      %v808 = vpack.c.bf16 %v776, %v776
      %v809 = vpack.c.bf16 %v777, %v777
      %v810 = vpack.c.bf16 %v778, %v778
      %v812 = vshrl.u32 %v779, 16
      %v814 = vrot.slane %v812, 7
      %v815 = vshll.u32 %v779, 16
      %v817 = vor.u32 %v814, %v815
      %v818 = vrot.slane %v814, 4
      %v820 = vshrl.u32 %v780, 16
      %v822 = vrot.slane %v820, 7
      %v823 = vshll.u32 %v780, 16
      %v825 = vor.u32 %v822, %v823
      %v826 = vsel %vm578, %v818, %v825
      %v827 = vrot.slane %v822, 4
      %v829 = vshrl.u32 %v781, 16
      %v831 = vrot.slane %v829, 7
      %v832 = vshll.u32 %v781, 16
      %v834 = vor.u32 %v831, %v832
      %v835 = vrot.slane %v831, 4
      %v837 = vshrl.u32 %v782, 16
      %v839 = vrot.slane %v837, 7
      %v840 = vshll.u32 %v782, 16
      %v842 = vor.u32 %v839, %v840
      %v843 = vsel %vm578, %v835, %v842
      %v844 = vrot.slane %v839, 4
      %v846 = vshrl.u32 %v783, 16
      %v848 = vrot.slane %v846, 7
      %v849 = vshll.u32 %v783, 16
      %v851 = vor.u32 %v848, %v849
      %v852 = vrot.slane %v848, 4
      %v854 = vshrl.u32 %v784, 16
      %v856 = vrot.slane %v854, 7
      %v857 = vshll.u32 %v784, 16
      %v859 = vor.u32 %v856, %v857
      %v860 = vsel %vm578, %v852, %v859
      %v861 = vrot.slane %v856, 4
      %v863 = vshrl.u32 %v785, 16
      %v865 = vrot.slane %v863, 7
      %v866 = vshll.u32 %v785, 16
      %v868 = vor.u32 %v865, %v866
      %v869 = vrot.slane %v865, 4
      %v871 = vshrl.u32 %v786, 16
      %v873 = vrot.slane %v871, 7
      %v874 = vshll.u32 %v786, 16
      %v876 = vor.u32 %v873, %v874
      %v877 = vsel %vm578, %v869, %v876
      %v878 = vrot.slane %v873, 4
      %v880 = vshrl.u32 %v787, 16
      %v882 = vrot.slane %v880, 7
      %v883 = vshll.u32 %v787, 16
      %v885 = vor.u32 %v882, %v883
      %v886 = vrot.slane %v882, 4
      %v888 = vshrl.u32 %v788, 16
      %v890 = vrot.slane %v888, 7
      %v891 = vshll.u32 %v788, 16
      %v893 = vor.u32 %v890, %v891
      %v894 = vsel %vm578, %v886, %v893
      %v895 = vrot.slane %v890, 4
      %v897 = vshrl.u32 %v789, 16
      %v899 = vrot.slane %v897, 7
      %v900 = vshll.u32 %v789, 16
      %v902 = vor.u32 %v899, %v900
      %v903 = vrot.slane %v899, 4
      %v905 = vshrl.u32 %v790, 16
      %v907 = vrot.slane %v905, 7
      %v908 = vshll.u32 %v790, 16
      %v910 = vor.u32 %v907, %v908
      %v911 = vsel %vm578, %v903, %v910
      %v912 = vrot.slane %v907, 4
      %v914 = vshrl.u32 %v791, 16
      %v916 = vrot.slane %v914, 7
      %v917 = vshll.u32 %v791, 16
      %v919 = vor.u32 %v916, %v917
      %v920 = vrot.slane %v916, 4
      %v922 = vshrl.u32 %v792, 16
      %v924 = vrot.slane %v922, 7
      %v925 = vshll.u32 %v792, 16
      %v927 = vor.u32 %v924, %v925
      %v928 = vsel %vm578, %v920, %v927
      %v929 = vrot.slane %v924, 4
      %v931 = vshrl.u32 %v793, 16
      %v933 = vrot.slane %v931, 7
      %v934 = vshll.u32 %v793, 16
      %v936 = vor.u32 %v933, %v934
      %v937 = vrot.slane %v933, 4
      %v939 = vshrl.u32 %v794, 16
      %v941 = vrot.slane %v939, 7
      %v942 = vshll.u32 %v794, 16
      %v944 = vor.u32 %v941, %v942
      %v945 = vsel %vm578, %v937, %v944
      %v946 = vrot.slane %v941, 4
      %v948 = vshrl.u32 %v795, 16
      %v950 = vrot.slane %v948, 7
      %v951 = vshll.u32 %v795, 16
      %v953 = vor.u32 %v950, %v951
      %v954 = vrot.slane %v950, 4
      %v956 = vshrl.u32 %v796, 16
      %v958 = vrot.slane %v956, 7
      %v959 = vshll.u32 %v796, 16
      %v961 = vor.u32 %v958, %v959
      %v962 = vsel %vm578, %v954, %v961
      %v963 = vrot.slane %v958, 4
      %v965 = vshrl.u32 %v797, 16
      %v967 = vrot.slane %v965, 7
      %v968 = vshll.u32 %v797, 16
      %v970 = vor.u32 %v967, %v968
      %v971 = vrot.slane %v967, 4
      %v973 = vshrl.u32 %v798, 16
      %v975 = vrot.slane %v973, 7
      %v976 = vshll.u32 %v798, 16
      %v978 = vor.u32 %v975, %v976
      %v979 = vsel %vm578, %v971, %v978
      %v980 = vrot.slane %v975, 4
      %v982 = vshrl.u32 %v799, 16
      %v984 = vrot.slane %v982, 7
      %v985 = vshll.u32 %v799, 16
      %v987 = vor.u32 %v984, %v985
      %v988 = vrot.slane %v984, 4
      %v990 = vshrl.u32 %v800, 16
      %v992 = vrot.slane %v990, 7
      %v993 = vshll.u32 %v800, 16
      %v995 = vor.u32 %v992, %v993
      %v996 = vsel %vm578, %v988, %v995
      %v997 = vrot.slane %v992, 4
      %v999 = vshrl.u32 %v801, 16
      %v1001 = vrot.slane %v999, 7
      %v1002 = vshll.u32 %v801, 16
      %v1004 = vor.u32 %v1001, %v1002
      %v1005 = vrot.slane %v1001, 4
      %v1007 = vshrl.u32 %v802, 16
      %v1009 = vrot.slane %v1007, 7
      %v1010 = vshll.u32 %v802, 16
      %v1012 = vor.u32 %v1009, %v1010
      %v1013 = vsel %vm578, %v1005, %v1012
      %v1014 = vrot.slane %v1009, 4
      %v1016 = vshrl.u32 %v803, 16
      %v1018 = vrot.slane %v1016, 7
      %v1019 = vshll.u32 %v803, 16
      %v1021 = vor.u32 %v1018, %v1019
      %v1022 = vrot.slane %v1018, 4
      %v1024 = vshrl.u32 %v804, 16
      %v1026 = vrot.slane %v1024, 7
      %v1027 = vshll.u32 %v804, 16
      %v1029 = vor.u32 %v1026, %v1027
      %v1030 = vsel %vm578, %v1022, %v1029
      %v1031 = vrot.slane %v1026, 4
      %v1033 = vshrl.u32 %v805, 16
      %v1035 = vrot.slane %v1033, 7
      %v1036 = vshll.u32 %v805, 16
      %v1038 = vor.u32 %v1035, %v1036
      %v1039 = vrot.slane %v1035, 4
      %v1041 = vshrl.u32 %v806, 16
      %v1043 = vrot.slane %v1041, 7
      %v1044 = vshll.u32 %v806, 16
      %v1046 = vor.u32 %v1043, %v1044
      %v1047 = vsel %vm578, %v1039, %v1046
      %v1048 = vrot.slane %v1043, 4
      %v1050 = vshrl.u32 %v807, 16
      %v1052 = vrot.slane %v1050, 7
      %v1053 = vshll.u32 %v807, 16
      %v1055 = vor.u32 %v1052, %v1053
      %v1056 = vrot.slane %v1052, 4
      %v1058 = vshrl.u32 %v808, 16
      %v1060 = vrot.slane %v1058, 7
      %v1061 = vshll.u32 %v808, 16
      %v1063 = vor.u32 %v1060, %v1061
      %v1064 = vsel %vm578, %v1056, %v1063
      %v1065 = vrot.slane %v1060, 4
      %v1067 = vshrl.u32 %v809, 16
      %v1069 = vrot.slane %v1067, 7
      %v1070 = vshll.u32 %v809, 16
      %v1072 = vor.u32 %v1069, %v1070
      %v1073 = vrot.slane %v1069, 4
      %v1075 = vshrl.u32 %v810, 16
      %v1077 = vrot.slane %v1075, 7
      %v1078 = vshll.u32 %v810, 16
      %v1080 = vor.u32 %v1077, %v1078
      %v1081 = vsel %vm578, %v1073, %v1080
      %v1082 = vrot.slane %v1077, 4
      %s1131 = scalar_lea.vmem [#allocation2], 12
      %v1132 = vld [vmem:[%s1131] sm:$0xf]
      %v1133 = vsel %vm601, %v817, %v1132
      %1134 = vst [vmem:[%s1131] sm:$0xf] %v1133
      %1135 = vst [vmem:[%s1131 + $0x4] sm:$0xf] %v826
      %v1136 = vld [vmem:[%s1131 + $0x8] sm:$0x1]
      %v1137 = vsel %vm607, %v827, %v1136
      %1138 = vst [vmem:[%s1131 + $0x8] sm:$0x1] %v1137
      %v1139 = vld [vmem:[%s1131 + $0xc] sm:$0xf]
      %v1140 = vsel %vm601, %v834, %v1139
      %1141 = vst [vmem:[%s1131 + $0xc] sm:$0xf] %v1140
      %1142 = vst [vmem:[%s1131 + $0x10] sm:$0xf] %v843
      %v1143 = vld [vmem:[%s1131 + $0x14] sm:$0x1]
      %v1144 = vsel %vm607, %v844, %v1143
      %1145 = vst [vmem:[%s1131 + $0x14] sm:$0x1] %v1144
      %v1146 = vld [vmem:[%s1131 + $0x18] sm:$0xf]
      %v1147 = vsel %vm601, %v851, %v1146
      %1148 = vst [vmem:[%s1131 + $0x18] sm:$0xf] %v1147
      %1149 = vst [vmem:[%s1131 + $0x1c] sm:$0xf] %v860
      %v1150 = vld [vmem:[%s1131 + $0x20] sm:$0x1]
      %v1151 = vsel %vm607, %v861, %v1150
      %1152 = vst [vmem:[%s1131 + $0x20] sm:$0x1] %v1151
      %v1153 = vld [vmem:[%s1131 + $0x24] sm:$0xf]
      %v1154 = vsel %vm601, %v868, %v1153
      %1155 = vst [vmem:[%s1131 + $0x24] sm:$0xf] %v1154
      %1156 = vst [vmem:[%s1131 + $0x28] sm:$0xf] %v877
      %v1157 = vld [vmem:[%s1131 + $0x2c] sm:$0x1]
      %v1158 = vsel %vm607, %v878, %v1157
      %1159 = vst [vmem:[%s1131 + $0x2c] sm:$0x1] %v1158
      %v1160 = vld [vmem:[%s1131 + $0x30] sm:$0xf]
      %v1161 = vsel %vm601, %v885, %v1160
      %1162 = vst [vmem:[%s1131 + $0x30] sm:$0xf] %v1161
      %1163 = vst [vmem:[%s1131 + $0x34] sm:$0xf] %v894
      %v1164 = vld [vmem:[%s1131 + $0x38] sm:$0x1]
      %v1165 = vsel %vm607, %v895, %v1164
      %1166 = vst [vmem:[%s1131 + $0x38] sm:$0x1] %v1165
      %v1167 = vld [vmem:[%s1131 + $0x3c] sm:$0xf]
      %v1168 = vsel %vm601, %v902, %v1167
      %1169 = vst [vmem:[%s1131 + $0x3c] sm:$0xf] %v1168
      %1170 = vst [vmem:[%s1131 + $0x40] sm:$0xf] %v911
      %v1171 = vld [vmem:[%s1131 + $0x44] sm:$0x1]
      %v1172 = vsel %vm607, %v912, %v1171
      %1173 = vst [vmem:[%s1131 + $0x44] sm:$0x1] %v1172
      %v1174 = vld [vmem:[%s1131 + $0x48] sm:$0xf]
      %v1175 = vsel %vm601, %v919, %v1174
      %1176 = vst [vmem:[%s1131 + $0x48] sm:$0xf] %v1175
      %1177 = vst [vmem:[%s1131 + $0x4c] sm:$0xf] %v928
      %v1178 = vld [vmem:[%s1131 + $0x50] sm:$0x1]
      %v1179 = vsel %vm607, %v929, %v1178
      %1180 = vst [vmem:[%s1131 + $0x50] sm:$0x1] %v1179
      %v1181 = vld [vmem:[%s1131 + $0x54] sm:$0xf]
      %v1182 = vsel %vm601, %v936, %v1181
      %1183 = vst [vmem:[%s1131 + $0x54] sm:$0xf] %v1182
      %1184 = vst [vmem:[%s1131 + $0x58] sm:$0xf] %v945
      %v1185 = vld [vmem:[%s1131 + $0x5c] sm:$0x1]
      %v1186 = vsel %vm607, %v946, %v1185
      %1187 = vst [vmem:[%s1131 + $0x5c] sm:$0x1] %v1186
      %v1188 = vld [vmem:[%s1131 + $0x60] sm:$0xf]
      %v1189 = vsel %vm601, %v953, %v1188
      %1190 = vst [vmem:[%s1131 + $0x60] sm:$0xf] %v1189
      %1191 = vst [vmem:[%s1131 + $0x64] sm:$0xf] %v962
      %v1192 = vld [vmem:[%s1131 + $0x68] sm:$0x1]
      %v1193 = vsel %vm607, %v963, %v1192
      %1194 = vst [vmem:[%s1131 + $0x68] sm:$0x1] %v1193
      %v1195 = vld [vmem:[%s1131 + $0x6c] sm:$0xf]
      %v1196 = vsel %vm601, %v970, %v1195
      %1197 = vst [vmem:[%s1131 + $0x6c] sm:$0xf] %v1196
      %1198 = vst [vmem:[%s1131 + $0x70] sm:$0xf] %v979
      %v1199 = vld [vmem:[%s1131 + $0x74] sm:$0x1]
      %v1200 = vsel %vm607, %v980, %v1199
      %1201 = vst [vmem:[%s1131 + $0x74] sm:$0x1] %v1200
      %v1202 = vld [vmem:[%s1131 + $0x78] sm:$0xf]
      %v1203 = vsel %vm601, %v987, %v1202
      %1204 = vst [vmem:[%s1131 + $0x78] sm:$0xf] %v1203
      %1205 = vst [vmem:[%s1131 + $0x7c] sm:$0xf] %v996
      %v1206 = vld [vmem:[%s1131 + $0x80] sm:$0x1]
      %v1207 = vsel %vm607, %v997, %v1206
      %1208 = vst [vmem:[%s1131 + $0x80] sm:$0x1] %v1207
      %v1209 = vld [vmem:[%s1131 + $0x84] sm:$0xf]
      %v1210 = vsel %vm601, %v1004, %v1209
      %1211 = vst [vmem:[%s1131 + $0x84] sm:$0xf] %v1210
      %1212 = vst [vmem:[%s1131 + $0x88] sm:$0xf] %v1013
      %v1213 = vld [vmem:[%s1131 + $0x8c] sm:$0x1]
      %v1214 = vsel %vm607, %v1014, %v1213
      %1215 = vst [vmem:[%s1131 + $0x8c] sm:$0x1] %v1214
      %v1216 = vld [vmem:[%s1131 + $0x90] sm:$0xf]
      %v1217 = vsel %vm601, %v1021, %v1216
      %1218 = vst [vmem:[%s1131 + $0x90] sm:$0xf] %v1217
      %1219 = vst [vmem:[%s1131 + $0x94] sm:$0xf] %v1030
      %v1220 = vld [vmem:[%s1131 + $0x98] sm:$0x1]
      %v1221 = vsel %vm607, %v1031, %v1220
      %1222 = vst [vmem:[%s1131 + $0x98] sm:$0x1] %v1221
      %v1223 = vld [vmem:[%s1131 + $0x9c] sm:$0xf]
      %v1224 = vsel %vm601, %v1038, %v1223
      %1225 = vst [vmem:[%s1131 + $0x9c] sm:$0xf] %v1224
      %1226 = vst [vmem:[%s1131 + $0xa0] sm:$0xf] %v1047
      %v1227 = vld [vmem:[%s1131 + $0xa4] sm:$0x1]
      %v1228 = vsel %vm607, %v1048, %v1227
      %1229 = vst [vmem:[%s1131 + $0xa4] sm:$0x1] %v1228
      %v1230 = vld [vmem:[%s1131 + $0xa8] sm:$0xf]
      %v1231 = vsel %vm601, %v1055, %v1230
      %1232 = vst [vmem:[%s1131 + $0xa8] sm:$0xf] %v1231
      %1233 = vst [vmem:[%s1131 + $0xac] sm:$0xf] %v1064
      %v1234 = vld [vmem:[%s1131 + $0xb0] sm:$0x1]
      %v1235 = vsel %vm607, %v1065, %v1234
      %1236 = vst [vmem:[%s1131 + $0xb0] sm:$0x1] %v1235
      %v1237 = vld [vmem:[%s1131 + $0xb4] sm:$0xf]
      %v1238 = vsel %vm601, %v1072, %v1237
      %1239 = vst [vmem:[%s1131 + $0xb4] sm:$0xf] %v1238
      %1240 = vst [vmem:[%s1131 + $0xb8] sm:$0xf] %v1081
      %v1241 = vld [vmem:[%s1131 + $0xbc] sm:$0x1]
      %v1242 = vsel %vm607, %v1082, %v1241
      %1243 = vst [vmem:[%s1131 + $0xbc] sm:$0x1] %v1242
      %v1244 = vld [vmem:[%s443] sm:$0xf]
      %v1245 = vld [vmem:[%s443 + $0x4] sm:$0xf]
      %v1246 = vunpack.c.l.bf16 %v1244
      %v1247 = vunpack.c.l.bf16 %v1245
      %v1248 = vld [vmem:[%s4] sm:$0x1]
      %v1250 = vperm.slane %v1248, 0
      %v1252 = vmul.f32 %v1246, %v1250
      %v1253 = vmul.f32 %v1247, %v1250
      %v1254 = vld [vmem:[%s5] sm:$0x1]
      %v1256 = vperm.slane %v1254, 0
      %v1258 = vadd.f32 %v1252, %v1256
      %v1259 = vadd.f32 %v1253, %v1256
      %v1260 = vmax.f32 %v1258, 0.0
      %v1261 = vmax.f32 %v1259, 0.0
      %v1262 = vpack.c.bf16 %v1260, %v1260
      %v1263 = vpack.c.bf16 %v1261, %v1261
      %s1264 = sshll.u32 %s490, 16
      %s1265 = sor.u32 %s490, %s1264
      %v1266 = vstv %s1265
      %v1268 = vunpack.c.l.bf16 %v1262
      %v1269 = vunpack.c.l.bf16 %v1263
      %v1270 = vunpack.c.l.bf16 %v1266
      %v1271 = vmul.f32 %v1268, %v1270
      %v1272 = vmul.f32 %v1269, %v1270
      %v1273 = vpack.c.bf16 %v1271, %v1271
      %v1274 = vpack.c.bf16 %v1272, %v1272
      %v1276 = vshrl.u32 %v1273, 16
      %v1278 = vrot.slane %v1276, 7
      %v1279 = vshll.u32 %v1273, 16
      %v1281 = vor.u32 %v1278, %v1279
      %v1282 = vrot.slane %v1278, 4
      %v1284 = vshrl.u32 %v1274, 16
      %v1286 = vrot.slane %v1284, 7
      %v1287 = vshll.u32 %v1274, 16
      %v1289 = vor.u32 %v1286, %v1287
      %v1290 = vsel %vm578, %v1282, %v1289
      %v1291 = vrot.slane %v1286, 4
      %s1295 = scalar_lea.vmem [#allocation2], 204
      %v1296 = vld [vmem:[%s1295] sm:$0xf]
      %v1297 = vsel %vm601, %v1281, %v1296
      %1298 = vst [vmem:[%s1295] sm:$0xf] %v1297
      %1299 = vst [vmem:[%s1295 + $0x4] sm:$0xf] %v1290
      %v1300 = vld [vmem:[%s1295 + $0x8] sm:$0x1]
      %v1301 = vsel %vm607, %v1291, %v1300
      %1302 = vst [vmem:[%s1295 + $0x8] sm:$0x1] %v1301
      %v1303 = vld [vmem:[#allocation2] sm:$0xf]
      %v1304 = vld [vmem:[#allocation2 + $0x4] sm:$0xf]
      %v1305 = vld [vmem:[#allocation2 + $0xc] sm:$0xf]
      %v1306 = vld [vmem:[#allocation2 + $0x10] sm:$0xf]
      %v1307 = vld [vmem:[#allocation2 + $0x18] sm:$0xf]
      %v1308 = vld [vmem:[#allocation2 + $0x1c] sm:$0xf]
      %v1309 = vld [vmem:[#allocation2 + $0x24] sm:$0xf]
      %v1310 = vld [vmem:[#allocation2 + $0x28] sm:$0xf]
      %v1311 = vld [vmem:[#allocation2 + $0x30] sm:$0xf]
      %v1312 = vld [vmem:[#allocation2 + $0x34] sm:$0xf]
      %v1313 = vld [vmem:[#allocation2 + $0x3c] sm:$0xf]
      %v1314 = vld [vmem:[#allocation2 + $0x40] sm:$0xf]
      %v1315 = vld [vmem:[#allocation2 + $0x48] sm:$0xf]
      %v1316 = vld [vmem:[#allocation2 + $0x4c] sm:$0xf]
      %v1317 = vld [vmem:[#allocation2 + $0x54] sm:$0xf]
      %v1318 = vld [vmem:[#allocation2 + $0x58] sm:$0xf]
      %v1319 = vld [vmem:[#allocation2 + $0x60] sm:$0xf]
      %v1320 = vld [vmem:[#allocation2 + $0x64] sm:$0xf]
      %v1321 = vld [vmem:[#allocation2 + $0x6c] sm:$0xf]
      %v1322 = vld [vmem:[#allocation2 + $0x70] sm:$0xf]
      %v1323 = vld [vmem:[#allocation2 + $0x78] sm:$0xf]
      %v1324 = vld [vmem:[#allocation2 + $0x7c] sm:$0xf]
      %v1325 = vld [vmem:[#allocation2 + $0x84] sm:$0xf]
      %v1326 = vld [vmem:[#allocation2 + $0x88] sm:$0xf]
      %v1327 = vld [vmem:[#allocation2 + $0x90] sm:$0xf]
      %v1328 = vld [vmem:[#allocation2 + $0x94] sm:$0xf]
      %v1329 = vld [vmem:[#allocation2 + $0x9c] sm:$0xf]
      %v1330 = vld [vmem:[#allocation2 + $0xa0] sm:$0xf]
      %v1331 = vld [vmem:[#allocation2 + $0xa8] sm:$0xf]
      %v1332 = vld [vmem:[#allocation2 + $0xac] sm:$0xf]
      %v1333 = vld [vmem:[#allocation2 + $0xb4] sm:$0xf]
      %v1334 = vld [vmem:[#allocation2 + $0xb8] sm:$0xf]
      %v1335 = vld [vmem:[#allocation2 + $0x8] sm:$0x1]
      %v1336 = vld [vmem:[#allocation2 + $0x14] sm:$0x1]
      %v1337 = vld [vmem:[#allocation2 + $0x20] sm:$0x1]
      %v1338 = vld [vmem:[#allocation2 + $0x2c] sm:$0x1]
      %v1339 = vld [vmem:[#allocation2 + $0x38] sm:$0x1]
      %v1340 = vld [vmem:[#allocation2 + $0x44] sm:$0x1]
      %v1341 = vld [vmem:[#allocation2 + $0x50] sm:$0x1]
      %v1342 = vld [vmem:[#allocation2 + $0x5c] sm:$0x1]
      %v1343 = vld [vmem:[#allocation2 + $0x68] sm:$0x1]
      %v1344 = vld [vmem:[#allocation2 + $0x74] sm:$0x1]
      %v1345 = vld [vmem:[#allocation2 + $0x80] sm:$0x1]
      %v1346 = vld [vmem:[#allocation2 + $0x8c] sm:$0x1]
      %v1347 = vld [vmem:[#allocation2 + $0x98] sm:$0x1]
      %v1348 = vld [vmem:[#allocation2 + $0xa4] sm:$0x1]
      %v1349 = vld [vmem:[#allocation2 + $0xb0] sm:$0x1]
      %v1350 = vld [vmem:[#allocation2 + $0xbc] sm:$0x1]
      %v1351 = vld [vmem:[#allocation2] sm:$0xe]
      %v1352 = vld [vmem:[#allocation2 + $0xc] sm:$0xe]
      %v1353 = vld [vmem:[#allocation2 + $0x18] sm:$0xe]
      %v1354 = vld [vmem:[#allocation2 + $0x24] sm:$0xe]
      %v1355 = vld [vmem:[#allocation2 + $0x30] sm:$0xe]
      %v1356 = vld [vmem:[#allocation2 + $0x3c] sm:$0xe]
      %v1357 = vld [vmem:[#allocation2 + $0x48] sm:$0xe]
      %v1358 = vld [vmem:[#allocation2 + $0x54] sm:$0xe]
      %v1359 = vld [vmem:[#allocation2 + $0x60] sm:$0xe]
      %v1360 = vld [vmem:[#allocation2 + $0x6c] sm:$0xe]
      %v1361 = vld [vmem:[#allocation2 + $0x78] sm:$0xe]
      %v1362 = vld [vmem:[#allocation2 + $0x84] sm:$0xe]
      %v1363 = vld [vmem:[#allocation2 + $0x90] sm:$0xe]
      %v1364 = vld [vmem:[#allocation2 + $0x9c] sm:$0xe]
      %v1365 = vld [vmem:[#allocation2 + $0xa8] sm:$0xe]
      %v1366 = vld [vmem:[#allocation2 + $0xb4] sm:$0xe]
      %v1399 = vunpack.c.l.b16 %v1303
      %v1400 = vunpack.c.l.b16 %v1304
      %v1401 = vunpack.c.l.b16 %v1305
      %v1402 = vunpack.c.l.b16 %v1306
      %v1403 = vunpack.c.l.b16 %v1307
      %v1404 = vunpack.c.l.b16 %v1308
      %v1405 = vunpack.c.l.b16 %v1309
      %v1406 = vunpack.c.l.b16 %v1310
      %v1407 = vunpack.c.l.b16 %v1311
      %v1408 = vunpack.c.l.b16 %v1312
      %v1409 = vunpack.c.l.b16 %v1313
      %v1410 = vunpack.c.l.b16 %v1314
      %v1411 = vunpack.c.l.b16 %v1315
      %v1412 = vunpack.c.l.b16 %v1316
      %v1413 = vunpack.c.l.b16 %v1317
      %v1414 = vunpack.c.l.b16 %v1318
      %v1415 = vunpack.c.l.b16 %v1319
      %v1416 = vunpack.c.l.b16 %v1320
      %v1417 = vunpack.c.l.b16 %v1321
      %v1418 = vunpack.c.l.b16 %v1322
      %v1419 = vunpack.c.l.b16 %v1323
      %v1420 = vunpack.c.l.b16 %v1324
      %v1421 = vunpack.c.l.b16 %v1325
      %v1422 = vunpack.c.l.b16 %v1326
      %v1423 = vunpack.c.l.b16 %v1327
      %v1424 = vunpack.c.l.b16 %v1328
      %v1425 = vunpack.c.l.b16 %v1329
      %v1426 = vunpack.c.l.b16 %v1330
      %v1427 = vunpack.c.l.b16 %v1331
      %v1428 = vunpack.c.l.b16 %v1332
      %v1429 = vunpack.c.l.b16 %v1333
      %v1430 = vunpack.c.l.b16 %v1334
      %v1431 = vpack.c.b16 %v1400, %v1399
      %v1432 = vpack.c.b16 %v1402, %v1401
      %v1433 = vpack.c.b16 %v1404, %v1403
      %v1434 = vpack.c.b16 %v1406, %v1405
      %v1435 = vpack.c.b16 %v1408, %v1407
      %v1436 = vpack.c.b16 %v1410, %v1409
      %v1437 = vpack.c.b16 %v1412, %v1411
      %v1438 = vpack.c.b16 %v1414, %v1413
      %v1439 = vpack.c.b16 %v1416, %v1415
      %v1440 = vpack.c.b16 %v1418, %v1417
      %v1441 = vpack.c.b16 %v1420, %v1419
      %v1442 = vpack.c.b16 %v1422, %v1421
      %v1443 = vpack.c.b16 %v1424, %v1423
      %v1444 = vpack.c.b16 %v1426, %v1425
      %v1445 = vpack.c.b16 %v1428, %v1427
      %v1446 = vpack.c.b16 %v1430, %v1429
      %v1479 = vunpack.c.l.b16 %v1335
      %v1480 = vunpack.c.l.b16 %v1336
      %v1481 = vunpack.c.l.b16 %v1337
      %v1482 = vunpack.c.l.b16 %v1338
      %v1483 = vunpack.c.l.b16 %v1339
      %v1484 = vunpack.c.l.b16 %v1340
      %v1485 = vunpack.c.l.b16 %v1341
      %v1486 = vunpack.c.l.b16 %v1342
      %v1487 = vunpack.c.l.b16 %v1343
      %v1488 = vunpack.c.l.b16 %v1344
      %v1489 = vunpack.c.l.b16 %v1345
      %v1490 = vunpack.c.l.b16 %v1346
      %v1491 = vunpack.c.l.b16 %v1347
      %v1492 = vunpack.c.l.b16 %v1348
      %v1493 = vunpack.c.l.b16 %v1349
      %v1494 = vunpack.c.l.b16 %v1350
      %v1495 = vpack.c.b16 %v1479, %v1479
      %v1496 = vpack.c.b16 %v1480, %v1480
      %v1497 = vpack.c.b16 %v1481, %v1481
      %v1498 = vpack.c.b16 %v1482, %v1482
      %v1499 = vpack.c.b16 %v1483, %v1483
      %v1500 = vpack.c.b16 %v1484, %v1484
      %v1501 = vpack.c.b16 %v1485, %v1485
      %v1502 = vpack.c.b16 %v1486, %v1486
      %v1503 = vpack.c.b16 %v1487, %v1487
      %v1504 = vpack.c.b16 %v1488, %v1488
      %v1505 = vpack.c.b16 %v1489, %v1489
      %v1506 = vpack.c.b16 %v1490, %v1490
      %v1507 = vpack.c.b16 %v1491, %v1491
      %v1508 = vpack.c.b16 %v1492, %v1492
      %v1509 = vpack.c.b16 %v1493, %v1493
      %v1510 = vpack.c.b16 %v1494, %v1494
      %vm1511 = vsmask.f32 7424
      %v1513 = vshrl.u32 %v1431, 16
      %v1515 = vshll.u32 %v1431, 16
      %v1517 = vrot.slane %v1515, 1
      %v1518 = vor.u32 %v1513, %v1517
      %v1520 = vshll.u32 %v1495, 16
      %v1522 = vrot.slane %v1520, 1
      %v1523 = vsel %vm1511, %v1518, %v1522
      %v1525 = vshrl.u32 %v1432, 16
      %v1527 = vshll.u32 %v1432, 16
      %v1529 = vrot.slane %v1527, 1
      %v1530 = vor.u32 %v1525, %v1529
      %v1532 = vshll.u32 %v1496, 16
      %v1534 = vrot.slane %v1532, 1
      %v1535 = vsel %vm1511, %v1530, %v1534
      %v1537 = vshrl.u32 %v1433, 16
      %v1539 = vshll.u32 %v1433, 16
      %v1541 = vrot.slane %v1539, 1
      %v1542 = vor.u32 %v1537, %v1541
      %v1544 = vshll.u32 %v1497, 16
      %v1546 = vrot.slane %v1544, 1
      %v1547 = vsel %vm1511, %v1542, %v1546
      %v1549 = vshrl.u32 %v1434, 16
      %v1551 = vshll.u32 %v1434, 16
      %v1553 = vrot.slane %v1551, 1
      %v1554 = vor.u32 %v1549, %v1553
      %v1556 = vshll.u32 %v1498, 16
      %v1558 = vrot.slane %v1556, 1
      %v1559 = vsel %vm1511, %v1554, %v1558
      %v1561 = vshrl.u32 %v1435, 16
      %v1563 = vshll.u32 %v1435, 16
      %v1565 = vrot.slane %v1563, 1
      %v1566 = vor.u32 %v1561, %v1565
      %v1568 = vshll.u32 %v1499, 16
      %v1570 = vrot.slane %v1568, 1
      %v1571 = vsel %vm1511, %v1566, %v1570
      %v1573 = vshrl.u32 %v1436, 16
      %v1575 = vshll.u32 %v1436, 16
      %v1577 = vrot.slane %v1575, 1
      %v1578 = vor.u32 %v1573, %v1577
      %v1580 = vshll.u32 %v1500, 16
      %v1582 = vrot.slane %v1580, 1
      %v1583 = vsel %vm1511, %v1578, %v1582
      %v1585 = vshrl.u32 %v1437, 16
      %v1587 = vshll.u32 %v1437, 16
      %v1589 = vrot.slane %v1587, 1
      %v1590 = vor.u32 %v1585, %v1589
      %v1592 = vshll.u32 %v1501, 16
      %v1594 = vrot.slane %v1592, 1
      %v1595 = vsel %vm1511, %v1590, %v1594
      %v1597 = vshrl.u32 %v1438, 16
      %v1599 = vshll.u32 %v1438, 16
      %v1601 = vrot.slane %v1599, 1
      %v1602 = vor.u32 %v1597, %v1601
      %v1604 = vshll.u32 %v1502, 16
      %v1606 = vrot.slane %v1604, 1
      %v1607 = vsel %vm1511, %v1602, %v1606
      %v1609 = vshrl.u32 %v1439, 16
      %v1611 = vshll.u32 %v1439, 16
      %v1613 = vrot.slane %v1611, 1
      %v1614 = vor.u32 %v1609, %v1613
      %v1616 = vshll.u32 %v1503, 16
      %v1618 = vrot.slane %v1616, 1
      %v1619 = vsel %vm1511, %v1614, %v1618
      %v1621 = vshrl.u32 %v1440, 16
      %v1623 = vshll.u32 %v1440, 16
      %v1625 = vrot.slane %v1623, 1
      %v1626 = vor.u32 %v1621, %v1625
      %v1628 = vshll.u32 %v1504, 16
      %v1630 = vrot.slane %v1628, 1
      %v1631 = vsel %vm1511, %v1626, %v1630
      %v1633 = vshrl.u32 %v1441, 16
      %v1635 = vshll.u32 %v1441, 16
      %v1637 = vrot.slane %v1635, 1
      %v1638 = vor.u32 %v1633, %v1637
      %v1640 = vshll.u32 %v1505, 16
      %v1642 = vrot.slane %v1640, 1
      %v1643 = vsel %vm1511, %v1638, %v1642
      %v1645 = vshrl.u32 %v1442, 16
      %v1647 = vshll.u32 %v1442, 16
      %v1649 = vrot.slane %v1647, 1
      %v1650 = vor.u32 %v1645, %v1649
      %v1652 = vshll.u32 %v1506, 16
      %v1654 = vrot.slane %v1652, 1
      %v1655 = vsel %vm1511, %v1650, %v1654
      %v1657 = vshrl.u32 %v1443, 16
      %v1659 = vshll.u32 %v1443, 16
      %v1661 = vrot.slane %v1659, 1
      %v1662 = vor.u32 %v1657, %v1661
      %v1664 = vshll.u32 %v1507, 16
      %v1666 = vrot.slane %v1664, 1
      %v1667 = vsel %vm1511, %v1662, %v1666
      %v1669 = vshrl.u32 %v1444, 16
      %v1671 = vshll.u32 %v1444, 16
      %v1673 = vrot.slane %v1671, 1
      %v1674 = vor.u32 %v1669, %v1673
      %v1676 = vshll.u32 %v1508, 16
      %v1678 = vrot.slane %v1676, 1
      %v1679 = vsel %vm1511, %v1674, %v1678
      %v1681 = vshrl.u32 %v1445, 16
      %v1683 = vshll.u32 %v1445, 16
      %v1685 = vrot.slane %v1683, 1
      %v1686 = vor.u32 %v1681, %v1685
      %v1688 = vshll.u32 %v1509, 16
      %v1690 = vrot.slane %v1688, 1
      %v1691 = vsel %vm1511, %v1686, %v1690
      %v1693 = vshrl.u32 %v1446, 16
      %v1695 = vshll.u32 %v1446, 16
      %v1697 = vrot.slane %v1695, 1
      %v1698 = vor.u32 %v1693, %v1697
      %v1700 = vshll.u32 %v1510, 16
      %v1702 = vrot.slane %v1700, 1
      %v1703 = vsel %vm1511, %v1698, %v1702
      %v1736 = vunpack.c.l.b16 %v1351
      %v1737 = vunpack.c.l.b16 %v1352
      %v1738 = vunpack.c.l.b16 %v1353
      %v1739 = vunpack.c.l.b16 %v1354
      %v1740 = vunpack.c.l.b16 %v1355
      %v1741 = vunpack.c.l.b16 %v1356
      %v1742 = vunpack.c.l.b16 %v1357
      %v1743 = vunpack.c.l.b16 %v1358
      %v1744 = vunpack.c.l.b16 %v1359
      %v1745 = vunpack.c.l.b16 %v1360
      %v1746 = vunpack.c.l.b16 %v1361
      %v1747 = vunpack.c.l.b16 %v1362
      %v1748 = vunpack.c.l.b16 %v1363
      %v1749 = vunpack.c.l.b16 %v1364
      %v1750 = vunpack.c.l.b16 %v1365
      %v1751 = vunpack.c.l.b16 %v1366
      %v1752 = vpack.c.b16 %v1400, %v1736
      %v1753 = vpack.c.b16 %v1402, %v1737
      %v1754 = vpack.c.b16 %v1404, %v1738
      %v1755 = vpack.c.b16 %v1406, %v1739
      %v1756 = vpack.c.b16 %v1408, %v1740
      %v1757 = vpack.c.b16 %v1410, %v1741
      %v1758 = vpack.c.b16 %v1412, %v1742
      %v1759 = vpack.c.b16 %v1414, %v1743
      %v1760 = vpack.c.b16 %v1416, %v1744
      %v1761 = vpack.c.b16 %v1418, %v1745
      %v1762 = vpack.c.b16 %v1420, %v1746
      %v1763 = vpack.c.b16 %v1422, %v1747
      %v1764 = vpack.c.b16 %v1424, %v1748
      %v1765 = vpack.c.b16 %v1426, %v1749
      %v1766 = vpack.c.b16 %v1428, %v1750
      %v1767 = vpack.c.b16 %v1430, %v1751
      %vm1768 = vcmask 1046528
      %v1769 = vrot.slane %v1752, 1
      %v1770 = vrot.slane %v1495, 1
      %v1771 = vsel %vm1768, %v1769, %v1770
      %v1772 = vrot.slane %v1753, 1
      %v1773 = vrot.slane %v1496, 1
      %v1774 = vsel %vm1768, %v1772, %v1773
      %v1775 = vrot.slane %v1754, 1
      %v1776 = vrot.slane %v1497, 1
      %v1777 = vsel %vm1768, %v1775, %v1776
      %v1778 = vrot.slane %v1755, 1
      %v1779 = vrot.slane %v1498, 1
      %v1780 = vsel %vm1768, %v1778, %v1779
      %v1781 = vrot.slane %v1756, 1
      %v1782 = vrot.slane %v1499, 1
      %v1783 = vsel %vm1768, %v1781, %v1782
      %v1784 = vrot.slane %v1757, 1
      %v1785 = vrot.slane %v1500, 1
      %v1786 = vsel %vm1768, %v1784, %v1785
      %v1787 = vrot.slane %v1758, 1
      %v1788 = vrot.slane %v1501, 1
      %v1789 = vsel %vm1768, %v1787, %v1788
      %v1790 = vrot.slane %v1759, 1
      %v1791 = vrot.slane %v1502, 1
      %v1792 = vsel %vm1768, %v1790, %v1791
      %v1793 = vrot.slane %v1760, 1
      %v1794 = vrot.slane %v1503, 1
      %v1795 = vsel %vm1768, %v1793, %v1794
      %v1796 = vrot.slane %v1761, 1
      %v1797 = vrot.slane %v1504, 1
      %v1798 = vsel %vm1768, %v1796, %v1797
      %v1799 = vrot.slane %v1762, 1
      %v1800 = vrot.slane %v1505, 1
      %v1801 = vsel %vm1768, %v1799, %v1800
      %v1802 = vrot.slane %v1763, 1
      %v1803 = vrot.slane %v1506, 1
      %v1804 = vsel %vm1768, %v1802, %v1803
      %v1805 = vrot.slane %v1764, 1
      %v1806 = vrot.slane %v1507, 1
      %v1807 = vsel %vm1768, %v1805, %v1806
      %v1808 = vrot.slane %v1765, 1
      %v1809 = vrot.slane %v1508, 1
      %v1810 = vsel %vm1768, %v1808, %v1809
      %v1811 = vrot.slane %v1766, 1
      %v1812 = vrot.slane %v1509, 1
      %v1813 = vsel %vm1768, %v1811, %v1812
      %v1814 = vrot.slane %v1767, 1
      %v1815 = vrot.slane %v1510, 1
      %v1816 = vsel %vm1768, %v1814, %v1815
      %v1833 = vld [vmem:[%s3] sm:$0xf]
      %v1834 = vld [vmem:[%s3 + $0x4] sm:$0xf]
      %v1835 = vld [vmem:[%s3 + $0x8] sm:$0xf]
      %v1836 = vld [vmem:[%s3 + $0xc] sm:$0xf]
      %v1837 = vld [vmem:[%s3 + $0x10] sm:$0xf]
      %v1838 = vld [vmem:[%s3 + $0x14] sm:$0xf]
      %v1839 = vld [vmem:[%s3 + $0x18] sm:$0xf]
      %v1840 = vld [vmem:[%s3 + $0x1c] sm:$0xf]
      %v1841 = vld [vmem:[%s3 + $0x20] sm:$0xf]
      %v1842 = vld [vmem:[%s3 + $0x24] sm:$0xf]
      %v1843 = vld [vmem:[%s3 + $0x28] sm:$0xf]
      %v1844 = vld [vmem:[%s3 + $0x2c] sm:$0xf]
      %v1845 = vld [vmem:[%s3 + $0x30] sm:$0xf]
      %v1846 = vld [vmem:[%s3 + $0x34] sm:$0xf]
      %v1847 = vld [vmem:[%s3 + $0x38] sm:$0xf]
      %v1848 = vld [vmem:[%s3 + $0x3c] sm:$0xf]
      %v1849 = vld [vmem:[%s3 + $0x40] sm:$0xf]
      %v1850 = vld [vmem:[%s3 + $0x44] sm:$0xf]
      %v1851 = vld [vmem:[%s3 + $0x48] sm:$0xf]
      %v1852 = vld [vmem:[%s3 + $0x4c] sm:$0xf]
      %v1853 = vld [vmem:[%s3 + $0x50] sm:$0xf]
      %v1854 = vld [vmem:[%s3 + $0x54] sm:$0xf]
      %v1855 = vld [vmem:[%s3 + $0x58] sm:$0xf]
      %v1856 = vld [vmem:[%s3 + $0x5c] sm:$0xf]
      %v1857 = vld [vmem:[%s3 + $0x60] sm:$0xf]
      %v1858 = vld [vmem:[%s3 + $0x64] sm:$0xf]
      %v1859 = vld [vmem:[%s3 + $0x68] sm:$0xf]
      %v1860 = vld [vmem:[%s3 + $0x6c] sm:$0xf]
      %v1861 = vld [vmem:[%s3 + $0x70] sm:$0xf]
      %v1862 = vld [vmem:[%s3 + $0x74] sm:$0xf]
      %v1863 = vld [vmem:[%s3 + $0x78] sm:$0xf]
      %v1864 = vld [vmem:[%s3 + $0x7c] sm:$0xf]
      %v1865 = vld [vmem:[%s3 + $0x80] sm:$0xf]
      %v1866 = vld [vmem:[%s3 + $0x84] sm:$0xf]
      %v1867 = vld [vmem:[%s3 + $0x88] sm:$0xf]
      %v1868 = vld [vmem:[%s3 + $0x8c] sm:$0xf]
      %v1869 = vld [vmem:[%s3 + $0x90] sm:$0xf]
      %v1870 = vld [vmem:[%s3 + $0x94] sm:$0xf]
      %v1871 = vld [vmem:[%s3 + $0x98] sm:$0xf]
      %v1872 = vld [vmem:[%s3 + $0x9c] sm:$0xf]
      %v1873 = vld [vmem:[%s3 + $0xa0] sm:$0xf]
      %v1874 = vld [vmem:[%s3 + $0xa4] sm:$0xf]
      %v1875 = vld [vmem:[%s3 + $0xa8] sm:$0xf]
      %v1876 = vld [vmem:[%s3 + $0xac] sm:$0xf]
      %v1877 = vld [vmem:[%s3 + $0xb0] sm:$0xf]
      %v1878 = vld [vmem:[%s3 + $0xb4] sm:$0xf]
      %v1879 = vld [vmem:[%s3 + $0xb8] sm:$0xf]
      %v1880 = vld [vmem:[%s3 + $0xbc] sm:$0xf]
      %v1881 = vld [vmem:[%s1131] sm:$0xf]
      %v1882 = vld [vmem:[%s1131 + $0x4] sm:$0xf]
      %v1883 = vld [vmem:[%s1131 + $0xc] sm:$0xf]
      %v1884 = vld [vmem:[%s1131 + $0x10] sm:$0xf]
      %v1885 = vld [vmem:[%s1131 + $0x18] sm:$0xf]
      %v1886 = vld [vmem:[%s1131 + $0x1c] sm:$0xf]
      %v1887 = vld [vmem:[%s1131 + $0x24] sm:$0xf]
      %v1888 = vld [vmem:[%s1131 + $0x28] sm:$0xf]
      %v1889 = vld [vmem:[%s1131 + $0x30] sm:$0xf]
      %v1890 = vld [vmem:[%s1131 + $0x34] sm:$0xf]
      %v1891 = vld [vmem:[%s1131 + $0x3c] sm:$0xf]
      %v1892 = vld [vmem:[%s1131 + $0x40] sm:$0xf]
      %v1893 = vld [vmem:[%s1131 + $0x48] sm:$0xf]
      %v1894 = vld [vmem:[%s1131 + $0x4c] sm:$0xf]
      %v1895 = vld [vmem:[%s1131 + $0x54] sm:$0xf]
      %v1896 = vld [vmem:[%s1131 + $0x58] sm:$0xf]
      %v1897 = vld [vmem:[%s1131 + $0x60] sm:$0xf]
      %v1898 = vld [vmem:[%s1131 + $0x64] sm:$0xf]
      %v1899 = vld [vmem:[%s1131 + $0x6c] sm:$0xf]
      %v1900 = vld [vmem:[%s1131 + $0x70] sm:$0xf]
      %v1901 = vld [vmem:[%s1131 + $0x78] sm:$0xf]
      %v1902 = vld [vmem:[%s1131 + $0x7c] sm:$0xf]
      %v1903 = vld [vmem:[%s1131 + $0x84] sm:$0xf]
      %v1904 = vld [vmem:[%s1131 + $0x88] sm:$0xf]
      %v1905 = vld [vmem:[%s1131 + $0x90] sm:$0xf]
      %v1906 = vld [vmem:[%s1131 + $0x94] sm:$0xf]
      %v1907 = vld [vmem:[%s1131 + $0x9c] sm:$0xf]
      %v1908 = vld [vmem:[%s1131 + $0xa0] sm:$0xf]
      %v1909 = vld [vmem:[%s1131 + $0xa8] sm:$0xf]
      %v1910 = vld [vmem:[%s1131 + $0xac] sm:$0xf]
      %v1911 = vld [vmem:[%s1131 + $0xb4] sm:$0xf]
      %v1912 = vld [vmem:[%s1131 + $0xb8] sm:$0xf]
      %v1913 = vld [vmem:[%s1131 + $0x8] sm:$0x1]
      %v1914 = vld [vmem:[%s1131 + $0x14] sm:$0x1]
      %v1915 = vld [vmem:[%s1131 + $0x20] sm:$0x1]
      %v1916 = vld [vmem:[%s1131 + $0x2c] sm:$0x1]
      %v1917 = vld [vmem:[%s1131 + $0x38] sm:$0x1]
      %v1918 = vld [vmem:[%s1131 + $0x44] sm:$0x1]
      %v1919 = vld [vmem:[%s1131 + $0x50] sm:$0x1]
      %v1920 = vld [vmem:[%s1131 + $0x5c] sm:$0x1]
      %v1921 = vld [vmem:[%s1131 + $0x68] sm:$0x1]
      %v1922 = vld [vmem:[%s1131 + $0x74] sm:$0x1]
      %v1923 = vld [vmem:[%s1131 + $0x80] sm:$0x1]
      %v1924 = vld [vmem:[%s1131 + $0x8c] sm:$0x1]
      %v1925 = vld [vmem:[%s1131 + $0x98] sm:$0x1]
      %v1926 = vld [vmem:[%s1131 + $0xa4] sm:$0x1]
      %v1927 = vld [vmem:[%s1131 + $0xb0] sm:$0x1]
      %v1928 = vld [vmem:[%s1131 + $0xbc] sm:$0x1]
      %v1929 = vld [vmem:[%s1131] sm:$0xe]
      %v1930 = vld [vmem:[%s1131 + $0xc] sm:$0xe]
      %v1931 = vld [vmem:[%s1131 + $0x18] sm:$0xe]
      %v1932 = vld [vmem:[%s1131 + $0x24] sm:$0xe]
      %v1933 = vld [vmem:[%s1131 + $0x30] sm:$0xe]
      %v1934 = vld [vmem:[%s1131 + $0x3c] sm:$0xe]
      %v1935 = vld [vmem:[%s1131 + $0x48] sm:$0xe]
      %v1936 = vld [vmem:[%s1131 + $0x54] sm:$0xe]
      %v1937 = vld [vmem:[%s1131 + $0x60] sm:$0xe]
      %v1938 = vld [vmem:[%s1131 + $0x6c] sm:$0xe]
      %v1939 = vld [vmem:[%s1131 + $0x78] sm:$0xe]
      %v1940 = vld [vmem:[%s1131 + $0x84] sm:$0xe]
      %v1941 = vld [vmem:[%s1131 + $0x90] sm:$0xe]
      %v1942 = vld [vmem:[%s1131 + $0x9c] sm:$0xe]
      %v1943 = vld [vmem:[%s1131 + $0xa8] sm:$0xe]
      %v1944 = vld [vmem:[%s1131 + $0xb4] sm:$0xe]
      %v1977 = vunpack.c.l.b16 %v1881
      %v1978 = vunpack.c.l.b16 %v1882
      %v1979 = vunpack.c.l.b16 %v1883
      %v1980 = vunpack.c.l.b16 %v1884
      %v1981 = vunpack.c.l.b16 %v1885
      %v1982 = vunpack.c.l.b16 %v1886
      %v1983 = vunpack.c.l.b16 %v1887
      %v1984 = vunpack.c.l.b16 %v1888
      %v1985 = vunpack.c.l.b16 %v1889
      %v1986 = vunpack.c.l.b16 %v1890
      %v1987 = vunpack.c.l.b16 %v1891
      %v1988 = vunpack.c.l.b16 %v1892
      %v1989 = vunpack.c.l.b16 %v1893
      %v1990 = vunpack.c.l.b16 %v1894
      %v1991 = vunpack.c.l.b16 %v1895
      %v1992 = vunpack.c.l.b16 %v1896
      %v1993 = vunpack.c.l.b16 %v1897
      %v1994 = vunpack.c.l.b16 %v1898
      %v1995 = vunpack.c.l.b16 %v1899
      %v1996 = vunpack.c.l.b16 %v1900
      %v1997 = vunpack.c.l.b16 %v1901
      %v1998 = vunpack.c.l.b16 %v1902
      %v1999 = vunpack.c.l.b16 %v1903
      %v2000 = vunpack.c.l.b16 %v1904
      %v2001 = vunpack.c.l.b16 %v1905
      %v2002 = vunpack.c.l.b16 %v1906
      %v2003 = vunpack.c.l.b16 %v1907
      %v2004 = vunpack.c.l.b16 %v1908
      %v2005 = vunpack.c.l.b16 %v1909
      %v2006 = vunpack.c.l.b16 %v1910
      %v2007 = vunpack.c.l.b16 %v1911
      %v2008 = vunpack.c.l.b16 %v1912
      %v2009 = vpack.c.b16 %v1978, %v1977
      %v2010 = vpack.c.b16 %v1980, %v1979
      %v2011 = vpack.c.b16 %v1982, %v1981
      %v2012 = vpack.c.b16 %v1984, %v1983
      %v2013 = vpack.c.b16 %v1986, %v1985
      %v2014 = vpack.c.b16 %v1988, %v1987
      %v2015 = vpack.c.b16 %v1990, %v1989
      %v2016 = vpack.c.b16 %v1992, %v1991
      %v2017 = vpack.c.b16 %v1994, %v1993
      %v2018 = vpack.c.b16 %v1996, %v1995
      %v2019 = vpack.c.b16 %v1998, %v1997
      %v2020 = vpack.c.b16 %v2000, %v1999
      %v2021 = vpack.c.b16 %v2002, %v2001
      %v2022 = vpack.c.b16 %v2004, %v2003
      %v2023 = vpack.c.b16 %v2006, %v2005
      %v2024 = vpack.c.b16 %v2008, %v2007
      %v2057 = vunpack.c.l.b16 %v1913
      %v2058 = vunpack.c.l.b16 %v1914
      %v2059 = vunpack.c.l.b16 %v1915
      %v2060 = vunpack.c.l.b16 %v1916
      %v2061 = vunpack.c.l.b16 %v1917
      %v2062 = vunpack.c.l.b16 %v1918
      %v2063 = vunpack.c.l.b16 %v1919
      %v2064 = vunpack.c.l.b16 %v1920
      %v2065 = vunpack.c.l.b16 %v1921
      %v2066 = vunpack.c.l.b16 %v1922
      %v2067 = vunpack.c.l.b16 %v1923
      %v2068 = vunpack.c.l.b16 %v1924
      %v2069 = vunpack.c.l.b16 %v1925
      %v2070 = vunpack.c.l.b16 %v1926
      %v2071 = vunpack.c.l.b16 %v1927
      %v2072 = vunpack.c.l.b16 %v1928
      %v2073 = vpack.c.b16 %v2057, %v2057
      %v2074 = vpack.c.b16 %v2058, %v2058
      %v2075 = vpack.c.b16 %v2059, %v2059
      %v2076 = vpack.c.b16 %v2060, %v2060
      %v2077 = vpack.c.b16 %v2061, %v2061
      %v2078 = vpack.c.b16 %v2062, %v2062
      %v2079 = vpack.c.b16 %v2063, %v2063
      %v2080 = vpack.c.b16 %v2064, %v2064
      %v2081 = vpack.c.b16 %v2065, %v2065
      %v2082 = vpack.c.b16 %v2066, %v2066
      %v2083 = vpack.c.b16 %v2067, %v2067
      %v2084 = vpack.c.b16 %v2068, %v2068
      %v2085 = vpack.c.b16 %v2069, %v2069
      %v2086 = vpack.c.b16 %v2070, %v2070
      %v2087 = vpack.c.b16 %v2071, %v2071
      %v2088 = vpack.c.b16 %v2072, %v2072
      %v2090 = vshrl.u32 %v2009, 16
      %v2092 = vshll.u32 %v2009, 16
      %v2094 = vrot.slane %v2092, 1
      %v2095 = vor.u32 %v2090, %v2094
      %v2097 = vshll.u32 %v2073, 16
      %v2099 = vrot.slane %v2097, 1
      %v2100 = vsel %vm1511, %v2095, %v2099
      %v2102 = vshrl.u32 %v2010, 16
      %v2104 = vshll.u32 %v2010, 16
      %v2106 = vrot.slane %v2104, 1
      %v2107 = vor.u32 %v2102, %v2106
      %v2109 = vshll.u32 %v2074, 16
      %v2111 = vrot.slane %v2109, 1
      %v2112 = vsel %vm1511, %v2107, %v2111
      %v2114 = vshrl.u32 %v2011, 16
      %v2116 = vshll.u32 %v2011, 16
      %v2118 = vrot.slane %v2116, 1
      %v2119 = vor.u32 %v2114, %v2118
      %v2121 = vshll.u32 %v2075, 16
      %v2123 = vrot.slane %v2121, 1
      %v2124 = vsel %vm1511, %v2119, %v2123
      %v2126 = vshrl.u32 %v2012, 16
      %v2128 = vshll.u32 %v2012, 16
      %v2130 = vrot.slane %v2128, 1
      %v2131 = vor.u32 %v2126, %v2130
      %v2133 = vshll.u32 %v2076, 16
      %v2135 = vrot.slane %v2133, 1
      %v2136 = vsel %vm1511, %v2131, %v2135
      %v2138 = vshrl.u32 %v2013, 16
      %v2140 = vshll.u32 %v2013, 16
      %v2142 = vrot.slane %v2140, 1
      %v2143 = vor.u32 %v2138, %v2142
      %v2145 = vshll.u32 %v2077, 16
      %v2147 = vrot.slane %v2145, 1
      %v2148 = vsel %vm1511, %v2143, %v2147
      %v2150 = vshrl.u32 %v2014, 16
      %v2152 = vshll.u32 %v2014, 16
      %v2154 = vrot.slane %v2152, 1
      %v2155 = vor.u32 %v2150, %v2154
      %v2157 = vshll.u32 %v2078, 16
      %v2159 = vrot.slane %v2157, 1
      %v2160 = vsel %vm1511, %v2155, %v2159
      %v2162 = vshrl.u32 %v2015, 16
      %v2164 = vshll.u32 %v2015, 16
      %v2166 = vrot.slane %v2164, 1
      %v2167 = vor.u32 %v2162, %v2166
      %v2169 = vshll.u32 %v2079, 16
      %v2171 = vrot.slane %v2169, 1
      %v2172 = vsel %vm1511, %v2167, %v2171
      %v2174 = vshrl.u32 %v2016, 16
      %v2176 = vshll.u32 %v2016, 16
      %v2178 = vrot.slane %v2176, 1
      %v2179 = vor.u32 %v2174, %v2178
      %v2181 = vshll.u32 %v2080, 16
      %v2183 = vrot.slane %v2181, 1
      %v2184 = vsel %vm1511, %v2179, %v2183
      %v2186 = vshrl.u32 %v2017, 16
      %v2188 = vshll.u32 %v2017, 16
      %v2190 = vrot.slane %v2188, 1
      %v2191 = vor.u32 %v2186, %v2190
      %v2193 = vshll.u32 %v2081, 16
      %v2195 = vrot.slane %v2193, 1
      %v2196 = vsel %vm1511, %v2191, %v2195
      %v2198 = vshrl.u32 %v2018, 16
      %v2200 = vshll.u32 %v2018, 16
      %v2202 = vrot.slane %v2200, 1
      %v2203 = vor.u32 %v2198, %v2202
      %v2205 = vshll.u32 %v2082, 16
      %v2207 = vrot.slane %v2205, 1
      %v2208 = vsel %vm1511, %v2203, %v2207
      %v2210 = vshrl.u32 %v2019, 16
      %v2212 = vshll.u32 %v2019, 16
      %v2214 = vrot.slane %v2212, 1
      %v2215 = vor.u32 %v2210, %v2214
      %v2217 = vshll.u32 %v2083, 16
      %v2219 = vrot.slane %v2217, 1
      %v2220 = vsel %vm1511, %v2215, %v2219
      %v2222 = vshrl.u32 %v2020, 16
      %v2224 = vshll.u32 %v2020, 16
      %v2226 = vrot.slane %v2224, 1
      %v2227 = vor.u32 %v2222, %v2226
      %v2229 = vshll.u32 %v2084, 16
      %v2231 = vrot.slane %v2229, 1
      %v2232 = vsel %vm1511, %v2227, %v2231
      %v2234 = vshrl.u32 %v2021, 16
      %v2236 = vshll.u32 %v2021, 16
      %v2238 = vrot.slane %v2236, 1
      %v2239 = vor.u32 %v2234, %v2238
      %v2241 = vshll.u32 %v2085, 16
      %v2243 = vrot.slane %v2241, 1
      %v2244 = vsel %vm1511, %v2239, %v2243
      %v2246 = vshrl.u32 %v2022, 16
      %v2248 = vshll.u32 %v2022, 16
      %v2250 = vrot.slane %v2248, 1
      %v2251 = vor.u32 %v2246, %v2250
      %v2253 = vshll.u32 %v2086, 16
      %v2255 = vrot.slane %v2253, 1
      %v2256 = vsel %vm1511, %v2251, %v2255
      %v2258 = vshrl.u32 %v2023, 16
      %v2260 = vshll.u32 %v2023, 16
      %v2262 = vrot.slane %v2260, 1
      %v2263 = vor.u32 %v2258, %v2262
      %v2265 = vshll.u32 %v2087, 16
      %v2267 = vrot.slane %v2265, 1
      %v2268 = vsel %vm1511, %v2263, %v2267
      %v2270 = vshrl.u32 %v2024, 16
      %v2272 = vshll.u32 %v2024, 16
      %v2274 = vrot.slane %v2272, 1
      %v2275 = vor.u32 %v2270, %v2274
      %v2277 = vshll.u32 %v2088, 16
      %v2279 = vrot.slane %v2277, 1
      %v2280 = vsel %vm1511, %v2275, %v2279
      %v2313 = vunpack.c.l.b16 %v1929
      %v2314 = vunpack.c.l.b16 %v1930
      %v2315 = vunpack.c.l.b16 %v1931
      %v2316 = vunpack.c.l.b16 %v1932
      %v2317 = vunpack.c.l.b16 %v1933
      %v2318 = vunpack.c.l.b16 %v1934
      %v2319 = vunpack.c.l.b16 %v1935
      %v2320 = vunpack.c.l.b16 %v1936
      %v2321 = vunpack.c.l.b16 %v1937
      %v2322 = vunpack.c.l.b16 %v1938
      %v2323 = vunpack.c.l.b16 %v1939
      %v2324 = vunpack.c.l.b16 %v1940
      %v2325 = vunpack.c.l.b16 %v1941
      %v2326 = vunpack.c.l.b16 %v1942
      %v2327 = vunpack.c.l.b16 %v1943
      %v2328 = vunpack.c.l.b16 %v1944
      %v2329 = vpack.c.b16 %v1978, %v2313
      %v2330 = vpack.c.b16 %v1980, %v2314
      %v2331 = vpack.c.b16 %v1982, %v2315
      %v2332 = vpack.c.b16 %v1984, %v2316
      %v2333 = vpack.c.b16 %v1986, %v2317
      %v2334 = vpack.c.b16 %v1988, %v2318
      %v2335 = vpack.c.b16 %v1990, %v2319
      %v2336 = vpack.c.b16 %v1992, %v2320
      %v2337 = vpack.c.b16 %v1994, %v2321
      %v2338 = vpack.c.b16 %v1996, %v2322
      %v2339 = vpack.c.b16 %v1998, %v2323
      %v2340 = vpack.c.b16 %v2000, %v2324
      %v2341 = vpack.c.b16 %v2002, %v2325
      %v2342 = vpack.c.b16 %v2004, %v2326
      %v2343 = vpack.c.b16 %v2006, %v2327
      %v2344 = vpack.c.b16 %v2008, %v2328
      %v2345 = vrot.slane %v2329, 1
      %v2346 = vrot.slane %v2073, 1
      %v2347 = vsel %vm1768, %v2345, %v2346
      %v2348 = vrot.slane %v2330, 1
      %v2349 = vrot.slane %v2074, 1
      %v2350 = vsel %vm1768, %v2348, %v2349
      %v2351 = vrot.slane %v2331, 1
      %v2352 = vrot.slane %v2075, 1
      %v2353 = vsel %vm1768, %v2351, %v2352
      %v2354 = vrot.slane %v2332, 1
      %v2355 = vrot.slane %v2076, 1
      %v2356 = vsel %vm1768, %v2354, %v2355
      %v2357 = vrot.slane %v2333, 1
      %v2358 = vrot.slane %v2077, 1
      %v2359 = vsel %vm1768, %v2357, %v2358
      %v2360 = vrot.slane %v2334, 1
      %v2361 = vrot.slane %v2078, 1
      %v2362 = vsel %vm1768, %v2360, %v2361
      %v2363 = vrot.slane %v2335, 1
      %v2364 = vrot.slane %v2079, 1
      %v2365 = vsel %vm1768, %v2363, %v2364
      %v2366 = vrot.slane %v2336, 1
      %v2367 = vrot.slane %v2080, 1
      %v2368 = vsel %vm1768, %v2366, %v2367
      %v2369 = vrot.slane %v2337, 1
      %v2370 = vrot.slane %v2081, 1
      %v2371 = vsel %vm1768, %v2369, %v2370
      %v2372 = vrot.slane %v2338, 1
      %v2373 = vrot.slane %v2082, 1
      %v2374 = vsel %vm1768, %v2372, %v2373
      %v2375 = vrot.slane %v2339, 1
      %v2376 = vrot.slane %v2083, 1
      %v2377 = vsel %vm1768, %v2375, %v2376
      %v2378 = vrot.slane %v2340, 1
      %v2379 = vrot.slane %v2084, 1
      %v2380 = vsel %vm1768, %v2378, %v2379
      %v2381 = vrot.slane %v2341, 1
      %v2382 = vrot.slane %v2085, 1
      %v2383 = vsel %vm1768, %v2381, %v2382
      %v2384 = vrot.slane %v2342, 1
      %v2385 = vrot.slane %v2086, 1
      %v2386 = vsel %vm1768, %v2384, %v2385
      %v2387 = vrot.slane %v2343, 1
      %v2388 = vrot.slane %v2087, 1
      %v2389 = vsel %vm1768, %v2387, %v2388
      %v2390 = vrot.slane %v2344, 1
      %v2391 = vrot.slane %v2088, 1
      %v2392 = vsel %vm1768, %v2390, %v2391
      %v2409 = vld [vmem:[%s3 + $0xc0] sm:$0xf]
      %v2410 = vld [vmem:[%s3 + $0xc4] sm:$0xf]
      %v2411 = vld [vmem:[%s3 + $0xc8] sm:$0xf]
      %v2412 = vld [vmem:[%s3 + $0xcc] sm:$0xf]
      %v2413 = vld [vmem:[%s3 + $0xd0] sm:$0xf]
      %v2414 = vld [vmem:[%s3 + $0xd4] sm:$0xf]
      %v2415 = vld [vmem:[%s3 + $0xd8] sm:$0xf]
      %v2416 = vld [vmem:[%s3 + $0xdc] sm:$0xf]
      %v2417 = vld [vmem:[%s3 + $0xe0] sm:$0xf]
      %v2418 = vld [vmem:[%s3 + $0xe4] sm:$0xf]
      %v2419 = vld [vmem:[%s3 + $0xe8] sm:$0xf]
      %v2420 = vld [vmem:[%s3 + $0xec] sm:$0xf]
      %v2421 = vld [vmem:[%s3 + $0xf0] sm:$0xf]
      %v2422 = vld [vmem:[%s3 + $0xf4] sm:$0xf]
      %v2423 = vld [vmem:[%s3 + $0xf8] sm:$0xf]
      %v2424 = vld [vmem:[%s3 + $0xfc] sm:$0xf]
      %v2425 = vld [vmem:[%s3 + $0x100] sm:$0xf]
      %v2426 = vld [vmem:[%s3 + $0x104] sm:$0xf]
      %v2427 = vld [vmem:[%s3 + $0x108] sm:$0xf]
      %v2428 = vld [vmem:[%s3 + $0x10c] sm:$0xf]
      %v2429 = vld [vmem:[%s3 + $0x110] sm:$0xf]
      %v2430 = vld [vmem:[%s3 + $0x114] sm:$0xf]
      %v2431 = vld [vmem:[%s3 + $0x118] sm:$0xf]
      %v2432 = vld [vmem:[%s3 + $0x11c] sm:$0xf]
      %v2433 = vld [vmem:[%s3 + $0x120] sm:$0xf]
      %v2434 = vld [vmem:[%s3 + $0x124] sm:$0xf]
      %v2435 = vld [vmem:[%s3 + $0x128] sm:$0xf]
      %v2436 = vld [vmem:[%s3 + $0x12c] sm:$0xf]
      %v2437 = vld [vmem:[%s3 + $0x130] sm:$0xf]
      %v2438 = vld [vmem:[%s3 + $0x134] sm:$0xf]
      %v2439 = vld [vmem:[%s3 + $0x138] sm:$0xf]
      %v2440 = vld [vmem:[%s3 + $0x13c] sm:$0xf]
      %v2441 = vld [vmem:[%s3 + $0x140] sm:$0xf]
      %v2442 = vld [vmem:[%s3 + $0x144] sm:$0xf]
      %v2443 = vld [vmem:[%s3 + $0x148] sm:$0xf]
      %v2444 = vld [vmem:[%s3 + $0x14c] sm:$0xf]
      %v2445 = vld [vmem:[%s3 + $0x150] sm:$0xf]
      %v2446 = vld [vmem:[%s3 + $0x154] sm:$0xf]
      %v2447 = vld [vmem:[%s3 + $0x158] sm:$0xf]
      %v2448 = vld [vmem:[%s3 + $0x15c] sm:$0xf]
      %v2449 = vld [vmem:[%s3 + $0x160] sm:$0xf]
      %v2450 = vld [vmem:[%s3 + $0x164] sm:$0xf]
      %v2451 = vld [vmem:[%s3 + $0x168] sm:$0xf]
      %v2452 = vld [vmem:[%s3 + $0x16c] sm:$0xf]
      %v2453 = vld [vmem:[%s3 + $0x170] sm:$0xf]
      %v2454 = vld [vmem:[%s3 + $0x174] sm:$0xf]
      %v2455 = vld [vmem:[%s3 + $0x178] sm:$0xf]
      %v2456 = vld [vmem:[%s3 + $0x17c] sm:$0xf]
      %v2505 = vunpack.c.l.b16 %v2409
      %v2506 = vunpack.c.l.b16 %v2410
      %v2507 = vunpack.c.l.b16 %v2411
      %v2508 = vunpack.c.l.b16 %v2412
      %v2509 = vunpack.c.l.b16 %v2413
      %v2510 = vunpack.c.l.b16 %v2414
      %v2511 = vunpack.c.l.b16 %v2415
      %v2512 = vunpack.c.l.b16 %v2416
      %v2513 = vunpack.c.l.b16 %v2417
      %v2514 = vunpack.c.l.b16 %v2418
      %v2515 = vunpack.c.l.b16 %v2419
      %v2516 = vunpack.c.l.b16 %v2420
      %v2517 = vunpack.c.l.b16 %v2421
      %v2518 = vunpack.c.l.b16 %v2422
      %v2519 = vunpack.c.l.b16 %v2423
      %v2520 = vunpack.c.l.b16 %v2424
      %v2521 = vunpack.c.l.b16 %v2425
      %v2522 = vunpack.c.l.b16 %v2426
      %v2523 = vunpack.c.l.b16 %v2427
      %v2524 = vunpack.c.l.b16 %v2428
      %v2525 = vunpack.c.l.b16 %v2429
      %v2526 = vunpack.c.l.b16 %v2430
      %v2527 = vunpack.c.l.b16 %v2431
      %v2528 = vunpack.c.l.b16 %v2432
      %v2529 = vunpack.c.l.b16 %v2433
      %v2530 = vunpack.c.l.b16 %v2434
      %v2531 = vunpack.c.l.b16 %v2435
      %v2532 = vunpack.c.l.b16 %v2436
      %v2533 = vunpack.c.l.b16 %v2437
      %v2534 = vunpack.c.l.b16 %v2438
      %v2535 = vunpack.c.l.b16 %v2439
      %v2536 = vunpack.c.l.b16 %v2440
      %v2537 = vunpack.c.l.b16 %v2441
      %v2538 = vunpack.c.l.b16 %v2442
      %v2539 = vunpack.c.l.b16 %v2443
      %v2540 = vunpack.c.l.b16 %v2444
      %v2541 = vunpack.c.l.b16 %v2445
      %v2542 = vunpack.c.l.b16 %v2446
      %v2543 = vunpack.c.l.b16 %v2447
      %v2544 = vunpack.c.l.b16 %v2448
      %v2545 = vunpack.c.l.b16 %v2449
      %v2546 = vunpack.c.l.b16 %v2450
      %v2547 = vunpack.c.l.b16 %v2451
      %v2548 = vunpack.c.l.b16 %v2452
      %v2549 = vunpack.c.l.b16 %v2453
      %v2550 = vunpack.c.l.b16 %v2454
      %v2551 = vunpack.c.l.b16 %v2455
      %v2552 = vunpack.c.l.b16 %v2456
      %v2553 = vpack.c.b16 %v2506, %v2505
      %v2554 = vpack.c.b16 %v2508, %v2507
      %v2555 = vpack.c.b16 %v2510, %v2509
      %v2556 = vpack.c.b16 %v2512, %v2511
      %v2557 = vpack.c.b16 %v2514, %v2513
      %v2558 = vpack.c.b16 %v2516, %v2515
      %v2559 = vpack.c.b16 %v2518, %v2517
      %v2560 = vpack.c.b16 %v2520, %v2519
      %v2561 = vpack.c.b16 %v2522, %v2521
      %v2562 = vpack.c.b16 %v2524, %v2523
      %v2563 = vpack.c.b16 %v2526, %v2525
      %v2564 = vpack.c.b16 %v2528, %v2527
      %v2565 = vpack.c.b16 %v2530, %v2529
      %v2566 = vpack.c.b16 %v2532, %v2531
      %v2567 = vpack.c.b16 %v2534, %v2533
      %v2568 = vpack.c.b16 %v2536, %v2535
      %v2569 = vpack.c.b16 %v2538, %v2537
      %v2570 = vpack.c.b16 %v2540, %v2539
      %v2571 = vpack.c.b16 %v2542, %v2541
      %v2572 = vpack.c.b16 %v2544, %v2543
      %v2573 = vpack.c.b16 %v2546, %v2545
      %v2574 = vpack.c.b16 %v2548, %v2547
      %v2575 = vpack.c.b16 %v2550, %v2549
      %v2576 = vpack.c.b16 %v2552, %v2551
      %2601 = vmatpush.bf16.msra.mxu0 %v2560
      %2602 = vmatpush.bf16.msra.mxu0 %v2559
      %2603 = vmatpush.bf16.msra.mxu0 %v2558
      %2604 = vmatpush.bf16.msra.mxu0 %v2557
      %2605 = vmatpush.bf16.msra.mxu0 %v2556
      %2606 = vmatpush.bf16.msra.mxu0 %v2555
      %2607 = vmatpush.bf16.msra.mxu0 %v2554
      %2608 = vmatpush.bf16.msra.mxu0 %v2553
      %2609 = vmatmul.bf16.gmra.mxu0 %v2009
      %v2610 = vpop.f32.mrf.mxu0
      %v2611 = vadd.f32 0.0, %v2610
      %v2612 = vpop.f32.mrf.mxu0
      %v2613 = vadd.f32 0.0, %v2612
      %2614 = vmatmul.bf16.gmra.mxu0 %v2010
      %v2615 = vpop.f32.mrf.mxu0
      %v2616 = vadd.f32 0.0, %v2615
      %v2617 = vpop.f32.mrf.mxu0
      %v2618 = vadd.f32 0.0, %v2617
      %2619 = vmatmul.bf16.gmra.mxu0 %v2011
      %v2620 = vpop.f32.mrf.mxu0
      %v2621 = vadd.f32 0.0, %v2620
      %v2622 = vpop.f32.mrf.mxu0
      %v2623 = vadd.f32 0.0, %v2622
      %2624 = vmatmul.bf16.gmra.mxu0 %v2012
      %v2625 = vpop.f32.mrf.mxu0
      %v2626 = vadd.f32 0.0, %v2625
      %v2627 = vpop.f32.mrf.mxu0
      %v2628 = vadd.f32 0.0, %v2627
      %2629 = vmatmul.bf16.gmra.mxu0 %v2013
      %v2630 = vpop.f32.mrf.mxu0
      %v2631 = vadd.f32 0.0, %v2630
      %v2632 = vpop.f32.mrf.mxu0
      %v2633 = vadd.f32 0.0, %v2632
      %2634 = vmatmul.bf16.gmra.mxu0 %v2014
      %v2635 = vpop.f32.mrf.mxu0
      %v2636 = vadd.f32 0.0, %v2635
      %v2637 = vpop.f32.mrf.mxu0
      %v2638 = vadd.f32 0.0, %v2637
      %2639 = vmatmul.bf16.gmra.mxu0 %v2015
      %v2640 = vpop.f32.mrf.mxu0
      %v2641 = vadd.f32 0.0, %v2640
      %v2642 = vpop.f32.mrf.mxu0
      %v2643 = vadd.f32 0.0, %v2642
      %2644 = vmatmul.bf16.gmra.mxu0 %v2016
      %v2645 = vpop.f32.mrf.mxu0
      %v2646 = vadd.f32 0.0, %v2645
      %v2647 = vpop.f32.mrf.mxu0
      %v2648 = vadd.f32 0.0, %v2647
      %2649 = vmatmul.bf16.gmra.mxu0 %v2017
      %v2650 = vpop.f32.mrf.mxu0
      %v2651 = vadd.f32 0.0, %v2650
      %v2652 = vpop.f32.mrf.mxu0
      %v2653 = vadd.f32 0.0, %v2652
      %2654 = vmatmul.bf16.gmra.mxu0 %v2018
      %v2655 = vpop.f32.mrf.mxu0
      %v2656 = vadd.f32 0.0, %v2655
      %v2657 = vpop.f32.mrf.mxu0
      %v2658 = vadd.f32 0.0, %v2657
      %2659 = vmatmul.bf16.gmra.mxu0 %v2019
      %v2660 = vpop.f32.mrf.mxu0
      %v2661 = vadd.f32 0.0, %v2660
      %v2662 = vpop.f32.mrf.mxu0
      %v2663 = vadd.f32 0.0, %v2662
      %2664 = vmatmul.bf16.gmra.mxu0 %v2020
      %v2665 = vpop.f32.mrf.mxu0
      %v2666 = vadd.f32 0.0, %v2665
      %v2667 = vpop.f32.mrf.mxu0
      %v2668 = vadd.f32 0.0, %v2667
      %2669 = vmatmul.bf16.gmra.mxu0 %v2021
      %v2670 = vpop.f32.mrf.mxu0
      %v2671 = vadd.f32 0.0, %v2670
      %v2672 = vpop.f32.mrf.mxu0
      %v2673 = vadd.f32 0.0, %v2672
      %2674 = vmatmul.bf16.gmra.mxu0 %v2022
      %v2675 = vpop.f32.mrf.mxu0
      %v2676 = vadd.f32 0.0, %v2675
      %v2677 = vpop.f32.mrf.mxu0
      %v2678 = vadd.f32 0.0, %v2677
      %2679 = vmatmul.bf16.gmra.mxu0 %v2023
      %v2680 = vpop.f32.mrf.mxu0
      %v2681 = vadd.f32 0.0, %v2680
      %v2682 = vpop.f32.mrf.mxu0
      %v2683 = vadd.f32 0.0, %v2682
      %2684 = vmatmul.bf16.gmra.mxu0 %v2024
      %v2685 = vpop.f32.mrf.mxu0
      %v2686 = vadd.f32 0.0, %v2685
      %v2687 = vpop.f32.mrf.mxu0
      %v2688 = vadd.f32 0.0, %v2687
      %2689 = vdwg.mxu0
      %2690 = vmatpush.bf16.msra.mxu0 %v2568
      %2691 = vmatpush.bf16.msra.mxu0 %v2567
      %2692 = vmatpush.bf16.msra.mxu0 %v2566
      %2693 = vmatpush.bf16.msra.mxu0 %v2565
      %2694 = vmatpush.bf16.msra.mxu0 %v2564
      %2695 = vmatpush.bf16.msra.mxu0 %v2563
      %2696 = vmatpush.bf16.msra.mxu0 %v2562
      %2697 = vmatpush.bf16.msra.mxu0 %v2561
      %2698 = vmatmul.bf16.gmra.mxu0 %v2100
      %v2699 = vpop.f32.mrf.mxu0
      %v2700 = vadd.f32 %v2611, %v2699
      %v2701 = vpop.f32.mrf.mxu0
      %v2702 = vadd.f32 %v2613, %v2701
      %2703 = vmatmul.bf16.gmra.mxu0 %v2112
      %v2704 = vpop.f32.mrf.mxu0
      %v2705 = vadd.f32 %v2616, %v2704
      %v2706 = vpop.f32.mrf.mxu0
      %v2707 = vadd.f32 %v2618, %v2706
      %2708 = vmatmul.bf16.gmra.mxu0 %v2124
      %v2709 = vpop.f32.mrf.mxu0
      %v2710 = vadd.f32 %v2621, %v2709
      %v2711 = vpop.f32.mrf.mxu0
      %v2712 = vadd.f32 %v2623, %v2711
      %2713 = vmatmul.bf16.gmra.mxu0 %v2136
      %v2714 = vpop.f32.mrf.mxu0
      %v2715 = vadd.f32 %v2626, %v2714
      %v2716 = vpop.f32.mrf.mxu0
      %v2717 = vadd.f32 %v2628, %v2716
      %2718 = vmatmul.bf16.gmra.mxu0 %v2148
      %v2719 = vpop.f32.mrf.mxu0
      %v2720 = vadd.f32 %v2631, %v2719
      %v2721 = vpop.f32.mrf.mxu0
      %v2722 = vadd.f32 %v2633, %v2721
      %2723 = vmatmul.bf16.gmra.mxu0 %v2160
      %v2724 = vpop.f32.mrf.mxu0
      %v2725 = vadd.f32 %v2636, %v2724
      %v2726 = vpop.f32.mrf.mxu0
      %v2727 = vadd.f32 %v2638, %v2726
      %2728 = vmatmul.bf16.gmra.mxu0 %v2172
      %v2729 = vpop.f32.mrf.mxu0
      %v2730 = vadd.f32 %v2641, %v2729
      %v2731 = vpop.f32.mrf.mxu0
      %v2732 = vadd.f32 %v2643, %v2731
      %2733 = vmatmul.bf16.gmra.mxu0 %v2184
      %v2734 = vpop.f32.mrf.mxu0
      %v2735 = vadd.f32 %v2646, %v2734
      %v2736 = vpop.f32.mrf.mxu0
      %v2737 = vadd.f32 %v2648, %v2736
      %2738 = vmatmul.bf16.gmra.mxu0 %v2196
      %v2739 = vpop.f32.mrf.mxu0
      %v2740 = vadd.f32 %v2651, %v2739
      %v2741 = vpop.f32.mrf.mxu0
      %v2742 = vadd.f32 %v2653, %v2741
      %2743 = vmatmul.bf16.gmra.mxu0 %v2208
      %v2744 = vpop.f32.mrf.mxu0
      %v2745 = vadd.f32 %v2656, %v2744
      %v2746 = vpop.f32.mrf.mxu0
      %v2747 = vadd.f32 %v2658, %v2746
      %2748 = vmatmul.bf16.gmra.mxu0 %v2220
      %v2749 = vpop.f32.mrf.mxu0
      %v2750 = vadd.f32 %v2661, %v2749
      %v2751 = vpop.f32.mrf.mxu0
      %v2752 = vadd.f32 %v2663, %v2751
      %2753 = vmatmul.bf16.gmra.mxu0 %v2232
      %v2754 = vpop.f32.mrf.mxu0
      %v2755 = vadd.f32 %v2666, %v2754
      %v2756 = vpop.f32.mrf.mxu0
      %v2757 = vadd.f32 %v2668, %v2756
      %2758 = vmatmul.bf16.gmra.mxu0 %v2244
      %v2759 = vpop.f32.mrf.mxu0
      %v2760 = vadd.f32 %v2671, %v2759
      %v2761 = vpop.f32.mrf.mxu0
      %v2762 = vadd.f32 %v2673, %v2761
      %2763 = vmatmul.bf16.gmra.mxu0 %v2256
      %v2764 = vpop.f32.mrf.mxu0
      %v2765 = vadd.f32 %v2676, %v2764
      %v2766 = vpop.f32.mrf.mxu0
      %v2767 = vadd.f32 %v2678, %v2766
      %2768 = vmatmul.bf16.gmra.mxu0 %v2268
      %v2769 = vpop.f32.mrf.mxu0
      %v2770 = vadd.f32 %v2681, %v2769
      %v2771 = vpop.f32.mrf.mxu0
      %v2772 = vadd.f32 %v2683, %v2771
      %2773 = vmatmul.bf16.gmra.mxu0 %v2280
      %v2774 = vpop.f32.mrf.mxu0
      %v2775 = vadd.f32 %v2686, %v2774
      %v2776 = vpop.f32.mrf.mxu0
      %v2777 = vadd.f32 %v2688, %v2776
      %2778 = vdwg.mxu0
      %2779 = vmatpush.bf16.msra.mxu0 %v2576
      %2780 = vmatpush.bf16.msra.mxu0 %v2575
      %2781 = vmatpush.bf16.msra.mxu0 %v2574
      %2782 = vmatpush.bf16.msra.mxu0 %v2573
      %2783 = vmatpush.bf16.msra.mxu0 %v2572
      %2784 = vmatpush.bf16.msra.mxu0 %v2571
      %2785 = vmatpush.bf16.msra.mxu0 %v2570
      %2786 = vmatpush.bf16.msra.mxu0 %v2569
      %2787 = vmatmul.bf16.gmra.mxu0 %v2347
      %v2788 = vpop.f32.mrf.mxu0
      %v2789 = vadd.f32 %v2700, %v2788
      %v2790 = vpop.f32.mrf.mxu0
      %v2791 = vadd.f32 %v2702, %v2790
      %2792 = vmatmul.bf16.gmra.mxu0 %v2350
      %v2793 = vpop.f32.mrf.mxu0
      %v2794 = vadd.f32 %v2705, %v2793
      %v2795 = vpop.f32.mrf.mxu0
      %v2796 = vadd.f32 %v2707, %v2795
      %2797 = vmatmul.bf16.gmra.mxu0 %v2353
      %v2798 = vpop.f32.mrf.mxu0
      %v2799 = vadd.f32 %v2710, %v2798
      %v2800 = vpop.f32.mrf.mxu0
      %v2801 = vadd.f32 %v2712, %v2800
      %2802 = vmatmul.bf16.gmra.mxu0 %v2356
      %v2803 = vpop.f32.mrf.mxu0
      %v2804 = vadd.f32 %v2715, %v2803
      %v2805 = vpop.f32.mrf.mxu0
      %v2806 = vadd.f32 %v2717, %v2805
      %2807 = vmatmul.bf16.gmra.mxu0 %v2359
      %v2808 = vpop.f32.mrf.mxu0
      %v2809 = vadd.f32 %v2720, %v2808
      %v2810 = vpop.f32.mrf.mxu0
      %v2811 = vadd.f32 %v2722, %v2810
      %2812 = vmatmul.bf16.gmra.mxu0 %v2362
      %v2813 = vpop.f32.mrf.mxu0
      %v2814 = vadd.f32 %v2725, %v2813
      %v2815 = vpop.f32.mrf.mxu0
      %v2816 = vadd.f32 %v2727, %v2815
      %2817 = vmatmul.bf16.gmra.mxu0 %v2365
      %v2818 = vpop.f32.mrf.mxu0
      %v2819 = vadd.f32 %v2730, %v2818
      %v2820 = vpop.f32.mrf.mxu0
      %v2821 = vadd.f32 %v2732, %v2820
      %2822 = vmatmul.bf16.gmra.mxu0 %v2368
      %v2823 = vpop.f32.mrf.mxu0
      %v2824 = vadd.f32 %v2735, %v2823
      %v2825 = vpop.f32.mrf.mxu0
      %v2826 = vadd.f32 %v2737, %v2825
      %2827 = vmatmul.bf16.gmra.mxu0 %v2371
      %v2828 = vpop.f32.mrf.mxu0
      %v2829 = vadd.f32 %v2740, %v2828
      %v2830 = vpop.f32.mrf.mxu0
      %v2831 = vadd.f32 %v2742, %v2830
      %2832 = vmatmul.bf16.gmra.mxu0 %v2374
      %v2833 = vpop.f32.mrf.mxu0
      %v2834 = vadd.f32 %v2745, %v2833
      %v2835 = vpop.f32.mrf.mxu0
      %v2836 = vadd.f32 %v2747, %v2835
      %2837 = vmatmul.bf16.gmra.mxu0 %v2377
      %v2838 = vpop.f32.mrf.mxu0
      %v2839 = vadd.f32 %v2750, %v2838
      %v2840 = vpop.f32.mrf.mxu0
      %v2841 = vadd.f32 %v2752, %v2840
      %2842 = vmatmul.bf16.gmra.mxu0 %v2380
      %v2843 = vpop.f32.mrf.mxu0
      %v2844 = vadd.f32 %v2755, %v2843
      %v2845 = vpop.f32.mrf.mxu0
      %v2846 = vadd.f32 %v2757, %v2845
      %2847 = vmatmul.bf16.gmra.mxu0 %v2383
      %v2848 = vpop.f32.mrf.mxu0
      %v2849 = vadd.f32 %v2760, %v2848
      %v2850 = vpop.f32.mrf.mxu0
      %v2851 = vadd.f32 %v2762, %v2850
      %2852 = vmatmul.bf16.gmra.mxu0 %v2386
      %v2853 = vpop.f32.mrf.mxu0
      %v2854 = vadd.f32 %v2765, %v2853
      %v2855 = vpop.f32.mrf.mxu0
      %v2856 = vadd.f32 %v2767, %v2855
      %2857 = vmatmul.bf16.gmra.mxu0 %v2389
      %v2858 = vpop.f32.mrf.mxu0
      %v2859 = vadd.f32 %v2770, %v2858
      %v2860 = vpop.f32.mrf.mxu0
      %v2861 = vadd.f32 %v2772, %v2860
      %2862 = vmatmul.bf16.gmra.mxu0 %v2392
      %v2863 = vpop.f32.mrf.mxu0
      %v2864 = vadd.f32 %v2775, %v2863
      %v2865 = vpop.f32.mrf.mxu0
      %v2866 = vadd.f32 %v2777, %v2865
      %2867 = vdwg.mxu0
      %v2916 = vunpack.c.l.b16 %v1833
      %v2917 = vunpack.c.l.b16 %v1834
      %v2918 = vunpack.c.l.b16 %v1835
      %v2919 = vunpack.c.l.b16 %v1836
      %v2920 = vunpack.c.l.b16 %v1837
      %v2921 = vunpack.c.l.b16 %v1838
      %v2922 = vunpack.c.l.b16 %v1839
      %v2923 = vunpack.c.l.b16 %v1840
      %v2924 = vunpack.c.l.b16 %v1841
      %v2925 = vunpack.c.l.b16 %v1842
      %v2926 = vunpack.c.l.b16 %v1843
      %v2927 = vunpack.c.l.b16 %v1844
      %v2928 = vunpack.c.l.b16 %v1845
      %v2929 = vunpack.c.l.b16 %v1846
      %v2930 = vunpack.c.l.b16 %v1847
      %v2931 = vunpack.c.l.b16 %v1848
      %v2932 = vunpack.c.l.b16 %v1849
      %v2933 = vunpack.c.l.b16 %v1850
      %v2934 = vunpack.c.l.b16 %v1851
      %v2935 = vunpack.c.l.b16 %v1852
      %v2936 = vunpack.c.l.b16 %v1853
      %v2937 = vunpack.c.l.b16 %v1854
      %v2938 = vunpack.c.l.b16 %v1855
      %v2939 = vunpack.c.l.b16 %v1856
      %v2940 = vunpack.c.l.b16 %v1857
      %v2941 = vunpack.c.l.b16 %v1858
      %v2942 = vunpack.c.l.b16 %v1859
      %v2943 = vunpack.c.l.b16 %v1860
      %v2944 = vunpack.c.l.b16 %v1861
      %v2945 = vunpack.c.l.b16 %v1862
      %v2946 = vunpack.c.l.b16 %v1863
      %v2947 = vunpack.c.l.b16 %v1864
      %v2948 = vunpack.c.l.b16 %v1865
      %v2949 = vunpack.c.l.b16 %v1866
      %v2950 = vunpack.c.l.b16 %v1867
      %v2951 = vunpack.c.l.b16 %v1868
      %v2952 = vunpack.c.l.b16 %v1869
      %v2953 = vunpack.c.l.b16 %v1870
      %v2954 = vunpack.c.l.b16 %v1871
      %v2955 = vunpack.c.l.b16 %v1872
      %v2956 = vunpack.c.l.b16 %v1873
      %v2957 = vunpack.c.l.b16 %v1874
      %v2958 = vunpack.c.l.b16 %v1875
      %v2959 = vunpack.c.l.b16 %v1876
      %v2960 = vunpack.c.l.b16 %v1877
      %v2961 = vunpack.c.l.b16 %v1878
      %v2962 = vunpack.c.l.b16 %v1879
      %v2963 = vunpack.c.l.b16 %v1880
      %v2964 = vpack.c.b16 %v2917, %v2916
      %v2965 = vpack.c.b16 %v2919, %v2918
      %v2966 = vpack.c.b16 %v2921, %v2920
      %v2967 = vpack.c.b16 %v2923, %v2922
      %v2968 = vpack.c.b16 %v2925, %v2924
      %v2969 = vpack.c.b16 %v2927, %v2926
      %v2970 = vpack.c.b16 %v2929, %v2928
      %v2971 = vpack.c.b16 %v2931, %v2930
      %v2972 = vpack.c.b16 %v2933, %v2932
      %v2973 = vpack.c.b16 %v2935, %v2934
      %v2974 = vpack.c.b16 %v2937, %v2936
      %v2975 = vpack.c.b16 %v2939, %v2938
      %v2976 = vpack.c.b16 %v2941, %v2940
      %v2977 = vpack.c.b16 %v2943, %v2942
      %v2978 = vpack.c.b16 %v2945, %v2944
      %v2979 = vpack.c.b16 %v2947, %v2946
      %v2980 = vpack.c.b16 %v2949, %v2948
      %v2981 = vpack.c.b16 %v2951, %v2950
      %v2982 = vpack.c.b16 %v2953, %v2952
      %v2983 = vpack.c.b16 %v2955, %v2954
      %v2984 = vpack.c.b16 %v2957, %v2956
      %v2985 = vpack.c.b16 %v2959, %v2958
      %v2986 = vpack.c.b16 %v2961, %v2960
      %v2987 = vpack.c.b16 %v2963, %v2962
      %3012 = vmatpush.bf16.msra.mxu0 %v2971
      %3013 = vmatpush.bf16.msra.mxu0 %v2970
      %3014 = vmatpush.bf16.msra.mxu0 %v2969
      %3015 = vmatpush.bf16.msra.mxu0 %v2968
      %3016 = vmatpush.bf16.msra.mxu0 %v2967
      %3017 = vmatpush.bf16.msra.mxu0 %v2966
      %3018 = vmatpush.bf16.msra.mxu0 %v2965
      %3019 = vmatpush.bf16.msra.mxu0 %v2964
      %3020 = vmatmul.bf16.gmra.mxu0 %v1431
      %v3021 = vpop.f32.mrf.mxu0
      %v3022 = vadd.f32 %v2789, %v3021
      %v3023 = vpop.f32.mrf.mxu0
      %v3024 = vadd.f32 %v2791, %v3023
      %3025 = vmatmul.bf16.gmra.mxu0 %v1432
      %v3026 = vpop.f32.mrf.mxu0
      %v3027 = vadd.f32 %v2794, %v3026
      %v3028 = vpop.f32.mrf.mxu0
      %v3029 = vadd.f32 %v2796, %v3028
      %3030 = vmatmul.bf16.gmra.mxu0 %v1433
      %v3031 = vpop.f32.mrf.mxu0
      %v3032 = vadd.f32 %v2799, %v3031
      %v3033 = vpop.f32.mrf.mxu0
      %v3034 = vadd.f32 %v2801, %v3033
      %3035 = vmatmul.bf16.gmra.mxu0 %v1434
      %v3036 = vpop.f32.mrf.mxu0
      %v3037 = vadd.f32 %v2804, %v3036
      %v3038 = vpop.f32.mrf.mxu0
      %v3039 = vadd.f32 %v2806, %v3038
      %3040 = vmatmul.bf16.gmra.mxu0 %v1435
      %v3041 = vpop.f32.mrf.mxu0
      %v3042 = vadd.f32 %v2809, %v3041
      %v3043 = vpop.f32.mrf.mxu0
      %v3044 = vadd.f32 %v2811, %v3043
      %3045 = vmatmul.bf16.gmra.mxu0 %v1436
      %v3046 = vpop.f32.mrf.mxu0
      %v3047 = vadd.f32 %v2814, %v3046
      %v3048 = vpop.f32.mrf.mxu0
      %v3049 = vadd.f32 %v2816, %v3048
      %3050 = vmatmul.bf16.gmra.mxu0 %v1437
      %v3051 = vpop.f32.mrf.mxu0
      %v3052 = vadd.f32 %v2819, %v3051
      %v3053 = vpop.f32.mrf.mxu0
      %v3054 = vadd.f32 %v2821, %v3053
      %3055 = vmatmul.bf16.gmra.mxu0 %v1438
      %v3056 = vpop.f32.mrf.mxu0
      %v3057 = vadd.f32 %v2824, %v3056
      %v3058 = vpop.f32.mrf.mxu0
      %v3059 = vadd.f32 %v2826, %v3058
      %3060 = vmatmul.bf16.gmra.mxu0 %v1439
      %v3061 = vpop.f32.mrf.mxu0
      %v3062 = vadd.f32 %v2829, %v3061
      %v3063 = vpop.f32.mrf.mxu0
      %v3064 = vadd.f32 %v2831, %v3063
      %3065 = vmatmul.bf16.gmra.mxu0 %v1440
      %v3066 = vpop.f32.mrf.mxu0
      %v3067 = vadd.f32 %v2834, %v3066
      %v3068 = vpop.f32.mrf.mxu0
      %v3069 = vadd.f32 %v2836, %v3068
      %3070 = vmatmul.bf16.gmra.mxu0 %v1441
      %v3071 = vpop.f32.mrf.mxu0
      %v3072 = vadd.f32 %v2839, %v3071
      %v3073 = vpop.f32.mrf.mxu0
      %v3074 = vadd.f32 %v2841, %v3073
      %3075 = vmatmul.bf16.gmra.mxu0 %v1442
      %v3076 = vpop.f32.mrf.mxu0
      %v3077 = vadd.f32 %v2844, %v3076
      %v3078 = vpop.f32.mrf.mxu0
      %v3079 = vadd.f32 %v2846, %v3078
      %3080 = vmatmul.bf16.gmra.mxu0 %v1443
      %v3081 = vpop.f32.mrf.mxu0
      %v3082 = vadd.f32 %v2849, %v3081
      %v3083 = vpop.f32.mrf.mxu0
      %v3084 = vadd.f32 %v2851, %v3083
      %3085 = vmatmul.bf16.gmra.mxu0 %v1444
      %v3086 = vpop.f32.mrf.mxu0
      %v3087 = vadd.f32 %v2854, %v3086
      %v3088 = vpop.f32.mrf.mxu0
      %v3089 = vadd.f32 %v2856, %v3088
      %3090 = vmatmul.bf16.gmra.mxu0 %v1445
      %v3091 = vpop.f32.mrf.mxu0
      %v3092 = vadd.f32 %v2859, %v3091
      %v3093 = vpop.f32.mrf.mxu0
      %v3094 = vadd.f32 %v2861, %v3093
      %3095 = vmatmul.bf16.gmra.mxu0 %v1446
      %v3096 = vpop.f32.mrf.mxu0
      %v3097 = vadd.f32 %v2864, %v3096
      %v3098 = vpop.f32.mrf.mxu0
      %v3099 = vadd.f32 %v2866, %v3098
      %3100 = vdwg.mxu0
      %3101 = vmatpush.bf16.msra.mxu0 %v2979
      %3102 = vmatpush.bf16.msra.mxu0 %v2978
      %3103 = vmatpush.bf16.msra.mxu0 %v2977
      %3104 = vmatpush.bf16.msra.mxu0 %v2976
      %3105 = vmatpush.bf16.msra.mxu0 %v2975
      %3106 = vmatpush.bf16.msra.mxu0 %v2974
      %3107 = vmatpush.bf16.msra.mxu0 %v2973
      %3108 = vmatpush.bf16.msra.mxu0 %v2972
      %3109 = vmatmul.bf16.gmra.mxu0 %v1523
      %v3110 = vpop.f32.mrf.mxu0
      %v3111 = vadd.f32 %v3022, %v3110
      %v3112 = vpop.f32.mrf.mxu0
      %v3113 = vadd.f32 %v3024, %v3112
      %3114 = vmatmul.bf16.gmra.mxu0 %v1535
      %v3115 = vpop.f32.mrf.mxu0
      %v3116 = vadd.f32 %v3027, %v3115
      %v3117 = vpop.f32.mrf.mxu0
      %v3118 = vadd.f32 %v3029, %v3117
      %3119 = vmatmul.bf16.gmra.mxu0 %v1547
      %v3120 = vpop.f32.mrf.mxu0
      %v3121 = vadd.f32 %v3032, %v3120
      %v3122 = vpop.f32.mrf.mxu0
      %v3123 = vadd.f32 %v3034, %v3122
      %3124 = vmatmul.bf16.gmra.mxu0 %v1559
      %v3125 = vpop.f32.mrf.mxu0
      %v3126 = vadd.f32 %v3037, %v3125
      %v3127 = vpop.f32.mrf.mxu0
      %v3128 = vadd.f32 %v3039, %v3127
      %3129 = vmatmul.bf16.gmra.mxu0 %v1571
      %v3130 = vpop.f32.mrf.mxu0
      %v3131 = vadd.f32 %v3042, %v3130
      %v3132 = vpop.f32.mrf.mxu0
      %v3133 = vadd.f32 %v3044, %v3132
      %3134 = vmatmul.bf16.gmra.mxu0 %v1583
      %v3135 = vpop.f32.mrf.mxu0
      %v3136 = vadd.f32 %v3047, %v3135
      %v3137 = vpop.f32.mrf.mxu0
      %v3138 = vadd.f32 %v3049, %v3137
      %3139 = vmatmul.bf16.gmra.mxu0 %v1595
      %v3140 = vpop.f32.mrf.mxu0
      %v3141 = vadd.f32 %v3052, %v3140
      %v3142 = vpop.f32.mrf.mxu0
      %v3143 = vadd.f32 %v3054, %v3142
      %3144 = vmatmul.bf16.gmra.mxu0 %v1607
      %v3145 = vpop.f32.mrf.mxu0
      %v3146 = vadd.f32 %v3057, %v3145
      %v3147 = vpop.f32.mrf.mxu0
      %v3148 = vadd.f32 %v3059, %v3147
      %3149 = vmatmul.bf16.gmra.mxu0 %v1619
      %v3150 = vpop.f32.mrf.mxu0
      %v3151 = vadd.f32 %v3062, %v3150
      %v3152 = vpop.f32.mrf.mxu0
      %v3153 = vadd.f32 %v3064, %v3152
      %3154 = vmatmul.bf16.gmra.mxu0 %v1631
      %v3155 = vpop.f32.mrf.mxu0
      %v3156 = vadd.f32 %v3067, %v3155
      %v3157 = vpop.f32.mrf.mxu0
      %v3158 = vadd.f32 %v3069, %v3157
      %3159 = vmatmul.bf16.gmra.mxu0 %v1643
      %v3160 = vpop.f32.mrf.mxu0
      %v3161 = vadd.f32 %v3072, %v3160
      %v3162 = vpop.f32.mrf.mxu0
      %v3163 = vadd.f32 %v3074, %v3162
      %3164 = vmatmul.bf16.gmra.mxu0 %v1655
      %v3165 = vpop.f32.mrf.mxu0
      %v3166 = vadd.f32 %v3077, %v3165
      %v3167 = vpop.f32.mrf.mxu0
      %v3168 = vadd.f32 %v3079, %v3167
      %3169 = vmatmul.bf16.gmra.mxu0 %v1667
      %v3170 = vpop.f32.mrf.mxu0
      %v3171 = vadd.f32 %v3082, %v3170
      %v3172 = vpop.f32.mrf.mxu0
      %v3173 = vadd.f32 %v3084, %v3172
      %3174 = vmatmul.bf16.gmra.mxu0 %v1679
      %v3175 = vpop.f32.mrf.mxu0
      %v3176 = vadd.f32 %v3087, %v3175
      %v3177 = vpop.f32.mrf.mxu0
      %v3178 = vadd.f32 %v3089, %v3177
      %3179 = vmatmul.bf16.gmra.mxu0 %v1691
      %v3180 = vpop.f32.mrf.mxu0
      %v3181 = vadd.f32 %v3092, %v3180
      %v3182 = vpop.f32.mrf.mxu0
      %v3183 = vadd.f32 %v3094, %v3182
      %3184 = vmatmul.bf16.gmra.mxu0 %v1703
      %v3185 = vpop.f32.mrf.mxu0
      %v3186 = vadd.f32 %v3097, %v3185
      %v3187 = vpop.f32.mrf.mxu0
      %v3188 = vadd.f32 %v3099, %v3187
      %3189 = vdwg.mxu0
      %3190 = vmatpush.bf16.msra.mxu0 %v2987
      %3191 = vmatpush.bf16.msra.mxu0 %v2986
      %3192 = vmatpush.bf16.msra.mxu0 %v2985
      %3193 = vmatpush.bf16.msra.mxu0 %v2984
      %3194 = vmatpush.bf16.msra.mxu0 %v2983
      %3195 = vmatpush.bf16.msra.mxu0 %v2982
      %3196 = vmatpush.bf16.msra.mxu0 %v2981
      %3197 = vmatpush.bf16.msra.mxu0 %v2980
      %3198 = vmatmul.bf16.gmra.mxu0 %v1771
      %v3199 = vpop.f32.mrf.mxu0
      %v3200 = vadd.f32 %v3111, %v3199
      %v3201 = vpop.f32.mrf.mxu0
      %v3202 = vadd.f32 %v3113, %v3201
      %3203 = vmatmul.bf16.gmra.mxu0 %v1774
      %v3204 = vpop.f32.mrf.mxu0
      %v3205 = vadd.f32 %v3116, %v3204
      %v3206 = vpop.f32.mrf.mxu0
      %v3207 = vadd.f32 %v3118, %v3206
      %3208 = vmatmul.bf16.gmra.mxu0 %v1777
      %v3209 = vpop.f32.mrf.mxu0
      %v3210 = vadd.f32 %v3121, %v3209
      %v3211 = vpop.f32.mrf.mxu0
      %v3212 = vadd.f32 %v3123, %v3211
      %3213 = vmatmul.bf16.gmra.mxu0 %v1780
      %v3214 = vpop.f32.mrf.mxu0
      %v3215 = vadd.f32 %v3126, %v3214
      %v3216 = vpop.f32.mrf.mxu0
      %v3217 = vadd.f32 %v3128, %v3216
      %3218 = vmatmul.bf16.gmra.mxu0 %v1783
      %v3219 = vpop.f32.mrf.mxu0
      %v3220 = vadd.f32 %v3131, %v3219
      %v3221 = vpop.f32.mrf.mxu0
      %v3222 = vadd.f32 %v3133, %v3221
      %3223 = vmatmul.bf16.gmra.mxu0 %v1786
      %v3224 = vpop.f32.mrf.mxu0
      %v3225 = vadd.f32 %v3136, %v3224
      %v3226 = vpop.f32.mrf.mxu0
      %v3227 = vadd.f32 %v3138, %v3226
      %3228 = vmatmul.bf16.gmra.mxu0 %v1789
      %v3229 = vpop.f32.mrf.mxu0
      %v3230 = vadd.f32 %v3141, %v3229
      %v3231 = vpop.f32.mrf.mxu0
      %v3232 = vadd.f32 %v3143, %v3231
      %3233 = vmatmul.bf16.gmra.mxu0 %v1792
      %v3234 = vpop.f32.mrf.mxu0
      %v3235 = vadd.f32 %v3146, %v3234
      %v3236 = vpop.f32.mrf.mxu0
      %v3237 = vadd.f32 %v3148, %v3236
      %3238 = vmatmul.bf16.gmra.mxu0 %v1795
      %v3239 = vpop.f32.mrf.mxu0
      %v3240 = vadd.f32 %v3151, %v3239
      %v3241 = vpop.f32.mrf.mxu0
      %v3242 = vadd.f32 %v3153, %v3241
      %3243 = vmatmul.bf16.gmra.mxu0 %v1798
      %v3244 = vpop.f32.mrf.mxu0
      %v3245 = vadd.f32 %v3156, %v3244
      %v3246 = vpop.f32.mrf.mxu0
      %v3247 = vadd.f32 %v3158, %v3246
      %3248 = vmatmul.bf16.gmra.mxu0 %v1801
      %v3249 = vpop.f32.mrf.mxu0
      %v3250 = vadd.f32 %v3161, %v3249
      %v3251 = vpop.f32.mrf.mxu0
      %v3252 = vadd.f32 %v3163, %v3251
      %3253 = vmatmul.bf16.gmra.mxu0 %v1804
      %v3254 = vpop.f32.mrf.mxu0
      %v3255 = vadd.f32 %v3166, %v3254
      %v3256 = vpop.f32.mrf.mxu0
      %v3257 = vadd.f32 %v3168, %v3256
      %3258 = vmatmul.bf16.gmra.mxu0 %v1807
      %v3259 = vpop.f32.mrf.mxu0
      %v3260 = vadd.f32 %v3171, %v3259
      %v3261 = vpop.f32.mrf.mxu0
      %v3262 = vadd.f32 %v3173, %v3261
      %3263 = vmatmul.bf16.gmra.mxu0 %v1810
      %v3264 = vpop.f32.mrf.mxu0
      %v3265 = vadd.f32 %v3176, %v3264
      %v3266 = vpop.f32.mrf.mxu0
      %v3267 = vadd.f32 %v3178, %v3266
      %3268 = vmatmul.bf16.gmra.mxu0 %v1813
      %v3269 = vpop.f32.mrf.mxu0
      %v3270 = vadd.f32 %v3181, %v3269
      %v3271 = vpop.f32.mrf.mxu0
      %v3272 = vadd.f32 %v3183, %v3271
      %3273 = vmatmul.bf16.gmra.mxu0 %v1816
      %v3274 = vpop.f32.mrf.mxu0
      %v3275 = vadd.f32 %v3186, %v3274
      %v3276 = vpop.f32.mrf.mxu0
      %v3277 = vadd.f32 %v3188, %v3276
      %3278 = vdwg.mxu0
      %s3279 = scalar_lea.vmem [#allocation2], 24
      %v3280 = vld [vmem:[%s3279] sm:$0xf]
      %v3281 = vld [vmem:[%s3279 + $0x4] sm:$0xf]
      %v3282 = vld [vmem:[%s3279 + $0xc] sm:$0xf]
      %v3283 = vld [vmem:[%s3279 + $0x10] sm:$0xf]
      %v3284 = vld [vmem:[%s3279 + $0x18] sm:$0xf]
      %v3285 = vld [vmem:[%s3279 + $0x1c] sm:$0xf]
      %v3286 = vld [vmem:[%s3279 + $0x24] sm:$0xf]
      %v3287 = vld [vmem:[%s3279 + $0x28] sm:$0xf]
      %v3288 = vld [vmem:[%s3279 + $0x30] sm:$0xf]
      %v3289 = vld [vmem:[%s3279 + $0x34] sm:$0xf]
      %v3290 = vld [vmem:[%s3279 + $0x3c] sm:$0xf]
      %v3291 = vld [vmem:[%s3279 + $0x40] sm:$0xf]
      %v3292 = vld [vmem:[%s3279 + $0x48] sm:$0xf]
      %v3293 = vld [vmem:[%s3279 + $0x4c] sm:$0xf]
      %v3294 = vld [vmem:[%s3279 + $0x54] sm:$0xf]
      %v3295 = vld [vmem:[%s3279 + $0x58] sm:$0xf]
      %v3296 = vld [vmem:[%s3279 + $0x60] sm:$0xf]
      %v3297 = vld [vmem:[%s3279 + $0x64] sm:$0xf]
      %v3298 = vld [vmem:[%s3279 + $0x6c] sm:$0xf]
      %v3299 = vld [vmem:[%s3279 + $0x70] sm:$0xf]
      %v3300 = vld [vmem:[%s3279 + $0x78] sm:$0xf]
      %v3301 = vld [vmem:[%s3279 + $0x7c] sm:$0xf]
      %v3302 = vld [vmem:[%s3279 + $0x84] sm:$0xf]
      %v3303 = vld [vmem:[%s3279 + $0x88] sm:$0xf]
      %v3304 = vld [vmem:[%s3279 + $0x90] sm:$0xf]
      %v3305 = vld [vmem:[%s3279 + $0x94] sm:$0xf]
      %v3306 = vld [vmem:[%s3279 + $0x9c] sm:$0xf]
      %v3307 = vld [vmem:[%s3279 + $0xa0] sm:$0xf]
      %v3308 = vld [vmem:[%s3279 + $0xa8] sm:$0xf]
      %v3309 = vld [vmem:[%s3279 + $0xac] sm:$0xf]
      %v3310 = vld [vmem:[%s3279 + $0xb4] sm:$0xf]
      %v3311 = vld [vmem:[%s3279 + $0xb8] sm:$0xf]
      %v3312 = vld [vmem:[%s3279 + $0x8] sm:$0x1]
      %v3313 = vld [vmem:[%s3279 + $0x14] sm:$0x1]
      %v3314 = vld [vmem:[%s3279 + $0x20] sm:$0x1]
      %v3315 = vld [vmem:[%s3279 + $0x2c] sm:$0x1]
      %v3316 = vld [vmem:[%s3279 + $0x38] sm:$0x1]
      %v3317 = vld [vmem:[%s3279 + $0x44] sm:$0x1]
      %v3318 = vld [vmem:[%s3279 + $0x50] sm:$0x1]
      %v3319 = vld [vmem:[%s3279 + $0x5c] sm:$0x1]
      %v3320 = vld [vmem:[%s3279 + $0x68] sm:$0x1]
      %v3321 = vld [vmem:[%s3279 + $0x74] sm:$0x1]
      %v3322 = vld [vmem:[%s3279 + $0x80] sm:$0x1]
      %v3323 = vld [vmem:[%s3279 + $0x8c] sm:$0x1]
      %v3324 = vld [vmem:[%s3279 + $0x98] sm:$0x1]
      %v3325 = vld [vmem:[%s3279 + $0xa4] sm:$0x1]
      %v3326 = vld [vmem:[%s3279 + $0xb0] sm:$0x1]
      %v3327 = vld [vmem:[%s3279 + $0xbc] sm:$0x1]
      %v3328 = vld [vmem:[%s3279] sm:$0xe]
      %v3329 = vld [vmem:[%s3279 + $0xc] sm:$0xe]
      %v3330 = vld [vmem:[%s3279 + $0x18] sm:$0xe]
      %v3331 = vld [vmem:[%s3279 + $0x24] sm:$0xe]
      %v3332 = vld [vmem:[%s3279 + $0x30] sm:$0xe]
      %v3333 = vld [vmem:[%s3279 + $0x3c] sm:$0xe]
      %v3334 = vld [vmem:[%s3279 + $0x48] sm:$0xe]
      %v3335 = vld [vmem:[%s3279 + $0x54] sm:$0xe]
      %v3336 = vld [vmem:[%s3279 + $0x60] sm:$0xe]
      %v3337 = vld [vmem:[%s3279 + $0x6c] sm:$0xe]
      %v3338 = vld [vmem:[%s3279 + $0x78] sm:$0xe]
      %v3339 = vld [vmem:[%s3279 + $0x84] sm:$0xe]
      %v3340 = vld [vmem:[%s3279 + $0x90] sm:$0xe]
      %v3341 = vld [vmem:[%s3279 + $0x9c] sm:$0xe]
      %v3342 = vld [vmem:[%s3279 + $0xa8] sm:$0xe]
      %v3343 = vld [vmem:[%s3279 + $0xb4] sm:$0xe]
      %v3376 = vunpack.c.l.b16 %v3280
      %v3377 = vunpack.c.l.b16 %v3281
      %v3378 = vunpack.c.l.b16 %v3282
      %v3379 = vunpack.c.l.b16 %v3283
      %v3380 = vunpack.c.l.b16 %v3284
      %v3381 = vunpack.c.l.b16 %v3285
      %v3382 = vunpack.c.l.b16 %v3286
      %v3383 = vunpack.c.l.b16 %v3287
      %v3384 = vunpack.c.l.b16 %v3288
      %v3385 = vunpack.c.l.b16 %v3289
      %v3386 = vunpack.c.l.b16 %v3290
      %v3387 = vunpack.c.l.b16 %v3291
      %v3388 = vunpack.c.l.b16 %v3292
      %v3389 = vunpack.c.l.b16 %v3293
      %v3390 = vunpack.c.l.b16 %v3294
      %v3391 = vunpack.c.l.b16 %v3295
      %v3392 = vunpack.c.l.b16 %v3296
      %v3393 = vunpack.c.l.b16 %v3297
      %v3394 = vunpack.c.l.b16 %v3298
      %v3395 = vunpack.c.l.b16 %v3299
      %v3396 = vunpack.c.l.b16 %v3300
      %v3397 = vunpack.c.l.b16 %v3301
      %v3398 = vunpack.c.l.b16 %v3302
      %v3399 = vunpack.c.l.b16 %v3303
      %v3400 = vunpack.c.l.b16 %v3304
      %v3401 = vunpack.c.l.b16 %v3305
      %v3402 = vunpack.c.l.b16 %v3306
      %v3403 = vunpack.c.l.b16 %v3307
      %v3404 = vunpack.c.l.b16 %v3308
      %v3405 = vunpack.c.l.b16 %v3309
      %v3406 = vunpack.c.l.b16 %v3310
      %v3407 = vunpack.c.l.b16 %v3311
      %v3408 = vpack.c.b16 %v3377, %v3376
      %v3409 = vpack.c.b16 %v3379, %v3378
      %v3410 = vpack.c.b16 %v3381, %v3380
      %v3411 = vpack.c.b16 %v3383, %v3382
      %v3412 = vpack.c.b16 %v3385, %v3384
      %v3413 = vpack.c.b16 %v3387, %v3386
      %v3414 = vpack.c.b16 %v3389, %v3388
      %v3415 = vpack.c.b16 %v3391, %v3390
      %v3416 = vpack.c.b16 %v3393, %v3392
      %v3417 = vpack.c.b16 %v3395, %v3394
      %v3418 = vpack.c.b16 %v3397, %v3396
      %v3419 = vpack.c.b16 %v3399, %v3398
      %v3420 = vpack.c.b16 %v3401, %v3400
      %v3421 = vpack.c.b16 %v3403, %v3402
      %v3422 = vpack.c.b16 %v3405, %v3404
      %v3423 = vpack.c.b16 %v3407, %v3406
      %v3456 = vunpack.c.l.b16 %v3312
      %v3457 = vunpack.c.l.b16 %v3313
      %v3458 = vunpack.c.l.b16 %v3314
      %v3459 = vunpack.c.l.b16 %v3315
      %v3460 = vunpack.c.l.b16 %v3316
      %v3461 = vunpack.c.l.b16 %v3317
      %v3462 = vunpack.c.l.b16 %v3318
      %v3463 = vunpack.c.l.b16 %v3319
      %v3464 = vunpack.c.l.b16 %v3320
      %v3465 = vunpack.c.l.b16 %v3321
      %v3466 = vunpack.c.l.b16 %v3322
      %v3467 = vunpack.c.l.b16 %v3323
      %v3468 = vunpack.c.l.b16 %v3324
      %v3469 = vunpack.c.l.b16 %v3325
      %v3470 = vunpack.c.l.b16 %v3326
      %v3471 = vunpack.c.l.b16 %v3327
      %v3472 = vpack.c.b16 %v3456, %v3456
      %v3473 = vpack.c.b16 %v3457, %v3457
      %v3474 = vpack.c.b16 %v3458, %v3458
      %v3475 = vpack.c.b16 %v3459, %v3459
      %v3476 = vpack.c.b16 %v3460, %v3460
      %v3477 = vpack.c.b16 %v3461, %v3461
      %v3478 = vpack.c.b16 %v3462, %v3462
      %v3479 = vpack.c.b16 %v3463, %v3463
      %v3480 = vpack.c.b16 %v3464, %v3464
      %v3481 = vpack.c.b16 %v3465, %v3465
      %v3482 = vpack.c.b16 %v3466, %v3466
      %v3483 = vpack.c.b16 %v3467, %v3467
      %v3484 = vpack.c.b16 %v3468, %v3468
      %v3485 = vpack.c.b16 %v3469, %v3469
      %v3486 = vpack.c.b16 %v3470, %v3470
      %v3487 = vpack.c.b16 %v3471, %v3471
      %v3489 = vshrl.u32 %v3408, 16
      %v3491 = vshll.u32 %v3408, 16
      %v3493 = vrot.slane %v3491, 1
      %v3494 = vor.u32 %v3489, %v3493
      %v3496 = vshll.u32 %v3472, 16
      %v3498 = vrot.slane %v3496, 1
      %v3499 = vsel %vm1511, %v3494, %v3498
      %v3501 = vshrl.u32 %v3409, 16
      %v3503 = vshll.u32 %v3409, 16
      %v3505 = vrot.slane %v3503, 1
      %v3506 = vor.u32 %v3501, %v3505
      %v3508 = vshll.u32 %v3473, 16
      %v3510 = vrot.slane %v3508, 1
      %v3511 = vsel %vm1511, %v3506, %v3510
      %v3513 = vshrl.u32 %v3410, 16
      %v3515 = vshll.u32 %v3410, 16
      %v3517 = vrot.slane %v3515, 1
      %v3518 = vor.u32 %v3513, %v3517
      %v3520 = vshll.u32 %v3474, 16
      %v3522 = vrot.slane %v3520, 1
      %v3523 = vsel %vm1511, %v3518, %v3522
      %v3525 = vshrl.u32 %v3411, 16
      %v3527 = vshll.u32 %v3411, 16
      %v3529 = vrot.slane %v3527, 1
      %v3530 = vor.u32 %v3525, %v3529
      %v3532 = vshll.u32 %v3475, 16
      %v3534 = vrot.slane %v3532, 1
      %v3535 = vsel %vm1511, %v3530, %v3534
      %v3537 = vshrl.u32 %v3412, 16
      %v3539 = vshll.u32 %v3412, 16
      %v3541 = vrot.slane %v3539, 1
      %v3542 = vor.u32 %v3537, %v3541
      %v3544 = vshll.u32 %v3476, 16
      %v3546 = vrot.slane %v3544, 1
      %v3547 = vsel %vm1511, %v3542, %v3546
      %v3549 = vshrl.u32 %v3413, 16
      %v3551 = vshll.u32 %v3413, 16
      %v3553 = vrot.slane %v3551, 1
      %v3554 = vor.u32 %v3549, %v3553
      %v3556 = vshll.u32 %v3477, 16
      %v3558 = vrot.slane %v3556, 1
      %v3559 = vsel %vm1511, %v3554, %v3558
      %v3561 = vshrl.u32 %v3414, 16
      %v3563 = vshll.u32 %v3414, 16
      %v3565 = vrot.slane %v3563, 1
      %v3566 = vor.u32 %v3561, %v3565
      %v3568 = vshll.u32 %v3478, 16
      %v3570 = vrot.slane %v3568, 1
      %v3571 = vsel %vm1511, %v3566, %v3570
      %v3573 = vshrl.u32 %v3415, 16
      %v3575 = vshll.u32 %v3415, 16
      %v3577 = vrot.slane %v3575, 1
      %v3578 = vor.u32 %v3573, %v3577
      %v3580 = vshll.u32 %v3479, 16
      %v3582 = vrot.slane %v3580, 1
      %v3583 = vsel %vm1511, %v3578, %v3582
      %v3585 = vshrl.u32 %v3416, 16
      %v3587 = vshll.u32 %v3416, 16
      %v3589 = vrot.slane %v3587, 1
      %v3590 = vor.u32 %v3585, %v3589
      %v3592 = vshll.u32 %v3480, 16
      %v3594 = vrot.slane %v3592, 1
      %v3595 = vsel %vm1511, %v3590, %v3594
      %v3597 = vshrl.u32 %v3417, 16
      %v3599 = vshll.u32 %v3417, 16
      %v3601 = vrot.slane %v3599, 1
      %v3602 = vor.u32 %v3597, %v3601
      %v3604 = vshll.u32 %v3481, 16
      %v3606 = vrot.slane %v3604, 1
      %v3607 = vsel %vm1511, %v3602, %v3606
      %v3609 = vshrl.u32 %v3418, 16
      %v3611 = vshll.u32 %v3418, 16
      %v3613 = vrot.slane %v3611, 1
      %v3614 = vor.u32 %v3609, %v3613
      %v3616 = vshll.u32 %v3482, 16
      %v3618 = vrot.slane %v3616, 1
      %v3619 = vsel %vm1511, %v3614, %v3618
      %v3621 = vshrl.u32 %v3419, 16
      %v3623 = vshll.u32 %v3419, 16
      %v3625 = vrot.slane %v3623, 1
      %v3626 = vor.u32 %v3621, %v3625
      %v3628 = vshll.u32 %v3483, 16
      %v3630 = vrot.slane %v3628, 1
      %v3631 = vsel %vm1511, %v3626, %v3630
      %v3633 = vshrl.u32 %v3420, 16
      %v3635 = vshll.u32 %v3420, 16
      %v3637 = vrot.slane %v3635, 1
      %v3638 = vor.u32 %v3633, %v3637
      %v3640 = vshll.u32 %v3484, 16
      %v3642 = vrot.slane %v3640, 1
      %v3643 = vsel %vm1511, %v3638, %v3642
      %v3645 = vshrl.u32 %v3421, 16
      %v3647 = vshll.u32 %v3421, 16
      %v3649 = vrot.slane %v3647, 1
      %v3650 = vor.u32 %v3645, %v3649
      %v3652 = vshll.u32 %v3485, 16
      %v3654 = vrot.slane %v3652, 1
      %v3655 = vsel %vm1511, %v3650, %v3654
      %v3657 = vshrl.u32 %v3422, 16
      %v3659 = vshll.u32 %v3422, 16
      %v3661 = vrot.slane %v3659, 1
      %v3662 = vor.u32 %v3657, %v3661
      %v3664 = vshll.u32 %v3486, 16
      %v3666 = vrot.slane %v3664, 1
      %v3667 = vsel %vm1511, %v3662, %v3666
      %v3669 = vshrl.u32 %v3423, 16
      %v3671 = vshll.u32 %v3423, 16
      %v3673 = vrot.slane %v3671, 1
      %v3674 = vor.u32 %v3669, %v3673
      %v3676 = vshll.u32 %v3487, 16
      %v3678 = vrot.slane %v3676, 1
      %v3679 = vsel %vm1511, %v3674, %v3678
      %v3712 = vunpack.c.l.b16 %v3328
      %v3713 = vunpack.c.l.b16 %v3329
      %v3714 = vunpack.c.l.b16 %v3330
      %v3715 = vunpack.c.l.b16 %v3331
      %v3716 = vunpack.c.l.b16 %v3332
      %v3717 = vunpack.c.l.b16 %v3333
      %v3718 = vunpack.c.l.b16 %v3334
      %v3719 = vunpack.c.l.b16 %v3335
      %v3720 = vunpack.c.l.b16 %v3336
      %v3721 = vunpack.c.l.b16 %v3337
      %v3722 = vunpack.c.l.b16 %v3338
      %v3723 = vunpack.c.l.b16 %v3339
      %v3724 = vunpack.c.l.b16 %v3340
      %v3725 = vunpack.c.l.b16 %v3341
      %v3726 = vunpack.c.l.b16 %v3342
      %v3727 = vunpack.c.l.b16 %v3343
      %v3728 = vpack.c.b16 %v3377, %v3712
      %v3729 = vpack.c.b16 %v3379, %v3713
      %v3730 = vpack.c.b16 %v3381, %v3714
      %v3731 = vpack.c.b16 %v3383, %v3715
      %v3732 = vpack.c.b16 %v3385, %v3716
      %v3733 = vpack.c.b16 %v3387, %v3717
      %v3734 = vpack.c.b16 %v3389, %v3718
      %v3735 = vpack.c.b16 %v3391, %v3719
      %v3736 = vpack.c.b16 %v3393, %v3720
      %v3737 = vpack.c.b16 %v3395, %v3721
      %v3738 = vpack.c.b16 %v3397, %v3722
      %v3739 = vpack.c.b16 %v3399, %v3723
      %v3740 = vpack.c.b16 %v3401, %v3724
      %v3741 = vpack.c.b16 %v3403, %v3725
      %v3742 = vpack.c.b16 %v3405, %v3726
      %v3743 = vpack.c.b16 %v3407, %v3727
      %v3744 = vrot.slane %v3728, 1
      %v3745 = vrot.slane %v3472, 1
      %v3746 = vsel %vm1768, %v3744, %v3745
      %v3747 = vrot.slane %v3729, 1
      %v3748 = vrot.slane %v3473, 1
      %v3749 = vsel %vm1768, %v3747, %v3748
      %v3750 = vrot.slane %v3730, 1
      %v3751 = vrot.slane %v3474, 1
      %v3752 = vsel %vm1768, %v3750, %v3751
      %v3753 = vrot.slane %v3731, 1
      %v3754 = vrot.slane %v3475, 1
      %v3755 = vsel %vm1768, %v3753, %v3754
      %v3756 = vrot.slane %v3732, 1
      %v3757 = vrot.slane %v3476, 1
      %v3758 = vsel %vm1768, %v3756, %v3757
      %v3759 = vrot.slane %v3733, 1
      %v3760 = vrot.slane %v3477, 1
      %v3761 = vsel %vm1768, %v3759, %v3760
      %v3762 = vrot.slane %v3734, 1
      %v3763 = vrot.slane %v3478, 1
      %v3764 = vsel %vm1768, %v3762, %v3763
      %v3765 = vrot.slane %v3735, 1
      %v3766 = vrot.slane %v3479, 1
      %v3767 = vsel %vm1768, %v3765, %v3766
      %v3768 = vrot.slane %v3736, 1
      %v3769 = vrot.slane %v3480, 1
      %v3770 = vsel %vm1768, %v3768, %v3769
      %v3771 = vrot.slane %v3737, 1
      %v3772 = vrot.slane %v3481, 1
      %v3773 = vsel %vm1768, %v3771, %v3772
      %v3774 = vrot.slane %v3738, 1
      %v3775 = vrot.slane %v3482, 1
      %v3776 = vsel %vm1768, %v3774, %v3775
      %v3777 = vrot.slane %v3739, 1
      %v3778 = vrot.slane %v3483, 1
      %v3779 = vsel %vm1768, %v3777, %v3778
      %v3780 = vrot.slane %v3740, 1
      %v3781 = vrot.slane %v3484, 1
      %v3782 = vsel %vm1768, %v3780, %v3781
      %v3783 = vrot.slane %v3741, 1
      %v3784 = vrot.slane %v3485, 1
      %v3785 = vsel %vm1768, %v3783, %v3784
      %v3786 = vrot.slane %v3742, 1
      %v3787 = vrot.slane %v3486, 1
      %v3788 = vsel %vm1768, %v3786, %v3787
      %v3789 = vrot.slane %v3743, 1
      %v3790 = vrot.slane %v3487, 1
      %v3791 = vsel %vm1768, %v3789, %v3790
      %v3808 = vld [vmem:[%s3 + $0x180] sm:$0xf]
      %v3809 = vld [vmem:[%s3 + $0x184] sm:$0xf]
      %v3810 = vld [vmem:[%s3 + $0x188] sm:$0xf]
      %v3811 = vld [vmem:[%s3 + $0x18c] sm:$0xf]
      %v3812 = vld [vmem:[%s3 + $0x190] sm:$0xf]
      %v3813 = vld [vmem:[%s3 + $0x194] sm:$0xf]
      %v3814 = vld [vmem:[%s3 + $0x198] sm:$0xf]
      %v3815 = vld [vmem:[%s3 + $0x19c] sm:$0xf]
      %v3816 = vld [vmem:[%s3 + $0x1a0] sm:$0xf]
      %v3817 = vld [vmem:[%s3 + $0x1a4] sm:$0xf]
      %v3818 = vld [vmem:[%s3 + $0x1a8] sm:$0xf]
      %v3819 = vld [vmem:[%s3 + $0x1ac] sm:$0xf]
      %v3820 = vld [vmem:[%s3 + $0x1b0] sm:$0xf]
      %v3821 = vld [vmem:[%s3 + $0x1b4] sm:$0xf]
      %v3822 = vld [vmem:[%s3 + $0x1b8] sm:$0xf]
      %v3823 = vld [vmem:[%s3 + $0x1bc] sm:$0xf]
      %v3824 = vld [vmem:[%s3 + $0x1c0] sm:$0xf]
      %v3825 = vld [vmem:[%s3 + $0x1c4] sm:$0xf]
      %v3826 = vld [vmem:[%s3 + $0x1c8] sm:$0xf]
      %v3827 = vld [vmem:[%s3 + $0x1cc] sm:$0xf]
      %v3828 = vld [vmem:[%s3 + $0x1d0] sm:$0xf]
      %v3829 = vld [vmem:[%s3 + $0x1d4] sm:$0xf]
      %v3830 = vld [vmem:[%s3 + $0x1d8] sm:$0xf]
      %v3831 = vld [vmem:[%s3 + $0x1dc] sm:$0xf]
      %v3832 = vld [vmem:[%s3 + $0x1e0] sm:$0xf]
      %v3833 = vld [vmem:[%s3 + $0x1e4] sm:$0xf]
      %v3834 = vld [vmem:[%s3 + $0x1e8] sm:$0xf]
      %v3835 = vld [vmem:[%s3 + $0x1ec] sm:$0xf]
      %v3836 = vld [vmem:[%s3 + $0x1f0] sm:$0xf]
      %v3837 = vld [vmem:[%s3 + $0x1f4] sm:$0xf]
      %v3838 = vld [vmem:[%s3 + $0x1f8] sm:$0xf]
      %v3839 = vld [vmem:[%s3 + $0x1fc] sm:$0xf]
      %v3840 = vld [vmem:[%s3 + $0x200] sm:$0xf]
      %v3841 = vld [vmem:[%s3 + $0x204] sm:$0xf]
      %v3842 = vld [vmem:[%s3 + $0x208] sm:$0xf]
      %v3843 = vld [vmem:[%s3 + $0x20c] sm:$0xf]
      %v3844 = vld [vmem:[%s3 + $0x210] sm:$0xf]
      %v3845 = vld [vmem:[%s3 + $0x214] sm:$0xf]
      %v3846 = vld [vmem:[%s3 + $0x218] sm:$0xf]
      %v3847 = vld [vmem:[%s3 + $0x21c] sm:$0xf]
      %v3848 = vld [vmem:[%s3 + $0x220] sm:$0xf]
      %v3849 = vld [vmem:[%s3 + $0x224] sm:$0xf]
      %v3850 = vld [vmem:[%s3 + $0x228] sm:$0xf]
      %v3851 = vld [vmem:[%s3 + $0x22c] sm:$0xf]
      %v3852 = vld [vmem:[%s3 + $0x230] sm:$0xf]
      %v3853 = vld [vmem:[%s3 + $0x234] sm:$0xf]
      %v3854 = vld [vmem:[%s3 + $0x238] sm:$0xf]
      %v3855 = vld [vmem:[%s3 + $0x23c] sm:$0xf]
      %v3904 = vunpack.c.l.b16 %v3808
      %v3905 = vunpack.c.l.b16 %v3809
      %v3906 = vunpack.c.l.b16 %v3810
      %v3907 = vunpack.c.l.b16 %v3811
      %v3908 = vunpack.c.l.b16 %v3812
      %v3909 = vunpack.c.l.b16 %v3813
      %v3910 = vunpack.c.l.b16 %v3814
      %v3911 = vunpack.c.l.b16 %v3815
      %v3912 = vunpack.c.l.b16 %v3816
      %v3913 = vunpack.c.l.b16 %v3817
      %v3914 = vunpack.c.l.b16 %v3818
      %v3915 = vunpack.c.l.b16 %v3819
      %v3916 = vunpack.c.l.b16 %v3820
      %v3917 = vunpack.c.l.b16 %v3821
      %v3918 = vunpack.c.l.b16 %v3822
      %v3919 = vunpack.c.l.b16 %v3823
      %v3920 = vunpack.c.l.b16 %v3824
      %v3921 = vunpack.c.l.b16 %v3825
      %v3922 = vunpack.c.l.b16 %v3826
      %v3923 = vunpack.c.l.b16 %v3827
      %v3924 = vunpack.c.l.b16 %v3828
      %v3925 = vunpack.c.l.b16 %v3829
      %v3926 = vunpack.c.l.b16 %v3830
      %v3927 = vunpack.c.l.b16 %v3831
      %v3928 = vunpack.c.l.b16 %v3832
      %v3929 = vunpack.c.l.b16 %v3833
      %v3930 = vunpack.c.l.b16 %v3834
      %v3931 = vunpack.c.l.b16 %v3835
      %v3932 = vunpack.c.l.b16 %v3836
      %v3933 = vunpack.c.l.b16 %v3837
      %v3934 = vunpack.c.l.b16 %v3838
      %v3935 = vunpack.c.l.b16 %v3839
      %v3936 = vunpack.c.l.b16 %v3840
      %v3937 = vunpack.c.l.b16 %v3841
      %v3938 = vunpack.c.l.b16 %v3842
      %v3939 = vunpack.c.l.b16 %v3843
      %v3940 = vunpack.c.l.b16 %v3844
      %v3941 = vunpack.c.l.b16 %v3845
      %v3942 = vunpack.c.l.b16 %v3846
      %v3943 = vunpack.c.l.b16 %v3847
      %v3944 = vunpack.c.l.b16 %v3848
      %v3945 = vunpack.c.l.b16 %v3849
      %v3946 = vunpack.c.l.b16 %v3850
      %v3947 = vunpack.c.l.b16 %v3851
      %v3948 = vunpack.c.l.b16 %v3852
      %v3949 = vunpack.c.l.b16 %v3853
      %v3950 = vunpack.c.l.b16 %v3854
      %v3951 = vunpack.c.l.b16 %v3855
      %v3952 = vpack.c.b16 %v3905, %v3904
      %v3953 = vpack.c.b16 %v3907, %v3906
      %v3954 = vpack.c.b16 %v3909, %v3908
      %v3955 = vpack.c.b16 %v3911, %v3910
      %v3956 = vpack.c.b16 %v3913, %v3912
      %v3957 = vpack.c.b16 %v3915, %v3914
      %v3958 = vpack.c.b16 %v3917, %v3916
      %v3959 = vpack.c.b16 %v3919, %v3918
      %v3960 = vpack.c.b16 %v3921, %v3920
      %v3961 = vpack.c.b16 %v3923, %v3922
      %v3962 = vpack.c.b16 %v3925, %v3924
      %v3963 = vpack.c.b16 %v3927, %v3926
      %v3964 = vpack.c.b16 %v3929, %v3928
      %v3965 = vpack.c.b16 %v3931, %v3930
      %v3966 = vpack.c.b16 %v3933, %v3932
      %v3967 = vpack.c.b16 %v3935, %v3934
      %v3968 = vpack.c.b16 %v3937, %v3936
      %v3969 = vpack.c.b16 %v3939, %v3938
      %v3970 = vpack.c.b16 %v3941, %v3940
      %v3971 = vpack.c.b16 %v3943, %v3942
      %v3972 = vpack.c.b16 %v3945, %v3944
      %v3973 = vpack.c.b16 %v3947, %v3946
      %v3974 = vpack.c.b16 %v3949, %v3948
      %v3975 = vpack.c.b16 %v3951, %v3950
      %4000 = vmatpush.bf16.msra.mxu0 %v3959
      %4001 = vmatpush.bf16.msra.mxu0 %v3958
      %4002 = vmatpush.bf16.msra.mxu0 %v3957
      %4003 = vmatpush.bf16.msra.mxu0 %v3956
      %4004 = vmatpush.bf16.msra.mxu0 %v3955
      %4005 = vmatpush.bf16.msra.mxu0 %v3954
      %4006 = vmatpush.bf16.msra.mxu0 %v3953
      %4007 = vmatpush.bf16.msra.mxu0 %v3952
      %4008 = vmatmul.bf16.gmra.mxu0 %v3408
      %v4009 = vpop.f32.mrf.mxu0
      %v4010 = vadd.f32 0.0, %v4009
      %v4011 = vpop.f32.mrf.mxu0
      %v4012 = vadd.f32 0.0, %v4011
      %4013 = vmatmul.bf16.gmra.mxu0 %v3409
      %v4014 = vpop.f32.mrf.mxu0
      %v4015 = vadd.f32 0.0, %v4014
      %v4016 = vpop.f32.mrf.mxu0
      %v4017 = vadd.f32 0.0, %v4016
      %4018 = vmatmul.bf16.gmra.mxu0 %v3410
      %v4019 = vpop.f32.mrf.mxu0
      %v4020 = vadd.f32 0.0, %v4019
      %v4021 = vpop.f32.mrf.mxu0
      %v4022 = vadd.f32 0.0, %v4021
      %4023 = vmatmul.bf16.gmra.mxu0 %v3411
      %v4024 = vpop.f32.mrf.mxu0
      %v4025 = vadd.f32 0.0, %v4024
      %v4026 = vpop.f32.mrf.mxu0
      %v4027 = vadd.f32 0.0, %v4026
      %4028 = vmatmul.bf16.gmra.mxu0 %v3412
      %v4029 = vpop.f32.mrf.mxu0
      %v4030 = vadd.f32 0.0, %v4029
      %v4031 = vpop.f32.mrf.mxu0
      %v4032 = vadd.f32 0.0, %v4031
      %4033 = vmatmul.bf16.gmra.mxu0 %v3413
      %v4034 = vpop.f32.mrf.mxu0
      %v4035 = vadd.f32 0.0, %v4034
      %v4036 = vpop.f32.mrf.mxu0
      %v4037 = vadd.f32 0.0, %v4036
      %4038 = vmatmul.bf16.gmra.mxu0 %v3414
      %v4039 = vpop.f32.mrf.mxu0
      %v4040 = vadd.f32 0.0, %v4039
      %v4041 = vpop.f32.mrf.mxu0
      %v4042 = vadd.f32 0.0, %v4041
      %4043 = vmatmul.bf16.gmra.mxu0 %v3415
      %v4044 = vpop.f32.mrf.mxu0
      %v4045 = vadd.f32 0.0, %v4044
      %v4046 = vpop.f32.mrf.mxu0
      %v4047 = vadd.f32 0.0, %v4046
      %4048 = vmatmul.bf16.gmra.mxu0 %v3416
      %v4049 = vpop.f32.mrf.mxu0
      %v4050 = vadd.f32 0.0, %v4049
      %v4051 = vpop.f32.mrf.mxu0
      %v4052 = vadd.f32 0.0, %v4051
      %4053 = vmatmul.bf16.gmra.mxu0 %v3417
      %v4054 = vpop.f32.mrf.mxu0
      %v4055 = vadd.f32 0.0, %v4054
      %v4056 = vpop.f32.mrf.mxu0
      %v4057 = vadd.f32 0.0, %v4056
      %4058 = vmatmul.bf16.gmra.mxu0 %v3418
      %v4059 = vpop.f32.mrf.mxu0
      %v4060 = vadd.f32 0.0, %v4059
      %v4061 = vpop.f32.mrf.mxu0
      %v4062 = vadd.f32 0.0, %v4061
      %4063 = vmatmul.bf16.gmra.mxu0 %v3419
      %v4064 = vpop.f32.mrf.mxu0
      %v4065 = vadd.f32 0.0, %v4064
      %v4066 = vpop.f32.mrf.mxu0
      %v4067 = vadd.f32 0.0, %v4066
      %4068 = vmatmul.bf16.gmra.mxu0 %v3420
      %v4069 = vpop.f32.mrf.mxu0
      %v4070 = vadd.f32 0.0, %v4069
      %v4071 = vpop.f32.mrf.mxu0
      %v4072 = vadd.f32 0.0, %v4071
      %4073 = vmatmul.bf16.gmra.mxu0 %v3421
      %v4074 = vpop.f32.mrf.mxu0
      %v4075 = vadd.f32 0.0, %v4074
      %v4076 = vpop.f32.mrf.mxu0
      %v4077 = vadd.f32 0.0, %v4076
      %4078 = vmatmul.bf16.gmra.mxu0 %v3422
      %v4079 = vpop.f32.mrf.mxu0
      %v4080 = vadd.f32 0.0, %v4079
      %v4081 = vpop.f32.mrf.mxu0
      %v4082 = vadd.f32 0.0, %v4081
      %4083 = vmatmul.bf16.gmra.mxu0 %v3423
      %v4084 = vpop.f32.mrf.mxu0
      %v4085 = vadd.f32 0.0, %v4084
      %v4086 = vpop.f32.mrf.mxu0
      %v4087 = vadd.f32 0.0, %v4086
      %4088 = vdwg.mxu0
      %4089 = vmatpush.bf16.msra.mxu0 %v3967
      %4090 = vmatpush.bf16.msra.mxu0 %v3966
      %4091 = vmatpush.bf16.msra.mxu0 %v3965
      %4092 = vmatpush.bf16.msra.mxu0 %v3964
      %4093 = vmatpush.bf16.msra.mxu0 %v3963
      %4094 = vmatpush.bf16.msra.mxu0 %v3962
      %4095 = vmatpush.bf16.msra.mxu0 %v3961
      %4096 = vmatpush.bf16.msra.mxu0 %v3960
      %4097 = vmatmul.bf16.gmra.mxu0 %v3499
      %v4098 = vpop.f32.mrf.mxu0
      %v4099 = vadd.f32 %v4010, %v4098
      %v4100 = vpop.f32.mrf.mxu0
      %v4101 = vadd.f32 %v4012, %v4100
      %4102 = vmatmul.bf16.gmra.mxu0 %v3511
      %v4103 = vpop.f32.mrf.mxu0
      %v4104 = vadd.f32 %v4015, %v4103
      %v4105 = vpop.f32.mrf.mxu0
      %v4106 = vadd.f32 %v4017, %v4105
      %4107 = vmatmul.bf16.gmra.mxu0 %v3523
      %v4108 = vpop.f32.mrf.mxu0
      %v4109 = vadd.f32 %v4020, %v4108
      %v4110 = vpop.f32.mrf.mxu0
      %v4111 = vadd.f32 %v4022, %v4110
      %4112 = vmatmul.bf16.gmra.mxu0 %v3535
      %v4113 = vpop.f32.mrf.mxu0
      %v4114 = vadd.f32 %v4025, %v4113
      %v4115 = vpop.f32.mrf.mxu0
      %v4116 = vadd.f32 %v4027, %v4115
      %4117 = vmatmul.bf16.gmra.mxu0 %v3547
      %v4118 = vpop.f32.mrf.mxu0
      %v4119 = vadd.f32 %v4030, %v4118
      %v4120 = vpop.f32.mrf.mxu0
      %v4121 = vadd.f32 %v4032, %v4120
      %4122 = vmatmul.bf16.gmra.mxu0 %v3559
      %v4123 = vpop.f32.mrf.mxu0
      %v4124 = vadd.f32 %v4035, %v4123
      %v4125 = vpop.f32.mrf.mxu0
      %v4126 = vadd.f32 %v4037, %v4125
      %4127 = vmatmul.bf16.gmra.mxu0 %v3571
      %v4128 = vpop.f32.mrf.mxu0
      %v4129 = vadd.f32 %v4040, %v4128
      %v4130 = vpop.f32.mrf.mxu0
      %v4131 = vadd.f32 %v4042, %v4130
      %4132 = vmatmul.bf16.gmra.mxu0 %v3583
      %v4133 = vpop.f32.mrf.mxu0
      %v4134 = vadd.f32 %v4045, %v4133
      %v4135 = vpop.f32.mrf.mxu0
      %v4136 = vadd.f32 %v4047, %v4135
      %4137 = vmatmul.bf16.gmra.mxu0 %v3595
      %v4138 = vpop.f32.mrf.mxu0
      %v4139 = vadd.f32 %v4050, %v4138
      %v4140 = vpop.f32.mrf.mxu0
      %v4141 = vadd.f32 %v4052, %v4140
      %4142 = vmatmul.bf16.gmra.mxu0 %v3607
      %v4143 = vpop.f32.mrf.mxu0
      %v4144 = vadd.f32 %v4055, %v4143
      %v4145 = vpop.f32.mrf.mxu0
      %v4146 = vadd.f32 %v4057, %v4145
      %4147 = vmatmul.bf16.gmra.mxu0 %v3619
      %v4148 = vpop.f32.mrf.mxu0
      %v4149 = vadd.f32 %v4060, %v4148
      %v4150 = vpop.f32.mrf.mxu0
      %v4151 = vadd.f32 %v4062, %v4150
      %4152 = vmatmul.bf16.gmra.mxu0 %v3631
      %v4153 = vpop.f32.mrf.mxu0
      %v4154 = vadd.f32 %v4065, %v4153
      %v4155 = vpop.f32.mrf.mxu0
      %v4156 = vadd.f32 %v4067, %v4155
      %4157 = vmatmul.bf16.gmra.mxu0 %v3643
      %v4158 = vpop.f32.mrf.mxu0
      %v4159 = vadd.f32 %v4070, %v4158
      %v4160 = vpop.f32.mrf.mxu0
      %v4161 = vadd.f32 %v4072, %v4160
      %4162 = vmatmul.bf16.gmra.mxu0 %v3655
      %v4163 = vpop.f32.mrf.mxu0
      %v4164 = vadd.f32 %v4075, %v4163
      %v4165 = vpop.f32.mrf.mxu0
      %v4166 = vadd.f32 %v4077, %v4165
      %4167 = vmatmul.bf16.gmra.mxu0 %v3667
      %v4168 = vpop.f32.mrf.mxu0
      %v4169 = vadd.f32 %v4080, %v4168
      %v4170 = vpop.f32.mrf.mxu0
      %v4171 = vadd.f32 %v4082, %v4170
      %4172 = vmatmul.bf16.gmra.mxu0 %v3679
      %v4173 = vpop.f32.mrf.mxu0
      %v4174 = vadd.f32 %v4085, %v4173
      %v4175 = vpop.f32.mrf.mxu0
      %v4176 = vadd.f32 %v4087, %v4175
      %4177 = vdwg.mxu0
      %4178 = vmatpush.bf16.msra.mxu0 %v3975
      %4179 = vmatpush.bf16.msra.mxu0 %v3974
      %4180 = vmatpush.bf16.msra.mxu0 %v3973
      %4181 = vmatpush.bf16.msra.mxu0 %v3972
      %4182 = vmatpush.bf16.msra.mxu0 %v3971
      %4183 = vmatpush.bf16.msra.mxu0 %v3970
      %4184 = vmatpush.bf16.msra.mxu0 %v3969
      %4185 = vmatpush.bf16.msra.mxu0 %v3968
      %4186 = vmatmul.bf16.gmra.mxu0 %v3746
      %v4187 = vpop.f32.mrf.mxu0
      %v4188 = vadd.f32 %v4099, %v4187
      %v4189 = vpop.f32.mrf.mxu0
      %v4190 = vadd.f32 %v4101, %v4189
      %4191 = vmatmul.bf16.gmra.mxu0 %v3749
      %v4192 = vpop.f32.mrf.mxu0
      %v4193 = vadd.f32 %v4104, %v4192
      %v4194 = vpop.f32.mrf.mxu0
      %v4195 = vadd.f32 %v4106, %v4194
      %4196 = vmatmul.bf16.gmra.mxu0 %v3752
      %v4197 = vpop.f32.mrf.mxu0
      %v4198 = vadd.f32 %v4109, %v4197
      %v4199 = vpop.f32.mrf.mxu0
      %v4200 = vadd.f32 %v4111, %v4199
      %4201 = vmatmul.bf16.gmra.mxu0 %v3755
      %v4202 = vpop.f32.mrf.mxu0
      %v4203 = vadd.f32 %v4114, %v4202
      %v4204 = vpop.f32.mrf.mxu0
      %v4205 = vadd.f32 %v4116, %v4204
      %4206 = vmatmul.bf16.gmra.mxu0 %v3758
      %v4207 = vpop.f32.mrf.mxu0
      %v4208 = vadd.f32 %v4119, %v4207
      %v4209 = vpop.f32.mrf.mxu0
      %v4210 = vadd.f32 %v4121, %v4209
      %4211 = vmatmul.bf16.gmra.mxu0 %v3761
      %v4212 = vpop.f32.mrf.mxu0
      %v4213 = vadd.f32 %v4124, %v4212
      %v4214 = vpop.f32.mrf.mxu0
      %v4215 = vadd.f32 %v4126, %v4214
      %4216 = vmatmul.bf16.gmra.mxu0 %v3764
      %v4217 = vpop.f32.mrf.mxu0
      %v4218 = vadd.f32 %v4129, %v4217
      %v4219 = vpop.f32.mrf.mxu0
      %v4220 = vadd.f32 %v4131, %v4219
      %4221 = vmatmul.bf16.gmra.mxu0 %v3767
      %v4222 = vpop.f32.mrf.mxu0
      %v4223 = vadd.f32 %v4134, %v4222
      %v4224 = vpop.f32.mrf.mxu0
      %v4225 = vadd.f32 %v4136, %v4224
      %4226 = vmatmul.bf16.gmra.mxu0 %v3770
      %v4227 = vpop.f32.mrf.mxu0
      %v4228 = vadd.f32 %v4139, %v4227
      %v4229 = vpop.f32.mrf.mxu0
      %v4230 = vadd.f32 %v4141, %v4229
      %4231 = vmatmul.bf16.gmra.mxu0 %v3773
      %v4232 = vpop.f32.mrf.mxu0
      %v4233 = vadd.f32 %v4144, %v4232
      %v4234 = vpop.f32.mrf.mxu0
      %v4235 = vadd.f32 %v4146, %v4234
      %4236 = vmatmul.bf16.gmra.mxu0 %v3776
      %v4237 = vpop.f32.mrf.mxu0
      %v4238 = vadd.f32 %v4149, %v4237
      %v4239 = vpop.f32.mrf.mxu0
      %v4240 = vadd.f32 %v4151, %v4239
      %4241 = vmatmul.bf16.gmra.mxu0 %v3779
      %v4242 = vpop.f32.mrf.mxu0
      %v4243 = vadd.f32 %v4154, %v4242
      %v4244 = vpop.f32.mrf.mxu0
      %v4245 = vadd.f32 %v4156, %v4244
      %4246 = vmatmul.bf16.gmra.mxu0 %v3782
      %v4247 = vpop.f32.mrf.mxu0
      %v4248 = vadd.f32 %v4159, %v4247
      %v4249 = vpop.f32.mrf.mxu0
      %v4250 = vadd.f32 %v4161, %v4249
      %4251 = vmatmul.bf16.gmra.mxu0 %v3785
      %v4252 = vpop.f32.mrf.mxu0
      %v4253 = vadd.f32 %v4164, %v4252
      %v4254 = vpop.f32.mrf.mxu0
      %v4255 = vadd.f32 %v4166, %v4254
      %4256 = vmatmul.bf16.gmra.mxu0 %v3788
      %v4257 = vpop.f32.mrf.mxu0
      %v4258 = vadd.f32 %v4169, %v4257
      %v4259 = vpop.f32.mrf.mxu0
      %v4260 = vadd.f32 %v4171, %v4259
      %4261 = vmatmul.bf16.gmra.mxu0 %v3791
      %v4262 = vpop.f32.mrf.mxu0
      %v4263 = vadd.f32 %v4174, %v4262
      %v4264 = vpop.f32.mrf.mxu0
      %v4265 = vadd.f32 %v4176, %v4264
      %4266 = vdwg.mxu0
      %v4267 = vadd.f32 %v3200, %v4188
      %v4268 = vadd.f32 %v3202, %v4190
      %v4269 = vadd.f32 %v3205, %v4193
      %v4270 = vadd.f32 %v3207, %v4195
      %v4271 = vadd.f32 %v3210, %v4198
      %v4272 = vadd.f32 %v3212, %v4200
      %v4273 = vadd.f32 %v3215, %v4203
      %v4274 = vadd.f32 %v3217, %v4205
      %v4275 = vadd.f32 %v3220, %v4208
      %v4276 = vadd.f32 %v3222, %v4210
      %v4277 = vadd.f32 %v3225, %v4213
      %v4278 = vadd.f32 %v3227, %v4215
      %v4279 = vadd.f32 %v3230, %v4218
      %v4280 = vadd.f32 %v3232, %v4220
      %v4281 = vadd.f32 %v3235, %v4223
      %v4282 = vadd.f32 %v3237, %v4225
      %v4283 = vadd.f32 %v3240, %v4228
      %v4284 = vadd.f32 %v3242, %v4230
      %v4285 = vadd.f32 %v3245, %v4233
      %v4286 = vadd.f32 %v3247, %v4235
      %v4287 = vadd.f32 %v3250, %v4238
      %v4288 = vadd.f32 %v3252, %v4240
      %v4289 = vadd.f32 %v3255, %v4243
      %v4290 = vadd.f32 %v3257, %v4245
      %v4291 = vadd.f32 %v3260, %v4248
      %v4292 = vadd.f32 %v3262, %v4250
      %v4293 = vadd.f32 %v3265, %v4253
      %v4294 = vadd.f32 %v3267, %v4255
      %v4295 = vadd.f32 %v3270, %v4258
      %v4296 = vadd.f32 %v3272, %v4260
      %v4297 = vadd.f32 %v3275, %v4263
      %v4298 = vadd.f32 %v3277, %v4265
      %v4299 = vpack.c.bf16 %v4267, %v4267
      %v4300 = vpack.c.bf16 %v4268, %v4268
      %v4301 = vpack.c.bf16 %v4269, %v4269
      %v4302 = vpack.c.bf16 %v4270, %v4270
      %v4303 = vpack.c.bf16 %v4271, %v4271
      %v4304 = vpack.c.bf16 %v4272, %v4272
      %v4305 = vpack.c.bf16 %v4273, %v4273
      %v4306 = vpack.c.bf16 %v4274, %v4274
      %v4307 = vpack.c.bf16 %v4275, %v4275
      %v4308 = vpack.c.bf16 %v4276, %v4276
      %v4309 = vpack.c.bf16 %v4277, %v4277
      %v4310 = vpack.c.bf16 %v4278, %v4278
      %v4311 = vpack.c.bf16 %v4279, %v4279
      %v4312 = vpack.c.bf16 %v4280, %v4280
      %v4313 = vpack.c.bf16 %v4281, %v4281
      %v4314 = vpack.c.bf16 %v4282, %v4282
      %v4315 = vpack.c.bf16 %v4283, %v4283
      %v4316 = vpack.c.bf16 %v4284, %v4284
      %v4317 = vpack.c.bf16 %v4285, %v4285
      %v4318 = vpack.c.bf16 %v4286, %v4286
      %v4319 = vpack.c.bf16 %v4287, %v4287
      %v4320 = vpack.c.bf16 %v4288, %v4288
      %v4321 = vpack.c.bf16 %v4289, %v4289
      %v4322 = vpack.c.bf16 %v4290, %v4290
      %v4323 = vpack.c.bf16 %v4291, %v4291
      %v4324 = vpack.c.bf16 %v4292, %v4292
      %v4325 = vpack.c.bf16 %v4293, %v4293
      %v4326 = vpack.c.bf16 %v4294, %v4294
      %v4327 = vpack.c.bf16 %v4295, %v4295
      %v4328 = vpack.c.bf16 %v4296, %v4296
      %v4329 = vpack.c.bf16 %v4297, %v4297
      %v4330 = vpack.c.bf16 %v4298, %v4298
      %4331 = vst [vmem:[%s457] sm:$0xf] %v4299
      %4332 = vst [vmem:[%s457 + $0x4] sm:$0xf] %v4300
      %4333 = vst [vmem:[%s457 + $0x8] sm:$0xf] %v4301
      %4334 = vst [vmem:[%s457 + $0xc] sm:$0xf] %v4302
      %4335 = vst [vmem:[%s457 + $0x10] sm:$0xf] %v4303
      %4336 = vst [vmem:[%s457 + $0x14] sm:$0xf] %v4304
      %4337 = vst [vmem:[%s457 + $0x18] sm:$0xf] %v4305
      %4338 = vst [vmem:[%s457 + $0x1c] sm:$0xf] %v4306
      %4339 = vst [vmem:[%s457 + $0x20] sm:$0xf] %v4307
      %4340 = vst [vmem:[%s457 + $0x24] sm:$0xf] %v4308
      %4341 = vst [vmem:[%s457 + $0x28] sm:$0xf] %v4309
      %4342 = vst [vmem:[%s457 + $0x2c] sm:$0xf] %v4310
      %4343 = vst [vmem:[%s457 + $0x30] sm:$0xf] %v4311
      %4344 = vst [vmem:[%s457 + $0x34] sm:$0xf] %v4312
      %4345 = vst [vmem:[%s457 + $0x38] sm:$0xf] %v4313
      %4346 = vst [vmem:[%s457 + $0x3c] sm:$0xf] %v4314
      %4347 = vst [vmem:[%s457 + $0x40] sm:$0xf] %v4315
      %4348 = vst [vmem:[%s457 + $0x44] sm:$0xf] %v4316
      %4349 = vst [vmem:[%s457 + $0x48] sm:$0xf] %v4317
      %4350 = vst [vmem:[%s457 + $0x4c] sm:$0xf] %v4318
      %4351 = vst [vmem:[%s457 + $0x50] sm:$0xf] %v4319
      %4352 = vst [vmem:[%s457 + $0x54] sm:$0xf] %v4320
      %4353 = vst [vmem:[%s457 + $0x58] sm:$0xf] %v4321
      %4354 = vst [vmem:[%s457 + $0x5c] sm:$0xf] %v4322
      %4355 = vst [vmem:[%s457 + $0x60] sm:$0xf] %v4323
      %4356 = vst [vmem:[%s457 + $0x64] sm:$0xf] %v4324
      %4357 = vst [vmem:[%s457 + $0x68] sm:$0xf] %v4325
      %4358 = vst [vmem:[%s457 + $0x6c] sm:$0xf] %v4326
      %4359 = vst [vmem:[%s457 + $0x70] sm:$0xf] %v4327
      %4360 = vst [vmem:[%s457 + $0x74] sm:$0xf] %v4328
      %4361 = vst [vmem:[%s457 + $0x78] sm:$0xf] %v4329
      %4362 = vst [vmem:[%s457 + $0x7c] sm:$0xf] %v4330
      %v4363 = vadd.f32 %v4267, %v4268
      %v4364 = vadd.f32 %v4363, %v4269
      %v4365 = vadd.f32 %v4364, %v4270
      %v4366 = vadd.f32 %v4365, %v4271
      %v4367 = vadd.f32 %v4366, %v4272
      %v4368 = vadd.f32 %v4367, %v4273
      %v4369 = vadd.f32 %v4368, %v4274
      %v4370 = vadd.f32 %v4369, %v4275
      %v4371 = vadd.f32 %v4370, %v4276
      %v4372 = vadd.f32 %v4371, %v4277
      %v4373 = vadd.f32 %v4372, %v4278
      %v4374 = vadd.f32 %v4373, %v4279
      %v4375 = vadd.f32 %v4374, %v4280
      %v4376 = vadd.f32 %v4375, %v4281
      %v4377 = vadd.f32 %v4376, %v4282
      %v4378 = vadd.f32 %v4377, %v4283
      %v4379 = vadd.f32 %v4378, %v4284
      %v4380 = vadd.f32 %v4379, %v4285
      %v4381 = vadd.f32 %v4380, %v4286
      %v4382 = vadd.f32 %v4381, %v4287
      %v4383 = vadd.f32 %v4382, %v4288
      %v4384 = vadd.f32 %v4383, %v4289
      %v4385 = vadd.f32 %v4384, %v4290
      %v4386 = vadd.f32 %v4385, %v4291
      %v4387 = vadd.f32 %v4386, %v4292
      %v4388 = vadd.f32 %v4387, %v4293
      %v4389 = vadd.f32 %v4388, %v4294
      %v4390 = vadd.f32 %v4389, %v4295
      %v4391 = vadd.f32 %v4390, %v4296
      %v4392 = vadd.f32 %v4391, %v4297
      %v4393 = vadd.f32 %v4392, %v4298
      %v4394 = vrot.slane %v4393, 4
      %v4395 = vadd.f32 %v4393, %v4394
      %v4396 = vrot.slane %v4395, 2
      %v4397 = vadd.f32 %v4395, %v4396
      %v4398 = vrot.slane %v4397, 1
      %v4399 = vadd.f32 %v4397, %v4398
      %v4400 = vmul.f32 %v4267, %v4267
      %v4401 = vmul.f32 %v4268, %v4268
      %v4402 = vmul.f32 %v4269, %v4269
      %v4403 = vmul.f32 %v4270, %v4270
      %v4404 = vmul.f32 %v4271, %v4271
      %v4405 = vmul.f32 %v4272, %v4272
      %v4406 = vmul.f32 %v4273, %v4273
      %v4407 = vmul.f32 %v4274, %v4274
      %v4408 = vmul.f32 %v4275, %v4275
      %v4409 = vmul.f32 %v4276, %v4276
      %v4410 = vmul.f32 %v4277, %v4277
      %v4411 = vmul.f32 %v4278, %v4278
      %v4412 = vmul.f32 %v4279, %v4279
      %v4413 = vmul.f32 %v4280, %v4280
      %v4414 = vmul.f32 %v4281, %v4281
      %v4415 = vmul.f32 %v4282, %v4282
      %v4416 = vmul.f32 %v4283, %v4283
      %v4417 = vmul.f32 %v4284, %v4284
      %v4418 = vmul.f32 %v4285, %v4285
      %v4419 = vmul.f32 %v4286, %v4286
      %v4420 = vmul.f32 %v4287, %v4287
      %v4421 = vmul.f32 %v4288, %v4288
      %v4422 = vmul.f32 %v4289, %v4289
      %v4423 = vmul.f32 %v4290, %v4290
      %v4424 = vmul.f32 %v4291, %v4291
      %v4425 = vmul.f32 %v4292, %v4292
      %v4426 = vmul.f32 %v4293, %v4293
      %v4427 = vmul.f32 %v4294, %v4294
      %v4428 = vmul.f32 %v4295, %v4295
      %v4429 = vmul.f32 %v4296, %v4296
      %v4430 = vmul.f32 %v4297, %v4297
      %v4431 = vmul.f32 %v4298, %v4298
      %v4432 = vadd.f32 %v4400, %v4401
      %v4433 = vadd.f32 %v4432, %v4402
      %v4434 = vadd.f32 %v4433, %v4403
      %v4435 = vadd.f32 %v4434, %v4404
      %v4436 = vadd.f32 %v4435, %v4405
      %v4437 = vadd.f32 %v4436, %v4406
      %v4438 = vadd.f32 %v4437, %v4407
      %v4439 = vadd.f32 %v4438, %v4408
      %v4440 = vadd.f32 %v4439, %v4409
      %v4441 = vadd.f32 %v4440, %v4410
      %v4442 = vadd.f32 %v4441, %v4411
      %v4443 = vadd.f32 %v4442, %v4412
      %v4444 = vadd.f32 %v4443, %v4413
      %v4445 = vadd.f32 %v4444, %v4414
      %v4446 = vadd.f32 %v4445, %v4415
      %v4447 = vadd.f32 %v4446, %v4416
      %v4448 = vadd.f32 %v4447, %v4417
      %v4449 = vadd.f32 %v4448, %v4418
      %v4450 = vadd.f32 %v4449, %v4419
      %v4451 = vadd.f32 %v4450, %v4420
      %v4452 = vadd.f32 %v4451, %v4421
      %v4453 = vadd.f32 %v4452, %v4422
      %v4454 = vadd.f32 %v4453, %v4423
      %v4455 = vadd.f32 %v4454, %v4424
      %v4456 = vadd.f32 %v4455, %v4425
      %v4457 = vadd.f32 %v4456, %v4426
      %v4458 = vadd.f32 %v4457, %v4427
      %v4459 = vadd.f32 %v4458, %v4428
      %v4460 = vadd.f32 %v4459, %v4429
      %v4461 = vadd.f32 %v4460, %v4430
      %v4462 = vadd.f32 %v4461, %v4431
      %v4463 = vrot.slane %v4462, 4
      %v4464 = vadd.f32 %v4462, %v4463
      %v4465 = vrot.slane %v4464, 2
      %v4466 = vadd.f32 %v4464, %v4465
      %v4467 = vrot.slane %v4466, 1
      %v4468 = vadd.f32 %v4466, %v4467
      %vm4469 = vcmask 1040384
      %v4470 = vsel %vm4469, %v4399, %v4468
      %4471 = vst [vmem:[%s465] sm:$0x3] %v4470
      %s4472 = smul.u32 16, %s24
      %p4473 = scmp.lt.s32.totalorder %s23, 1
      %s4474 = scalar_select %p4473, %s23, 1
      %p4475 = scmp.lt.s32.totalorder %s4472, 15
      %s4476 = scalar_select %p4475, %s4472, 15
      %s4477 = smul.addr %s4476, 2
      %s4478 = smul.addr %s4474, 32
      %s4479 = sadd.s32 %s4477, %s4478
      %s4480 = smul.addr %s4479, 4
      %s4481 = scalar_lea.vmem %s6, %s4480
      %p4482 = scmp.lt.s32.totalorder %s23, 1
      %s4483 = scalar_select %p4482, %s23, 1
      %p4484 = scmp.lt.s32.totalorder %s24, 0
      %s4485 = scalar_select %p4484, %s24, 0
      %s4486 = sadd.s32 %s4485, %s4483
      %s4487 = smul.addr %s4486, 2
      %s4488 = scalar_lea.vmem %s7, %s4487
      // Predicated region
      $region45: #{double_conv_forward.4} parent=43 // pred_check
        %p4489 = pneg %p214
      $region46: #{double_conv_forward.4} parent=43 // pred_check_branch
        %4491 = sbr.rel (%p4489) target = $region48
      $region47: #{double_conv_forward.4} parent=43 // pred_region
        %s4492 = smul.u32 16, %s24
      $region48: #{double_conv_forward.4} parent=43 // pred_fallthru
        _
      // Predicated region
      $region49: #{double_conv_forward.4} parent=43 // pred_check
        %p4493 = pneg %p242
      $region50: #{double_conv_forward.4} parent=43 // pred_check_branch
        %4495 = sbr.rel (%p4493) target = $region52
      $region51: #{double_conv_forward.4} parent=43 // pred_region
        _
      $region52: #{double_conv_forward.4} parent=43 // pred_fallthru
        _
    $region44: #{double_conv_forward.4} parent=5 // pred_fallthru
      _
    %p4496 = scmp.le.s32.totalorder 2, %s14
    // Predicated region
    $region53: #{double_conv_forward.4} parent=5 // pred_check
      %p4497 = pneg %p4496
    $region54: #{double_conv_forward.4} parent=5 // pred_check_branch
      %4499 = sbr.rel (%p4497) target = $region56
    $region55: #{double_conv_forward.4} parent=5 // pred_region
      %s4500 = ssub.s32 %s14, 2
      // Predicated region
      $region57: #{double_conv_forward.4} parent=55 // pred_check
        %p4501 = pneg %p220
      $region58: #{double_conv_forward.4} parent=55 // pred_check_branch
        %4503 = sbr.rel (%p4501) target = $region60
      $region59: #{double_conv_forward.4} parent=55 // pred_region
        %s4504 = smul.u32 16, %s26
        %p4505 = scmp.lt.s32.totalorder %s25, 1
        %s4506 = scalar_select %p4505, %s25, 1
        %p4507 = scmp.lt.s32.totalorder %s4504, 15
        %s4508 = scalar_select %p4507, %s4504, 15
        %s4509 = smul.addr %s4508, 2
        %s4510 = smul.addr %s4506, 32
        %s4511 = sadd.s32 %s4509, %s4510
        %s4512 = smul.addr %s4511, 4
        %s4513 = scalar_lea.vmem %s6, %s4512
      $region60: #{double_conv_forward.4} parent=55 // pred_fallthru
        _
      // Predicated region
      $region61: #{double_conv_forward.4} parent=55 // pred_check
        %p4514 = pneg %p248
      $region62: #{double_conv_forward.4} parent=55 // pred_check_branch
        %4516 = sbr.rel (%p4514) target = $region64
      $region63: #{double_conv_forward.4} parent=55 // pred_region
        %p4517 = scmp.lt.s32.totalorder %s25, 1
        %s4518 = scalar_select %p4517, %s25, 1
        %p4519 = scmp.lt.s32.totalorder %s26, 0
        %s4520 = scalar_select %p4519, %s26, 0
        %s4521 = sadd.s32 %s4520, %s4518
        %s4522 = smul.addr %s4521, 2
        %s4523 = scalar_lea.vmem %s7, %s4522
      $region64: #{double_conv_forward.4} parent=55 // pred_fallthru
        _
    $region56: #{double_conv_forward.4} parent=5 // pred_fallthru
      _
  $region6: #{double_conv_forward.4} parent=0 // loop_footer
    %s18 = sadd.s32 1, %s14
  $region7: #{double_conv_forward.4} parent=0 // loop_footer_branch
    %13 = sbr.rel target = $region3
  $region8: #{double_conv_forward.4} parent=0 // loop_exit
    _

</llo_original>
